<compile_context>
chip_gen: v6e
topology: v6e:2x2x1
jax: 0.10.0
libtpu: 0.0.40
codegen_flags: <defaults>
</compile_context>

<pallas_src>
import functools

import jax
import jax.numpy as jnp
from jax.experimental import pallas as pl
from jax.experimental.pallas import tpu as pltpu

LATENT = 100
LATENT_PAD = 128      # lane-aligned K for fc1
D1, D2, D3, D4 = 256, 512, 1024, 1024


def mlp_kernel(z_ref,
               w1_ref, b1_ref,
               w2_ref, b2_ref,
               w3q_ref, s3_ref, b3_ref,
               w4q_ref, s4_ref, b4_ref,
               out_ref,
               w3_sc, w4_sc):
    # z_ref: (tb, 128) bf16; w1/w2 bf16 (in, out); w3q/w4q int8 (in, out);
    # s*/b* f32 (1, out); w3_sc/w4_sc bf16 VMEM scratch.

    @pl.when(pl.program_id(0) == 0)
    def _dequant():
        # One-time int8 -> bf16 dequant into VMEM scratch (values stay exact
        # integers <= 127, representable in bf16); the per-column scales are
        # applied to the f32 accumulator below, so precision is preserved.
        w3_sc[...] = w3q_ref[...].astype(jnp.bfloat16)
        w4_sc[...] = w4q_ref[...].astype(jnp.bfloat16)

    x = z_ref[...]
    h = jnp.dot(x, w1_ref[...], preferred_element_type=jnp.float32)       # (tb, 256)
    h = jnp.maximum(h + b1_ref[...], 0.0).astype(jnp.bfloat16)
    h = jnp.dot(h, w2_ref[...], preferred_element_type=jnp.float32)       # (tb, 512)
    h = jnp.maximum(h + b2_ref[...], 0.0).astype(jnp.bfloat16)
    h = jnp.dot(h, w3_sc[...], preferred_element_type=jnp.float32)        # (tb, 1024)
    h = jnp.maximum(h * s3_ref[...] + b3_ref[...], 0.0).astype(jnp.bfloat16)
    h = jnp.dot(h, w4_sc[...], preferred_element_type=jnp.float32)        # (tb, 1024)
    out_ref[...] = (h * s4_ref[...] + b4_ref[...]).astype(out_ref.dtype)


def _round_up(x, m):
    return ((x + m - 1) // m) * m


def _quantize_int8_per_col(w):
    """Symmetric per-output-column int8 quantization; returns (q_int8, scale_f32)."""
    s = jnp.maximum(jnp.max(jnp.abs(w), axis=0, keepdims=True), 1e-8) / 127.0
    q = jnp.clip(jnp.round(w / s), -127, 127).astype(jnp.int8)
    return q, s.astype(jnp.float32)


def prepare_params(params):
    """One-time weight prep:
       fc1: pad K 100->128 with zero rows, bf16
       fc2: bf16
       fc3/fc4: int8 weights + per-column f32 scales
       all biases: f32, shape (1, out)."""
    (w1, b1), (w2, b2), (w3, b3), (w4, b4) = params
    w1p = jnp.zeros((LATENT_PAD, D1), jnp.float32).at[:LATENT, :].set(w1)
    w3q, s3 = _quantize_int8_per_col(w3)
    w4q, s4 = _quantize_int8_per_col(w4)
    row = lambda b: b.reshape(1, -1).astype(jnp.float32)
    return ((w1p.astype(jnp.bfloat16), row(b1)),
            (w2.astype(jnp.bfloat16), row(b2)),
            (w3q, s3, row(b3)),
            (w4q, s4, row(b4)))


@functools.partial(jax.jit, static_argnames=("tb", "out_dtype"))
def _generator_forward_padded(z_pad, prepped, tb, out_dtype):
    """z_pad: (b_pad, 128) bf16 with b_pad % tb == 0."""
    (w1, b1), (w2, b2), (w3q, s3, b3), (w4q, s4, b4) = prepped
    b_pad = z_pad.shape[0]
    grid = (b_pad // tb,)

    def resident(shape):
        # Full-array block, same block index every grid step -> DMA'd once,
        # VMEM-resident across the whole batch.
        return pl.BlockSpec(shape, lambda i: (0, 0))

    return pl.pallas_call(
        mlp_kernel,
        out_shape=jax.ShapeDtypeStruct((b_pad, D4), out_dtype),
        grid=grid,
        in_specs=[
            pl.BlockSpec((tb, LATENT_PAD), lambda i: (i, 0)),      # z tile
            resident((LATENT_PAD, D1)), resident((1, D1)),         # w1, b1
            resident((D1, D2)), resident((1, D2)),                 # w2, b2
            resident((D2, D3)), resident((1, D3)), resident((1, D3)),   # w3q, s3, b3
            resident((D3, D4)), resident((1, D4)), resident((1, D4)),   # w4q, s4, b4
        ],
        out_specs=pl.BlockSpec((tb, D4), lambda i: (i, 0)),
        scratch_shapes=[
            pltpu.VMEM((D2, D3), jnp.bfloat16),   # dequantized fc3 weights
            pltpu.VMEM((D3, D4), jnp.bfloat16),   # dequantized fc4 weights
        ],
        compiler_params=pltpu.CompilerParams(
            dimension_semantics=("arbitrary",),
            vmem_limit_bytes=32 << 20,
        ),
    )(z_pad, w1, b1, w2, b2, w3q, s3, b3, w4q, s4, b4)


def _choose_tile(B):
    """Batch tile: power of two in [16, 512] (bf16 sublane pack, bounded
    recompile buckets for small batches); 512 for large batches."""
    if B >= 512:
        return 512
    t = 16
    while t < B:
        t *= 2
    return t


def generator_forward(z, prepped, out_dtype=jnp.float32):
    """z: (B, 100) float32 -> (B, 1024) out_dtype (f32 default; bf16 halves
    the output HBM stream at large B if downstream tolerates it)."""
    B = z.shape[0]
    tb = _choose_tile(B)
    b_pad = _round_up(B, tb)
    # Single fused pad op: batch B -> b_pad, latent 100 -> 128.
    z_pad = jnp.pad(z, ((0, b_pad - B), (0, LATENT_PAD - LATENT))).astype(jnp.bfloat16)
    out = _generator_forward_padded(z_pad, prepped, tb, out_dtype)
    return out[:B]


def init_params(key):
    """Deterministic init mirroring PyTorch nn.Linear default
    (U[-1/sqrt(fan_in), +1/sqrt(fan_in)]).  Weights stored (in, out)."""
    dims = [(LATENT, D1), (D1, D2), (D2, D3), (D3, D4)]
    params = []
    for fan_in, fan_out in dims:
        key, kw, kb = jax.random.split(key, 3)
        bound = 1.0 / jnp.sqrt(jnp.float32(fan_in))
        w = jax.random.uniform(kw, (fan_in, fan_out), jnp.float32, -bound, bound)
        b = jax.random.uniform(kb, (fan_out,), jnp.float32, -bound, bound)
        params.append((w, b))
    return params


def reference_forward(z, prepped):
    """Plain-JAX reference with identical numerics to the kernel:
    bf16 activations, bf16 / int8-dequant weights, f32 accumulation."""
    (w1, b1), (w2, b2), (w3q, s3, b3), (w4q, s4, b4) = prepped
    h = jnp.pad(z, ((0, 0), (0, LATENT_PAD - LATENT))).astype(jnp.bfloat16)
    h = jnp.dot(h, w1, preferred_element_type=jnp.float32) + b1
    h = jnp.maximum(h, 0.0).astype(jnp.bfloat16)
    h = jnp.dot(h, w2, preferred_element_type=jnp.float32) + b2
    h = jnp.maximum(h, 0.0).astype(jnp.bfloat16)
    h = jnp.dot(h, w3q.astype(jnp.bfloat16), preferred_element_type=jnp.float32) * s3 + b3
    h = jnp.maximum(h, 0.0).astype(jnp.bfloat16)
    h = jnp.dot(h, w4q.astype(jnp.bfloat16), preferred_element_type=jnp.float32) * s4 + b4
    return h


if __name__ == "__main__":
    key = jax.random.PRNGKey(0)
    key, kz = jax.random.split(key)

    B = 8  # small batch of latent vectors
    z = jax.random.normal(kz, (B, LATENT), dtype=jnp.float32)
    params = init_params(key)
    prepped = prepare_params(params)

    out = generator_forward(z, prepped)
    out = jax.block_until_ready(out)

    ref = reference_forward(z, prepped)
    assert out.shape == (B, D4)
    assert out.dtype == jnp.float32
    max_err = float(jnp.max(jnp.abs(out - ref)))
    assert jnp.allclose(out, ref, atol=2e-2, rtol=2e-2), max_err

    print("KERNEL_OK")
</pallas_src>

<mosaic_0001>
module attributes {stable_mosaic.version = 11 : i64} {
  func.func @mlp_kernel(%arg0: i32, %arg1: memref<16x128xbf16, #tpu.memory_space<vmem>>, %arg2: memref<128x256xbf16, #tpu.memory_space<vmem>>, %arg3: memref<1x256xf32, #tpu.memory_space<vmem>>, %arg4: memref<256x512xbf16, #tpu.memory_space<vmem>>, %arg5: memref<1x512xf32, #tpu.memory_space<vmem>>, %arg6: memref<512x1024xi8, #tpu.memory_space<vmem>>, %arg7: memref<1x1024xf32, #tpu.memory_space<vmem>>, %arg8: memref<1x1024xf32, #tpu.memory_space<vmem>>, %arg9: memref<1024x1024xi8, #tpu.memory_space<vmem>>, %arg10: memref<1x1024xf32, #tpu.memory_space<vmem>>, %arg11: memref<1x1024xf32, #tpu.memory_space<vmem>>, %arg12: memref<16x1024xf32, #tpu.memory_space<vmem>>, %arg13: memref<512x1024xbf16, #tpu.memory_space<vmem>>, %arg14: memref<1024x1024xbf16, #tpu.memory_space<vmem>>) attributes {dimension_semantics = [#tpu.dimension_semantics<arbitrary>], iteration_bounds = array<i64: 1>, scalar_prefetch = 0 : i64, scratch_operands = 2 : i64, tpu.core_type = #tpu.core_type<tc>, window_params = [{transform_indices = @transform_0, window_bounds = array<i64: 16, 128>}, {pipeline_mode = #tpu.pipeline_mode<synchronous>, transform_indices = @transform_1, window_bounds = array<i64: 128, 256>}, {pipeline_mode = #tpu.pipeline_mode<synchronous>, transform_indices = @transform_2, window_bounds = array<i64: 1, 256>}, {pipeline_mode = #tpu.pipeline_mode<synchronous>, transform_indices = @transform_3, window_bounds = array<i64: 256, 512>}, {pipeline_mode = #tpu.pipeline_mode<synchronous>, transform_indices = @transform_4, window_bounds = array<i64: 1, 512>}, {pipeline_mode = #tpu.pipeline_mode<synchronous>, transform_indices = @transform_5, window_bounds = array<i64: 512, 1024>}, {pipeline_mode = #tpu.pipeline_mode<synchronous>, transform_indices = @transform_6, window_bounds = array<i64: 1, 1024>}, {pipeline_mode = #tpu.pipeline_mode<synchronous>, transform_indices = @transform_7, window_bounds = array<i64: 1, 1024>}, {pipeline_mode = #tpu.pipeline_mode<synchronous>, transform_indices = @transform_8, window_bounds = array<i64: 1024, 1024>}, {pipeline_mode = #tpu.pipeline_mode<synchronous>, transform_indices = @transform_9, window_bounds = array<i64: 1, 1024>}, {pipeline_mode = #tpu.pipeline_mode<synchronous>, transform_indices = @transform_10, window_bounds = array<i64: 1, 1024>}, {transform_indices = @transform_11, window_bounds = array<i64: 16, 1024>}]} {
    %c0_i32 = arith.constant 0 : i32
    %0 = arith.cmpi eq, %arg0, %c0_i32 : i32
    %1 = arith.extui %0 : i1 to i32
    %c0_i32_0 = arith.constant 0 : i32
    %2 = arith.cmpi ne, %1, %c0_i32_0 : i32
    scf.if %2 {
      %c0_30 = arith.constant 0 : index
      %c0_31 = arith.constant 0 : index
      %40 = vector.load %arg6[%c0_30, %c0_31] : memref<512x1024xi8, #tpu.memory_space<vmem>>, vector<512x1024xi8>
      %41 = arith.sitofp %40 : vector<512x1024xi8> to vector<512x1024xbf16>
      %c0_32 = arith.constant 0 : index
      %c0_33 = arith.constant 0 : index
      %42 = vector.load %arg13[%c0_32, %c0_33] : memref<512x1024xbf16, #tpu.memory_space<vmem>>, vector<512x1024xbf16>
      tpu.vector_store %arg13[%c0_32, %c0_33], %41 {strides = array<i32>} : memref<512x1024xbf16, #tpu.memory_space<vmem>>, vector<512x1024xbf16>,
      %c0_34 = arith.constant 0 : index
      %c0_35 = arith.constant 0 : index
      %43 = vector.load %arg9[%c0_34, %c0_35] : memref<1024x1024xi8, #tpu.memory_space<vmem>>, vector<1024x1024xi8>
      %44 = arith.sitofp %43 : vector<1024x1024xi8> to vector<1024x1024xbf16>
      %c0_36 = arith.constant 0 : index
      %c0_37 = arith.constant 0 : index
      %45 = vector.load %arg14[%c0_36, %c0_37] : memref<1024x1024xbf16, #tpu.memory_space<vmem>>, vector<1024x1024xbf16>
      tpu.vector_store %arg14[%c0_36, %c0_37], %44 {strides = array<i32>} : memref<1024x1024xbf16, #tpu.memory_space<vmem>>, vector<1024x1024xbf16>,
    } else {
    }
    %c0 = arith.constant 0 : index
    %c0_1 = arith.constant 0 : index
    %3 = vector.load %arg1[%c0, %c0_1] : memref<16x128xbf16, #tpu.memory_space<vmem>>, vector<16x128xbf16>
    %c0_2 = arith.constant 0 : index
    %c0_3 = arith.constant 0 : index
    %4 = vector.load %arg2[%c0_2, %c0_3] : memref<128x256xbf16, #tpu.memory_space<vmem>>, vector<128x256xbf16>
    %cst = arith.constant dense<0.000000e+00> : vector<16x256xf32>
    %5 = tpu.matmul %3, %4, %cst {dimension_numbers = #tpu.dot_dimension_numbers<[1], [0], [0], [1], [0, 0, 1, 1], [], []>} : vector<16x128xbf16>, vector<128x256xbf16>, vector<16x256xf32> -> vector<16x256xf32>
    %c0_4 = arith.constant 0 : index
    %c0_5 = arith.constant 0 : index
    %6 = vector.load %arg3[%c0_4, %c0_5] : memref<1x256xf32, #tpu.memory_space<vmem>>, vector<1x256xf32>
    %7 = vector.broadcast %6 : vector<1x256xf32> to vector<16x256xf32>
    %8 = arith.addf %5, %7 : vector<16x256xf32>
    %cst_6 = arith.constant 0.000000e+00 : f32
    %9 = vector.broadcast %cst_6 : f32 to vector<16x256xf32>
    %10 = arith.maximumf %8, %9 : vector<16x256xf32>
    %11 = arith.truncf %10 : vector<16x256xf32> to vector<16x256xbf16>
    %c0_7 = arith.constant 0 : index
    %c0_8 = arith.constant 0 : index
    %12 = vector.load %arg4[%c0_7, %c0_8] : memref<256x512xbf16, #tpu.memory_space<vmem>>, vector<256x512xbf16>
    %cst_9 = arith.constant dense<0.000000e+00> : vector<16x512xf32>
    %13 = tpu.matmul %11, %12, %cst_9 {dimension_numbers = #tpu.dot_dimension_numbers<[1], [0], [0], [1], [0, 0, 1, 1], [], []>} : vector<16x256xbf16>, vector<256x512xbf16>, vector<16x512xf32> -> vector<16x512xf32>
    %c0_10 = arith.constant 0 : index
    %c0_11 = arith.constant 0 : index
    %14 = vector.load %arg5[%c0_10, %c0_11] : memref<1x512xf32, #tpu.memory_space<vmem>>, vector<1x512xf32>
    %15 = vector.broadcast %14 : vector<1x512xf32> to vector<16x512xf32>
    %16 = arith.addf %13, %15 : vector<16x512xf32>
    %cst_12 = arith.constant 0.000000e+00 : f32
    %17 = vector.broadcast %cst_12 : f32 to vector<16x512xf32>
    %18 = arith.maximumf %16, %17 : vector<16x512xf32>
    %19 = arith.truncf %18 : vector<16x512xf32> to vector<16x512xbf16>
    %c0_13 = arith.constant 0 : index
    %c0_14 = arith.constant 0 : index
    %20 = vector.load %arg13[%c0_13, %c0_14] : memref<512x1024xbf16, #tpu.memory_space<vmem>>, vector<512x1024xbf16>
    %cst_15 = arith.constant dense<0.000000e+00> : vector<16x1024xf32>
    %21 = tpu.matmul %19, %20, %cst_15 {dimension_numbers = #tpu.dot_dimension_numbers<[1], [0], [0], [1], [0, 0, 1, 1], [], []>} : vector<16x512xbf16>, vector<512x1024xbf16>, vector<16x1024xf32> -> vector<16x1024xf32>
    %c0_16 = arith.constant 0 : index
    %c0_17 = arith.constant 0 : index
    %22 = vector.load %arg7[%c0_16, %c0_17] : memref<1x1024xf32, #tpu.memory_space<vmem>>, vector<1x1024xf32>
    %23 = vector.broadcast %22 : vector<1x1024xf32> to vector<16x1024xf32>
    %24 = arith.mulf %21, %23 : vector<16x1024xf32>
    %c0_18 = arith.constant 0 : index
    %c0_19 = arith.constant 0 : index
    %25 = vector.load %arg8[%c0_18, %c0_19] : memref<1x1024xf32, #tpu.memory_space<vmem>>, vector<1x1024xf32>
    %26 = vector.broadcast %25 : vector<1x1024xf32> to vector<16x1024xf32>
    %27 = arith.addf %24, %26 : vector<16x1024xf32>
    %cst_20 = arith.constant 0.000000e+00 : f32
    %28 = vector.broadcast %cst_20 : f32 to vector<16x1024xf32>
    %29 = arith.maximumf %27, %28 : vector<16x1024xf32>
    %30 = arith.truncf %29 : vector<16x1024xf32> to vector<16x1024xbf16>
    %c0_21 = arith.constant 0 : index
    %c0_22 = arith.constant 0 : index
    %31 = vector.load %arg14[%c0_21, %c0_22] : memref<1024x1024xbf16, #tpu.memory_space<vmem>>, vector<1024x1024xbf16>
    %cst_23 = arith.constant dense<0.000000e+00> : vector<16x1024xf32>
    %32 = tpu.matmul %30, %31, %cst_23 {dimension_numbers = #tpu.dot_dimension_numbers<[1], [0], [0], [1], [0, 0, 1, 1], [], []>} : vector<16x1024xbf16>, vector<1024x1024xbf16>, vector<16x1024xf32> -> vector<16x1024xf32>
    %c0_24 = arith.constant 0 : index
    %c0_25 = arith.constant 0 : index
    %33 = vector.load %arg10[%c0_24, %c0_25] : memref<1x1024xf32, #tpu.memory_space<vmem>>, vector<1x1024xf32>
    %34 = vector.broadcast %33 : vector<1x1024xf32> to vector<16x1024xf32>
    %35 = arith.mulf %32, %34 : vector<16x1024xf32>
    %c0_26 = arith.constant 0 : index
    %c0_27 = arith.constant 0 : index
    %36 = vector.load %arg11[%c0_26, %c0_27] : memref<1x1024xf32, #tpu.memory_space<vmem>>, vector<1x1024xf32>
    %37 = vector.broadcast %36 : vector<1x1024xf32> to vector<16x1024xf32>
    %38 = arith.addf %35, %37 : vector<16x1024xf32>
    %c0_28 = arith.constant 0 : index
    %c0_29 = arith.constant 0 : index
    %39 = vector.load %arg12[%c0_28, %c0_29] : memref<16x1024xf32, #tpu.memory_space<vmem>>, vector<16x1024xf32>
    tpu.vector_store %arg12[%c0_28, %c0_29], %38 {strides = array<i32>} : memref<16x1024xf32, #tpu.memory_space<vmem>>, vector<16x1024xf32>,
    return
  }
  func.func @transform_0(%arg0: i32) -> (i32, i32) {
    %c0_i32 = arith.constant 0 : i32
    %c0_i32_0 = arith.constant 0 : i32
    return %arg0, %c0_i32 : i32, i32
  }
  func.func @transform_1(%arg0: i32) -> (i32, i32) {
    %c0_i32 = arith.constant 0 : i32
    %c0_i32_0 = arith.constant 0 : i32
    %c0_i32_1 = arith.constant 0 : i32
    return %c0_i32, %c0_i32_0 : i32, i32
  }
  func.func @transform_2(%arg0: i32) -> (i32, i32) {
    %c0_i32 = arith.constant 0 : i32
    %c0_i32_0 = arith.constant 0 : i32
    %c0_i32_1 = arith.constant 0 : i32
    return %c0_i32, %c0_i32_0 : i32, i32
  }
  func.func @transform_3(%arg0: i32) -> (i32, i32) {
    %c0_i32 = arith.constant 0 : i32
    %c0_i32_0 = arith.constant 0 : i32
    %c0_i32_1 = arith.constant 0 : i32
    return %c0_i32, %c0_i32_0 : i32, i32
  }
  func.func @transform_4(%arg0: i32) -> (i32, i32) {
    %c0_i32 = arith.constant 0 : i32
    %c0_i32_0 = arith.constant 0 : i32
    %c0_i32_1 = arith.constant 0 : i32
    return %c0_i32, %c0_i32_0 : i32, i32
  }
  func.func @transform_5(%arg0: i32) -> (i32, i32) {
    %c0_i32 = arith.constant 0 : i32
    %c0_i32_0 = arith.constant 0 : i32
    %c0_i32_1 = arith.constant 0 : i32
    return %c0_i32, %c0_i32_0 : i32, i32
  }
  func.func @transform_6(%arg0: i32) -> (i32, i32) {
    %c0_i32 = arith.constant 0 : i32
    %c0_i32_0 = arith.constant 0 : i32
    %c0_i32_1 = arith.constant 0 : i32
    return %c0_i32, %c0_i32_0 : i32, i32
  }
  func.func @transform_7(%arg0: i32) -> (i32, i32) {
    %c0_i32 = arith.constant 0 : i32
    %c0_i32_0 = arith.constant 0 : i32
    %c0_i32_1 = arith.constant 0 : i32
    return %c0_i32, %c0_i32_0 : i32, i32
  }
  func.func @transform_8(%arg0: i32) -> (i32, i32) {
    %c0_i32 = arith.constant 0 : i32
    %c0_i32_0 = arith.constant 0 : i32
    %c0_i32_1 = arith.constant 0 : i32
    return %c0_i32, %c0_i32_0 : i32, i32
  }
  func.func @transform_9(%arg0: i32) -> (i32, i32) {
    %c0_i32 = arith.constant 0 : i32
    %c0_i32_0 = arith.constant 0 : i32
    %c0_i32_1 = arith.constant 0 : i32
    return %c0_i32, %c0_i32_0 : i32, i32
  }
  func.func @transform_10(%arg0: i32) -> (i32, i32) {
    %c0_i32 = arith.constant 0 : i32
    %c0_i32_0 = arith.constant 0 : i32
    %c0_i32_1 = arith.constant 0 : i32
    return %c0_i32, %c0_i32_0 : i32, i32
  }
  func.func @transform_11(%arg0: i32) -> (i32, i32) {
    %c0_i32 = arith.constant 0 : i32
    %c0_i32_0 = arith.constant 0 : i32
    return %arg0, %c0_i32 : i32, i32
  }
}

</mosaic_0001>

<llo_original>
// kernel: _generator_forward_padded.1
$region0: #{_generator_forward_padded.1}
  #allocation0 [shape = 'u32[]', space=smem, size = 0x4, offset = 0x4, fixed_abs, tag = 'smem constant byte address 0x4 - core index']
  #allocation1 [shape = 'u32[144,128]{1,0:T(1,128)}', space=vmem, size = 0x12000, scoped, tag = 'internal scratch']
  #allocation2 [shape = 'bf16[512,1024]{1,0:T(8,128)(2,1)}', space=vmem, size = 0x100000, scoped, tag = 'scratch operand']
  #allocation3 [shape = 'bf16[1024,1024]{1,0:T(8,128)(2,1)}', space=vmem, size = 0x200000, scoped, tag = 'scratch operand']
  %s0 = inlined_call_operand.hbm [shape: bf16[16,128], index: 0, kind: input, shape index: {}]
  %s1 = inlined_call_operand.hbm [shape: bf16[128,256], index: 1, kind: input, shape index: {}]
  %s2 = inlined_call_operand.hbm [shape: f32[1,256], index: 2, kind: input, shape index: {}]
  %s3 = inlined_call_operand.hbm [shape: bf16[256,512], index: 3, kind: input, shape index: {}]
  %s4 = inlined_call_operand.hbm [shape: f32[1,512], index: 4, kind: input, shape index: {}]
  %s5 = inlined_call_operand.hbm [shape: s8[512,1024], index: 5, kind: input, shape index: {}]
  %s6 = inlined_call_operand.vmem [shape: f32[1,1024], index: 6, kind: input, shape index: {}]
  %s7 = inlined_call_operand.hbm [shape: f32[1,1024], index: 7, kind: input, shape index: {}]
  %s8 = inlined_call_operand.hbm [shape: s8[1024,1024], index: 8, kind: input, shape index: {}]
  %s9 = inlined_call_operand.vmem [shape: f32[1,1024], index: 9, kind: input, shape index: {}]
  %s10 = inlined_call_operand.hbm [shape: f32[1,1024], index: 10, kind: input, shape index: {}]
  %s11 = inlined_call_operand.hbm [shape: f32[16,1024], index: 11, kind: output, shape index: {}]
  %s12 = sld [smem:[#allocation0]]
  $region94: #{_generator_forward_padded.1} parent=0
    _
  %s14 = ssub.s32 1, %s12
  %s15 = scalar_select 0, %s14, %s12
  $region1: #{_generator_forward_padded.1} parent=0
    #allocation4 [shape = 'u8[4096]{0}', space=vmem, size = 0x1000, scoped, tag = 'input window, operand 0, single buffered']
    #allocation5 [shape = 's32[1]{0}', space=sflag, size = 0x4, scoped, tag = 'scoped memory for _generator_forward_padded.1']
    #allocation6 [shape = 's32[1]{0}', space=sflag, size = 0x4, scoped, tag = 'scoped memory for _generator_forward_padded.1']
    #allocation7 [shape = 'u8[65536]{0}', space=vmem, size = 0x10000, scoped, tag = 'input window, operand 1, single buffered']
    #allocation8 [shape = 's32[1]{0}', space=sflag, size = 0x4, scoped, tag = 'scoped memory for _generator_forward_padded.1']
    #allocation9 [shape = 'u8[1024]{0}', space=vmem, size = 0x400, scoped, tag = 'input window, operand 2, single buffered']
    #allocation10 [shape = 'u8[262144]{0}', space=vmem, size = 0x40000, scoped, tag = 'input window, operand 3, single buffered']
    #allocation11 [shape = 's32[1]{0}', space=sflag, size = 0x4, scoped, tag = 'scoped memory for _generator_forward_padded.1']
    #allocation12 [shape = 'u8[2048]{0}', space=vmem, size = 0x800, scoped, tag = 'input window, operand 4, single buffered']
    #allocation13 [shape = 'u8[524288]{0}', space=vmem, size = 0x80000, scoped, tag = 'input window, operand 5, single buffered']
    #allocation14 [shape = 's32[1]{0}', space=sflag, size = 0x4, scoped, tag = 'scoped memory for _generator_forward_padded.1']
    #allocation15 [shape = 'u8[4096]{0}', space=vmem, size = 0x1000, scoped, tag = 'input window, operand 7, single buffered']
    #allocation16 [shape = 'u8[1048576]{0}', space=vmem, size = 0x100000, scoped, tag = 'input window, operand 8, single buffered']
    #allocation17 [shape = 's32[1]{0}', space=sflag, size = 0x4, scoped, tag = 'scoped memory for _generator_forward_padded.1']
    #allocation18 [shape = 'u8[4096]{0}', space=vmem, size = 0x1000, scoped, tag = 'input window, operand 10, single buffered']
    #allocation19 [shape = 'u8[65536]{0}', space=vmem, size = 0x10000, scoped, tag = 'output window, operand 0, single buffered']
    %16 = vsyncpa [#allocation5], 0
    %17 = vsyncpa [#allocation8], 0
    %18 = vsyncpa [#allocation11], 0
    %19 = vsyncpa [#allocation14], 0
    %20 = vsyncpa [#allocation17], 0
    %21 = vsyncpa [#allocation6], 0
    // Predicated region
    $region2: #{_generator_forward_padded.1} parent=1 // pred_check
      _
    $region3: #{_generator_forward_padded.1} parent=1 // pred_check_branch
      %23 = sbr.rel (0) target = $region5
    $region4: #{_generator_forward_padded.1} parent=1 // pred_region
      %s25 = ssub.s32 128, 128
      %26 = vsyncadd [#allocation5], %s25
      %s27 = sshll.u32 [#allocation4], 4
      %s28 = int_to_ptr.vmem [resolvable:$true] %s27
      %33 = dma.hbm_to_vmem [thread:$0]  %s0, 128, %s28, [#allocation5], 64, 64, 4
    $region5: #{_generator_forward_padded.1} parent=1 // pred_fallthru
      _
    // Predicated region
    $region6: #{_generator_forward_padded.1} parent=1 // pred_check
      _
    $region7: #{_generator_forward_padded.1} parent=1 // pred_check_branch
      %35 = sbr.rel (0) target = $region9
    $region8: #{_generator_forward_padded.1} parent=1 // pred_region
      %s37 = ssub.s32 2048, 2048
      %38 = vsyncadd [#allocation8], %s37
      %s39 = sshll.u32 [#allocation7], 4
      %s40 = int_to_ptr.vmem [resolvable:$true] %s39
      %45 = dma.hbm_to_vmem [thread:$0]  %s1, 2048, %s40, [#allocation8], 128, 128, 8
    $region9: #{_generator_forward_padded.1} parent=1 // pred_fallthru
      _
    // Predicated region
    $region10: #{_generator_forward_padded.1} parent=1 // pred_check
      _
    $region11: #{_generator_forward_padded.1} parent=1 // pred_check_branch
      %47 = sbr.rel (0) target = $region13
    $region12: #{_generator_forward_padded.1} parent=1 // pred_region
      %s49 = ssub.s32 32, 32
      %50 = vsyncadd [#allocation8], %s49
      %s52 = sshll.u32 [#allocation9], 4
      %s53 = int_to_ptr.vmem [resolvable:$true] %s52
      %55 = dma.hbm_to_vmem [thread:$0]  %s2, 32, %s53, [#allocation8]
    $region13: #{_generator_forward_padded.1} parent=1 // pred_fallthru
      _
    // Predicated region
    $region14: #{_generator_forward_padded.1} parent=1 // pred_check
      _
    $region15: #{_generator_forward_padded.1} parent=1 // pred_check_branch
      %57 = sbr.rel (0) target = $region17
    $region16: #{_generator_forward_padded.1} parent=1 // pred_region
      %s59 = ssub.s32 8192, 8192
      %60 = vsyncadd [#allocation11], %s59
      %s61 = sshll.u32 [#allocation10], 4
      %s62 = int_to_ptr.vmem [resolvable:$true] %s61
      %67 = dma.hbm_to_vmem [thread:$0]  %s3, 8192, %s62, [#allocation11], 256, 256, 16
    $region17: #{_generator_forward_padded.1} parent=1 // pred_fallthru
      _
    // Predicated region
    $region18: #{_generator_forward_padded.1} parent=1 // pred_check
      _
    $region19: #{_generator_forward_padded.1} parent=1 // pred_check_branch
      %69 = sbr.rel (0) target = $region21
    $region20: #{_generator_forward_padded.1} parent=1 // pred_region
      %s71 = ssub.s32 64, 64
      %72 = vsyncadd [#allocation11], %s71
      %s74 = sshll.u32 [#allocation12], 4
      %s75 = int_to_ptr.vmem [resolvable:$true] %s74
      %77 = dma.hbm_to_vmem [thread:$0]  %s4, 64, %s75, [#allocation11]
    $region21: #{_generator_forward_padded.1} parent=1 // pred_fallthru
      _
    // Predicated region
    $region22: #{_generator_forward_padded.1} parent=1 // pred_check
      _
    $region23: #{_generator_forward_padded.1} parent=1 // pred_check_branch
      %79 = sbr.rel (0) target = $region25
    $region24: #{_generator_forward_padded.1} parent=1 // pred_region
      %s81 = ssub.s32 16384, 16384
      %82 = vsyncadd [#allocation14], %s81
      %s83 = sshll.u32 [#allocation13], 4
      %s84 = int_to_ptr.vmem [resolvable:$true] %s83
      %89 = dma.hbm_to_vmem [thread:$0]  %s5, 16384, %s84, [#allocation14], 1024, 1024, 64
    $region25: #{_generator_forward_padded.1} parent=1 // pred_fallthru
      _
    // Predicated region
    $region26: #{_generator_forward_padded.1} parent=1 // pred_check
      _
    $region27: #{_generator_forward_padded.1} parent=1 // pred_check_branch
      %91 = sbr.rel (0) target = $region29
    $region28: #{_generator_forward_padded.1} parent=1 // pred_region
      _
    $region29: #{_generator_forward_padded.1} parent=1 // pred_fallthru
      _
    // Predicated region
    $region30: #{_generator_forward_padded.1} parent=1 // pred_check
      _
    $region31: #{_generator_forward_padded.1} parent=1 // pred_check_branch
      %93 = sbr.rel (0) target = $region33
    $region32: #{_generator_forward_padded.1} parent=1 // pred_region
      %s95 = ssub.s32 128, 128
      %96 = vsyncadd [#allocation14], %s95
      %s98 = sshll.u32 [#allocation15], 4
      %s99 = int_to_ptr.vmem [resolvable:$true] %s98
      %101 = dma.hbm_to_vmem [thread:$0]  %s7, 128, %s99, [#allocation14]
    $region33: #{_generator_forward_padded.1} parent=1 // pred_fallthru
      _
    // Predicated region
    $region34: #{_generator_forward_padded.1} parent=1 // pred_check
      _
    $region35: #{_generator_forward_padded.1} parent=1 // pred_check_branch
      %103 = sbr.rel (0) target = $region37
    $region36: #{_generator_forward_padded.1} parent=1 // pred_region
      %s105 = ssub.s32 32768, 32768
      %106 = vsyncadd [#allocation17], %s105
      %s107 = sshll.u32 [#allocation16], 4
      %s108 = int_to_ptr.vmem [resolvable:$true] %s107
      %113 = dma.hbm_to_vmem [thread:$0]  %s8, 32768, %s108, [#allocation17], 1024, 1024, 64
    $region37: #{_generator_forward_padded.1} parent=1 // pred_fallthru
      _
    // Predicated region
    $region38: #{_generator_forward_padded.1} parent=1 // pred_check
      _
    $region39: #{_generator_forward_padded.1} parent=1 // pred_check_branch
      %115 = sbr.rel (0) target = $region41
    $region40: #{_generator_forward_padded.1} parent=1 // pred_region
      _
    $region41: #{_generator_forward_padded.1} parent=1 // pred_fallthru
      _
    // Predicated region
    $region42: #{_generator_forward_padded.1} parent=1 // pred_check
      _
    $region43: #{_generator_forward_padded.1} parent=1 // pred_check_branch
      %117 = sbr.rel (0) target = $region45
    $region44: #{_generator_forward_padded.1} parent=1 // pred_region
      %s119 = ssub.s32 128, 128
      %120 = vsyncadd [#allocation17], %s119
      %s122 = sshll.u32 [#allocation18], 4
      %s123 = int_to_ptr.vmem [resolvable:$true] %s122
      %125 = dma.hbm_to_vmem [thread:$0]  %s10, 128, %s123, [#allocation17]
    $region45: #{_generator_forward_padded.1} parent=1 // pred_fallthru
      _
    // Predicated region
    $region46: #{_generator_forward_padded.1} parent=1 // pred_check
      _
    $region47: #{_generator_forward_padded.1} parent=1 // pred_check_branch
      %127 = sbr.rel (0) target = $region49
    $region48: #{_generator_forward_padded.1} parent=1 // pred_region
      %128 = dma.done [#allocation5], 128
    $region49: #{_generator_forward_padded.1} parent=1 // pred_fallthru
      _
    // Predicated region
    $region50: #{_generator_forward_padded.1} parent=1 // pred_check
      _
    $region51: #{_generator_forward_padded.1} parent=1 // pred_check_branch
      %130 = sbr.rel (0) target = $region53
    $region52: #{_generator_forward_padded.1} parent=1 // pred_region
      %131 = dma.done [#allocation8], 2048
    $region53: #{_generator_forward_padded.1} parent=1 // pred_fallthru
      _
    // Predicated region
    $region54: #{_generator_forward_padded.1} parent=1 // pred_check
      _
    $region55: #{_generator_forward_padded.1} parent=1 // pred_check_branch
      %133 = sbr.rel (0) target = $region57
    $region56: #{_generator_forward_padded.1} parent=1 // pred_region
      %134 = dma.done [#allocation8], 32
    $region57: #{_generator_forward_padded.1} parent=1 // pred_fallthru
      _
    // Predicated region
    $region58: #{_generator_forward_padded.1} parent=1 // pred_check
      _
    $region59: #{_generator_forward_padded.1} parent=1 // pred_check_branch
      %136 = sbr.rel (0) target = $region61
    $region60: #{_generator_forward_padded.1} parent=1 // pred_region
      %137 = dma.done [#allocation11], 8192
    $region61: #{_generator_forward_padded.1} parent=1 // pred_fallthru
      _
    // Predicated region
    $region62: #{_generator_forward_padded.1} parent=1 // pred_check
      _
    $region63: #{_generator_forward_padded.1} parent=1 // pred_check_branch
      %139 = sbr.rel (0) target = $region65
    $region64: #{_generator_forward_padded.1} parent=1 // pred_region
      %140 = dma.done [#allocation11], 64
    $region65: #{_generator_forward_padded.1} parent=1 // pred_fallthru
      _
    // Predicated region
    $region66: #{_generator_forward_padded.1} parent=1 // pred_check
      _
    $region67: #{_generator_forward_padded.1} parent=1 // pred_check_branch
      %142 = sbr.rel (0) target = $region69
    $region68: #{_generator_forward_padded.1} parent=1 // pred_region
      %143 = dma.done [#allocation14], 16384
    $region69: #{_generator_forward_padded.1} parent=1 // pred_fallthru
      _
    // Predicated region
    $region70: #{_generator_forward_padded.1} parent=1 // pred_check
      _
    $region71: #{_generator_forward_padded.1} parent=1 // pred_check_branch
      %145 = sbr.rel (0) target = $region73
    $region72: #{_generator_forward_padded.1} parent=1 // pred_region
      %146 = dma.done [#allocation14], 128
    $region73: #{_generator_forward_padded.1} parent=1 // pred_fallthru
      _
    // Predicated region
    $region74: #{_generator_forward_padded.1} parent=1 // pred_check
      _
    $region75: #{_generator_forward_padded.1} parent=1 // pred_check_branch
      %148 = sbr.rel (0) target = $region77
    $region76: #{_generator_forward_padded.1} parent=1 // pred_region
      %149 = dma.done [#allocation17], 32768
    $region77: #{_generator_forward_padded.1} parent=1 // pred_fallthru
      _
    // Predicated region
    $region78: #{_generator_forward_padded.1} parent=1 // pred_check
      _
    $region79: #{_generator_forward_padded.1} parent=1 // pred_check_branch
      %151 = sbr.rel (0) target = $region81
    $region80: #{_generator_forward_padded.1} parent=1 // pred_region
      %152 = dma.done [#allocation17], 128
    $region81: #{_generator_forward_padded.1} parent=1 // pred_fallthru
      _
    %p154 = scmp.eq.s32.totalorder 0, 0
    // Predicated region
    $region82: #{_generator_forward_padded.1} parent=1 // pred_check
      %p155 = pneg %p154
    $region83: #{_generator_forward_padded.1} parent=1 // pred_check_branch
      %157 = sbr.rel (%p155) target = $region85
    $region84: #{_generator_forward_padded.1} parent=1 // pred_region
      %v158 = vld [vmem:[#allocation13] sm:$0xff]
      %v159 = vld [vmem:[#allocation13 + $0x8] sm:$0xff]
      %v160 = vld [vmem:[#allocation13 + $0x10] sm:$0xff]
      %v161 = vld [vmem:[#allocation13 + $0x18] sm:$0xff]
      %v162 = vld [vmem:[#allocation13 + $0x20] sm:$0xff]
      %v163 = vld [vmem:[#allocation13 + $0x28] sm:$0xff]
      %v164 = vld [vmem:[#allocation13 + $0x30] sm:$0xff]
      %v165 = vld [vmem:[#allocation13 + $0x38] sm:$0xff]
      %v166 = vld [vmem:[#allocation13 + $0x40] sm:$0xff]
      %v167 = vld [vmem:[#allocation13 + $0x48] sm:$0xff]
      %v168 = vld [vmem:[#allocation13 + $0x50] sm:$0xff]
      %v169 = vld [vmem:[#allocation13 + $0x58] sm:$0xff]
      %v170 = vld [vmem:[#allocation13 + $0x60] sm:$0xff]
      %v171 = vld [vmem:[#allocation13 + $0x68] sm:$0xff]
      %v172 = vld [vmem:[#allocation13 + $0x70] sm:$0xff]
      %v173 = vld [vmem:[#allocation13 + $0x78] sm:$0xff]
      %v174 = vld [vmem:[#allocation13 + $0x80] sm:$0xff]
      %v175 = vld [vmem:[#allocation13 + $0x88] sm:$0xff]
      %v176 = vld [vmem:[#allocation13 + $0x90] sm:$0xff]
      %v177 = vld [vmem:[#allocation13 + $0x98] sm:$0xff]
      %v178 = vld [vmem:[#allocation13 + $0xa0] sm:$0xff]
      %v179 = vld [vmem:[#allocation13 + $0xa8] sm:$0xff]
      %v180 = vld [vmem:[#allocation13 + $0xb0] sm:$0xff]
      %v181 = vld [vmem:[#allocation13 + $0xb8] sm:$0xff]
      %v182 = vld [vmem:[#allocation13 + $0xc0] sm:$0xff]
      %v183 = vld [vmem:[#allocation13 + $0xc8] sm:$0xff]
      %v184 = vld [vmem:[#allocation13 + $0xd0] sm:$0xff]
      %v185 = vld [vmem:[#allocation13 + $0xd8] sm:$0xff]
      %v186 = vld [vmem:[#allocation13 + $0xe0] sm:$0xff]
      %v187 = vld [vmem:[#allocation13 + $0xe8] sm:$0xff]
      %v188 = vld [vmem:[#allocation13 + $0xf0] sm:$0xff]
      %v189 = vld [vmem:[#allocation13 + $0xf8] sm:$0xff]
      %v190 = vld [vmem:[#allocation13 + $0x100] sm:$0xff]
      %v191 = vld [vmem:[#allocation13 + $0x108] sm:$0xff]
      %v192 = vld [vmem:[#allocation13 + $0x110] sm:$0xff]
      %v193 = vld [vmem:[#allocation13 + $0x118] sm:$0xff]
      %v194 = vld [vmem:[#allocation13 + $0x120] sm:$0xff]
      %v195 = vld [vmem:[#allocation13 + $0x128] sm:$0xff]
      %v196 = vld [vmem:[#allocation13 + $0x130] sm:$0xff]
      %v197 = vld [vmem:[#allocation13 + $0x138] sm:$0xff]
      %v198 = vld [vmem:[#allocation13 + $0x140] sm:$0xff]
      %v199 = vld [vmem:[#allocation13 + $0x148] sm:$0xff]
      %v200 = vld [vmem:[#allocation13 + $0x150] sm:$0xff]
      %v201 = vld [vmem:[#allocation13 + $0x158] sm:$0xff]
      %v202 = vld [vmem:[#allocation13 + $0x160] sm:$0xff]
      %v203 = vld [vmem:[#allocation13 + $0x168] sm:$0xff]
      %v204 = vld [vmem:[#allocation13 + $0x170] sm:$0xff]
      %v205 = vld [vmem:[#allocation13 + $0x178] sm:$0xff]
      %v206 = vld [vmem:[#allocation13 + $0x180] sm:$0xff]
      %v207 = vld [vmem:[#allocation13 + $0x188] sm:$0xff]
      %v208 = vld [vmem:[#allocation13 + $0x190] sm:$0xff]
      %v209 = vld [vmem:[#allocation13 + $0x198] sm:$0xff]
      %v210 = vld [vmem:[#allocation13 + $0x1a0] sm:$0xff]
      %v211 = vld [vmem:[#allocation13 + $0x1a8] sm:$0xff]
      %v212 = vld [vmem:[#allocation13 + $0x1b0] sm:$0xff]
      %v213 = vld [vmem:[#allocation13 + $0x1b8] sm:$0xff]
      %v214 = vld [vmem:[#allocation13 + $0x1c0] sm:$0xff]
      %v215 = vld [vmem:[#allocation13 + $0x1c8] sm:$0xff]
      %v216 = vld [vmem:[#allocation13 + $0x1d0] sm:$0xff]
      %v217 = vld [vmem:[#allocation13 + $0x1d8] sm:$0xff]
      %v218 = vld [vmem:[#allocation13 + $0x1e0] sm:$0xff]
      %v219 = vld [vmem:[#allocation13 + $0x1e8] sm:$0xff]
      %v220 = vld [vmem:[#allocation13 + $0x1f0] sm:$0xff]
      %v221 = vld [vmem:[#allocation13 + $0x1f8] sm:$0xff]
      %v222 = vld [vmem:[#allocation13 + $0x200] sm:$0xff]
      %v223 = vld [vmem:[#allocation13 + $0x208] sm:$0xff]
      %v224 = vld [vmem:[#allocation13 + $0x210] sm:$0xff]
      %v225 = vld [vmem:[#allocation13 + $0x218] sm:$0xff]
      %v226 = vld [vmem:[#allocation13 + $0x220] sm:$0xff]
      %v227 = vld [vmem:[#allocation13 + $0x228] sm:$0xff]
      %v228 = vld [vmem:[#allocation13 + $0x230] sm:$0xff]
      %v229 = vld [vmem:[#allocation13 + $0x238] sm:$0xff]
      %v230 = vld [vmem:[#allocation13 + $0x240] sm:$0xff]
      %v231 = vld [vmem:[#allocation13 + $0x248] sm:$0xff]
      %v232 = vld [vmem:[#allocation13 + $0x250] sm:$0xff]
      %v233 = vld [vmem:[#allocation13 + $0x258] sm:$0xff]
      %v234 = vld [vmem:[#allocation13 + $0x260] sm:$0xff]
      %v235 = vld [vmem:[#allocation13 + $0x268] sm:$0xff]
      %v236 = vld [vmem:[#allocation13 + $0x270] sm:$0xff]
      %v237 = vld [vmem:[#allocation13 + $0x278] sm:$0xff]
      %v238 = vld [vmem:[#allocation13 + $0x280] sm:$0xff]
      %v239 = vld [vmem:[#allocation13 + $0x288] sm:$0xff]
      %v240 = vld [vmem:[#allocation13 + $0x290] sm:$0xff]
      %v241 = vld [vmem:[#allocation13 + $0x298] sm:$0xff]
      %v242 = vld [vmem:[#allocation13 + $0x2a0] sm:$0xff]
      %v243 = vld [vmem:[#allocation13 + $0x2a8] sm:$0xff]
      %v244 = vld [vmem:[#allocation13 + $0x2b0] sm:$0xff]
      %v245 = vld [vmem:[#allocation13 + $0x2b8] sm:$0xff]
      %v246 = vld [vmem:[#allocation13 + $0x2c0] sm:$0xff]
      %v247 = vld [vmem:[#allocation13 + $0x2c8] sm:$0xff]
      %v248 = vld [vmem:[#allocation13 + $0x2d0] sm:$0xff]
      %v249 = vld [vmem:[#allocation13 + $0x2d8] sm:$0xff]
      %v250 = vld [vmem:[#allocation13 + $0x2e0] sm:$0xff]
      %v251 = vld [vmem:[#allocation13 + $0x2e8] sm:$0xff]
      %v252 = vld [vmem:[#allocation13 + $0x2f0] sm:$0xff]
      %v253 = vld [vmem:[#allocation13 + $0x2f8] sm:$0xff]
      %v254 = vld [vmem:[#allocation13 + $0x300] sm:$0xff]
      %v255 = vld [vmem:[#allocation13 + $0x308] sm:$0xff]
      %v256 = vld [vmem:[#allocation13 + $0x310] sm:$0xff]
      %v257 = vld [vmem:[#allocation13 + $0x318] sm:$0xff]
      %v258 = vld [vmem:[#allocation13 + $0x320] sm:$0xff]
      %v259 = vld [vmem:[#allocation13 + $0x328] sm:$0xff]
      %v260 = vld [vmem:[#allocation13 + $0x330] sm:$0xff]
      %v261 = vld [vmem:[#allocation13 + $0x338] sm:$0xff]
      %v262 = vld [vmem:[#allocation13 + $0x340] sm:$0xff]
      %v263 = vld [vmem:[#allocation13 + $0x348] sm:$0xff]
      %v264 = vld [vmem:[#allocation13 + $0x350] sm:$0xff]
      %v265 = vld [vmem:[#allocation13 + $0x358] sm:$0xff]
      %v266 = vld [vmem:[#allocation13 + $0x360] sm:$0xff]
      %v267 = vld [vmem:[#allocation13 + $0x368] sm:$0xff]
      %v268 = vld [vmem:[#allocation13 + $0x370] sm:$0xff]
      %v269 = vld [vmem:[#allocation13 + $0x378] sm:$0xff]
      %v270 = vld [vmem:[#allocation13 + $0x380] sm:$0xff]
      %v271 = vld [vmem:[#allocation13 + $0x388] sm:$0xff]
      %v272 = vld [vmem:[#allocation13 + $0x390] sm:$0xff]
      %v273 = vld [vmem:[#allocation13 + $0x398] sm:$0xff]
      %v274 = vld [vmem:[#allocation13 + $0x3a0] sm:$0xff]
      %v275 = vld [vmem:[#allocation13 + $0x3a8] sm:$0xff]
      %v276 = vld [vmem:[#allocation13 + $0x3b0] sm:$0xff]
      %v277 = vld [vmem:[#allocation13 + $0x3b8] sm:$0xff]
      %v278 = vld [vmem:[#allocation13 + $0x3c0] sm:$0xff]
      %v279 = vld [vmem:[#allocation13 + $0x3c8] sm:$0xff]
      %v280 = vld [vmem:[#allocation13 + $0x3d0] sm:$0xff]
      %v281 = vld [vmem:[#allocation13 + $0x3d8] sm:$0xff]
      %v282 = vld [vmem:[#allocation13 + $0x3e0] sm:$0xff]
      %v283 = vld [vmem:[#allocation13 + $0x3e8] sm:$0xff]
      %v284 = vld [vmem:[#allocation13 + $0x3f0] sm:$0xff]
      %v285 = vld [vmem:[#allocation13 + $0x3f8] sm:$0xff]
      %v286 = vunpack.c.l.s8.bf16 %v158
      %v287 = vunpack.c.l.s8.bf16 %v159
      %v288 = vunpack.c.l.s8.bf16 %v160
      %v289 = vunpack.c.l.s8.bf16 %v161
      %v290 = vunpack.c.l.s8.bf16 %v162
      %v291 = vunpack.c.l.s8.bf16 %v163
      %v292 = vunpack.c.l.s8.bf16 %v164
      %v293 = vunpack.c.l.s8.bf16 %v165
      %v294 = vunpack.c.h.s8.bf16 %v158
      %v295 = vunpack.c.h.s8.bf16 %v159
      %v296 = vunpack.c.h.s8.bf16 %v160
      %v297 = vunpack.c.h.s8.bf16 %v161
      %v298 = vunpack.c.h.s8.bf16 %v162
      %v299 = vunpack.c.h.s8.bf16 %v163
      %v300 = vunpack.c.h.s8.bf16 %v164
      %v301 = vunpack.c.h.s8.bf16 %v165
      %v302 = vunpack.c.l.s8.bf16 %v166
      %v303 = vunpack.c.l.s8.bf16 %v167
      %v304 = vunpack.c.l.s8.bf16 %v168
      %v305 = vunpack.c.l.s8.bf16 %v169
      %v306 = vunpack.c.l.s8.bf16 %v170
      %v307 = vunpack.c.l.s8.bf16 %v171
      %v308 = vunpack.c.l.s8.bf16 %v172
      %v309 = vunpack.c.l.s8.bf16 %v173
      %v310 = vunpack.c.h.s8.bf16 %v166
      %v311 = vunpack.c.h.s8.bf16 %v167
      %v312 = vunpack.c.h.s8.bf16 %v168
      %v313 = vunpack.c.h.s8.bf16 %v169
      %v314 = vunpack.c.h.s8.bf16 %v170
      %v315 = vunpack.c.h.s8.bf16 %v171
      %v316 = vunpack.c.h.s8.bf16 %v172
      %v317 = vunpack.c.h.s8.bf16 %v173
      %v318 = vunpack.c.l.s8.bf16 %v174
      %v319 = vunpack.c.l.s8.bf16 %v175
      %v320 = vunpack.c.l.s8.bf16 %v176
      %v321 = vunpack.c.l.s8.bf16 %v177
      %v322 = vunpack.c.l.s8.bf16 %v178
      %v323 = vunpack.c.l.s8.bf16 %v179
      %v324 = vunpack.c.l.s8.bf16 %v180
      %v325 = vunpack.c.l.s8.bf16 %v181
      %v326 = vunpack.c.h.s8.bf16 %v174
      %v327 = vunpack.c.h.s8.bf16 %v175
      %v328 = vunpack.c.h.s8.bf16 %v176
      %v329 = vunpack.c.h.s8.bf16 %v177
      %v330 = vunpack.c.h.s8.bf16 %v178
      %v331 = vunpack.c.h.s8.bf16 %v179
      %v332 = vunpack.c.h.s8.bf16 %v180
      %v333 = vunpack.c.h.s8.bf16 %v181
      %v334 = vunpack.c.l.s8.bf16 %v182
      %v335 = vunpack.c.l.s8.bf16 %v183
      %v336 = vunpack.c.l.s8.bf16 %v184
      %v337 = vunpack.c.l.s8.bf16 %v185
      %v338 = vunpack.c.l.s8.bf16 %v186
      %v339 = vunpack.c.l.s8.bf16 %v187
      %v340 = vunpack.c.l.s8.bf16 %v188
      %v341 = vunpack.c.l.s8.bf16 %v189
      %v342 = vunpack.c.h.s8.bf16 %v182
      %v343 = vunpack.c.h.s8.bf16 %v183
      %v344 = vunpack.c.h.s8.bf16 %v184
      %v345 = vunpack.c.h.s8.bf16 %v185
      %v346 = vunpack.c.h.s8.bf16 %v186
      %v347 = vunpack.c.h.s8.bf16 %v187
      %v348 = vunpack.c.h.s8.bf16 %v188
      %v349 = vunpack.c.h.s8.bf16 %v189
      %v350 = vunpack.c.l.s8.bf16 %v190
      %v351 = vunpack.c.l.s8.bf16 %v191
      %v352 = vunpack.c.l.s8.bf16 %v192
      %v353 = vunpack.c.l.s8.bf16 %v193
      %v354 = vunpack.c.l.s8.bf16 %v194
      %v355 = vunpack.c.l.s8.bf16 %v195
      %v356 = vunpack.c.l.s8.bf16 %v196
      %v357 = vunpack.c.l.s8.bf16 %v197
      %v358 = vunpack.c.h.s8.bf16 %v190
      %v359 = vunpack.c.h.s8.bf16 %v191
      %v360 = vunpack.c.h.s8.bf16 %v192
      %v361 = vunpack.c.h.s8.bf16 %v193
      %v362 = vunpack.c.h.s8.bf16 %v194
      %v363 = vunpack.c.h.s8.bf16 %v195
      %v364 = vunpack.c.h.s8.bf16 %v196
      %v365 = vunpack.c.h.s8.bf16 %v197
      %v366 = vunpack.c.l.s8.bf16 %v198
      %v367 = vunpack.c.l.s8.bf16 %v199
      %v368 = vunpack.c.l.s8.bf16 %v200
      %v369 = vunpack.c.l.s8.bf16 %v201
      %v370 = vunpack.c.l.s8.bf16 %v202
      %v371 = vunpack.c.l.s8.bf16 %v203
      %v372 = vunpack.c.l.s8.bf16 %v204
      %v373 = vunpack.c.l.s8.bf16 %v205
      %v374 = vunpack.c.h.s8.bf16 %v198
      %v375 = vunpack.c.h.s8.bf16 %v199
      %v376 = vunpack.c.h.s8.bf16 %v200
      %v377 = vunpack.c.h.s8.bf16 %v201
      %v378 = vunpack.c.h.s8.bf16 %v202
      %v379 = vunpack.c.h.s8.bf16 %v203
      %v380 = vunpack.c.h.s8.bf16 %v204
      %v381 = vunpack.c.h.s8.bf16 %v205
      %v382 = vunpack.c.l.s8.bf16 %v206
      %v383 = vunpack.c.l.s8.bf16 %v207
      %v384 = vunpack.c.l.s8.bf16 %v208
      %v385 = vunpack.c.l.s8.bf16 %v209
      %v386 = vunpack.c.l.s8.bf16 %v210
      %v387 = vunpack.c.l.s8.bf16 %v211
      %v388 = vunpack.c.l.s8.bf16 %v212
      %v389 = vunpack.c.l.s8.bf16 %v213
      %v390 = vunpack.c.h.s8.bf16 %v206
      %v391 = vunpack.c.h.s8.bf16 %v207
      %v392 = vunpack.c.h.s8.bf16 %v208
      %v393 = vunpack.c.h.s8.bf16 %v209
      %v394 = vunpack.c.h.s8.bf16 %v210
      %v395 = vunpack.c.h.s8.bf16 %v211
      %v396 = vunpack.c.h.s8.bf16 %v212
      %v397 = vunpack.c.h.s8.bf16 %v213
      %v398 = vunpack.c.l.s8.bf16 %v214
      %v399 = vunpack.c.l.s8.bf16 %v215
      %v400 = vunpack.c.l.s8.bf16 %v216
      %v401 = vunpack.c.l.s8.bf16 %v217
      %v402 = vunpack.c.l.s8.bf16 %v218
      %v403 = vunpack.c.l.s8.bf16 %v219
      %v404 = vunpack.c.l.s8.bf16 %v220
      %v405 = vunpack.c.l.s8.bf16 %v221
      %v406 = vunpack.c.h.s8.bf16 %v214
      %v407 = vunpack.c.h.s8.bf16 %v215
      %v408 = vunpack.c.h.s8.bf16 %v216
      %v409 = vunpack.c.h.s8.bf16 %v217
      %v410 = vunpack.c.h.s8.bf16 %v218
      %v411 = vunpack.c.h.s8.bf16 %v219
      %v412 = vunpack.c.h.s8.bf16 %v220
      %v413 = vunpack.c.h.s8.bf16 %v221
      %v414 = vunpack.c.l.s8.bf16 %v222
      %v415 = vunpack.c.l.s8.bf16 %v223
      %v416 = vunpack.c.l.s8.bf16 %v224
      %v417 = vunpack.c.l.s8.bf16 %v225
      %v418 = vunpack.c.l.s8.bf16 %v226
      %v419 = vunpack.c.l.s8.bf16 %v227
      %v420 = vunpack.c.l.s8.bf16 %v228
      %v421 = vunpack.c.l.s8.bf16 %v229
      %v422 = vunpack.c.h.s8.bf16 %v222
      %v423 = vunpack.c.h.s8.bf16 %v223
      %v424 = vunpack.c.h.s8.bf16 %v224
      %v425 = vunpack.c.h.s8.bf16 %v225
      %v426 = vunpack.c.h.s8.bf16 %v226
      %v427 = vunpack.c.h.s8.bf16 %v227
      %v428 = vunpack.c.h.s8.bf16 %v228
      %v429 = vunpack.c.h.s8.bf16 %v229
      %v430 = vunpack.c.l.s8.bf16 %v230
      %v431 = vunpack.c.l.s8.bf16 %v231
      %v432 = vunpack.c.l.s8.bf16 %v232
      %v433 = vunpack.c.l.s8.bf16 %v233
      %v434 = vunpack.c.l.s8.bf16 %v234
      %v435 = vunpack.c.l.s8.bf16 %v235
      %v436 = vunpack.c.l.s8.bf16 %v236
      %v437 = vunpack.c.l.s8.bf16 %v237
      %v438 = vunpack.c.h.s8.bf16 %v230
      %v439 = vunpack.c.h.s8.bf16 %v231
      %v440 = vunpack.c.h.s8.bf16 %v232
      %v441 = vunpack.c.h.s8.bf16 %v233
      %v442 = vunpack.c.h.s8.bf16 %v234
      %v443 = vunpack.c.h.s8.bf16 %v235
      %v444 = vunpack.c.h.s8.bf16 %v236
      %v445 = vunpack.c.h.s8.bf16 %v237
      %v446 = vunpack.c.l.s8.bf16 %v238
      %v447 = vunpack.c.l.s8.bf16 %v239
      %v448 = vunpack.c.l.s8.bf16 %v240
      %v449 = vunpack.c.l.s8.bf16 %v241
      %v450 = vunpack.c.l.s8.bf16 %v242
      %v451 = vunpack.c.l.s8.bf16 %v243
      %v452 = vunpack.c.l.s8.bf16 %v244
      %v453 = vunpack.c.l.s8.bf16 %v245
      %v454 = vunpack.c.h.s8.bf16 %v238
      %v455 = vunpack.c.h.s8.bf16 %v239
      %v456 = vunpack.c.h.s8.bf16 %v240
      %v457 = vunpack.c.h.s8.bf16 %v241
      %v458 = vunpack.c.h.s8.bf16 %v242
      %v459 = vunpack.c.h.s8.bf16 %v243
      %v460 = vunpack.c.h.s8.bf16 %v244
      %v461 = vunpack.c.h.s8.bf16 %v245
      %v462 = vunpack.c.l.s8.bf16 %v246
      %v463 = vunpack.c.l.s8.bf16 %v247
      %v464 = vunpack.c.l.s8.bf16 %v248
      %v465 = vunpack.c.l.s8.bf16 %v249
      %v466 = vunpack.c.l.s8.bf16 %v250
      %v467 = vunpack.c.l.s8.bf16 %v251
      %v468 = vunpack.c.l.s8.bf16 %v252
      %v469 = vunpack.c.l.s8.bf16 %v253
      %v470 = vunpack.c.h.s8.bf16 %v246
      %v471 = vunpack.c.h.s8.bf16 %v247
      %v472 = vunpack.c.h.s8.bf16 %v248
      %v473 = vunpack.c.h.s8.bf16 %v249
      %v474 = vunpack.c.h.s8.bf16 %v250
      %v475 = vunpack.c.h.s8.bf16 %v251
      %v476 = vunpack.c.h.s8.bf16 %v252
      %v477 = vunpack.c.h.s8.bf16 %v253
      %v478 = vunpack.c.l.s8.bf16 %v254
      %v479 = vunpack.c.l.s8.bf16 %v255
      %v480 = vunpack.c.l.s8.bf16 %v256
      %v481 = vunpack.c.l.s8.bf16 %v257
      %v482 = vunpack.c.l.s8.bf16 %v258
      %v483 = vunpack.c.l.s8.bf16 %v259
      %v484 = vunpack.c.l.s8.bf16 %v260
      %v485 = vunpack.c.l.s8.bf16 %v261
      %v486 = vunpack.c.h.s8.bf16 %v254
      %v487 = vunpack.c.h.s8.bf16 %v255
      %v488 = vunpack.c.h.s8.bf16 %v256
      %v489 = vunpack.c.h.s8.bf16 %v257
      %v490 = vunpack.c.h.s8.bf16 %v258
      %v491 = vunpack.c.h.s8.bf16 %v259
      %v492 = vunpack.c.h.s8.bf16 %v260
      %v493 = vunpack.c.h.s8.bf16 %v261
      %v494 = vunpack.c.l.s8.bf16 %v262
      %v495 = vunpack.c.l.s8.bf16 %v263
      %v496 = vunpack.c.l.s8.bf16 %v264
      %v497 = vunpack.c.l.s8.bf16 %v265
      %v498 = vunpack.c.l.s8.bf16 %v266
      %v499 = vunpack.c.l.s8.bf16 %v267
      %v500 = vunpack.c.l.s8.bf16 %v268
      %v501 = vunpack.c.l.s8.bf16 %v269
      %v502 = vunpack.c.h.s8.bf16 %v262
      %v503 = vunpack.c.h.s8.bf16 %v263
      %v504 = vunpack.c.h.s8.bf16 %v264
      %v505 = vunpack.c.h.s8.bf16 %v265
      %v506 = vunpack.c.h.s8.bf16 %v266
      %v507 = vunpack.c.h.s8.bf16 %v267
      %v508 = vunpack.c.h.s8.bf16 %v268
      %v509 = vunpack.c.h.s8.bf16 %v269
      %v510 = vunpack.c.l.s8.bf16 %v270
      %v511 = vunpack.c.l.s8.bf16 %v271
      %v512 = vunpack.c.l.s8.bf16 %v272
      %v513 = vunpack.c.l.s8.bf16 %v273
      %v514 = vunpack.c.l.s8.bf16 %v274
      %v515 = vunpack.c.l.s8.bf16 %v275
      %v516 = vunpack.c.l.s8.bf16 %v276
      %v517 = vunpack.c.l.s8.bf16 %v277
      %v518 = vunpack.c.h.s8.bf16 %v270
      %v519 = vunpack.c.h.s8.bf16 %v271
      %v520 = vunpack.c.h.s8.bf16 %v272
      %v521 = vunpack.c.h.s8.bf16 %v273
      %v522 = vunpack.c.h.s8.bf16 %v274
      %v523 = vunpack.c.h.s8.bf16 %v275
      %v524 = vunpack.c.h.s8.bf16 %v276
      %v525 = vunpack.c.h.s8.bf16 %v277
      %v526 = vunpack.c.l.s8.bf16 %v278
      %v527 = vunpack.c.l.s8.bf16 %v279
      %v528 = vunpack.c.l.s8.bf16 %v280
      %v529 = vunpack.c.l.s8.bf16 %v281
      %v530 = vunpack.c.l.s8.bf16 %v282
      %v531 = vunpack.c.l.s8.bf16 %v283
      %v532 = vunpack.c.l.s8.bf16 %v284
      %v533 = vunpack.c.l.s8.bf16 %v285
      %v534 = vunpack.c.h.s8.bf16 %v278
      %v535 = vunpack.c.h.s8.bf16 %v279
      %v536 = vunpack.c.h.s8.bf16 %v280
      %v537 = vunpack.c.h.s8.bf16 %v281
      %v538 = vunpack.c.h.s8.bf16 %v282
      %v539 = vunpack.c.h.s8.bf16 %v283
      %v540 = vunpack.c.h.s8.bf16 %v284
      %v541 = vunpack.c.h.s8.bf16 %v285
      %v798 = vunpack.c.l.b16 %v286
      %v799 = vunpack.c.l.b16 %v287
      %v800 = vunpack.c.l.b16 %v288
      %v801 = vunpack.c.l.b16 %v289
      %v802 = vunpack.c.l.b16 %v290
      %v803 = vunpack.c.l.b16 %v291
      %v804 = vunpack.c.l.b16 %v292
      %v805 = vunpack.c.l.b16 %v293
      %v806 = vunpack.c.h.b16 %v286
      %v807 = vunpack.c.h.b16 %v287
      %v808 = vunpack.c.h.b16 %v288
      %v809 = vunpack.c.h.b16 %v289
      %v810 = vunpack.c.h.b16 %v290
      %v811 = vunpack.c.h.b16 %v291
      %v812 = vunpack.c.h.b16 %v292
      %v813 = vunpack.c.h.b16 %v293
      %v814 = vunpack.c.l.b16 %v294
      %v815 = vunpack.c.l.b16 %v295
      %v816 = vunpack.c.l.b16 %v296
      %v817 = vunpack.c.l.b16 %v297
      %v818 = vunpack.c.l.b16 %v298
      %v819 = vunpack.c.l.b16 %v299
      %v820 = vunpack.c.l.b16 %v300
      %v821 = vunpack.c.l.b16 %v301
      %v822 = vunpack.c.h.b16 %v294
      %v823 = vunpack.c.h.b16 %v295
      %v824 = vunpack.c.h.b16 %v296
      %v825 = vunpack.c.h.b16 %v297
      %v826 = vunpack.c.h.b16 %v298
      %v827 = vunpack.c.h.b16 %v299
      %v828 = vunpack.c.h.b16 %v300
      %v829 = vunpack.c.h.b16 %v301
      %v830 = vunpack.c.l.b16 %v302
      %v831 = vunpack.c.l.b16 %v303
      %v832 = vunpack.c.l.b16 %v304
      %v833 = vunpack.c.l.b16 %v305
      %v834 = vunpack.c.l.b16 %v306
      %v835 = vunpack.c.l.b16 %v307
      %v836 = vunpack.c.l.b16 %v308
      %v837 = vunpack.c.l.b16 %v309
      %v838 = vunpack.c.h.b16 %v302
      %v839 = vunpack.c.h.b16 %v303
      %v840 = vunpack.c.h.b16 %v304
      %v841 = vunpack.c.h.b16 %v305
      %v842 = vunpack.c.h.b16 %v306
      %v843 = vunpack.c.h.b16 %v307
      %v844 = vunpack.c.h.b16 %v308
      %v845 = vunpack.c.h.b16 %v309
      %v846 = vunpack.c.l.b16 %v310
      %v847 = vunpack.c.l.b16 %v311
      %v848 = vunpack.c.l.b16 %v312
      %v849 = vunpack.c.l.b16 %v313
      %v850 = vunpack.c.l.b16 %v314
      %v851 = vunpack.c.l.b16 %v315
      %v852 = vunpack.c.l.b16 %v316
      %v853 = vunpack.c.l.b16 %v317
      %v854 = vunpack.c.h.b16 %v310
      %v855 = vunpack.c.h.b16 %v311
      %v856 = vunpack.c.h.b16 %v312
      %v857 = vunpack.c.h.b16 %v313
      %v858 = vunpack.c.h.b16 %v314
      %v859 = vunpack.c.h.b16 %v315
      %v860 = vunpack.c.h.b16 %v316
      %v861 = vunpack.c.h.b16 %v317
      %v862 = vunpack.c.l.b16 %v318
      %v863 = vunpack.c.l.b16 %v319
      %v864 = vunpack.c.l.b16 %v320
      %v865 = vunpack.c.l.b16 %v321
      %v866 = vunpack.c.l.b16 %v322
      %v867 = vunpack.c.l.b16 %v323
      %v868 = vunpack.c.l.b16 %v324
      %v869 = vunpack.c.l.b16 %v325
      %v870 = vunpack.c.h.b16 %v318
      %v871 = vunpack.c.h.b16 %v319
      %v872 = vunpack.c.h.b16 %v320
      %v873 = vunpack.c.h.b16 %v321
      %v874 = vunpack.c.h.b16 %v322
      %v875 = vunpack.c.h.b16 %v323
      %v876 = vunpack.c.h.b16 %v324
      %v877 = vunpack.c.h.b16 %v325
      %v878 = vunpack.c.l.b16 %v326
      %v879 = vunpack.c.l.b16 %v327
      %v880 = vunpack.c.l.b16 %v328
      %v881 = vunpack.c.l.b16 %v329
      %v882 = vunpack.c.l.b16 %v330
      %v883 = vunpack.c.l.b16 %v331
      %v884 = vunpack.c.l.b16 %v332
      %v885 = vunpack.c.l.b16 %v333
      %v886 = vunpack.c.h.b16 %v326
      %v887 = vunpack.c.h.b16 %v327
      %v888 = vunpack.c.h.b16 %v328
      %v889 = vunpack.c.h.b16 %v329
      %v890 = vunpack.c.h.b16 %v330
      %v891 = vunpack.c.h.b16 %v331
      %v892 = vunpack.c.h.b16 %v332
      %v893 = vunpack.c.h.b16 %v333
      %v894 = vunpack.c.l.b16 %v334
      %v895 = vunpack.c.l.b16 %v335
      %v896 = vunpack.c.l.b16 %v336
      %v897 = vunpack.c.l.b16 %v337
      %v898 = vunpack.c.l.b16 %v338
      %v899 = vunpack.c.l.b16 %v339
      %v900 = vunpack.c.l.b16 %v340
      %v901 = vunpack.c.l.b16 %v341
      %v902 = vunpack.c.h.b16 %v334
      %v903 = vunpack.c.h.b16 %v335
      %v904 = vunpack.c.h.b16 %v336
      %v905 = vunpack.c.h.b16 %v337
      %v906 = vunpack.c.h.b16 %v338
      %v907 = vunpack.c.h.b16 %v339
      %v908 = vunpack.c.h.b16 %v340
      %v909 = vunpack.c.h.b16 %v341
      %v910 = vunpack.c.l.b16 %v342
      %v911 = vunpack.c.l.b16 %v343
      %v912 = vunpack.c.l.b16 %v344
      %v913 = vunpack.c.l.b16 %v345
      %v914 = vunpack.c.l.b16 %v346
      %v915 = vunpack.c.l.b16 %v347
      %v916 = vunpack.c.l.b16 %v348
      %v917 = vunpack.c.l.b16 %v349
      %v918 = vunpack.c.h.b16 %v342
      %v919 = vunpack.c.h.b16 %v343
      %v920 = vunpack.c.h.b16 %v344
      %v921 = vunpack.c.h.b16 %v345
      %v922 = vunpack.c.h.b16 %v346
      %v923 = vunpack.c.h.b16 %v347
      %v924 = vunpack.c.h.b16 %v348
      %v925 = vunpack.c.h.b16 %v349
      %v926 = vunpack.c.l.b16 %v350
      %v927 = vunpack.c.l.b16 %v351
      %v928 = vunpack.c.l.b16 %v352
      %v929 = vunpack.c.l.b16 %v353
      %v930 = vunpack.c.l.b16 %v354
      %v931 = vunpack.c.l.b16 %v355
      %v932 = vunpack.c.l.b16 %v356
      %v933 = vunpack.c.l.b16 %v357
      %v934 = vunpack.c.h.b16 %v350
      %v935 = vunpack.c.h.b16 %v351
      %v936 = vunpack.c.h.b16 %v352
      %v937 = vunpack.c.h.b16 %v353
      %v938 = vunpack.c.h.b16 %v354
      %v939 = vunpack.c.h.b16 %v355
      %v940 = vunpack.c.h.b16 %v356
      %v941 = vunpack.c.h.b16 %v357
      %v942 = vunpack.c.l.b16 %v358
      %v943 = vunpack.c.l.b16 %v359
      %v944 = vunpack.c.l.b16 %v360
      %v945 = vunpack.c.l.b16 %v361
      %v946 = vunpack.c.l.b16 %v362
      %v947 = vunpack.c.l.b16 %v363
      %v948 = vunpack.c.l.b16 %v364
      %v949 = vunpack.c.l.b16 %v365
      %v950 = vunpack.c.h.b16 %v358
      %v951 = vunpack.c.h.b16 %v359
      %v952 = vunpack.c.h.b16 %v360
      %v953 = vunpack.c.h.b16 %v361
      %v954 = vunpack.c.h.b16 %v362
      %v955 = vunpack.c.h.b16 %v363
      %v956 = vunpack.c.h.b16 %v364
      %v957 = vunpack.c.h.b16 %v365
      %v958 = vunpack.c.l.b16 %v366
      %v959 = vunpack.c.l.b16 %v367
      %v960 = vunpack.c.l.b16 %v368
      %v961 = vunpack.c.l.b16 %v369
      %v962 = vunpack.c.l.b16 %v370
      %v963 = vunpack.c.l.b16 %v371
      %v964 = vunpack.c.l.b16 %v372
      %v965 = vunpack.c.l.b16 %v373
      %v966 = vunpack.c.h.b16 %v366
      %v967 = vunpack.c.h.b16 %v367
      %v968 = vunpack.c.h.b16 %v368
      %v969 = vunpack.c.h.b16 %v369
      %v970 = vunpack.c.h.b16 %v370
      %v971 = vunpack.c.h.b16 %v371
      %v972 = vunpack.c.h.b16 %v372
      %v973 = vunpack.c.h.b16 %v373
      %v974 = vunpack.c.l.b16 %v374
      %v975 = vunpack.c.l.b16 %v375
      %v976 = vunpack.c.l.b16 %v376
      %v977 = vunpack.c.l.b16 %v377
      %v978 = vunpack.c.l.b16 %v378
      %v979 = vunpack.c.l.b16 %v379
      %v980 = vunpack.c.l.b16 %v380
      %v981 = vunpack.c.l.b16 %v381
      %v982 = vunpack.c.h.b16 %v374
      %v983 = vunpack.c.h.b16 %v375
      %v984 = vunpack.c.h.b16 %v376
      %v985 = vunpack.c.h.b16 %v377
      %v986 = vunpack.c.h.b16 %v378
      %v987 = vunpack.c.h.b16 %v379
      %v988 = vunpack.c.h.b16 %v380
      %v989 = vunpack.c.h.b16 %v381
      %v990 = vunpack.c.l.b16 %v382
      %v991 = vunpack.c.l.b16 %v383
      %v992 = vunpack.c.l.b16 %v384
      %v993 = vunpack.c.l.b16 %v385
      %v994 = vunpack.c.l.b16 %v386
      %v995 = vunpack.c.l.b16 %v387
      %v996 = vunpack.c.l.b16 %v388
      %v997 = vunpack.c.l.b16 %v389
      %v998 = vunpack.c.h.b16 %v382
      %v999 = vunpack.c.h.b16 %v383
      %v1000 = vunpack.c.h.b16 %v384
      %v1001 = vunpack.c.h.b16 %v385
      %v1002 = vunpack.c.h.b16 %v386
      %v1003 = vunpack.c.h.b16 %v387
      %v1004 = vunpack.c.h.b16 %v388
      %v1005 = vunpack.c.h.b16 %v389
      %v1006 = vunpack.c.l.b16 %v390
      %v1007 = vunpack.c.l.b16 %v391
      %v1008 = vunpack.c.l.b16 %v392
      %v1009 = vunpack.c.l.b16 %v393
      %v1010 = vunpack.c.l.b16 %v394
      %v1011 = vunpack.c.l.b16 %v395
      %v1012 = vunpack.c.l.b16 %v396
      %v1013 = vunpack.c.l.b16 %v397
      %v1014 = vunpack.c.h.b16 %v390
      %v1015 = vunpack.c.h.b16 %v391
      %v1016 = vunpack.c.h.b16 %v392
      %v1017 = vunpack.c.h.b16 %v393
      %v1018 = vunpack.c.h.b16 %v394
      %v1019 = vunpack.c.h.b16 %v395
      %v1020 = vunpack.c.h.b16 %v396
      %v1021 = vunpack.c.h.b16 %v397
      %v1022 = vunpack.c.l.b16 %v398
      %v1023 = vunpack.c.l.b16 %v399
      %v1024 = vunpack.c.l.b16 %v400
      %v1025 = vunpack.c.l.b16 %v401
      %v1026 = vunpack.c.l.b16 %v402
      %v1027 = vunpack.c.l.b16 %v403
      %v1028 = vunpack.c.l.b16 %v404
      %v1029 = vunpack.c.l.b16 %v405
      %v1030 = vunpack.c.h.b16 %v398
      %v1031 = vunpack.c.h.b16 %v399
      %v1032 = vunpack.c.h.b16 %v400
      %v1033 = vunpack.c.h.b16 %v401
      %v1034 = vunpack.c.h.b16 %v402
      %v1035 = vunpack.c.h.b16 %v403
      %v1036 = vunpack.c.h.b16 %v404
      %v1037 = vunpack.c.h.b16 %v405
      %v1038 = vunpack.c.l.b16 %v406
      %v1039 = vunpack.c.l.b16 %v407
      %v1040 = vunpack.c.l.b16 %v408
      %v1041 = vunpack.c.l.b16 %v409
      %v1042 = vunpack.c.l.b16 %v410
      %v1043 = vunpack.c.l.b16 %v411
      %v1044 = vunpack.c.l.b16 %v412
      %v1045 = vunpack.c.l.b16 %v413
      %v1046 = vunpack.c.h.b16 %v406
      %v1047 = vunpack.c.h.b16 %v407
      %v1048 = vunpack.c.h.b16 %v408
      %v1049 = vunpack.c.h.b16 %v409
      %v1050 = vunpack.c.h.b16 %v410
      %v1051 = vunpack.c.h.b16 %v411
      %v1052 = vunpack.c.h.b16 %v412
      %v1053 = vunpack.c.h.b16 %v413
      %v1054 = vunpack.c.l.b16 %v414
      %v1055 = vunpack.c.l.b16 %v415
      %v1056 = vunpack.c.l.b16 %v416
      %v1057 = vunpack.c.l.b16 %v417
      %v1058 = vunpack.c.l.b16 %v418
      %v1059 = vunpack.c.l.b16 %v419
      %v1060 = vunpack.c.l.b16 %v420
      %v1061 = vunpack.c.l.b16 %v421
      %v1062 = vunpack.c.h.b16 %v414
      %v1063 = vunpack.c.h.b16 %v415
      %v1064 = vunpack.c.h.b16 %v416
      %v1065 = vunpack.c.h.b16 %v417
      %v1066 = vunpack.c.h.b16 %v418
      %v1067 = vunpack.c.h.b16 %v419
      %v1068 = vunpack.c.h.b16 %v420
      %v1069 = vunpack.c.h.b16 %v421
      %v1070 = vunpack.c.l.b16 %v422
      %v1071 = vunpack.c.l.b16 %v423
      %v1072 = vunpack.c.l.b16 %v424
      %v1073 = vunpack.c.l.b16 %v425
      %v1074 = vunpack.c.l.b16 %v426
      %v1075 = vunpack.c.l.b16 %v427
      %v1076 = vunpack.c.l.b16 %v428
      %v1077 = vunpack.c.l.b16 %v429
      %v1078 = vunpack.c.h.b16 %v422
      %v1079 = vunpack.c.h.b16 %v423
      %v1080 = vunpack.c.h.b16 %v424
      %v1081 = vunpack.c.h.b16 %v425
      %v1082 = vunpack.c.h.b16 %v426
      %v1083 = vunpack.c.h.b16 %v427
      %v1084 = vunpack.c.h.b16 %v428
      %v1085 = vunpack.c.h.b16 %v429
      %v1086 = vunpack.c.l.b16 %v430
      %v1087 = vunpack.c.l.b16 %v431
      %v1088 = vunpack.c.l.b16 %v432
      %v1089 = vunpack.c.l.b16 %v433
      %v1090 = vunpack.c.l.b16 %v434
      %v1091 = vunpack.c.l.b16 %v435
      %v1092 = vunpack.c.l.b16 %v436
      %v1093 = vunpack.c.l.b16 %v437
      %v1094 = vunpack.c.h.b16 %v430
      %v1095 = vunpack.c.h.b16 %v431
      %v1096 = vunpack.c.h.b16 %v432
      %v1097 = vunpack.c.h.b16 %v433
      %v1098 = vunpack.c.h.b16 %v434
      %v1099 = vunpack.c.h.b16 %v435
      %v1100 = vunpack.c.h.b16 %v436
      %v1101 = vunpack.c.h.b16 %v437
      %v1102 = vunpack.c.l.b16 %v438
      %v1103 = vunpack.c.l.b16 %v439
      %v1104 = vunpack.c.l.b16 %v440
      %v1105 = vunpack.c.l.b16 %v441
      %v1106 = vunpack.c.l.b16 %v442
      %v1107 = vunpack.c.l.b16 %v443
      %v1108 = vunpack.c.l.b16 %v444
      %v1109 = vunpack.c.l.b16 %v445
      %v1110 = vunpack.c.h.b16 %v438
      %v1111 = vunpack.c.h.b16 %v439
      %v1112 = vunpack.c.h.b16 %v440
      %v1113 = vunpack.c.h.b16 %v441
      %v1114 = vunpack.c.h.b16 %v442
      %v1115 = vunpack.c.h.b16 %v443
      %v1116 = vunpack.c.h.b16 %v444
      %v1117 = vunpack.c.h.b16 %v445
      %v1118 = vunpack.c.l.b16 %v446
      %v1119 = vunpack.c.l.b16 %v447
      %v1120 = vunpack.c.l.b16 %v448
      %v1121 = vunpack.c.l.b16 %v449
      %v1122 = vunpack.c.l.b16 %v450
      %v1123 = vunpack.c.l.b16 %v451
      %v1124 = vunpack.c.l.b16 %v452
      %v1125 = vunpack.c.l.b16 %v453
      %v1126 = vunpack.c.h.b16 %v446
      %v1127 = vunpack.c.h.b16 %v447
      %v1128 = vunpack.c.h.b16 %v448
      %v1129 = vunpack.c.h.b16 %v449
      %v1130 = vunpack.c.h.b16 %v450
      %v1131 = vunpack.c.h.b16 %v451
      %v1132 = vunpack.c.h.b16 %v452
      %v1133 = vunpack.c.h.b16 %v453
      %v1134 = vunpack.c.l.b16 %v454
      %v1135 = vunpack.c.l.b16 %v455
      %v1136 = vunpack.c.l.b16 %v456
      %v1137 = vunpack.c.l.b16 %v457
      %v1138 = vunpack.c.l.b16 %v458
      %v1139 = vunpack.c.l.b16 %v459
      %v1140 = vunpack.c.l.b16 %v460
      %v1141 = vunpack.c.l.b16 %v461
      %v1142 = vunpack.c.h.b16 %v454
      %v1143 = vunpack.c.h.b16 %v455
      %v1144 = vunpack.c.h.b16 %v456
      %v1145 = vunpack.c.h.b16 %v457
      %v1146 = vunpack.c.h.b16 %v458
      %v1147 = vunpack.c.h.b16 %v459
      %v1148 = vunpack.c.h.b16 %v460
      %v1149 = vunpack.c.h.b16 %v461
      %v1150 = vunpack.c.l.b16 %v462
      %v1151 = vunpack.c.l.b16 %v463
      %v1152 = vunpack.c.l.b16 %v464
      %v1153 = vunpack.c.l.b16 %v465
      %v1154 = vunpack.c.l.b16 %v466
      %v1155 = vunpack.c.l.b16 %v467
      %v1156 = vunpack.c.l.b16 %v468
      %v1157 = vunpack.c.l.b16 %v469
      %v1158 = vunpack.c.h.b16 %v462
      %v1159 = vunpack.c.h.b16 %v463
      %v1160 = vunpack.c.h.b16 %v464
      %v1161 = vunpack.c.h.b16 %v465
      %v1162 = vunpack.c.h.b16 %v466
      %v1163 = vunpack.c.h.b16 %v467
      %v1164 = vunpack.c.h.b16 %v468
      %v1165 = vunpack.c.h.b16 %v469
      %v1166 = vunpack.c.l.b16 %v470
      %v1167 = vunpack.c.l.b16 %v471
      %v1168 = vunpack.c.l.b16 %v472
      %v1169 = vunpack.c.l.b16 %v473
      %v1170 = vunpack.c.l.b16 %v474
      %v1171 = vunpack.c.l.b16 %v475
      %v1172 = vunpack.c.l.b16 %v476
      %v1173 = vunpack.c.l.b16 %v477
      %v1174 = vunpack.c.h.b16 %v470
      %v1175 = vunpack.c.h.b16 %v471
      %v1176 = vunpack.c.h.b16 %v472
      %v1177 = vunpack.c.h.b16 %v473
      %v1178 = vunpack.c.h.b16 %v474
      %v1179 = vunpack.c.h.b16 %v475
      %v1180 = vunpack.c.h.b16 %v476
      %v1181 = vunpack.c.h.b16 %v477
      %v1182 = vunpack.c.l.b16 %v478
      %v1183 = vunpack.c.l.b16 %v479
      %v1184 = vunpack.c.l.b16 %v480
      %v1185 = vunpack.c.l.b16 %v481
      %v1186 = vunpack.c.l.b16 %v482
      %v1187 = vunpack.c.l.b16 %v483
      %v1188 = vunpack.c.l.b16 %v484
      %v1189 = vunpack.c.l.b16 %v485
      %v1190 = vunpack.c.h.b16 %v478
      %v1191 = vunpack.c.h.b16 %v479
      %v1192 = vunpack.c.h.b16 %v480
      %v1193 = vunpack.c.h.b16 %v481
      %v1194 = vunpack.c.h.b16 %v482
      %v1195 = vunpack.c.h.b16 %v483
      %v1196 = vunpack.c.h.b16 %v484
      %v1197 = vunpack.c.h.b16 %v485
      %v1198 = vunpack.c.l.b16 %v486
      %v1199 = vunpack.c.l.b16 %v487
      %v1200 = vunpack.c.l.b16 %v488
      %v1201 = vunpack.c.l.b16 %v489
      %v1202 = vunpack.c.l.b16 %v490
      %v1203 = vunpack.c.l.b16 %v491
      %v1204 = vunpack.c.l.b16 %v492
      %v1205 = vunpack.c.l.b16 %v493
      %v1206 = vunpack.c.h.b16 %v486
      %v1207 = vunpack.c.h.b16 %v487
      %v1208 = vunpack.c.h.b16 %v488
      %v1209 = vunpack.c.h.b16 %v489
      %v1210 = vunpack.c.h.b16 %v490
      %v1211 = vunpack.c.h.b16 %v491
      %v1212 = vunpack.c.h.b16 %v492
      %v1213 = vunpack.c.h.b16 %v493
      %v1214 = vunpack.c.l.b16 %v494
      %v1215 = vunpack.c.l.b16 %v495
      %v1216 = vunpack.c.l.b16 %v496
      %v1217 = vunpack.c.l.b16 %v497
      %v1218 = vunpack.c.l.b16 %v498
      %v1219 = vunpack.c.l.b16 %v499
      %v1220 = vunpack.c.l.b16 %v500
      %v1221 = vunpack.c.l.b16 %v501
      %v1222 = vunpack.c.h.b16 %v494
      %v1223 = vunpack.c.h.b16 %v495
      %v1224 = vunpack.c.h.b16 %v496
      %v1225 = vunpack.c.h.b16 %v497
      %v1226 = vunpack.c.h.b16 %v498
      %v1227 = vunpack.c.h.b16 %v499
      %v1228 = vunpack.c.h.b16 %v500
      %v1229 = vunpack.c.h.b16 %v501
      %v1230 = vunpack.c.l.b16 %v502
      %v1231 = vunpack.c.l.b16 %v503
      %v1232 = vunpack.c.l.b16 %v504
      %v1233 = vunpack.c.l.b16 %v505
      %v1234 = vunpack.c.l.b16 %v506
      %v1235 = vunpack.c.l.b16 %v507
      %v1236 = vunpack.c.l.b16 %v508
      %v1237 = vunpack.c.l.b16 %v509
      %v1238 = vunpack.c.h.b16 %v502
      %v1239 = vunpack.c.h.b16 %v503
      %v1240 = vunpack.c.h.b16 %v504
      %v1241 = vunpack.c.h.b16 %v505
      %v1242 = vunpack.c.h.b16 %v506
      %v1243 = vunpack.c.h.b16 %v507
      %v1244 = vunpack.c.h.b16 %v508
      %v1245 = vunpack.c.h.b16 %v509
      %v1246 = vunpack.c.l.b16 %v510
      %v1247 = vunpack.c.l.b16 %v511
      %v1248 = vunpack.c.l.b16 %v512
      %v1249 = vunpack.c.l.b16 %v513
      %v1250 = vunpack.c.l.b16 %v514
      %v1251 = vunpack.c.l.b16 %v515
      %v1252 = vunpack.c.l.b16 %v516
      %v1253 = vunpack.c.l.b16 %v517
      %v1254 = vunpack.c.h.b16 %v510
      %v1255 = vunpack.c.h.b16 %v511
      %v1256 = vunpack.c.h.b16 %v512
      %v1257 = vunpack.c.h.b16 %v513
      %v1258 = vunpack.c.h.b16 %v514
      %v1259 = vunpack.c.h.b16 %v515
      %v1260 = vunpack.c.h.b16 %v516
      %v1261 = vunpack.c.h.b16 %v517
      %v1262 = vunpack.c.l.b16 %v518
      %v1263 = vunpack.c.l.b16 %v519
      %v1264 = vunpack.c.l.b16 %v520
      %v1265 = vunpack.c.l.b16 %v521
      %v1266 = vunpack.c.l.b16 %v522
      %v1267 = vunpack.c.l.b16 %v523
      %v1268 = vunpack.c.l.b16 %v524
      %v1269 = vunpack.c.l.b16 %v525
      %v1270 = vunpack.c.h.b16 %v518
      %v1271 = vunpack.c.h.b16 %v519
      %v1272 = vunpack.c.h.b16 %v520
      %v1273 = vunpack.c.h.b16 %v521
      %v1274 = vunpack.c.h.b16 %v522
      %v1275 = vunpack.c.h.b16 %v523
      %v1276 = vunpack.c.h.b16 %v524
      %v1277 = vunpack.c.h.b16 %v525
      %v1278 = vunpack.c.l.b16 %v526
      %v1279 = vunpack.c.l.b16 %v527
      %v1280 = vunpack.c.l.b16 %v528
      %v1281 = vunpack.c.l.b16 %v529
      %v1282 = vunpack.c.l.b16 %v530
      %v1283 = vunpack.c.l.b16 %v531
      %v1284 = vunpack.c.l.b16 %v532
      %v1285 = vunpack.c.l.b16 %v533
      %v1286 = vunpack.c.h.b16 %v526
      %v1287 = vunpack.c.h.b16 %v527
      %v1288 = vunpack.c.h.b16 %v528
      %v1289 = vunpack.c.h.b16 %v529
      %v1290 = vunpack.c.h.b16 %v530
      %v1291 = vunpack.c.h.b16 %v531
      %v1292 = vunpack.c.h.b16 %v532
      %v1293 = vunpack.c.h.b16 %v533
      %v1294 = vunpack.c.l.b16 %v534
      %v1295 = vunpack.c.l.b16 %v535
      %v1296 = vunpack.c.l.b16 %v536
      %v1297 = vunpack.c.l.b16 %v537
      %v1298 = vunpack.c.l.b16 %v538
      %v1299 = vunpack.c.l.b16 %v539
      %v1300 = vunpack.c.l.b16 %v540
      %v1301 = vunpack.c.l.b16 %v541
      %v1302 = vunpack.c.h.b16 %v534
      %v1303 = vunpack.c.h.b16 %v535
      %v1304 = vunpack.c.h.b16 %v536
      %v1305 = vunpack.c.h.b16 %v537
      %v1306 = vunpack.c.h.b16 %v538
      %v1307 = vunpack.c.h.b16 %v539
      %v1308 = vunpack.c.h.b16 %v540
      %v1309 = vunpack.c.h.b16 %v541
      %v1310 = vpack.c.b16 %v799, %v798
      %v1311 = vpack.c.b16 %v801, %v800
      %v1312 = vpack.c.b16 %v803, %v802
      %v1313 = vpack.c.b16 %v805, %v804
      %v1314 = vpack.c.b16 %v807, %v806
      %v1315 = vpack.c.b16 %v809, %v808
      %v1316 = vpack.c.b16 %v811, %v810
      %v1317 = vpack.c.b16 %v813, %v812
      %v1318 = vpack.c.b16 %v815, %v814
      %v1319 = vpack.c.b16 %v817, %v816
      %v1320 = vpack.c.b16 %v819, %v818
      %v1321 = vpack.c.b16 %v821, %v820
      %v1322 = vpack.c.b16 %v823, %v822
      %v1323 = vpack.c.b16 %v825, %v824
      %v1324 = vpack.c.b16 %v827, %v826
      %v1325 = vpack.c.b16 %v829, %v828
      %v1326 = vpack.c.b16 %v831, %v830
      %v1327 = vpack.c.b16 %v833, %v832
      %v1328 = vpack.c.b16 %v835, %v834
      %v1329 = vpack.c.b16 %v837, %v836
      %v1330 = vpack.c.b16 %v839, %v838
      %v1331 = vpack.c.b16 %v841, %v840
      %v1332 = vpack.c.b16 %v843, %v842
      %v1333 = vpack.c.b16 %v845, %v844
      %v1334 = vpack.c.b16 %v847, %v846
      %v1335 = vpack.c.b16 %v849, %v848
      %v1336 = vpack.c.b16 %v851, %v850
      %v1337 = vpack.c.b16 %v853, %v852
      %v1338 = vpack.c.b16 %v855, %v854
      %v1339 = vpack.c.b16 %v857, %v856
      %v1340 = vpack.c.b16 %v859, %v858
      %v1341 = vpack.c.b16 %v861, %v860
      %v1342 = vpack.c.b16 %v863, %v862
      %v1343 = vpack.c.b16 %v865, %v864
      %v1344 = vpack.c.b16 %v867, %v866
      %v1345 = vpack.c.b16 %v869, %v868
      %v1346 = vpack.c.b16 %v871, %v870
      %v1347 = vpack.c.b16 %v873, %v872
      %v1348 = vpack.c.b16 %v875, %v874
      %v1349 = vpack.c.b16 %v877, %v876
      %v1350 = vpack.c.b16 %v879, %v878
      %v1351 = vpack.c.b16 %v881, %v880
      %v1352 = vpack.c.b16 %v883, %v882
      %v1353 = vpack.c.b16 %v885, %v884
      %v1354 = vpack.c.b16 %v887, %v886
      %v1355 = vpack.c.b16 %v889, %v888
      %v1356 = vpack.c.b16 %v891, %v890
      %v1357 = vpack.c.b16 %v893, %v892
      %v1358 = vpack.c.b16 %v895, %v894
      %v1359 = vpack.c.b16 %v897, %v896
      %v1360 = vpack.c.b16 %v899, %v898
      %v1361 = vpack.c.b16 %v901, %v900
      %v1362 = vpack.c.b16 %v903, %v902
      %v1363 = vpack.c.b16 %v905, %v904
      %v1364 = vpack.c.b16 %v907, %v906
      %v1365 = vpack.c.b16 %v909, %v908
      %v1366 = vpack.c.b16 %v911, %v910
      %v1367 = vpack.c.b16 %v913, %v912
      %v1368 = vpack.c.b16 %v915, %v914
      %v1369 = vpack.c.b16 %v917, %v916
      %v1370 = vpack.c.b16 %v919, %v918
      %v1371 = vpack.c.b16 %v921, %v920
      %v1372 = vpack.c.b16 %v923, %v922
      %v1373 = vpack.c.b16 %v925, %v924
      %v1374 = vpack.c.b16 %v927, %v926
      %v1375 = vpack.c.b16 %v929, %v928
      %v1376 = vpack.c.b16 %v931, %v930
      %v1377 = vpack.c.b16 %v933, %v932
      %v1378 = vpack.c.b16 %v935, %v934
      %v1379 = vpack.c.b16 %v937, %v936
      %v1380 = vpack.c.b16 %v939, %v938
      %v1381 = vpack.c.b16 %v941, %v940
      %v1382 = vpack.c.b16 %v943, %v942
      %v1383 = vpack.c.b16 %v945, %v944
      %v1384 = vpack.c.b16 %v947, %v946
      %v1385 = vpack.c.b16 %v949, %v948
      %v1386 = vpack.c.b16 %v951, %v950
      %v1387 = vpack.c.b16 %v953, %v952
      %v1388 = vpack.c.b16 %v955, %v954
      %v1389 = vpack.c.b16 %v957, %v956
      %v1390 = vpack.c.b16 %v959, %v958
      %v1391 = vpack.c.b16 %v961, %v960
      %v1392 = vpack.c.b16 %v963, %v962
      %v1393 = vpack.c.b16 %v965, %v964
      %v1394 = vpack.c.b16 %v967, %v966
      %v1395 = vpack.c.b16 %v969, %v968
      %v1396 = vpack.c.b16 %v971, %v970
      %v1397 = vpack.c.b16 %v973, %v972
      %v1398 = vpack.c.b16 %v975, %v974
      %v1399 = vpack.c.b16 %v977, %v976
      %v1400 = vpack.c.b16 %v979, %v978
      %v1401 = vpack.c.b16 %v981, %v980
      %v1402 = vpack.c.b16 %v983, %v982
      %v1403 = vpack.c.b16 %v985, %v984
      %v1404 = vpack.c.b16 %v987, %v986
      %v1405 = vpack.c.b16 %v989, %v988
      %v1406 = vpack.c.b16 %v991, %v990
      %v1407 = vpack.c.b16 %v993, %v992
      %v1408 = vpack.c.b16 %v995, %v994
      %v1409 = vpack.c.b16 %v997, %v996
      %v1410 = vpack.c.b16 %v999, %v998
      %v1411 = vpack.c.b16 %v1001, %v1000
      %v1412 = vpack.c.b16 %v1003, %v1002
      %v1413 = vpack.c.b16 %v1005, %v1004
      %v1414 = vpack.c.b16 %v1007, %v1006
      %v1415 = vpack.c.b16 %v1009, %v1008
      %v1416 = vpack.c.b16 %v1011, %v1010
      %v1417 = vpack.c.b16 %v1013, %v1012
      %v1418 = vpack.c.b16 %v1015, %v1014
      %v1419 = vpack.c.b16 %v1017, %v1016
      %v1420 = vpack.c.b16 %v1019, %v1018
      %v1421 = vpack.c.b16 %v1021, %v1020
      %v1422 = vpack.c.b16 %v1023, %v1022
      %v1423 = vpack.c.b16 %v1025, %v1024
      %v1424 = vpack.c.b16 %v1027, %v1026
      %v1425 = vpack.c.b16 %v1029, %v1028
      %v1426 = vpack.c.b16 %v1031, %v1030
      %v1427 = vpack.c.b16 %v1033, %v1032
      %v1428 = vpack.c.b16 %v1035, %v1034
      %v1429 = vpack.c.b16 %v1037, %v1036
      %v1430 = vpack.c.b16 %v1039, %v1038
      %v1431 = vpack.c.b16 %v1041, %v1040
      %v1432 = vpack.c.b16 %v1043, %v1042
      %v1433 = vpack.c.b16 %v1045, %v1044
      %v1434 = vpack.c.b16 %v1047, %v1046
      %v1435 = vpack.c.b16 %v1049, %v1048
      %v1436 = vpack.c.b16 %v1051, %v1050
      %v1437 = vpack.c.b16 %v1053, %v1052
      %v1438 = vpack.c.b16 %v1055, %v1054
      %v1439 = vpack.c.b16 %v1057, %v1056
      %v1440 = vpack.c.b16 %v1059, %v1058
      %v1441 = vpack.c.b16 %v1061, %v1060
      %v1442 = vpack.c.b16 %v1063, %v1062
      %v1443 = vpack.c.b16 %v1065, %v1064
      %v1444 = vpack.c.b16 %v1067, %v1066
      %v1445 = vpack.c.b16 %v1069, %v1068
      %v1446 = vpack.c.b16 %v1071, %v1070
      %v1447 = vpack.c.b16 %v1073, %v1072
      %v1448 = vpack.c.b16 %v1075, %v1074
      %v1449 = vpack.c.b16 %v1077, %v1076
      %v1450 = vpack.c.b16 %v1079, %v1078
      %v1451 = vpack.c.b16 %v1081, %v1080
      %v1452 = vpack.c.b16 %v1083, %v1082
      %v1453 = vpack.c.b16 %v1085, %v1084
      %v1454 = vpack.c.b16 %v1087, %v1086
      %v1455 = vpack.c.b16 %v1089, %v1088
      %v1456 = vpack.c.b16 %v1091, %v1090
      %v1457 = vpack.c.b16 %v1093, %v1092
      %v1458 = vpack.c.b16 %v1095, %v1094
      %v1459 = vpack.c.b16 %v1097, %v1096
      %v1460 = vpack.c.b16 %v1099, %v1098
      %v1461 = vpack.c.b16 %v1101, %v1100
      %v1462 = vpack.c.b16 %v1103, %v1102
      %v1463 = vpack.c.b16 %v1105, %v1104
      %v1464 = vpack.c.b16 %v1107, %v1106
      %v1465 = vpack.c.b16 %v1109, %v1108
      %v1466 = vpack.c.b16 %v1111, %v1110
      %v1467 = vpack.c.b16 %v1113, %v1112
      %v1468 = vpack.c.b16 %v1115, %v1114
      %v1469 = vpack.c.b16 %v1117, %v1116
      %v1470 = vpack.c.b16 %v1119, %v1118
      %v1471 = vpack.c.b16 %v1121, %v1120
      %v1472 = vpack.c.b16 %v1123, %v1122
      %v1473 = vpack.c.b16 %v1125, %v1124
      %v1474 = vpack.c.b16 %v1127, %v1126
      %v1475 = vpack.c.b16 %v1129, %v1128
      %v1476 = vpack.c.b16 %v1131, %v1130
      %v1477 = vpack.c.b16 %v1133, %v1132
      %v1478 = vpack.c.b16 %v1135, %v1134
      %v1479 = vpack.c.b16 %v1137, %v1136
      %v1480 = vpack.c.b16 %v1139, %v1138
      %v1481 = vpack.c.b16 %v1141, %v1140
      %v1482 = vpack.c.b16 %v1143, %v1142
      %v1483 = vpack.c.b16 %v1145, %v1144
      %v1484 = vpack.c.b16 %v1147, %v1146
      %v1485 = vpack.c.b16 %v1149, %v1148
      %v1486 = vpack.c.b16 %v1151, %v1150
      %v1487 = vpack.c.b16 %v1153, %v1152
      %v1488 = vpack.c.b16 %v1155, %v1154
      %v1489 = vpack.c.b16 %v1157, %v1156
      %v1490 = vpack.c.b16 %v1159, %v1158
      %v1491 = vpack.c.b16 %v1161, %v1160
      %v1492 = vpack.c.b16 %v1163, %v1162
      %v1493 = vpack.c.b16 %v1165, %v1164
      %v1494 = vpack.c.b16 %v1167, %v1166
      %v1495 = vpack.c.b16 %v1169, %v1168
      %v1496 = vpack.c.b16 %v1171, %v1170
      %v1497 = vpack.c.b16 %v1173, %v1172
      %v1498 = vpack.c.b16 %v1175, %v1174
      %v1499 = vpack.c.b16 %v1177, %v1176
      %v1500 = vpack.c.b16 %v1179, %v1178
      %v1501 = vpack.c.b16 %v1181, %v1180
      %v1502 = vpack.c.b16 %v1183, %v1182
      %v1503 = vpack.c.b16 %v1185, %v1184
      %v1504 = vpack.c.b16 %v1187, %v1186
      %v1505 = vpack.c.b16 %v1189, %v1188
      %v1506 = vpack.c.b16 %v1191, %v1190
      %v1507 = vpack.c.b16 %v1193, %v1192
      %v1508 = vpack.c.b16 %v1195, %v1194
      %v1509 = vpack.c.b16 %v1197, %v1196
      %v1510 = vpack.c.b16 %v1199, %v1198
      %v1511 = vpack.c.b16 %v1201, %v1200
      %v1512 = vpack.c.b16 %v1203, %v1202
      %v1513 = vpack.c.b16 %v1205, %v1204
      %v1514 = vpack.c.b16 %v1207, %v1206
      %v1515 = vpack.c.b16 %v1209, %v1208
      %v1516 = vpack.c.b16 %v1211, %v1210
      %v1517 = vpack.c.b16 %v1213, %v1212
      %v1518 = vpack.c.b16 %v1215, %v1214
      %v1519 = vpack.c.b16 %v1217, %v1216
      %v1520 = vpack.c.b16 %v1219, %v1218
      %v1521 = vpack.c.b16 %v1221, %v1220
      %v1522 = vpack.c.b16 %v1223, %v1222
      %v1523 = vpack.c.b16 %v1225, %v1224
      %v1524 = vpack.c.b16 %v1227, %v1226
      %v1525 = vpack.c.b16 %v1229, %v1228
      %v1526 = vpack.c.b16 %v1231, %v1230
      %v1527 = vpack.c.b16 %v1233, %v1232
      %v1528 = vpack.c.b16 %v1235, %v1234
      %v1529 = vpack.c.b16 %v1237, %v1236
      %v1530 = vpack.c.b16 %v1239, %v1238
      %v1531 = vpack.c.b16 %v1241, %v1240
      %v1532 = vpack.c.b16 %v1243, %v1242
      %v1533 = vpack.c.b16 %v1245, %v1244
      %v1534 = vpack.c.b16 %v1247, %v1246
      %v1535 = vpack.c.b16 %v1249, %v1248
      %v1536 = vpack.c.b16 %v1251, %v1250
      %v1537 = vpack.c.b16 %v1253, %v1252
      %v1538 = vpack.c.b16 %v1255, %v1254
      %v1539 = vpack.c.b16 %v1257, %v1256
      %v1540 = vpack.c.b16 %v1259, %v1258
      %v1541 = vpack.c.b16 %v1261, %v1260
      %v1542 = vpack.c.b16 %v1263, %v1262
      %v1543 = vpack.c.b16 %v1265, %v1264
      %v1544 = vpack.c.b16 %v1267, %v1266
      %v1545 = vpack.c.b16 %v1269, %v1268
      %v1546 = vpack.c.b16 %v1271, %v1270
      %v1547 = vpack.c.b16 %v1273, %v1272
      %v1548 = vpack.c.b16 %v1275, %v1274
      %v1549 = vpack.c.b16 %v1277, %v1276
      %v1550 = vpack.c.b16 %v1279, %v1278
      %v1551 = vpack.c.b16 %v1281, %v1280
      %v1552 = vpack.c.b16 %v1283, %v1282
      %v1553 = vpack.c.b16 %v1285, %v1284
      %v1554 = vpack.c.b16 %v1287, %v1286
      %v1555 = vpack.c.b16 %v1289, %v1288
      %v1556 = vpack.c.b16 %v1291, %v1290
      %v1557 = vpack.c.b16 %v1293, %v1292
      %v1558 = vpack.c.b16 %v1295, %v1294
      %v1559 = vpack.c.b16 %v1297, %v1296
      %v1560 = vpack.c.b16 %v1299, %v1298
      %v1561 = vpack.c.b16 %v1301, %v1300
      %v1562 = vpack.c.b16 %v1303, %v1302
      %v1563 = vpack.c.b16 %v1305, %v1304
      %v1564 = vpack.c.b16 %v1307, %v1306
      %v1565 = vpack.c.b16 %v1309, %v1308
      %1822 = vst [vmem:[#allocation2] sm:$0xff] %v1310
      %1823 = vst [vmem:[#allocation2 + $0x8] sm:$0xff] %v1311
      %1824 = vst [vmem:[#allocation2 + $0x10] sm:$0xff] %v1312
      %1825 = vst [vmem:[#allocation2 + $0x18] sm:$0xff] %v1313
      %1826 = vst [vmem:[#allocation2 + $0x20] sm:$0xff] %v1314
      %1827 = vst [vmem:[#allocation2 + $0x28] sm:$0xff] %v1315
      %1828 = vst [vmem:[#allocation2 + $0x30] sm:$0xff] %v1316
      %1829 = vst [vmem:[#allocation2 + $0x38] sm:$0xff] %v1317
      %1830 = vst [vmem:[#allocation2 + $0x40] sm:$0xff] %v1318
      %1831 = vst [vmem:[#allocation2 + $0x48] sm:$0xff] %v1319
      %1832 = vst [vmem:[#allocation2 + $0x50] sm:$0xff] %v1320
      %1833 = vst [vmem:[#allocation2 + $0x58] sm:$0xff] %v1321
      %1834 = vst [vmem:[#allocation2 + $0x60] sm:$0xff] %v1322
      %1835 = vst [vmem:[#allocation2 + $0x68] sm:$0xff] %v1323
      %1836 = vst [vmem:[#allocation2 + $0x70] sm:$0xff] %v1324
      %1837 = vst [vmem:[#allocation2 + $0x78] sm:$0xff] %v1325
      %1838 = vst [vmem:[#allocation2 + $0x80] sm:$0xff] %v1326
      %1839 = vst [vmem:[#allocation2 + $0x88] sm:$0xff] %v1327
      %1840 = vst [vmem:[#allocation2 + $0x90] sm:$0xff] %v1328
      %1841 = vst [vmem:[#allocation2 + $0x98] sm:$0xff] %v1329
      %1842 = vst [vmem:[#allocation2 + $0xa0] sm:$0xff] %v1330
      %1843 = vst [vmem:[#allocation2 + $0xa8] sm:$0xff] %v1331
      %1844 = vst [vmem:[#allocation2 + $0xb0] sm:$0xff] %v1332
      %1845 = vst [vmem:[#allocation2 + $0xb8] sm:$0xff] %v1333
      %1846 = vst [vmem:[#allocation2 + $0xc0] sm:$0xff] %v1334
      %1847 = vst [vmem:[#allocation2 + $0xc8] sm:$0xff] %v1335
      %1848 = vst [vmem:[#allocation2 + $0xd0] sm:$0xff] %v1336
      %1849 = vst [vmem:[#allocation2 + $0xd8] sm:$0xff] %v1337
      %1850 = vst [vmem:[#allocation2 + $0xe0] sm:$0xff] %v1338
      %1851 = vst [vmem:[#allocation2 + $0xe8] sm:$0xff] %v1339
      %1852 = vst [vmem:[#allocation2 + $0xf0] sm:$0xff] %v1340
      %1853 = vst [vmem:[#allocation2 + $0xf8] sm:$0xff] %v1341
      %1854 = vst [vmem:[#allocation2 + $0x100] sm:$0xff] %v1342
      %1855 = vst [vmem:[#allocation2 + $0x108] sm:$0xff] %v1343
      %1856 = vst [vmem:[#allocation2 + $0x110] sm:$0xff] %v1344
      %1857 = vst [vmem:[#allocation2 + $0x118] sm:$0xff] %v1345
      %1858 = vst [vmem:[#allocation2 + $0x120] sm:$0xff] %v1346
      %1859 = vst [vmem:[#allocation2 + $0x128] sm:$0xff] %v1347
      %1860 = vst [vmem:[#allocation2 + $0x130] sm:$0xff] %v1348
      %1861 = vst [vmem:[#allocation2 + $0x138] sm:$0xff] %v1349
      %1862 = vst [vmem:[#allocation2 + $0x140] sm:$0xff] %v1350
      %1863 = vst [vmem:[#allocation2 + $0x148] sm:$0xff] %v1351
      %1864 = vst [vmem:[#allocation2 + $0x150] sm:$0xff] %v1352
      %1865 = vst [vmem:[#allocation2 + $0x158] sm:$0xff] %v1353
      %1866 = vst [vmem:[#allocation2 + $0x160] sm:$0xff] %v1354
      %1867 = vst [vmem:[#allocation2 + $0x168] sm:$0xff] %v1355
      %1868 = vst [vmem:[#allocation2 + $0x170] sm:$0xff] %v1356
      %1869 = vst [vmem:[#allocation2 + $0x178] sm:$0xff] %v1357
      %1870 = vst [vmem:[#allocation2 + $0x180] sm:$0xff] %v1358
      %1871 = vst [vmem:[#allocation2 + $0x188] sm:$0xff] %v1359
      %1872 = vst [vmem:[#allocation2 + $0x190] sm:$0xff] %v1360
      %1873 = vst [vmem:[#allocation2 + $0x198] sm:$0xff] %v1361
      %1874 = vst [vmem:[#allocation2 + $0x1a0] sm:$0xff] %v1362
      %1875 = vst [vmem:[#allocation2 + $0x1a8] sm:$0xff] %v1363
      %1876 = vst [vmem:[#allocation2 + $0x1b0] sm:$0xff] %v1364
      %1877 = vst [vmem:[#allocation2 + $0x1b8] sm:$0xff] %v1365
      %1878 = vst [vmem:[#allocation2 + $0x1c0] sm:$0xff] %v1366
      %1879 = vst [vmem:[#allocation2 + $0x1c8] sm:$0xff] %v1367
      %1880 = vst [vmem:[#allocation2 + $0x1d0] sm:$0xff] %v1368
      %1881 = vst [vmem:[#allocation2 + $0x1d8] sm:$0xff] %v1369
      %1882 = vst [vmem:[#allocation2 + $0x1e0] sm:$0xff] %v1370
      %1883 = vst [vmem:[#allocation2 + $0x1e8] sm:$0xff] %v1371
      %1884 = vst [vmem:[#allocation2 + $0x1f0] sm:$0xff] %v1372
      %1885 = vst [vmem:[#allocation2 + $0x1f8] sm:$0xff] %v1373
      %1886 = vst [vmem:[#allocation2 + $0x200] sm:$0xff] %v1374
      %1887 = vst [vmem:[#allocation2 + $0x208] sm:$0xff] %v1375
      %1888 = vst [vmem:[#allocation2 + $0x210] sm:$0xff] %v1376
      %1889 = vst [vmem:[#allocation2 + $0x218] sm:$0xff] %v1377
      %1890 = vst [vmem:[#allocation2 + $0x220] sm:$0xff] %v1378
      %1891 = vst [vmem:[#allocation2 + $0x228] sm:$0xff] %v1379
      %1892 = vst [vmem:[#allocation2 + $0x230] sm:$0xff] %v1380
      %1893 = vst [vmem:[#allocation2 + $0x238] sm:$0xff] %v1381
      %1894 = vst [vmem:[#allocation2 + $0x240] sm:$0xff] %v1382
      %1895 = vst [vmem:[#allocation2 + $0x248] sm:$0xff] %v1383
      %1896 = vst [vmem:[#allocation2 + $0x250] sm:$0xff] %v1384
      %1897 = vst [vmem:[#allocation2 + $0x258] sm:$0xff] %v1385
      %1898 = vst [vmem:[#allocation2 + $0x260] sm:$0xff] %v1386
      %1899 = vst [vmem:[#allocation2 + $0x268] sm:$0xff] %v1387
      %1900 = vst [vmem:[#allocation2 + $0x270] sm:$0xff] %v1388
      %1901 = vst [vmem:[#allocation2 + $0x278] sm:$0xff] %v1389
      %1902 = vst [vmem:[#allocation2 + $0x280] sm:$0xff] %v1390
      %1903 = vst [vmem:[#allocation2 + $0x288] sm:$0xff] %v1391
      %1904 = vst [vmem:[#allocation2 + $0x290] sm:$0xff] %v1392
      %1905 = vst [vmem:[#allocation2 + $0x298] sm:$0xff] %v1393
      %1906 = vst [vmem:[#allocation2 + $0x2a0] sm:$0xff] %v1394
      %1907 = vst [vmem:[#allocation2 + $0x2a8] sm:$0xff] %v1395
      %1908 = vst [vmem:[#allocation2 + $0x2b0] sm:$0xff] %v1396
      %1909 = vst [vmem:[#allocation2 + $0x2b8] sm:$0xff] %v1397
      %1910 = vst [vmem:[#allocation2 + $0x2c0] sm:$0xff] %v1398
      %1911 = vst [vmem:[#allocation2 + $0x2c8] sm:$0xff] %v1399
      %1912 = vst [vmem:[#allocation2 + $0x2d0] sm:$0xff] %v1400
      %1913 = vst [vmem:[#allocation2 + $0x2d8] sm:$0xff] %v1401
      %1914 = vst [vmem:[#allocation2 + $0x2e0] sm:$0xff] %v1402
      %1915 = vst [vmem:[#allocation2 + $0x2e8] sm:$0xff] %v1403
      %1916 = vst [vmem:[#allocation2 + $0x2f0] sm:$0xff] %v1404
      %1917 = vst [vmem:[#allocation2 + $0x2f8] sm:$0xff] %v1405
      %1918 = vst [vmem:[#allocation2 + $0x300] sm:$0xff] %v1406
      %1919 = vst [vmem:[#allocation2 + $0x308] sm:$0xff] %v1407
      %1920 = vst [vmem:[#allocation2 + $0x310] sm:$0xff] %v1408
      %1921 = vst [vmem:[#allocation2 + $0x318] sm:$0xff] %v1409
      %1922 = vst [vmem:[#allocation2 + $0x320] sm:$0xff] %v1410
      %1923 = vst [vmem:[#allocation2 + $0x328] sm:$0xff] %v1411
      %1924 = vst [vmem:[#allocation2 + $0x330] sm:$0xff] %v1412
      %1925 = vst [vmem:[#allocation2 + $0x338] sm:$0xff] %v1413
      %1926 = vst [vmem:[#allocation2 + $0x340] sm:$0xff] %v1414
      %1927 = vst [vmem:[#allocation2 + $0x348] sm:$0xff] %v1415
      %1928 = vst [vmem:[#allocation2 + $0x350] sm:$0xff] %v1416
      %1929 = vst [vmem:[#allocation2 + $0x358] sm:$0xff] %v1417
      %1930 = vst [vmem:[#allocation2 + $0x360] sm:$0xff] %v1418
      %1931 = vst [vmem:[#allocation2 + $0x368] sm:$0xff] %v1419
      %1932 = vst [vmem:[#allocation2 + $0x370] sm:$0xff] %v1420
      %1933 = vst [vmem:[#allocation2 + $0x378] sm:$0xff] %v1421
      %1934 = vst [vmem:[#allocation2 + $0x380] sm:$0xff] %v1422
      %1935 = vst [vmem:[#allocation2 + $0x388] sm:$0xff] %v1423
      %1936 = vst [vmem:[#allocation2 + $0x390] sm:$0xff] %v1424
      %1937 = vst [vmem:[#allocation2 + $0x398] sm:$0xff] %v1425
      %1938 = vst [vmem:[#allocation2 + $0x3a0] sm:$0xff] %v1426
      %1939 = vst [vmem:[#allocation2 + $0x3a8] sm:$0xff] %v1427
      %1940 = vst [vmem:[#allocation2 + $0x3b0] sm:$0xff] %v1428
      %1941 = vst [vmem:[#allocation2 + $0x3b8] sm:$0xff] %v1429
      %1942 = vst [vmem:[#allocation2 + $0x3c0] sm:$0xff] %v1430
      %1943 = vst [vmem:[#allocation2 + $0x3c8] sm:$0xff] %v1431
      %1944 = vst [vmem:[#allocation2 + $0x3d0] sm:$0xff] %v1432
      %1945 = vst [vmem:[#allocation2 + $0x3d8] sm:$0xff] %v1433
      %1946 = vst [vmem:[#allocation2 + $0x3e0] sm:$0xff] %v1434
      %1947 = vst [vmem:[#allocation2 + $0x3e8] sm:$0xff] %v1435
      %1948 = vst [vmem:[#allocation2 + $0x3f0] sm:$0xff] %v1436
      %1949 = vst [vmem:[#allocation2 + $0x3f8] sm:$0xff] %v1437
      %1950 = vst [vmem:[#allocation2 + $0x400] sm:$0xff] %v1438
      %1951 = vst [vmem:[#allocation2 + $0x408] sm:$0xff] %v1439
      %1952 = vst [vmem:[#allocation2 + $0x410] sm:$0xff] %v1440
      %1953 = vst [vmem:[#allocation2 + $0x418] sm:$0xff] %v1441
      %1954 = vst [vmem:[#allocation2 + $0x420] sm:$0xff] %v1442
      %1955 = vst [vmem:[#allocation2 + $0x428] sm:$0xff] %v1443
      %1956 = vst [vmem:[#allocation2 + $0x430] sm:$0xff] %v1444
      %1957 = vst [vmem:[#allocation2 + $0x438] sm:$0xff] %v1445
      %1958 = vst [vmem:[#allocation2 + $0x440] sm:$0xff] %v1446
      %1959 = vst [vmem:[#allocation2 + $0x448] sm:$0xff] %v1447
      %1960 = vst [vmem:[#allocation2 + $0x450] sm:$0xff] %v1448
      %1961 = vst [vmem:[#allocation2 + $0x458] sm:$0xff] %v1449
      %1962 = vst [vmem:[#allocation2 + $0x460] sm:$0xff] %v1450
      %1963 = vst [vmem:[#allocation2 + $0x468] sm:$0xff] %v1451
      %1964 = vst [vmem:[#allocation2 + $0x470] sm:$0xff] %v1452
      %1965 = vst [vmem:[#allocation2 + $0x478] sm:$0xff] %v1453
      %1966 = vst [vmem:[#allocation2 + $0x480] sm:$0xff] %v1454
      %1967 = vst [vmem:[#allocation2 + $0x488] sm:$0xff] %v1455
      %1968 = vst [vmem:[#allocation2 + $0x490] sm:$0xff] %v1456
      %1969 = vst [vmem:[#allocation2 + $0x498] sm:$0xff] %v1457
      %1970 = vst [vmem:[#allocation2 + $0x4a0] sm:$0xff] %v1458
      %1971 = vst [vmem:[#allocation2 + $0x4a8] sm:$0xff] %v1459
      %1972 = vst [vmem:[#allocation2 + $0x4b0] sm:$0xff] %v1460
      %1973 = vst [vmem:[#allocation2 + $0x4b8] sm:$0xff] %v1461
      %1974 = vst [vmem:[#allocation2 + $0x4c0] sm:$0xff] %v1462
      %1975 = vst [vmem:[#allocation2 + $0x4c8] sm:$0xff] %v1463
      %1976 = vst [vmem:[#allocation2 + $0x4d0] sm:$0xff] %v1464
      %1977 = vst [vmem:[#allocation2 + $0x4d8] sm:$0xff] %v1465
      %1978 = vst [vmem:[#allocation2 + $0x4e0] sm:$0xff] %v1466
      %1979 = vst [vmem:[#allocation2 + $0x4e8] sm:$0xff] %v1467
      %1980 = vst [vmem:[#allocation2 + $0x4f0] sm:$0xff] %v1468
      %1981 = vst [vmem:[#allocation2 + $0x4f8] sm:$0xff] %v1469
      %1982 = vst [vmem:[#allocation2 + $0x500] sm:$0xff] %v1470
      %1983 = vst [vmem:[#allocation2 + $0x508] sm:$0xff] %v1471
      %1984 = vst [vmem:[#allocation2 + $0x510] sm:$0xff] %v1472
      %1985 = vst [vmem:[#allocation2 + $0x518] sm:$0xff] %v1473
      %1986 = vst [vmem:[#allocation2 + $0x520] sm:$0xff] %v1474
      %1987 = vst [vmem:[#allocation2 + $0x528] sm:$0xff] %v1475
      %1988 = vst [vmem:[#allocation2 + $0x530] sm:$0xff] %v1476
      %1989 = vst [vmem:[#allocation2 + $0x538] sm:$0xff] %v1477
      %1990 = vst [vmem:[#allocation2 + $0x540] sm:$0xff] %v1478
      %1991 = vst [vmem:[#allocation2 + $0x548] sm:$0xff] %v1479
      %1992 = vst [vmem:[#allocation2 + $0x550] sm:$0xff] %v1480
      %1993 = vst [vmem:[#allocation2 + $0x558] sm:$0xff] %v1481
      %1994 = vst [vmem:[#allocation2 + $0x560] sm:$0xff] %v1482
      %1995 = vst [vmem:[#allocation2 + $0x568] sm:$0xff] %v1483
      %1996 = vst [vmem:[#allocation2 + $0x570] sm:$0xff] %v1484
      %1997 = vst [vmem:[#allocation2 + $0x578] sm:$0xff] %v1485
      %1998 = vst [vmem:[#allocation2 + $0x580] sm:$0xff] %v1486
      %1999 = vst [vmem:[#allocation2 + $0x588] sm:$0xff] %v1487
      %2000 = vst [vmem:[#allocation2 + $0x590] sm:$0xff] %v1488
      %2001 = vst [vmem:[#allocation2 + $0x598] sm:$0xff] %v1489
      %2002 = vst [vmem:[#allocation2 + $0x5a0] sm:$0xff] %v1490
      %2003 = vst [vmem:[#allocation2 + $0x5a8] sm:$0xff] %v1491
      %2004 = vst [vmem:[#allocation2 + $0x5b0] sm:$0xff] %v1492
      %2005 = vst [vmem:[#allocation2 + $0x5b8] sm:$0xff] %v1493
      %2006 = vst [vmem:[#allocation2 + $0x5c0] sm:$0xff] %v1494
      %2007 = vst [vmem:[#allocation2 + $0x5c8] sm:$0xff] %v1495
      %2008 = vst [vmem:[#allocation2 + $0x5d0] sm:$0xff] %v1496
      %2009 = vst [vmem:[#allocation2 + $0x5d8] sm:$0xff] %v1497
      %2010 = vst [vmem:[#allocation2 + $0x5e0] sm:$0xff] %v1498
      %2011 = vst [vmem:[#allocation2 + $0x5e8] sm:$0xff] %v1499
      %2012 = vst [vmem:[#allocation2 + $0x5f0] sm:$0xff] %v1500
      %2013 = vst [vmem:[#allocation2 + $0x5f8] sm:$0xff] %v1501
      %2014 = vst [vmem:[#allocation2 + $0x600] sm:$0xff] %v1502
      %2015 = vst [vmem:[#allocation2 + $0x608] sm:$0xff] %v1503
      %2016 = vst [vmem:[#allocation2 + $0x610] sm:$0xff] %v1504
      %2017 = vst [vmem:[#allocation2 + $0x618] sm:$0xff] %v1505
      %2018 = vst [vmem:[#allocation2 + $0x620] sm:$0xff] %v1506
      %2019 = vst [vmem:[#allocation2 + $0x628] sm:$0xff] %v1507
      %2020 = vst [vmem:[#allocation2 + $0x630] sm:$0xff] %v1508
      %2021 = vst [vmem:[#allocation2 + $0x638] sm:$0xff] %v1509
      %2022 = vst [vmem:[#allocation2 + $0x640] sm:$0xff] %v1510
      %2023 = vst [vmem:[#allocation2 + $0x648] sm:$0xff] %v1511
      %2024 = vst [vmem:[#allocation2 + $0x650] sm:$0xff] %v1512
      %2025 = vst [vmem:[#allocation2 + $0x658] sm:$0xff] %v1513
      %2026 = vst [vmem:[#allocation2 + $0x660] sm:$0xff] %v1514
      %2027 = vst [vmem:[#allocation2 + $0x668] sm:$0xff] %v1515
      %2028 = vst [vmem:[#allocation2 + $0x670] sm:$0xff] %v1516
      %2029 = vst [vmem:[#allocation2 + $0x678] sm:$0xff] %v1517
      %2030 = vst [vmem:[#allocation2 + $0x680] sm:$0xff] %v1518
      %2031 = vst [vmem:[#allocation2 + $0x688] sm:$0xff] %v1519
      %2032 = vst [vmem:[#allocation2 + $0x690] sm:$0xff] %v1520
      %2033 = vst [vmem:[#allocation2 + $0x698] sm:$0xff] %v1521
      %2034 = vst [vmem:[#allocation2 + $0x6a0] sm:$0xff] %v1522
      %2035 = vst [vmem:[#allocation2 + $0x6a8] sm:$0xff] %v1523
      %2036 = vst [vmem:[#allocation2 + $0x6b0] sm:$0xff] %v1524
      %2037 = vst [vmem:[#allocation2 + $0x6b8] sm:$0xff] %v1525
      %2038 = vst [vmem:[#allocation2 + $0x6c0] sm:$0xff] %v1526
      %2039 = vst [vmem:[#allocation2 + $0x6c8] sm:$0xff] %v1527
      %2040 = vst [vmem:[#allocation2 + $0x6d0] sm:$0xff] %v1528
      %2041 = vst [vmem:[#allocation2 + $0x6d8] sm:$0xff] %v1529
      %2042 = vst [vmem:[#allocation2 + $0x6e0] sm:$0xff] %v1530
      %2043 = vst [vmem:[#allocation2 + $0x6e8] sm:$0xff] %v1531
      %2044 = vst [vmem:[#allocation2 + $0x6f0] sm:$0xff] %v1532
      %2045 = vst [vmem:[#allocation2 + $0x6f8] sm:$0xff] %v1533
      %2046 = vst [vmem:[#allocation2 + $0x700] sm:$0xff] %v1534
      %2047 = vst [vmem:[#allocation2 + $0x708] sm:$0xff] %v1535
      %2048 = vst [vmem:[#allocation2 + $0x710] sm:$0xff] %v1536
      %2049 = vst [vmem:[#allocation2 + $0x718] sm:$0xff] %v1537
      %2050 = vst [vmem:[#allocation2 + $0x720] sm:$0xff] %v1538
      %2051 = vst [vmem:[#allocation2 + $0x728] sm:$0xff] %v1539
      %2052 = vst [vmem:[#allocation2 + $0x730] sm:$0xff] %v1540
      %2053 = vst [vmem:[#allocation2 + $0x738] sm:$0xff] %v1541
      %2054 = vst [vmem:[#allocation2 + $0x740] sm:$0xff] %v1542
      %2055 = vst [vmem:[#allocation2 + $0x748] sm:$0xff] %v1543
      %2056 = vst [vmem:[#allocation2 + $0x750] sm:$0xff] %v1544
      %2057 = vst [vmem:[#allocation2 + $0x758] sm:$0xff] %v1545
      %2058 = vst [vmem:[#allocation2 + $0x760] sm:$0xff] %v1546
      %2059 = vst [vmem:[#allocation2 + $0x768] sm:$0xff] %v1547
      %2060 = vst [vmem:[#allocation2 + $0x770] sm:$0xff] %v1548
      %2061 = vst [vmem:[#allocation2 + $0x778] sm:$0xff] %v1549
      %2062 = vst [vmem:[#allocation2 + $0x780] sm:$0xff] %v1550
      %2063 = vst [vmem:[#allocation2 + $0x788] sm:$0xff] %v1551
      %2064 = vst [vmem:[#allocation2 + $0x790] sm:$0xff] %v1552
      %2065 = vst [vmem:[#allocation2 + $0x798] sm:$0xff] %v1553
      %2066 = vst [vmem:[#allocation2 + $0x7a0] sm:$0xff] %v1554
      %2067 = vst [vmem:[#allocation2 + $0x7a8] sm:$0xff] %v1555
      %2068 = vst [vmem:[#allocation2 + $0x7b0] sm:$0xff] %v1556
      %2069 = vst [vmem:[#allocation2 + $0x7b8] sm:$0xff] %v1557
      %2070 = vst [vmem:[#allocation2 + $0x7c0] sm:$0xff] %v1558
      %2071 = vst [vmem:[#allocation2 + $0x7c8] sm:$0xff] %v1559
      %2072 = vst [vmem:[#allocation2 + $0x7d0] sm:$0xff] %v1560
      %2073 = vst [vmem:[#allocation2 + $0x7d8] sm:$0xff] %v1561
      %2074 = vst [vmem:[#allocation2 + $0x7e0] sm:$0xff] %v1562
      %2075 = vst [vmem:[#allocation2 + $0x7e8] sm:$0xff] %v1563
      %2076 = vst [vmem:[#allocation2 + $0x7f0] sm:$0xff] %v1564
      %2077 = vst [vmem:[#allocation2 + $0x7f8] sm:$0xff] %v1565
      %v2078 = vld [vmem:[#allocation16] sm:$0xff]
      %v2079 = vld [vmem:[#allocation16 + $0x8] sm:$0xff]
      %v2080 = vld [vmem:[#allocation16 + $0x10] sm:$0xff]
      %v2081 = vld [vmem:[#allocation16 + $0x18] sm:$0xff]
      %v2082 = vld [vmem:[#allocation16 + $0x20] sm:$0xff]
      %v2083 = vld [vmem:[#allocation16 + $0x28] sm:$0xff]
      %v2084 = vld [vmem:[#allocation16 + $0x30] sm:$0xff]
      %v2085 = vld [vmem:[#allocation16 + $0x38] sm:$0xff]
      %v2086 = vld [vmem:[#allocation16 + $0x40] sm:$0xff]
      %v2087 = vld [vmem:[#allocation16 + $0x48] sm:$0xff]
      %v2088 = vld [vmem:[#allocation16 + $0x50] sm:$0xff]
      %v2089 = vld [vmem:[#allocation16 + $0x58] sm:$0xff]
      %v2090 = vld [vmem:[#allocation16 + $0x60] sm:$0xff]
      %v2091 = vld [vmem:[#allocation16 + $0x68] sm:$0xff]
      %v2092 = vld [vmem:[#allocation16 + $0x70] sm:$0xff]
      %v2093 = vld [vmem:[#allocation16 + $0x78] sm:$0xff]
      %v2094 = vld [vmem:[#allocation16 + $0x80] sm:$0xff]
      %v2095 = vld [vmem:[#allocation16 + $0x88] sm:$0xff]
      %v2096 = vld [vmem:[#allocation16 + $0x90] sm:$0xff]
      %v2097 = vld [vmem:[#allocation16 + $0x98] sm:$0xff]
      %v2098 = vld [vmem:[#allocation16 + $0xa0] sm:$0xff]
      %v2099 = vld [vmem:[#allocation16 + $0xa8] sm:$0xff]
      %v2100 = vld [vmem:[#allocation16 + $0xb0] sm:$0xff]
      %v2101 = vld [vmem:[#allocation16 + $0xb8] sm:$0xff]
      %v2102 = vld [vmem:[#allocation16 + $0xc0] sm:$0xff]
      %v2103 = vld [vmem:[#allocation16 + $0xc8] sm:$0xff]
      %v2104 = vld [vmem:[#allocation16 + $0xd0] sm:$0xff]
      %v2105 = vld [vmem:[#allocation16 + $0xd8] sm:$0xff]
      %v2106 = vld [vmem:[#allocation16 + $0xe0] sm:$0xff]
      %v2107 = vld [vmem:[#allocation16 + $0xe8] sm:$0xff]
      %v2108 = vld [vmem:[#allocation16 + $0xf0] sm:$0xff]
      %v2109 = vld [vmem:[#allocation16 + $0xf8] sm:$0xff]
      %v2110 = vld [vmem:[#allocation16 + $0x100] sm:$0xff]
      %v2111 = vld [vmem:[#allocation16 + $0x108] sm:$0xff]
      %v2112 = vld [vmem:[#allocation16 + $0x110] sm:$0xff]
      %v2113 = vld [vmem:[#allocation16 + $0x118] sm:$0xff]
      %v2114 = vld [vmem:[#allocation16 + $0x120] sm:$0xff]
      %v2115 = vld [vmem:[#allocation16 + $0x128] sm:$0xff]
      %v2116 = vld [vmem:[#allocation16 + $0x130] sm:$0xff]
      %v2117 = vld [vmem:[#allocation16 + $0x138] sm:$0xff]
      %v2118 = vld [vmem:[#allocation16 + $0x140] sm:$0xff]
      %v2119 = vld [vmem:[#allocation16 + $0x148] sm:$0xff]
      %v2120 = vld [vmem:[#allocation16 + $0x150] sm:$0xff]
      %v2121 = vld [vmem:[#allocation16 + $0x158] sm:$0xff]
      %v2122 = vld [vmem:[#allocation16 + $0x160] sm:$0xff]
      %v2123 = vld [vmem:[#allocation16 + $0x168] sm:$0xff]
      %v2124 = vld [vmem:[#allocation16 + $0x170] sm:$0xff]
      %v2125 = vld [vmem:[#allocation16 + $0x178] sm:$0xff]
      %v2126 = vld [vmem:[#allocation16 + $0x180] sm:$0xff]
      %v2127 = vld [vmem:[#allocation16 + $0x188] sm:$0xff]
      %v2128 = vld [vmem:[#allocation16 + $0x190] sm:$0xff]
      %v2129 = vld [vmem:[#allocation16 + $0x198] sm:$0xff]
      %v2130 = vld [vmem:[#allocation16 + $0x1a0] sm:$0xff]
      %v2131 = vld [vmem:[#allocation16 + $0x1a8] sm:$0xff]
      %v2132 = vld [vmem:[#allocation16 + $0x1b0] sm:$0xff]
      %v2133 = vld [vmem:[#allocation16 + $0x1b8] sm:$0xff]
      %v2134 = vld [vmem:[#allocation16 + $0x1c0] sm:$0xff]
      %v2135 = vld [vmem:[#allocation16 + $0x1c8] sm:$0xff]
      %v2136 = vld [vmem:[#allocation16 + $0x1d0] sm:$0xff]
      %v2137 = vld [vmem:[#allocation16 + $0x1d8] sm:$0xff]
      %v2138 = vld [vmem:[#allocation16 + $0x1e0] sm:$0xff]
      %v2139 = vld [vmem:[#allocation16 + $0x1e8] sm:$0xff]
      %v2140 = vld [vmem:[#allocation16 + $0x1f0] sm:$0xff]
      %v2141 = vld [vmem:[#allocation16 + $0x1f8] sm:$0xff]
      %v2142 = vld [vmem:[#allocation16 + $0x200] sm:$0xff]
      %v2143 = vld [vmem:[#allocation16 + $0x208] sm:$0xff]
      %v2144 = vld [vmem:[#allocation16 + $0x210] sm:$0xff]
      %v2145 = vld [vmem:[#allocation16 + $0x218] sm:$0xff]
      %v2146 = vld [vmem:[#allocation16 + $0x220] sm:$0xff]
      %v2147 = vld [vmem:[#allocation16 + $0x228] sm:$0xff]
      %v2148 = vld [vmem:[#allocation16 + $0x230] sm:$0xff]
      %v2149 = vld [vmem:[#allocation16 + $0x238] sm:$0xff]
      %v2150 = vld [vmem:[#allocation16 + $0x240] sm:$0xff]
      %v2151 = vld [vmem:[#allocation16 + $0x248] sm:$0xff]
      %v2152 = vld [vmem:[#allocation16 + $0x250] sm:$0xff]
      %v2153 = vld [vmem:[#allocation16 + $0x258] sm:$0xff]
      %v2154 = vld [vmem:[#allocation16 + $0x260] sm:$0xff]
      %v2155 = vld [vmem:[#allocation16 + $0x268] sm:$0xff]
      %v2156 = vld [vmem:[#allocation16 + $0x270] sm:$0xff]
      %v2157 = vld [vmem:[#allocation16 + $0x278] sm:$0xff]
      %v2158 = vld [vmem:[#allocation16 + $0x280] sm:$0xff]
      %v2159 = vld [vmem:[#allocation16 + $0x288] sm:$0xff]
      %v2160 = vld [vmem:[#allocation16 + $0x290] sm:$0xff]
      %v2161 = vld [vmem:[#allocation16 + $0x298] sm:$0xff]
      %v2162 = vld [vmem:[#allocation16 + $0x2a0] sm:$0xff]
      %v2163 = vld [vmem:[#allocation16 + $0x2a8] sm:$0xff]
      %v2164 = vld [vmem:[#allocation16 + $0x2b0] sm:$0xff]
      %v2165 = vld [vmem:[#allocation16 + $0x2b8] sm:$0xff]
      %v2166 = vld [vmem:[#allocation16 + $0x2c0] sm:$0xff]
      %v2167 = vld [vmem:[#allocation16 + $0x2c8] sm:$0xff]
      %v2168 = vld [vmem:[#allocation16 + $0x2d0] sm:$0xff]
      %v2169 = vld [vmem:[#allocation16 + $0x2d8] sm:$0xff]
      %v2170 = vld [vmem:[#allocation16 + $0x2e0] sm:$0xff]
      %v2171 = vld [vmem:[#allocation16 + $0x2e8] sm:$0xff]
      %v2172 = vld [vmem:[#allocation16 + $0x2f0] sm:$0xff]
      %v2173 = vld [vmem:[#allocation16 + $0x2f8] sm:$0xff]
      %v2174 = vld [vmem:[#allocation16 + $0x300] sm:$0xff]
      %v2175 = vld [vmem:[#allocation16 + $0x308] sm:$0xff]
      %v2176 = vld [vmem:[#allocation16 + $0x310] sm:$0xff]
      %v2177 = vld [vmem:[#allocation16 + $0x318] sm:$0xff]
      %v2178 = vld [vmem:[#allocation16 + $0x320] sm:$0xff]
      %v2179 = vld [vmem:[#allocation16 + $0x328] sm:$0xff]
      %v2180 = vld [vmem:[#allocation16 + $0x330] sm:$0xff]
      %v2181 = vld [vmem:[#allocation16 + $0x338] sm:$0xff]
      %v2182 = vld [vmem:[#allocation16 + $0x340] sm:$0xff]
      %v2183 = vld [vmem:[#allocation16 + $0x348] sm:$0xff]
      %v2184 = vld [vmem:[#allocation16 + $0x350] sm:$0xff]
      %v2185 = vld [vmem:[#allocation16 + $0x358] sm:$0xff]
      %v2186 = vld [vmem:[#allocation16 + $0x360] sm:$0xff]
      %v2187 = vld [vmem:[#allocation16 + $0x368] sm:$0xff]
      %v2188 = vld [vmem:[#allocation16 + $0x370] sm:$0xff]
      %v2189 = vld [vmem:[#allocation16 + $0x378] sm:$0xff]
      %v2190 = vld [vmem:[#allocation16 + $0x380] sm:$0xff]
      %v2191 = vld [vmem:[#allocation16 + $0x388] sm:$0xff]
      %v2192 = vld [vmem:[#allocation16 + $0x390] sm:$0xff]
      %v2193 = vld [vmem:[#allocation16 + $0x398] sm:$0xff]
      %v2194 = vld [vmem:[#allocation16 + $0x3a0] sm:$0xff]
      %v2195 = vld [vmem:[#allocation16 + $0x3a8] sm:$0xff]
      %v2196 = vld [vmem:[#allocation16 + $0x3b0] sm:$0xff]
      %v2197 = vld [vmem:[#allocation16 + $0x3b8] sm:$0xff]
      %v2198 = vld [vmem:[#allocation16 + $0x3c0] sm:$0xff]
      %v2199 = vld [vmem:[#allocation16 + $0x3c8] sm:$0xff]
      %v2200 = vld [vmem:[#allocation16 + $0x3d0] sm:$0xff]
      %v2201 = vld [vmem:[#allocation16 + $0x3d8] sm:$0xff]
      %v2202 = vld [vmem:[#allocation16 + $0x3e0] sm:$0xff]
      %v2203 = vld [vmem:[#allocation16 + $0x3e8] sm:$0xff]
      %v2204 = vld [vmem:[#allocation16 + $0x3f0] sm:$0xff]
      %v2205 = vld [vmem:[#allocation16 + $0x3f8] sm:$0xff]
      %v2206 = vld [vmem:[#allocation16 + $0x400] sm:$0xff]
      %v2207 = vld [vmem:[#allocation16 + $0x408] sm:$0xff]
      %v2208 = vld [vmem:[#allocation16 + $0x410] sm:$0xff]
      %v2209 = vld [vmem:[#allocation16 + $0x418] sm:$0xff]
      %v2210 = vld [vmem:[#allocation16 + $0x420] sm:$0xff]
      %v2211 = vld [vmem:[#allocation16 + $0x428] sm:$0xff]
      %v2212 = vld [vmem:[#allocation16 + $0x430] sm:$0xff]
      %v2213 = vld [vmem:[#allocation16 + $0x438] sm:$0xff]
      %v2214 = vld [vmem:[#allocation16 + $0x440] sm:$0xff]
      %v2215 = vld [vmem:[#allocation16 + $0x448] sm:$0xff]
      %v2216 = vld [vmem:[#allocation16 + $0x450] sm:$0xff]
      %v2217 = vld [vmem:[#allocation16 + $0x458] sm:$0xff]
      %v2218 = vld [vmem:[#allocation16 + $0x460] sm:$0xff]
      %v2219 = vld [vmem:[#allocation16 + $0x468] sm:$0xff]
      %v2220 = vld [vmem:[#allocation16 + $0x470] sm:$0xff]
      %v2221 = vld [vmem:[#allocation16 + $0x478] sm:$0xff]
      %v2222 = vld [vmem:[#allocation16 + $0x480] sm:$0xff]
      %v2223 = vld [vmem:[#allocation16 + $0x488] sm:$0xff]
      %v2224 = vld [vmem:[#allocation16 + $0x490] sm:$0xff]
      %v2225 = vld [vmem:[#allocation16 + $0x498] sm:$0xff]
      %v2226 = vld [vmem:[#allocation16 + $0x4a0] sm:$0xff]
      %v2227 = vld [vmem:[#allocation16 + $0x4a8] sm:$0xff]
      %v2228 = vld [vmem:[#allocation16 + $0x4b0] sm:$0xff]
      %v2229 = vld [vmem:[#allocation16 + $0x4b8] sm:$0xff]
      %v2230 = vld [vmem:[#allocation16 + $0x4c0] sm:$0xff]
      %v2231 = vld [vmem:[#allocation16 + $0x4c8] sm:$0xff]
      %v2232 = vld [vmem:[#allocation16 + $0x4d0] sm:$0xff]
      %v2233 = vld [vmem:[#allocation16 + $0x4d8] sm:$0xff]
      %v2234 = vld [vmem:[#allocation16 + $0x4e0] sm:$0xff]
      %v2235 = vld [vmem:[#allocation16 + $0x4e8] sm:$0xff]
      %v2236 = vld [vmem:[#allocation16 + $0x4f0] sm:$0xff]
      %v2237 = vld [vmem:[#allocation16 + $0x4f8] sm:$0xff]
      %v2238 = vld [vmem:[#allocation16 + $0x500] sm:$0xff]
      %v2239 = vld [vmem:[#allocation16 + $0x508] sm:$0xff]
      %v2240 = vld [vmem:[#allocation16 + $0x510] sm:$0xff]
      %v2241 = vld [vmem:[#allocation16 + $0x518] sm:$0xff]
      %v2242 = vld [vmem:[#allocation16 + $0x520] sm:$0xff]
      %v2243 = vld [vmem:[#allocation16 + $0x528] sm:$0xff]
      %v2244 = vld [vmem:[#allocation16 + $0x530] sm:$0xff]
      %v2245 = vld [vmem:[#allocation16 + $0x538] sm:$0xff]
      %v2246 = vld [vmem:[#allocation16 + $0x540] sm:$0xff]
      %v2247 = vld [vmem:[#allocation16 + $0x548] sm:$0xff]
      %v2248 = vld [vmem:[#allocation16 + $0x550] sm:$0xff]
      %v2249 = vld [vmem:[#allocation16 + $0x558] sm:$0xff]
      %v2250 = vld [vmem:[#allocation16 + $0x560] sm:$0xff]
      %v2251 = vld [vmem:[#allocation16 + $0x568] sm:$0xff]
      %v2252 = vld [vmem:[#allocation16 + $0x570] sm:$0xff]
      %v2253 = vld [vmem:[#allocation16 + $0x578] sm:$0xff]
      %v2254 = vld [vmem:[#allocation16 + $0x580] sm:$0xff]
      %v2255 = vld [vmem:[#allocation16 + $0x588] sm:$0xff]
      %v2256 = vld [vmem:[#allocation16 + $0x590] sm:$0xff]
      %v2257 = vld [vmem:[#allocation16 + $0x598] sm:$0xff]
      %v2258 = vld [vmem:[#allocation16 + $0x5a0] sm:$0xff]
      %v2259 = vld [vmem:[#allocation16 + $0x5a8] sm:$0xff]
      %v2260 = vld [vmem:[#allocation16 + $0x5b0] sm:$0xff]
      %v2261 = vld [vmem:[#allocation16 + $0x5b8] sm:$0xff]
      %v2262 = vld [vmem:[#allocation16 + $0x5c0] sm:$0xff]
      %v2263 = vld [vmem:[#allocation16 + $0x5c8] sm:$0xff]
      %v2264 = vld [vmem:[#allocation16 + $0x5d0] sm:$0xff]
      %v2265 = vld [vmem:[#allocation16 + $0x5d8] sm:$0xff]
      %v2266 = vld [vmem:[#allocation16 + $0x5e0] sm:$0xff]
      %v2267 = vld [vmem:[#allocation16 + $0x5e8] sm:$0xff]
      %v2268 = vld [vmem:[#allocation16 + $0x5f0] sm:$0xff]
      %v2269 = vld [vmem:[#allocation16 + $0x5f8] sm:$0xff]
      %v2270 = vld [vmem:[#allocation16 + $0x600] sm:$0xff]
      %v2271 = vld [vmem:[#allocation16 + $0x608] sm:$0xff]
      %v2272 = vld [vmem:[#allocation16 + $0x610] sm:$0xff]
      %v2273 = vld [vmem:[#allocation16 + $0x618] sm:$0xff]
      %v2274 = vld [vmem:[#allocation16 + $0x620] sm:$0xff]
      %v2275 = vld [vmem:[#allocation16 + $0x628] sm:$0xff]
      %v2276 = vld [vmem:[#allocation16 + $0x630] sm:$0xff]
      %v2277 = vld [vmem:[#allocation16 + $0x638] sm:$0xff]
      %v2278 = vld [vmem:[#allocation16 + $0x640] sm:$0xff]
      %v2279 = vld [vmem:[#allocation16 + $0x648] sm:$0xff]
      %v2280 = vld [vmem:[#allocation16 + $0x650] sm:$0xff]
      %v2281 = vld [vmem:[#allocation16 + $0x658] sm:$0xff]
      %v2282 = vld [vmem:[#allocation16 + $0x660] sm:$0xff]
      %v2283 = vld [vmem:[#allocation16 + $0x668] sm:$0xff]
      %v2284 = vld [vmem:[#allocation16 + $0x670] sm:$0xff]
      %v2285 = vld [vmem:[#allocation16 + $0x678] sm:$0xff]
      %v2286 = vld [vmem:[#allocation16 + $0x680] sm:$0xff]
      %v2287 = vld [vmem:[#allocation16 + $0x688] sm:$0xff]
      %v2288 = vld [vmem:[#allocation16 + $0x690] sm:$0xff]
      %v2289 = vld [vmem:[#allocation16 + $0x698] sm:$0xff]
      %v2290 = vld [vmem:[#allocation16 + $0x6a0] sm:$0xff]
      %v2291 = vld [vmem:[#allocation16 + $0x6a8] sm:$0xff]
      %v2292 = vld [vmem:[#allocation16 + $0x6b0] sm:$0xff]
      %v2293 = vld [vmem:[#allocation16 + $0x6b8] sm:$0xff]
      %v2294 = vld [vmem:[#allocation16 + $0x6c0] sm:$0xff]
      %v2295 = vld [vmem:[#allocation16 + $0x6c8] sm:$0xff]
      %v2296 = vld [vmem:[#allocation16 + $0x6d0] sm:$0xff]
      %v2297 = vld [vmem:[#allocation16 + $0x6d8] sm:$0xff]
      %v2298 = vld [vmem:[#allocation16 + $0x6e0] sm:$0xff]
      %v2299 = vld [vmem:[#allocation16 + $0x6e8] sm:$0xff]
      %v2300 = vld [vmem:[#allocation16 + $0x6f0] sm:$0xff]
      %v2301 = vld [vmem:[#allocation16 + $0x6f8] sm:$0xff]
      %v2302 = vld [vmem:[#allocation16 + $0x700] sm:$0xff]
      %v2303 = vld [vmem:[#allocation16 + $0x708] sm:$0xff]
      %v2304 = vld [vmem:[#allocation16 + $0x710] sm:$0xff]
      %v2305 = vld [vmem:[#allocation16 + $0x718] sm:$0xff]
      %v2306 = vld [vmem:[#allocation16 + $0x720] sm:$0xff]
      %v2307 = vld [vmem:[#allocation16 + $0x728] sm:$0xff]
      %v2308 = vld [vmem:[#allocation16 + $0x730] sm:$0xff]
      %v2309 = vld [vmem:[#allocation16 + $0x738] sm:$0xff]
      %v2310 = vld [vmem:[#allocation16 + $0x740] sm:$0xff]
      %v2311 = vld [vmem:[#allocation16 + $0x748] sm:$0xff]
      %v2312 = vld [vmem:[#allocation16 + $0x750] sm:$0xff]
      %v2313 = vld [vmem:[#allocation16 + $0x758] sm:$0xff]
      %v2314 = vld [vmem:[#allocation16 + $0x760] sm:$0xff]
      %v2315 = vld [vmem:[#allocation16 + $0x768] sm:$0xff]
      %v2316 = vld [vmem:[#allocation16 + $0x770] sm:$0xff]
      %v2317 = vld [vmem:[#allocation16 + $0x778] sm:$0xff]
      %v2318 = vld [vmem:[#allocation16 + $0x780] sm:$0xff]
      %v2319 = vld [vmem:[#allocation16 + $0x788] sm:$0xff]
      %v2320 = vld [vmem:[#allocation16 + $0x790] sm:$0xff]
      %v2321 = vld [vmem:[#allocation16 + $0x798] sm:$0xff]
      %v2322 = vld [vmem:[#allocation16 + $0x7a0] sm:$0xff]
      %v2323 = vld [vmem:[#allocation16 + $0x7a8] sm:$0xff]
      %v2324 = vld [vmem:[#allocation16 + $0x7b0] sm:$0xff]
      %v2325 = vld [vmem:[#allocation16 + $0x7b8] sm:$0xff]
      %v2326 = vld [vmem:[#allocation16 + $0x7c0] sm:$0xff]
      %v2327 = vld [vmem:[#allocation16 + $0x7c8] sm:$0xff]
      %v2328 = vld [vmem:[#allocation16 + $0x7d0] sm:$0xff]
      %v2329 = vld [vmem:[#allocation16 + $0x7d8] sm:$0xff]
      %v2330 = vld [vmem:[#allocation16 + $0x7e0] sm:$0xff]
      %v2331 = vld [vmem:[#allocation16 + $0x7e8] sm:$0xff]
      %v2332 = vld [vmem:[#allocation16 + $0x7f0] sm:$0xff]
      %v2333 = vld [vmem:[#allocation16 + $0x7f8] sm:$0xff]
      %v2334 = vunpack.c.l.s8.bf16 %v2078
      %v2335 = vunpack.c.l.s8.bf16 %v2079
      %v2336 = vunpack.c.l.s8.bf16 %v2080
      %v2337 = vunpack.c.l.s8.bf16 %v2081
      %v2338 = vunpack.c.l.s8.bf16 %v2082
      %v2339 = vunpack.c.l.s8.bf16 %v2083
      %v2340 = vunpack.c.l.s8.bf16 %v2084
      %v2341 = vunpack.c.l.s8.bf16 %v2085
      %v2342 = vunpack.c.h.s8.bf16 %v2078
      %v2343 = vunpack.c.h.s8.bf16 %v2079
      %v2344 = vunpack.c.h.s8.bf16 %v2080
      %v2345 = vunpack.c.h.s8.bf16 %v2081
      %v2346 = vunpack.c.h.s8.bf16 %v2082
      %v2347 = vunpack.c.h.s8.bf16 %v2083
      %v2348 = vunpack.c.h.s8.bf16 %v2084
      %v2349 = vunpack.c.h.s8.bf16 %v2085
      %v2350 = vunpack.c.l.s8.bf16 %v2086
      %v2351 = vunpack.c.l.s8.bf16 %v2087
      %v2352 = vunpack.c.l.s8.bf16 %v2088
      %v2353 = vunpack.c.l.s8.bf16 %v2089
      %v2354 = vunpack.c.l.s8.bf16 %v2090
      %v2355 = vunpack.c.l.s8.bf16 %v2091
      %v2356 = vunpack.c.l.s8.bf16 %v2092
      %v2357 = vunpack.c.l.s8.bf16 %v2093
      %v2358 = vunpack.c.h.s8.bf16 %v2086
      %v2359 = vunpack.c.h.s8.bf16 %v2087
      %v2360 = vunpack.c.h.s8.bf16 %v2088
      %v2361 = vunpack.c.h.s8.bf16 %v2089
      %v2362 = vunpack.c.h.s8.bf16 %v2090
      %v2363 = vunpack.c.h.s8.bf16 %v2091
      %v2364 = vunpack.c.h.s8.bf16 %v2092
      %v2365 = vunpack.c.h.s8.bf16 %v2093
      %v2366 = vunpack.c.l.s8.bf16 %v2094
      %v2367 = vunpack.c.l.s8.bf16 %v2095
      %v2368 = vunpack.c.l.s8.bf16 %v2096
      %v2369 = vunpack.c.l.s8.bf16 %v2097
      %v2370 = vunpack.c.l.s8.bf16 %v2098
      %v2371 = vunpack.c.l.s8.bf16 %v2099
      %v2372 = vunpack.c.l.s8.bf16 %v2100
      %v2373 = vunpack.c.l.s8.bf16 %v2101
      %v2374 = vunpack.c.h.s8.bf16 %v2094
      %v2375 = vunpack.c.h.s8.bf16 %v2095
      %v2376 = vunpack.c.h.s8.bf16 %v2096
      %v2377 = vunpack.c.h.s8.bf16 %v2097
      %v2378 = vunpack.c.h.s8.bf16 %v2098
      %v2379 = vunpack.c.h.s8.bf16 %v2099
      %v2380 = vunpack.c.h.s8.bf16 %v2100
      %v2381 = vunpack.c.h.s8.bf16 %v2101
      %v2382 = vunpack.c.l.s8.bf16 %v2102
      %v2383 = vunpack.c.l.s8.bf16 %v2103
      %v2384 = vunpack.c.l.s8.bf16 %v2104
      %v2385 = vunpack.c.l.s8.bf16 %v2105
      %v2386 = vunpack.c.l.s8.bf16 %v2106
      %v2387 = vunpack.c.l.s8.bf16 %v2107
      %v2388 = vunpack.c.l.s8.bf16 %v2108
      %v2389 = vunpack.c.l.s8.bf16 %v2109
      %v2390 = vunpack.c.h.s8.bf16 %v2102
      %v2391 = vunpack.c.h.s8.bf16 %v2103
      %v2392 = vunpack.c.h.s8.bf16 %v2104
      %v2393 = vunpack.c.h.s8.bf16 %v2105
      %v2394 = vunpack.c.h.s8.bf16 %v2106
      %v2395 = vunpack.c.h.s8.bf16 %v2107
      %v2396 = vunpack.c.h.s8.bf16 %v2108
      %v2397 = vunpack.c.h.s8.bf16 %v2109
      %v2398 = vunpack.c.l.s8.bf16 %v2110
      %v2399 = vunpack.c.l.s8.bf16 %v2111
      %v2400 = vunpack.c.l.s8.bf16 %v2112
      %v2401 = vunpack.c.l.s8.bf16 %v2113
      %v2402 = vunpack.c.l.s8.bf16 %v2114
      %v2403 = vunpack.c.l.s8.bf16 %v2115
      %v2404 = vunpack.c.l.s8.bf16 %v2116
      %v2405 = vunpack.c.l.s8.bf16 %v2117
      %v2406 = vunpack.c.h.s8.bf16 %v2110
      %v2407 = vunpack.c.h.s8.bf16 %v2111
      %v2408 = vunpack.c.h.s8.bf16 %v2112
      %v2409 = vunpack.c.h.s8.bf16 %v2113
      %v2410 = vunpack.c.h.s8.bf16 %v2114
      %v2411 = vunpack.c.h.s8.bf16 %v2115
      %v2412 = vunpack.c.h.s8.bf16 %v2116
      %v2413 = vunpack.c.h.s8.bf16 %v2117
      %v2414 = vunpack.c.l.s8.bf16 %v2118
      %v2415 = vunpack.c.l.s8.bf16 %v2119
      %v2416 = vunpack.c.l.s8.bf16 %v2120
      %v2417 = vunpack.c.l.s8.bf16 %v2121
      %v2418 = vunpack.c.l.s8.bf16 %v2122
      %v2419 = vunpack.c.l.s8.bf16 %v2123
      %v2420 = vunpack.c.l.s8.bf16 %v2124
      %v2421 = vunpack.c.l.s8.bf16 %v2125
      %v2422 = vunpack.c.h.s8.bf16 %v2118
      %v2423 = vunpack.c.h.s8.bf16 %v2119
      %v2424 = vunpack.c.h.s8.bf16 %v2120
      %v2425 = vunpack.c.h.s8.bf16 %v2121
      %v2426 = vunpack.c.h.s8.bf16 %v2122
      %v2427 = vunpack.c.h.s8.bf16 %v2123
      %v2428 = vunpack.c.h.s8.bf16 %v2124
      %v2429 = vunpack.c.h.s8.bf16 %v2125
      %v2430 = vunpack.c.l.s8.bf16 %v2126
      %v2431 = vunpack.c.l.s8.bf16 %v2127
      %v2432 = vunpack.c.l.s8.bf16 %v2128
      %v2433 = vunpack.c.l.s8.bf16 %v2129
      %v2434 = vunpack.c.l.s8.bf16 %v2130
      %v2435 = vunpack.c.l.s8.bf16 %v2131
      %v2436 = vunpack.c.l.s8.bf16 %v2132
      %v2437 = vunpack.c.l.s8.bf16 %v2133
      %v2438 = vunpack.c.h.s8.bf16 %v2126
      %v2439 = vunpack.c.h.s8.bf16 %v2127
      %v2440 = vunpack.c.h.s8.bf16 %v2128
      %v2441 = vunpack.c.h.s8.bf16 %v2129
      %v2442 = vunpack.c.h.s8.bf16 %v2130
      %v2443 = vunpack.c.h.s8.bf16 %v2131
      %v2444 = vunpack.c.h.s8.bf16 %v2132
      %v2445 = vunpack.c.h.s8.bf16 %v2133
      %v2446 = vunpack.c.l.s8.bf16 %v2134
      %v2447 = vunpack.c.l.s8.bf16 %v2135
      %v2448 = vunpack.c.l.s8.bf16 %v2136
      %v2449 = vunpack.c.l.s8.bf16 %v2137
      %v2450 = vunpack.c.l.s8.bf16 %v2138
      %v2451 = vunpack.c.l.s8.bf16 %v2139
      %v2452 = vunpack.c.l.s8.bf16 %v2140
      %v2453 = vunpack.c.l.s8.bf16 %v2141
      %v2454 = vunpack.c.h.s8.bf16 %v2134
      %v2455 = vunpack.c.h.s8.bf16 %v2135
      %v2456 = vunpack.c.h.s8.bf16 %v2136
      %v2457 = vunpack.c.h.s8.bf16 %v2137
      %v2458 = vunpack.c.h.s8.bf16 %v2138
      %v2459 = vunpack.c.h.s8.bf16 %v2139
      %v2460 = vunpack.c.h.s8.bf16 %v2140
      %v2461 = vunpack.c.h.s8.bf16 %v2141
      %v2462 = vunpack.c.l.s8.bf16 %v2142
      %v2463 = vunpack.c.l.s8.bf16 %v2143
      %v2464 = vunpack.c.l.s8.bf16 %v2144
      %v2465 = vunpack.c.l.s8.bf16 %v2145
      %v2466 = vunpack.c.l.s8.bf16 %v2146
      %v2467 = vunpack.c.l.s8.bf16 %v2147
      %v2468 = vunpack.c.l.s8.bf16 %v2148
      %v2469 = vunpack.c.l.s8.bf16 %v2149
      %v2470 = vunpack.c.h.s8.bf16 %v2142
      %v2471 = vunpack.c.h.s8.bf16 %v2143
      %v2472 = vunpack.c.h.s8.bf16 %v2144
      %v2473 = vunpack.c.h.s8.bf16 %v2145
      %v2474 = vunpack.c.h.s8.bf16 %v2146
      %v2475 = vunpack.c.h.s8.bf16 %v2147
      %v2476 = vunpack.c.h.s8.bf16 %v2148
      %v2477 = vunpack.c.h.s8.bf16 %v2149
      %v2478 = vunpack.c.l.s8.bf16 %v2150
      %v2479 = vunpack.c.l.s8.bf16 %v2151
      %v2480 = vunpack.c.l.s8.bf16 %v2152
      %v2481 = vunpack.c.l.s8.bf16 %v2153
      %v2482 = vunpack.c.l.s8.bf16 %v2154
      %v2483 = vunpack.c.l.s8.bf16 %v2155
      %v2484 = vunpack.c.l.s8.bf16 %v2156
      %v2485 = vunpack.c.l.s8.bf16 %v2157
      %v2486 = vunpack.c.h.s8.bf16 %v2150
      %v2487 = vunpack.c.h.s8.bf16 %v2151
      %v2488 = vunpack.c.h.s8.bf16 %v2152
      %v2489 = vunpack.c.h.s8.bf16 %v2153
      %v2490 = vunpack.c.h.s8.bf16 %v2154
      %v2491 = vunpack.c.h.s8.bf16 %v2155
      %v2492 = vunpack.c.h.s8.bf16 %v2156
      %v2493 = vunpack.c.h.s8.bf16 %v2157
      %v2494 = vunpack.c.l.s8.bf16 %v2158
      %v2495 = vunpack.c.l.s8.bf16 %v2159
      %v2496 = vunpack.c.l.s8.bf16 %v2160
      %v2497 = vunpack.c.l.s8.bf16 %v2161
      %v2498 = vunpack.c.l.s8.bf16 %v2162
      %v2499 = vunpack.c.l.s8.bf16 %v2163
      %v2500 = vunpack.c.l.s8.bf16 %v2164
      %v2501 = vunpack.c.l.s8.bf16 %v2165
      %v2502 = vunpack.c.h.s8.bf16 %v2158
      %v2503 = vunpack.c.h.s8.bf16 %v2159
      %v2504 = vunpack.c.h.s8.bf16 %v2160
      %v2505 = vunpack.c.h.s8.bf16 %v2161
      %v2506 = vunpack.c.h.s8.bf16 %v2162
      %v2507 = vunpack.c.h.s8.bf16 %v2163
      %v2508 = vunpack.c.h.s8.bf16 %v2164
      %v2509 = vunpack.c.h.s8.bf16 %v2165
      %v2510 = vunpack.c.l.s8.bf16 %v2166
      %v2511 = vunpack.c.l.s8.bf16 %v2167
      %v2512 = vunpack.c.l.s8.bf16 %v2168
      %v2513 = vunpack.c.l.s8.bf16 %v2169
      %v2514 = vunpack.c.l.s8.bf16 %v2170
      %v2515 = vunpack.c.l.s8.bf16 %v2171
      %v2516 = vunpack.c.l.s8.bf16 %v2172
      %v2517 = vunpack.c.l.s8.bf16 %v2173
      %v2518 = vunpack.c.h.s8.bf16 %v2166
      %v2519 = vunpack.c.h.s8.bf16 %v2167
      %v2520 = vunpack.c.h.s8.bf16 %v2168
      %v2521 = vunpack.c.h.s8.bf16 %v2169
      %v2522 = vunpack.c.h.s8.bf16 %v2170
      %v2523 = vunpack.c.h.s8.bf16 %v2171
      %v2524 = vunpack.c.h.s8.bf16 %v2172
      %v2525 = vunpack.c.h.s8.bf16 %v2173
      %v2526 = vunpack.c.l.s8.bf16 %v2174
      %v2527 = vunpack.c.l.s8.bf16 %v2175
      %v2528 = vunpack.c.l.s8.bf16 %v2176
      %v2529 = vunpack.c.l.s8.bf16 %v2177
      %v2530 = vunpack.c.l.s8.bf16 %v2178
      %v2531 = vunpack.c.l.s8.bf16 %v2179
      %v2532 = vunpack.c.l.s8.bf16 %v2180
      %v2533 = vunpack.c.l.s8.bf16 %v2181
      %v2534 = vunpack.c.h.s8.bf16 %v2174
      %v2535 = vunpack.c.h.s8.bf16 %v2175
      %v2536 = vunpack.c.h.s8.bf16 %v2176
      %v2537 = vunpack.c.h.s8.bf16 %v2177
      %v2538 = vunpack.c.h.s8.bf16 %v2178
      %v2539 = vunpack.c.h.s8.bf16 %v2179
      %v2540 = vunpack.c.h.s8.bf16 %v2180
      %v2541 = vunpack.c.h.s8.bf16 %v2181
      %v2542 = vunpack.c.l.s8.bf16 %v2182
      %v2543 = vunpack.c.l.s8.bf16 %v2183
      %v2544 = vunpack.c.l.s8.bf16 %v2184
      %v2545 = vunpack.c.l.s8.bf16 %v2185
      %v2546 = vunpack.c.l.s8.bf16 %v2186
      %v2547 = vunpack.c.l.s8.bf16 %v2187
      %v2548 = vunpack.c.l.s8.bf16 %v2188
      %v2549 = vunpack.c.l.s8.bf16 %v2189
      %v2550 = vunpack.c.h.s8.bf16 %v2182
      %v2551 = vunpack.c.h.s8.bf16 %v2183
      %v2552 = vunpack.c.h.s8.bf16 %v2184
      %v2553 = vunpack.c.h.s8.bf16 %v2185
      %v2554 = vunpack.c.h.s8.bf16 %v2186
      %v2555 = vunpack.c.h.s8.bf16 %v2187
      %v2556 = vunpack.c.h.s8.bf16 %v2188
      %v2557 = vunpack.c.h.s8.bf16 %v2189
      %v2558 = vunpack.c.l.s8.bf16 %v2190
      %v2559 = vunpack.c.l.s8.bf16 %v2191
      %v2560 = vunpack.c.l.s8.bf16 %v2192
      %v2561 = vunpack.c.l.s8.bf16 %v2193
      %v2562 = vunpack.c.l.s8.bf16 %v2194
      %v2563 = vunpack.c.l.s8.bf16 %v2195
      %v2564 = vunpack.c.l.s8.bf16 %v2196
      %v2565 = vunpack.c.l.s8.bf16 %v2197
      %v2566 = vunpack.c.h.s8.bf16 %v2190
      %v2567 = vunpack.c.h.s8.bf16 %v2191
      %v2568 = vunpack.c.h.s8.bf16 %v2192
      %v2569 = vunpack.c.h.s8.bf16 %v2193
      %v2570 = vunpack.c.h.s8.bf16 %v2194
      %v2571 = vunpack.c.h.s8.bf16 %v2195
      %v2572 = vunpack.c.h.s8.bf16 %v2196
      %v2573 = vunpack.c.h.s8.bf16 %v2197
      %v2574 = vunpack.c.l.s8.bf16 %v2198
      %v2575 = vunpack.c.l.s8.bf16 %v2199
      %v2576 = vunpack.c.l.s8.bf16 %v2200
      %v2577 = vunpack.c.l.s8.bf16 %v2201
      %v2578 = vunpack.c.l.s8.bf16 %v2202
      %v2579 = vunpack.c.l.s8.bf16 %v2203
      %v2580 = vunpack.c.l.s8.bf16 %v2204
      %v2581 = vunpack.c.l.s8.bf16 %v2205
      %v2582 = vunpack.c.h.s8.bf16 %v2198
      %v2583 = vunpack.c.h.s8.bf16 %v2199
      %v2584 = vunpack.c.h.s8.bf16 %v2200
      %v2585 = vunpack.c.h.s8.bf16 %v2201
      %v2586 = vunpack.c.h.s8.bf16 %v2202
      %v2587 = vunpack.c.h.s8.bf16 %v2203
      %v2588 = vunpack.c.h.s8.bf16 %v2204
      %v2589 = vunpack.c.h.s8.bf16 %v2205
      %v2590 = vunpack.c.l.s8.bf16 %v2206
      %v2591 = vunpack.c.l.s8.bf16 %v2207
      %v2592 = vunpack.c.l.s8.bf16 %v2208
      %v2593 = vunpack.c.l.s8.bf16 %v2209
      %v2594 = vunpack.c.l.s8.bf16 %v2210
      %v2595 = vunpack.c.l.s8.bf16 %v2211
      %v2596 = vunpack.c.l.s8.bf16 %v2212
      %v2597 = vunpack.c.l.s8.bf16 %v2213
      %v2598 = vunpack.c.h.s8.bf16 %v2206
      %v2599 = vunpack.c.h.s8.bf16 %v2207
      %v2600 = vunpack.c.h.s8.bf16 %v2208
      %v2601 = vunpack.c.h.s8.bf16 %v2209
      %v2602 = vunpack.c.h.s8.bf16 %v2210
      %v2603 = vunpack.c.h.s8.bf16 %v2211
      %v2604 = vunpack.c.h.s8.bf16 %v2212
      %v2605 = vunpack.c.h.s8.bf16 %v2213
      %v2606 = vunpack.c.l.s8.bf16 %v2214
      %v2607 = vunpack.c.l.s8.bf16 %v2215
      %v2608 = vunpack.c.l.s8.bf16 %v2216
      %v2609 = vunpack.c.l.s8.bf16 %v2217
      %v2610 = vunpack.c.l.s8.bf16 %v2218
      %v2611 = vunpack.c.l.s8.bf16 %v2219
      %v2612 = vunpack.c.l.s8.bf16 %v2220
      %v2613 = vunpack.c.l.s8.bf16 %v2221
      %v2614 = vunpack.c.h.s8.bf16 %v2214
      %v2615 = vunpack.c.h.s8.bf16 %v2215
      %v2616 = vunpack.c.h.s8.bf16 %v2216
      %v2617 = vunpack.c.h.s8.bf16 %v2217
      %v2618 = vunpack.c.h.s8.bf16 %v2218
      %v2619 = vunpack.c.h.s8.bf16 %v2219
      %v2620 = vunpack.c.h.s8.bf16 %v2220
      %v2621 = vunpack.c.h.s8.bf16 %v2221
      %v2622 = vunpack.c.l.s8.bf16 %v2222
      %v2623 = vunpack.c.l.s8.bf16 %v2223
      %v2624 = vunpack.c.l.s8.bf16 %v2224
      %v2625 = vunpack.c.l.s8.bf16 %v2225
      %v2626 = vunpack.c.l.s8.bf16 %v2226
      %v2627 = vunpack.c.l.s8.bf16 %v2227
      %v2628 = vunpack.c.l.s8.bf16 %v2228
      %v2629 = vunpack.c.l.s8.bf16 %v2229
      %v2630 = vunpack.c.h.s8.bf16 %v2222
      %v2631 = vunpack.c.h.s8.bf16 %v2223
      %v2632 = vunpack.c.h.s8.bf16 %v2224
      %v2633 = vunpack.c.h.s8.bf16 %v2225
      %v2634 = vunpack.c.h.s8.bf16 %v2226
      %v2635 = vunpack.c.h.s8.bf16 %v2227
      %v2636 = vunpack.c.h.s8.bf16 %v2228
      %v2637 = vunpack.c.h.s8.bf16 %v2229
      %v2638 = vunpack.c.l.s8.bf16 %v2230
      %v2639 = vunpack.c.l.s8.bf16 %v2231
      %v2640 = vunpack.c.l.s8.bf16 %v2232
      %v2641 = vunpack.c.l.s8.bf16 %v2233
      %v2642 = vunpack.c.l.s8.bf16 %v2234
      %v2643 = vunpack.c.l.s8.bf16 %v2235
      %v2644 = vunpack.c.l.s8.bf16 %v2236
      %v2645 = vunpack.c.l.s8.bf16 %v2237
      %v2646 = vunpack.c.h.s8.bf16 %v2230
      %v2647 = vunpack.c.h.s8.bf16 %v2231
      %v2648 = vunpack.c.h.s8.bf16 %v2232
      %v2649 = vunpack.c.h.s8.bf16 %v2233
      %v2650 = vunpack.c.h.s8.bf16 %v2234
      %v2651 = vunpack.c.h.s8.bf16 %v2235
      %v2652 = vunpack.c.h.s8.bf16 %v2236
      %v2653 = vunpack.c.h.s8.bf16 %v2237
      %v2654 = vunpack.c.l.s8.bf16 %v2238
      %v2655 = vunpack.c.l.s8.bf16 %v2239
      %v2656 = vunpack.c.l.s8.bf16 %v2240
      %v2657 = vunpack.c.l.s8.bf16 %v2241
      %v2658 = vunpack.c.l.s8.bf16 %v2242
      %v2659 = vunpack.c.l.s8.bf16 %v2243
      %v2660 = vunpack.c.l.s8.bf16 %v2244
      %v2661 = vunpack.c.l.s8.bf16 %v2245
      %v2662 = vunpack.c.h.s8.bf16 %v2238
      %v2663 = vunpack.c.h.s8.bf16 %v2239
      %v2664 = vunpack.c.h.s8.bf16 %v2240
      %v2665 = vunpack.c.h.s8.bf16 %v2241
      %v2666 = vunpack.c.h.s8.bf16 %v2242
      %v2667 = vunpack.c.h.s8.bf16 %v2243
      %v2668 = vunpack.c.h.s8.bf16 %v2244
      %v2669 = vunpack.c.h.s8.bf16 %v2245
      %v2670 = vunpack.c.l.s8.bf16 %v2246
      %v2671 = vunpack.c.l.s8.bf16 %v2247
      %v2672 = vunpack.c.l.s8.bf16 %v2248
      %v2673 = vunpack.c.l.s8.bf16 %v2249
      %v2674 = vunpack.c.l.s8.bf16 %v2250
      %v2675 = vunpack.c.l.s8.bf16 %v2251
      %v2676 = vunpack.c.l.s8.bf16 %v2252
      %v2677 = vunpack.c.l.s8.bf16 %v2253
      %v2678 = vunpack.c.h.s8.bf16 %v2246
      %v2679 = vunpack.c.h.s8.bf16 %v2247
      %v2680 = vunpack.c.h.s8.bf16 %v2248
      %v2681 = vunpack.c.h.s8.bf16 %v2249
      %v2682 = vunpack.c.h.s8.bf16 %v2250
      %v2683 = vunpack.c.h.s8.bf16 %v2251
      %v2684 = vunpack.c.h.s8.bf16 %v2252
      %v2685 = vunpack.c.h.s8.bf16 %v2253
      %v2686 = vunpack.c.l.s8.bf16 %v2254
      %v2687 = vunpack.c.l.s8.bf16 %v2255
      %v2688 = vunpack.c.l.s8.bf16 %v2256
      %v2689 = vunpack.c.l.s8.bf16 %v2257
      %v2690 = vunpack.c.l.s8.bf16 %v2258
      %v2691 = vunpack.c.l.s8.bf16 %v2259
      %v2692 = vunpack.c.l.s8.bf16 %v2260
      %v2693 = vunpack.c.l.s8.bf16 %v2261
      %v2694 = vunpack.c.h.s8.bf16 %v2254
      %v2695 = vunpack.c.h.s8.bf16 %v2255
      %v2696 = vunpack.c.h.s8.bf16 %v2256
      %v2697 = vunpack.c.h.s8.bf16 %v2257
      %v2698 = vunpack.c.h.s8.bf16 %v2258
      %v2699 = vunpack.c.h.s8.bf16 %v2259
      %v2700 = vunpack.c.h.s8.bf16 %v2260
      %v2701 = vunpack.c.h.s8.bf16 %v2261
      %v2702 = vunpack.c.l.s8.bf16 %v2262
      %v2703 = vunpack.c.l.s8.bf16 %v2263
      %v2704 = vunpack.c.l.s8.bf16 %v2264
      %v2705 = vunpack.c.l.s8.bf16 %v2265
      %v2706 = vunpack.c.l.s8.bf16 %v2266
      %v2707 = vunpack.c.l.s8.bf16 %v2267
      %v2708 = vunpack.c.l.s8.bf16 %v2268
      %v2709 = vunpack.c.l.s8.bf16 %v2269
      %v2710 = vunpack.c.h.s8.bf16 %v2262
      %v2711 = vunpack.c.h.s8.bf16 %v2263
      %v2712 = vunpack.c.h.s8.bf16 %v2264
      %v2713 = vunpack.c.h.s8.bf16 %v2265
      %v2714 = vunpack.c.h.s8.bf16 %v2266
      %v2715 = vunpack.c.h.s8.bf16 %v2267
      %v2716 = vunpack.c.h.s8.bf16 %v2268
      %v2717 = vunpack.c.h.s8.bf16 %v2269
      %v2718 = vunpack.c.l.s8.bf16 %v2270
      %v2719 = vunpack.c.l.s8.bf16 %v2271
      %v2720 = vunpack.c.l.s8.bf16 %v2272
      %v2721 = vunpack.c.l.s8.bf16 %v2273
      %v2722 = vunpack.c.l.s8.bf16 %v2274
      %v2723 = vunpack.c.l.s8.bf16 %v2275
      %v2724 = vunpack.c.l.s8.bf16 %v2276
      %v2725 = vunpack.c.l.s8.bf16 %v2277
      %v2726 = vunpack.c.h.s8.bf16 %v2270
      %v2727 = vunpack.c.h.s8.bf16 %v2271
      %v2728 = vunpack.c.h.s8.bf16 %v2272
      %v2729 = vunpack.c.h.s8.bf16 %v2273
      %v2730 = vunpack.c.h.s8.bf16 %v2274
      %v2731 = vunpack.c.h.s8.bf16 %v2275
      %v2732 = vunpack.c.h.s8.bf16 %v2276
      %v2733 = vunpack.c.h.s8.bf16 %v2277
      %v2734 = vunpack.c.l.s8.bf16 %v2278
      %v2735 = vunpack.c.l.s8.bf16 %v2279
      %v2736 = vunpack.c.l.s8.bf16 %v2280
      %v2737 = vunpack.c.l.s8.bf16 %v2281
      %v2738 = vunpack.c.l.s8.bf16 %v2282
      %v2739 = vunpack.c.l.s8.bf16 %v2283
      %v2740 = vunpack.c.l.s8.bf16 %v2284
      %v2741 = vunpack.c.l.s8.bf16 %v2285
      %v2742 = vunpack.c.h.s8.bf16 %v2278
      %v2743 = vunpack.c.h.s8.bf16 %v2279
      %v2744 = vunpack.c.h.s8.bf16 %v2280
      %v2745 = vunpack.c.h.s8.bf16 %v2281
      %v2746 = vunpack.c.h.s8.bf16 %v2282
      %v2747 = vunpack.c.h.s8.bf16 %v2283
      %v2748 = vunpack.c.h.s8.bf16 %v2284
      %v2749 = vunpack.c.h.s8.bf16 %v2285
      %v2750 = vunpack.c.l.s8.bf16 %v2286
      %v2751 = vunpack.c.l.s8.bf16 %v2287
      %v2752 = vunpack.c.l.s8.bf16 %v2288
      %v2753 = vunpack.c.l.s8.bf16 %v2289
      %v2754 = vunpack.c.l.s8.bf16 %v2290
      %v2755 = vunpack.c.l.s8.bf16 %v2291
      %v2756 = vunpack.c.l.s8.bf16 %v2292
      %v2757 = vunpack.c.l.s8.bf16 %v2293
      %v2758 = vunpack.c.h.s8.bf16 %v2286
      %v2759 = vunpack.c.h.s8.bf16 %v2287
      %v2760 = vunpack.c.h.s8.bf16 %v2288
      %v2761 = vunpack.c.h.s8.bf16 %v2289
      %v2762 = vunpack.c.h.s8.bf16 %v2290
      %v2763 = vunpack.c.h.s8.bf16 %v2291
      %v2764 = vunpack.c.h.s8.bf16 %v2292
      %v2765 = vunpack.c.h.s8.bf16 %v2293
      %v2766 = vunpack.c.l.s8.bf16 %v2294
      %v2767 = vunpack.c.l.s8.bf16 %v2295
      %v2768 = vunpack.c.l.s8.bf16 %v2296
      %v2769 = vunpack.c.l.s8.bf16 %v2297
      %v2770 = vunpack.c.l.s8.bf16 %v2298
      %v2771 = vunpack.c.l.s8.bf16 %v2299
      %v2772 = vunpack.c.l.s8.bf16 %v2300
      %v2773 = vunpack.c.l.s8.bf16 %v2301
      %v2774 = vunpack.c.h.s8.bf16 %v2294
      %v2775 = vunpack.c.h.s8.bf16 %v2295
      %v2776 = vunpack.c.h.s8.bf16 %v2296
      %v2777 = vunpack.c.h.s8.bf16 %v2297
      %v2778 = vunpack.c.h.s8.bf16 %v2298
      %v2779 = vunpack.c.h.s8.bf16 %v2299
      %v2780 = vunpack.c.h.s8.bf16 %v2300
      %v2781 = vunpack.c.h.s8.bf16 %v2301
      %v2782 = vunpack.c.l.s8.bf16 %v2302
      %v2783 = vunpack.c.l.s8.bf16 %v2303
      %v2784 = vunpack.c.l.s8.bf16 %v2304
      %v2785 = vunpack.c.l.s8.bf16 %v2305
      %v2786 = vunpack.c.l.s8.bf16 %v2306
      %v2787 = vunpack.c.l.s8.bf16 %v2307
      %v2788 = vunpack.c.l.s8.bf16 %v2308
      %v2789 = vunpack.c.l.s8.bf16 %v2309
      %v2790 = vunpack.c.h.s8.bf16 %v2302
      %v2791 = vunpack.c.h.s8.bf16 %v2303
      %v2792 = vunpack.c.h.s8.bf16 %v2304
      %v2793 = vunpack.c.h.s8.bf16 %v2305
      %v2794 = vunpack.c.h.s8.bf16 %v2306
      %v2795 = vunpack.c.h.s8.bf16 %v2307
      %v2796 = vunpack.c.h.s8.bf16 %v2308
      %v2797 = vunpack.c.h.s8.bf16 %v2309
      %v2798 = vunpack.c.l.s8.bf16 %v2310
      %v2799 = vunpack.c.l.s8.bf16 %v2311
      %v2800 = vunpack.c.l.s8.bf16 %v2312
      %v2801 = vunpack.c.l.s8.bf16 %v2313
      %v2802 = vunpack.c.l.s8.bf16 %v2314
      %v2803 = vunpack.c.l.s8.bf16 %v2315
      %v2804 = vunpack.c.l.s8.bf16 %v2316
      %v2805 = vunpack.c.l.s8.bf16 %v2317
      %v2806 = vunpack.c.h.s8.bf16 %v2310
      %v2807 = vunpack.c.h.s8.bf16 %v2311
      %v2808 = vunpack.c.h.s8.bf16 %v2312
      %v2809 = vunpack.c.h.s8.bf16 %v2313
      %v2810 = vunpack.c.h.s8.bf16 %v2314
      %v2811 = vunpack.c.h.s8.bf16 %v2315
      %v2812 = vunpack.c.h.s8.bf16 %v2316
      %v2813 = vunpack.c.h.s8.bf16 %v2317
      %v2814 = vunpack.c.l.s8.bf16 %v2318
      %v2815 = vunpack.c.l.s8.bf16 %v2319
      %v2816 = vunpack.c.l.s8.bf16 %v2320
      %v2817 = vunpack.c.l.s8.bf16 %v2321
      %v2818 = vunpack.c.l.s8.bf16 %v2322
      %v2819 = vunpack.c.l.s8.bf16 %v2323
      %v2820 = vunpack.c.l.s8.bf16 %v2324
      %v2821 = vunpack.c.l.s8.bf16 %v2325
      %v2822 = vunpack.c.h.s8.bf16 %v2318
      %v2823 = vunpack.c.h.s8.bf16 %v2319
      %v2824 = vunpack.c.h.s8.bf16 %v2320
      %v2825 = vunpack.c.h.s8.bf16 %v2321
      %v2826 = vunpack.c.h.s8.bf16 %v2322
      %v2827 = vunpack.c.h.s8.bf16 %v2323
      %v2828 = vunpack.c.h.s8.bf16 %v2324
      %v2829 = vunpack.c.h.s8.bf16 %v2325
      %v2830 = vunpack.c.l.s8.bf16 %v2326
      %v2831 = vunpack.c.l.s8.bf16 %v2327
      %v2832 = vunpack.c.l.s8.bf16 %v2328
      %v2833 = vunpack.c.l.s8.bf16 %v2329
      %v2834 = vunpack.c.l.s8.bf16 %v2330
      %v2835 = vunpack.c.l.s8.bf16 %v2331
      %v2836 = vunpack.c.l.s8.bf16 %v2332
      %v2837 = vunpack.c.l.s8.bf16 %v2333
      %v2838 = vunpack.c.h.s8.bf16 %v2326
      %v2839 = vunpack.c.h.s8.bf16 %v2327
      %v2840 = vunpack.c.h.s8.bf16 %v2328
      %v2841 = vunpack.c.h.s8.bf16 %v2329
      %v2842 = vunpack.c.h.s8.bf16 %v2330
      %v2843 = vunpack.c.h.s8.bf16 %v2331
      %v2844 = vunpack.c.h.s8.bf16 %v2332
      %v2845 = vunpack.c.h.s8.bf16 %v2333
      %v3358 = vunpack.c.l.b16 %v2334
      %v3359 = vunpack.c.l.b16 %v2335
      %v3360 = vunpack.c.l.b16 %v2336
      %v3361 = vunpack.c.l.b16 %v2337
      %v3362 = vunpack.c.l.b16 %v2338
      %v3363 = vunpack.c.l.b16 %v2339
      %v3364 = vunpack.c.l.b16 %v2340
      %v3365 = vunpack.c.l.b16 %v2341
      %v3366 = vunpack.c.h.b16 %v2334
      %v3367 = vunpack.c.h.b16 %v2335
      %v3368 = vunpack.c.h.b16 %v2336
      %v3369 = vunpack.c.h.b16 %v2337
      %v3370 = vunpack.c.h.b16 %v2338
      %v3371 = vunpack.c.h.b16 %v2339
      %v3372 = vunpack.c.h.b16 %v2340
      %v3373 = vunpack.c.h.b16 %v2341
      %v3374 = vunpack.c.l.b16 %v2342
      %v3375 = vunpack.c.l.b16 %v2343
      %v3376 = vunpack.c.l.b16 %v2344
      %v3377 = vunpack.c.l.b16 %v2345
      %v3378 = vunpack.c.l.b16 %v2346
      %v3379 = vunpack.c.l.b16 %v2347
      %v3380 = vunpack.c.l.b16 %v2348
      %v3381 = vunpack.c.l.b16 %v2349
      %v3382 = vunpack.c.h.b16 %v2342
      %v3383 = vunpack.c.h.b16 %v2343
      %v3384 = vunpack.c.h.b16 %v2344
      %v3385 = vunpack.c.h.b16 %v2345
      %v3386 = vunpack.c.h.b16 %v2346
      %v3387 = vunpack.c.h.b16 %v2347
      %v3388 = vunpack.c.h.b16 %v2348
      %v3389 = vunpack.c.h.b16 %v2349
      %v3390 = vunpack.c.l.b16 %v2350
      %v3391 = vunpack.c.l.b16 %v2351
      %v3392 = vunpack.c.l.b16 %v2352
      %v3393 = vunpack.c.l.b16 %v2353
      %v3394 = vunpack.c.l.b16 %v2354
      %v3395 = vunpack.c.l.b16 %v2355
      %v3396 = vunpack.c.l.b16 %v2356
      %v3397 = vunpack.c.l.b16 %v2357
      %v3398 = vunpack.c.h.b16 %v2350
      %v3399 = vunpack.c.h.b16 %v2351
      %v3400 = vunpack.c.h.b16 %v2352
      %v3401 = vunpack.c.h.b16 %v2353
      %v3402 = vunpack.c.h.b16 %v2354
      %v3403 = vunpack.c.h.b16 %v2355
      %v3404 = vunpack.c.h.b16 %v2356
      %v3405 = vunpack.c.h.b16 %v2357
      %v3406 = vunpack.c.l.b16 %v2358
      %v3407 = vunpack.c.l.b16 %v2359
      %v3408 = vunpack.c.l.b16 %v2360
      %v3409 = vunpack.c.l.b16 %v2361
      %v3410 = vunpack.c.l.b16 %v2362
      %v3411 = vunpack.c.l.b16 %v2363
      %v3412 = vunpack.c.l.b16 %v2364
      %v3413 = vunpack.c.l.b16 %v2365
      %v3414 = vunpack.c.h.b16 %v2358
      %v3415 = vunpack.c.h.b16 %v2359
      %v3416 = vunpack.c.h.b16 %v2360
      %v3417 = vunpack.c.h.b16 %v2361
      %v3418 = vunpack.c.h.b16 %v2362
      %v3419 = vunpack.c.h.b16 %v2363
      %v3420 = vunpack.c.h.b16 %v2364
      %v3421 = vunpack.c.h.b16 %v2365
      %v3422 = vunpack.c.l.b16 %v2366
      %v3423 = vunpack.c.l.b16 %v2367
      %v3424 = vunpack.c.l.b16 %v2368
      %v3425 = vunpack.c.l.b16 %v2369
      %v3426 = vunpack.c.l.b16 %v2370
      %v3427 = vunpack.c.l.b16 %v2371
      %v3428 = vunpack.c.l.b16 %v2372
      %v3429 = vunpack.c.l.b16 %v2373
      %v3430 = vunpack.c.h.b16 %v2366
      %v3431 = vunpack.c.h.b16 %v2367
      %v3432 = vunpack.c.h.b16 %v2368
      %v3433 = vunpack.c.h.b16 %v2369
      %v3434 = vunpack.c.h.b16 %v2370
      %v3435 = vunpack.c.h.b16 %v2371
      %v3436 = vunpack.c.h.b16 %v2372
      %v3437 = vunpack.c.h.b16 %v2373
      %v3438 = vunpack.c.l.b16 %v2374
      %v3439 = vunpack.c.l.b16 %v2375
      %v3440 = vunpack.c.l.b16 %v2376
      %v3441 = vunpack.c.l.b16 %v2377
      %v3442 = vunpack.c.l.b16 %v2378
      %v3443 = vunpack.c.l.b16 %v2379
      %v3444 = vunpack.c.l.b16 %v2380
      %v3445 = vunpack.c.l.b16 %v2381
      %v3446 = vunpack.c.h.b16 %v2374
      %v3447 = vunpack.c.h.b16 %v2375
      %v3448 = vunpack.c.h.b16 %v2376
      %v3449 = vunpack.c.h.b16 %v2377
      %v3450 = vunpack.c.h.b16 %v2378
      %v3451 = vunpack.c.h.b16 %v2379
      %v3452 = vunpack.c.h.b16 %v2380
      %v3453 = vunpack.c.h.b16 %v2381
      %v3454 = vunpack.c.l.b16 %v2382
      %v3455 = vunpack.c.l.b16 %v2383
      %v3456 = vunpack.c.l.b16 %v2384
      %v3457 = vunpack.c.l.b16 %v2385
      %v3458 = vunpack.c.l.b16 %v2386
      %v3459 = vunpack.c.l.b16 %v2387
      %v3460 = vunpack.c.l.b16 %v2388
      %v3461 = vunpack.c.l.b16 %v2389
      %v3462 = vunpack.c.h.b16 %v2382
      %v3463 = vunpack.c.h.b16 %v2383
      %v3464 = vunpack.c.h.b16 %v2384
      %v3465 = vunpack.c.h.b16 %v2385
      %v3466 = vunpack.c.h.b16 %v2386
      %v3467 = vunpack.c.h.b16 %v2387
      %v3468 = vunpack.c.h.b16 %v2388
      %v3469 = vunpack.c.h.b16 %v2389
      %v3470 = vunpack.c.l.b16 %v2390
      %v3471 = vunpack.c.l.b16 %v2391
      %v3472 = vunpack.c.l.b16 %v2392
      %v3473 = vunpack.c.l.b16 %v2393
      %v3474 = vunpack.c.l.b16 %v2394
      %v3475 = vunpack.c.l.b16 %v2395
      %v3476 = vunpack.c.l.b16 %v2396
      %v3477 = vunpack.c.l.b16 %v2397
      %v3478 = vunpack.c.h.b16 %v2390
      %v3479 = vunpack.c.h.b16 %v2391
      %v3480 = vunpack.c.h.b16 %v2392
      %v3481 = vunpack.c.h.b16 %v2393
      %v3482 = vunpack.c.h.b16 %v2394
      %v3483 = vunpack.c.h.b16 %v2395
      %v3484 = vunpack.c.h.b16 %v2396
      %v3485 = vunpack.c.h.b16 %v2397
      %v3486 = vunpack.c.l.b16 %v2398
      %v3487 = vunpack.c.l.b16 %v2399
      %v3488 = vunpack.c.l.b16 %v2400
      %v3489 = vunpack.c.l.b16 %v2401
      %v3490 = vunpack.c.l.b16 %v2402
      %v3491 = vunpack.c.l.b16 %v2403
      %v3492 = vunpack.c.l.b16 %v2404
      %v3493 = vunpack.c.l.b16 %v2405
      %v3494 = vunpack.c.h.b16 %v2398
      %v3495 = vunpack.c.h.b16 %v2399
      %v3496 = vunpack.c.h.b16 %v2400
      %v3497 = vunpack.c.h.b16 %v2401
      %v3498 = vunpack.c.h.b16 %v2402
      %v3499 = vunpack.c.h.b16 %v2403
      %v3500 = vunpack.c.h.b16 %v2404
      %v3501 = vunpack.c.h.b16 %v2405
      %v3502 = vunpack.c.l.b16 %v2406
      %v3503 = vunpack.c.l.b16 %v2407
      %v3504 = vunpack.c.l.b16 %v2408
      %v3505 = vunpack.c.l.b16 %v2409
      %v3506 = vunpack.c.l.b16 %v2410
      %v3507 = vunpack.c.l.b16 %v2411
      %v3508 = vunpack.c.l.b16 %v2412
      %v3509 = vunpack.c.l.b16 %v2413
      %v3510 = vunpack.c.h.b16 %v2406
      %v3511 = vunpack.c.h.b16 %v2407
      %v3512 = vunpack.c.h.b16 %v2408
      %v3513 = vunpack.c.h.b16 %v2409
      %v3514 = vunpack.c.h.b16 %v2410
      %v3515 = vunpack.c.h.b16 %v2411
      %v3516 = vunpack.c.h.b16 %v2412
      %v3517 = vunpack.c.h.b16 %v2413
      %v3518 = vunpack.c.l.b16 %v2414
      %v3519 = vunpack.c.l.b16 %v2415
      %v3520 = vunpack.c.l.b16 %v2416
      %v3521 = vunpack.c.l.b16 %v2417
      %v3522 = vunpack.c.l.b16 %v2418
      %v3523 = vunpack.c.l.b16 %v2419
      %v3524 = vunpack.c.l.b16 %v2420
      %v3525 = vunpack.c.l.b16 %v2421
      %v3526 = vunpack.c.h.b16 %v2414
      %v3527 = vunpack.c.h.b16 %v2415
      %v3528 = vunpack.c.h.b16 %v2416
      %v3529 = vunpack.c.h.b16 %v2417
      %v3530 = vunpack.c.h.b16 %v2418
      %v3531 = vunpack.c.h.b16 %v2419
      %v3532 = vunpack.c.h.b16 %v2420
      %v3533 = vunpack.c.h.b16 %v2421
      %v3534 = vunpack.c.l.b16 %v2422
      %v3535 = vunpack.c.l.b16 %v2423
      %v3536 = vunpack.c.l.b16 %v2424
      %v3537 = vunpack.c.l.b16 %v2425
      %v3538 = vunpack.c.l.b16 %v2426
      %v3539 = vunpack.c.l.b16 %v2427
      %v3540 = vunpack.c.l.b16 %v2428
      %v3541 = vunpack.c.l.b16 %v2429
      %v3542 = vunpack.c.h.b16 %v2422
      %v3543 = vunpack.c.h.b16 %v2423
      %v3544 = vunpack.c.h.b16 %v2424
      %v3545 = vunpack.c.h.b16 %v2425
      %v3546 = vunpack.c.h.b16 %v2426
      %v3547 = vunpack.c.h.b16 %v2427
      %v3548 = vunpack.c.h.b16 %v2428
      %v3549 = vunpack.c.h.b16 %v2429
      %v3550 = vunpack.c.l.b16 %v2430
      %v3551 = vunpack.c.l.b16 %v2431
      %v3552 = vunpack.c.l.b16 %v2432
      %v3553 = vunpack.c.l.b16 %v2433
      %v3554 = vunpack.c.l.b16 %v2434
      %v3555 = vunpack.c.l.b16 %v2435
      %v3556 = vunpack.c.l.b16 %v2436
      %v3557 = vunpack.c.l.b16 %v2437
      %v3558 = vunpack.c.h.b16 %v2430
      %v3559 = vunpack.c.h.b16 %v2431
      %v3560 = vunpack.c.h.b16 %v2432
      %v3561 = vunpack.c.h.b16 %v2433
      %v3562 = vunpack.c.h.b16 %v2434
      %v3563 = vunpack.c.h.b16 %v2435
      %v3564 = vunpack.c.h.b16 %v2436
      %v3565 = vunpack.c.h.b16 %v2437
      %v3566 = vunpack.c.l.b16 %v2438
      %v3567 = vunpack.c.l.b16 %v2439
      %v3568 = vunpack.c.l.b16 %v2440
      %v3569 = vunpack.c.l.b16 %v2441
      %v3570 = vunpack.c.l.b16 %v2442
      %v3571 = vunpack.c.l.b16 %v2443
      %v3572 = vunpack.c.l.b16 %v2444
      %v3573 = vunpack.c.l.b16 %v2445
      %v3574 = vunpack.c.h.b16 %v2438
      %v3575 = vunpack.c.h.b16 %v2439
      %v3576 = vunpack.c.h.b16 %v2440
      %v3577 = vunpack.c.h.b16 %v2441
      %v3578 = vunpack.c.h.b16 %v2442
      %v3579 = vunpack.c.h.b16 %v2443
      %v3580 = vunpack.c.h.b16 %v2444
      %v3581 = vunpack.c.h.b16 %v2445
      %v3582 = vunpack.c.l.b16 %v2446
      %v3583 = vunpack.c.l.b16 %v2447
      %v3584 = vunpack.c.l.b16 %v2448
      %v3585 = vunpack.c.l.b16 %v2449
      %v3586 = vunpack.c.l.b16 %v2450
      %v3587 = vunpack.c.l.b16 %v2451
      %v3588 = vunpack.c.l.b16 %v2452
      %v3589 = vunpack.c.l.b16 %v2453
      %v3590 = vunpack.c.h.b16 %v2446
      %v3591 = vunpack.c.h.b16 %v2447
      %v3592 = vunpack.c.h.b16 %v2448
      %v3593 = vunpack.c.h.b16 %v2449
      %v3594 = vunpack.c.h.b16 %v2450
      %v3595 = vunpack.c.h.b16 %v2451
      %v3596 = vunpack.c.h.b16 %v2452
      %v3597 = vunpack.c.h.b16 %v2453
      %v3598 = vunpack.c.l.b16 %v2454
      %v3599 = vunpack.c.l.b16 %v2455
      %v3600 = vunpack.c.l.b16 %v2456
      %v3601 = vunpack.c.l.b16 %v2457
      %v3602 = vunpack.c.l.b16 %v2458
      %v3603 = vunpack.c.l.b16 %v2459
      %v3604 = vunpack.c.l.b16 %v2460
      %v3605 = vunpack.c.l.b16 %v2461
      %v3606 = vunpack.c.h.b16 %v2454
      %v3607 = vunpack.c.h.b16 %v2455
      %v3608 = vunpack.c.h.b16 %v2456
      %v3609 = vunpack.c.h.b16 %v2457
      %v3610 = vunpack.c.h.b16 %v2458
      %v3611 = vunpack.c.h.b16 %v2459
      %v3612 = vunpack.c.h.b16 %v2460
      %v3613 = vunpack.c.h.b16 %v2461
      %v3614 = vunpack.c.l.b16 %v2462
      %v3615 = vunpack.c.l.b16 %v2463
      %v3616 = vunpack.c.l.b16 %v2464
      %v3617 = vunpack.c.l.b16 %v2465
      %v3618 = vunpack.c.l.b16 %v2466
      %v3619 = vunpack.c.l.b16 %v2467
      %v3620 = vunpack.c.l.b16 %v2468
      %v3621 = vunpack.c.l.b16 %v2469
      %v3622 = vunpack.c.h.b16 %v2462
      %v3623 = vunpack.c.h.b16 %v2463
      %v3624 = vunpack.c.h.b16 %v2464
      %v3625 = vunpack.c.h.b16 %v2465
      %v3626 = vunpack.c.h.b16 %v2466
      %v3627 = vunpack.c.h.b16 %v2467
      %v3628 = vunpack.c.h.b16 %v2468
      %v3629 = vunpack.c.h.b16 %v2469
      %v3630 = vunpack.c.l.b16 %v2470
      %v3631 = vunpack.c.l.b16 %v2471
      %v3632 = vunpack.c.l.b16 %v2472
      %v3633 = vunpack.c.l.b16 %v2473
      %v3634 = vunpack.c.l.b16 %v2474
      %v3635 = vunpack.c.l.b16 %v2475
      %v3636 = vunpack.c.l.b16 %v2476
      %v3637 = vunpack.c.l.b16 %v2477
      %v3638 = vunpack.c.h.b16 %v2470
      %v3639 = vunpack.c.h.b16 %v2471
      %v3640 = vunpack.c.h.b16 %v2472
      %v3641 = vunpack.c.h.b16 %v2473
      %v3642 = vunpack.c.h.b16 %v2474
      %v3643 = vunpack.c.h.b16 %v2475
      %v3644 = vunpack.c.h.b16 %v2476
      %v3645 = vunpack.c.h.b16 %v2477
      %v3646 = vunpack.c.l.b16 %v2478
      %v3647 = vunpack.c.l.b16 %v2479
      %v3648 = vunpack.c.l.b16 %v2480
      %v3649 = vunpack.c.l.b16 %v2481
      %v3650 = vunpack.c.l.b16 %v2482
      %v3651 = vunpack.c.l.b16 %v2483
      %v3652 = vunpack.c.l.b16 %v2484
      %v3653 = vunpack.c.l.b16 %v2485
      %v3654 = vunpack.c.h.b16 %v2478
      %v3655 = vunpack.c.h.b16 %v2479
      %v3656 = vunpack.c.h.b16 %v2480
      %v3657 = vunpack.c.h.b16 %v2481
      %v3658 = vunpack.c.h.b16 %v2482
      %v3659 = vunpack.c.h.b16 %v2483
      %v3660 = vunpack.c.h.b16 %v2484
      %v3661 = vunpack.c.h.b16 %v2485
      %v3662 = vunpack.c.l.b16 %v2486
      %v3663 = vunpack.c.l.b16 %v2487
      %v3664 = vunpack.c.l.b16 %v2488
      %v3665 = vunpack.c.l.b16 %v2489
      %v3666 = vunpack.c.l.b16 %v2490
      %v3667 = vunpack.c.l.b16 %v2491
      %v3668 = vunpack.c.l.b16 %v2492
      %v3669 = vunpack.c.l.b16 %v2493
      %v3670 = vunpack.c.h.b16 %v2486
      %v3671 = vunpack.c.h.b16 %v2487
      %v3672 = vunpack.c.h.b16 %v2488
      %v3673 = vunpack.c.h.b16 %v2489
      %v3674 = vunpack.c.h.b16 %v2490
      %v3675 = vunpack.c.h.b16 %v2491
      %v3676 = vunpack.c.h.b16 %v2492
      %v3677 = vunpack.c.h.b16 %v2493
      %v3678 = vunpack.c.l.b16 %v2494
      %v3679 = vunpack.c.l.b16 %v2495
      %v3680 = vunpack.c.l.b16 %v2496
      %v3681 = vunpack.c.l.b16 %v2497
      %v3682 = vunpack.c.l.b16 %v2498
      %v3683 = vunpack.c.l.b16 %v2499
      %v3684 = vunpack.c.l.b16 %v2500
      %v3685 = vunpack.c.l.b16 %v2501
      %v3686 = vunpack.c.h.b16 %v2494
      %v3687 = vunpack.c.h.b16 %v2495
      %v3688 = vunpack.c.h.b16 %v2496
      %v3689 = vunpack.c.h.b16 %v2497
      %v3690 = vunpack.c.h.b16 %v2498
      %v3691 = vunpack.c.h.b16 %v2499
      %v3692 = vunpack.c.h.b16 %v2500
      %v3693 = vunpack.c.h.b16 %v2501
      %v3694 = vunpack.c.l.b16 %v2502
      %v3695 = vunpack.c.l.b16 %v2503
      %v3696 = vunpack.c.l.b16 %v2504
      %v3697 = vunpack.c.l.b16 %v2505
      %v3698 = vunpack.c.l.b16 %v2506
      %v3699 = vunpack.c.l.b16 %v2507
      %v3700 = vunpack.c.l.b16 %v2508
      %v3701 = vunpack.c.l.b16 %v2509
      %v3702 = vunpack.c.h.b16 %v2502
      %v3703 = vunpack.c.h.b16 %v2503
      %v3704 = vunpack.c.h.b16 %v2504
      %v3705 = vunpack.c.h.b16 %v2505
      %v3706 = vunpack.c.h.b16 %v2506
      %v3707 = vunpack.c.h.b16 %v2507
      %v3708 = vunpack.c.h.b16 %v2508
      %v3709 = vunpack.c.h.b16 %v2509
      %v3710 = vunpack.c.l.b16 %v2510
      %v3711 = vunpack.c.l.b16 %v2511
      %v3712 = vunpack.c.l.b16 %v2512
      %v3713 = vunpack.c.l.b16 %v2513
      %v3714 = vunpack.c.l.b16 %v2514
      %v3715 = vunpack.c.l.b16 %v2515
      %v3716 = vunpack.c.l.b16 %v2516
      %v3717 = vunpack.c.l.b16 %v2517
      %v3718 = vunpack.c.h.b16 %v2510
      %v3719 = vunpack.c.h.b16 %v2511
      %v3720 = vunpack.c.h.b16 %v2512
      %v3721 = vunpack.c.h.b16 %v2513
      %v3722 = vunpack.c.h.b16 %v2514
      %v3723 = vunpack.c.h.b16 %v2515
      %v3724 = vunpack.c.h.b16 %v2516
      %v3725 = vunpack.c.h.b16 %v2517
      %v3726 = vunpack.c.l.b16 %v2518
      %v3727 = vunpack.c.l.b16 %v2519
      %v3728 = vunpack.c.l.b16 %v2520
      %v3729 = vunpack.c.l.b16 %v2521
      %v3730 = vunpack.c.l.b16 %v2522
      %v3731 = vunpack.c.l.b16 %v2523
      %v3732 = vunpack.c.l.b16 %v2524
      %v3733 = vunpack.c.l.b16 %v2525
      %v3734 = vunpack.c.h.b16 %v2518
      %v3735 = vunpack.c.h.b16 %v2519
      %v3736 = vunpack.c.h.b16 %v2520
      %v3737 = vunpack.c.h.b16 %v2521
      %v3738 = vunpack.c.h.b16 %v2522
      %v3739 = vunpack.c.h.b16 %v2523
      %v3740 = vunpack.c.h.b16 %v2524
      %v3741 = vunpack.c.h.b16 %v2525
      %v3742 = vunpack.c.l.b16 %v2526
      %v3743 = vunpack.c.l.b16 %v2527
      %v3744 = vunpack.c.l.b16 %v2528
      %v3745 = vunpack.c.l.b16 %v2529
      %v3746 = vunpack.c.l.b16 %v2530
      %v3747 = vunpack.c.l.b16 %v2531
      %v3748 = vunpack.c.l.b16 %v2532
      %v3749 = vunpack.c.l.b16 %v2533
      %v3750 = vunpack.c.h.b16 %v2526
      %v3751 = vunpack.c.h.b16 %v2527
      %v3752 = vunpack.c.h.b16 %v2528
      %v3753 = vunpack.c.h.b16 %v2529
      %v3754 = vunpack.c.h.b16 %v2530
      %v3755 = vunpack.c.h.b16 %v2531
      %v3756 = vunpack.c.h.b16 %v2532
      %v3757 = vunpack.c.h.b16 %v2533
      %v3758 = vunpack.c.l.b16 %v2534
      %v3759 = vunpack.c.l.b16 %v2535
      %v3760 = vunpack.c.l.b16 %v2536
      %v3761 = vunpack.c.l.b16 %v2537
      %v3762 = vunpack.c.l.b16 %v2538
      %v3763 = vunpack.c.l.b16 %v2539
      %v3764 = vunpack.c.l.b16 %v2540
      %v3765 = vunpack.c.l.b16 %v2541
      %v3766 = vunpack.c.h.b16 %v2534
      %v3767 = vunpack.c.h.b16 %v2535
      %v3768 = vunpack.c.h.b16 %v2536
      %v3769 = vunpack.c.h.b16 %v2537
      %v3770 = vunpack.c.h.b16 %v2538
      %v3771 = vunpack.c.h.b16 %v2539
      %v3772 = vunpack.c.h.b16 %v2540
      %v3773 = vunpack.c.h.b16 %v2541
      %v3774 = vunpack.c.l.b16 %v2542
      %v3775 = vunpack.c.l.b16 %v2543
      %v3776 = vunpack.c.l.b16 %v2544
      %v3777 = vunpack.c.l.b16 %v2545
      %v3778 = vunpack.c.l.b16 %v2546
      %v3779 = vunpack.c.l.b16 %v2547
      %v3780 = vunpack.c.l.b16 %v2548
      %v3781 = vunpack.c.l.b16 %v2549
      %v3782 = vunpack.c.h.b16 %v2542
      %v3783 = vunpack.c.h.b16 %v2543
      %v3784 = vunpack.c.h.b16 %v2544
      %v3785 = vunpack.c.h.b16 %v2545
      %v3786 = vunpack.c.h.b16 %v2546
      %v3787 = vunpack.c.h.b16 %v2547
      %v3788 = vunpack.c.h.b16 %v2548
      %v3789 = vunpack.c.h.b16 %v2549
      %v3790 = vunpack.c.l.b16 %v2550
      %v3791 = vunpack.c.l.b16 %v2551
      %v3792 = vunpack.c.l.b16 %v2552
      %v3793 = vunpack.c.l.b16 %v2553
      %v3794 = vunpack.c.l.b16 %v2554
      %v3795 = vunpack.c.l.b16 %v2555
      %v3796 = vunpack.c.l.b16 %v2556
      %v3797 = vunpack.c.l.b16 %v2557
      %v3798 = vunpack.c.h.b16 %v2550
      %v3799 = vunpack.c.h.b16 %v2551
      %v3800 = vunpack.c.h.b16 %v2552
      %v3801 = vunpack.c.h.b16 %v2553
      %v3802 = vunpack.c.h.b16 %v2554
      %v3803 = vunpack.c.h.b16 %v2555
      %v3804 = vunpack.c.h.b16 %v2556
      %v3805 = vunpack.c.h.b16 %v2557
      %v3806 = vunpack.c.l.b16 %v2558
      %v3807 = vunpack.c.l.b16 %v2559
      %v3808 = vunpack.c.l.b16 %v2560
      %v3809 = vunpack.c.l.b16 %v2561
      %v3810 = vunpack.c.l.b16 %v2562
      %v3811 = vunpack.c.l.b16 %v2563
      %v3812 = vunpack.c.l.b16 %v2564
      %v3813 = vunpack.c.l.b16 %v2565
      %v3814 = vunpack.c.h.b16 %v2558
      %v3815 = vunpack.c.h.b16 %v2559
      %v3816 = vunpack.c.h.b16 %v2560
      %v3817 = vunpack.c.h.b16 %v2561
      %v3818 = vunpack.c.h.b16 %v2562
      %v3819 = vunpack.c.h.b16 %v2563
      %v3820 = vunpack.c.h.b16 %v2564
      %v3821 = vunpack.c.h.b16 %v2565
      %v3822 = vunpack.c.l.b16 %v2566
      %v3823 = vunpack.c.l.b16 %v2567
      %v3824 = vunpack.c.l.b16 %v2568
      %v3825 = vunpack.c.l.b16 %v2569
      %v3826 = vunpack.c.l.b16 %v2570
      %v3827 = vunpack.c.l.b16 %v2571
      %v3828 = vunpack.c.l.b16 %v2572
      %v3829 = vunpack.c.l.b16 %v2573
      %v3830 = vunpack.c.h.b16 %v2566
      %v3831 = vunpack.c.h.b16 %v2567
      %v3832 = vunpack.c.h.b16 %v2568
      %v3833 = vunpack.c.h.b16 %v2569
      %v3834 = vunpack.c.h.b16 %v2570
      %v3835 = vunpack.c.h.b16 %v2571
      %v3836 = vunpack.c.h.b16 %v2572
      %v3837 = vunpack.c.h.b16 %v2573
      %v3838 = vunpack.c.l.b16 %v2574
      %v3839 = vunpack.c.l.b16 %v2575
      %v3840 = vunpack.c.l.b16 %v2576
      %v3841 = vunpack.c.l.b16 %v2577
      %v3842 = vunpack.c.l.b16 %v2578
      %v3843 = vunpack.c.l.b16 %v2579
      %v3844 = vunpack.c.l.b16 %v2580
      %v3845 = vunpack.c.l.b16 %v2581
      %v3846 = vunpack.c.h.b16 %v2574
      %v3847 = vunpack.c.h.b16 %v2575
      %v3848 = vunpack.c.h.b16 %v2576
      %v3849 = vunpack.c.h.b16 %v2577
      %v3850 = vunpack.c.h.b16 %v2578
      %v3851 = vunpack.c.h.b16 %v2579
      %v3852 = vunpack.c.h.b16 %v2580
      %v3853 = vunpack.c.h.b16 %v2581
      %v3854 = vunpack.c.l.b16 %v2582
      %v3855 = vunpack.c.l.b16 %v2583
      %v3856 = vunpack.c.l.b16 %v2584
      %v3857 = vunpack.c.l.b16 %v2585
      %v3858 = vunpack.c.l.b16 %v2586
      %v3859 = vunpack.c.l.b16 %v2587
      %v3860 = vunpack.c.l.b16 %v2588
      %v3861 = vunpack.c.l.b16 %v2589
      %v3862 = vunpack.c.h.b16 %v2582
      %v3863 = vunpack.c.h.b16 %v2583
      %v3864 = vunpack.c.h.b16 %v2584
      %v3865 = vunpack.c.h.b16 %v2585
      %v3866 = vunpack.c.h.b16 %v2586
      %v3867 = vunpack.c.h.b16 %v2587
      %v3868 = vunpack.c.h.b16 %v2588
      %v3869 = vunpack.c.h.b16 %v2589
      %v3870 = vunpack.c.l.b16 %v2590
      %v3871 = vunpack.c.l.b16 %v2591
      %v3872 = vunpack.c.l.b16 %v2592
      %v3873 = vunpack.c.l.b16 %v2593
      %v3874 = vunpack.c.l.b16 %v2594
      %v3875 = vunpack.c.l.b16 %v2595
      %v3876 = vunpack.c.l.b16 %v2596
      %v3877 = vunpack.c.l.b16 %v2597
      %v3878 = vunpack.c.h.b16 %v2590
      %v3879 = vunpack.c.h.b16 %v2591
      %v3880 = vunpack.c.h.b16 %v2592
      %v3881 = vunpack.c.h.b16 %v2593
      %v3882 = vunpack.c.h.b16 %v2594
      %v3883 = vunpack.c.h.b16 %v2595
      %v3884 = vunpack.c.h.b16 %v2596
      %v3885 = vunpack.c.h.b16 %v2597
      %v3886 = vunpack.c.l.b16 %v2598
      %v3887 = vunpack.c.l.b16 %v2599
      %v3888 = vunpack.c.l.b16 %v2600
      %v3889 = vunpack.c.l.b16 %v2601
      %v3890 = vunpack.c.l.b16 %v2602
      %v3891 = vunpack.c.l.b16 %v2603
      %v3892 = vunpack.c.l.b16 %v2604
      %v3893 = vunpack.c.l.b16 %v2605
      %v3894 = vunpack.c.h.b16 %v2598
      %v3895 = vunpack.c.h.b16 %v2599
      %v3896 = vunpack.c.h.b16 %v2600
      %v3897 = vunpack.c.h.b16 %v2601
      %v3898 = vunpack.c.h.b16 %v2602
      %v3899 = vunpack.c.h.b16 %v2603
      %v3900 = vunpack.c.h.b16 %v2604
      %v3901 = vunpack.c.h.b16 %v2605
      %v3902 = vunpack.c.l.b16 %v2606
      %v3903 = vunpack.c.l.b16 %v2607
      %v3904 = vunpack.c.l.b16 %v2608
      %v3905 = vunpack.c.l.b16 %v2609
      %v3906 = vunpack.c.l.b16 %v2610
      %v3907 = vunpack.c.l.b16 %v2611
      %v3908 = vunpack.c.l.b16 %v2612
      %v3909 = vunpack.c.l.b16 %v2613
      %v3910 = vunpack.c.h.b16 %v2606
      %v3911 = vunpack.c.h.b16 %v2607
      %v3912 = vunpack.c.h.b16 %v2608
      %v3913 = vunpack.c.h.b16 %v2609
      %v3914 = vunpack.c.h.b16 %v2610
      %v3915 = vunpack.c.h.b16 %v2611
      %v3916 = vunpack.c.h.b16 %v2612
      %v3917 = vunpack.c.h.b16 %v2613
      %v3918 = vunpack.c.l.b16 %v2614
      %v3919 = vunpack.c.l.b16 %v2615
      %v3920 = vunpack.c.l.b16 %v2616
      %v3921 = vunpack.c.l.b16 %v2617
      %v3922 = vunpack.c.l.b16 %v2618
      %v3923 = vunpack.c.l.b16 %v2619
      %v3924 = vunpack.c.l.b16 %v2620
      %v3925 = vunpack.c.l.b16 %v2621
      %v3926 = vunpack.c.h.b16 %v2614
      %v3927 = vunpack.c.h.b16 %v2615
      %v3928 = vunpack.c.h.b16 %v2616
      %v3929 = vunpack.c.h.b16 %v2617
      %v3930 = vunpack.c.h.b16 %v2618
      %v3931 = vunpack.c.h.b16 %v2619
      %v3932 = vunpack.c.h.b16 %v2620
      %v3933 = vunpack.c.h.b16 %v2621
      %v3934 = vunpack.c.l.b16 %v2622
      %v3935 = vunpack.c.l.b16 %v2623
      %v3936 = vunpack.c.l.b16 %v2624
      %v3937 = vunpack.c.l.b16 %v2625
      %v3938 = vunpack.c.l.b16 %v2626
      %v3939 = vunpack.c.l.b16 %v2627
      %v3940 = vunpack.c.l.b16 %v2628
      %v3941 = vunpack.c.l.b16 %v2629
      %v3942 = vunpack.c.h.b16 %v2622
      %v3943 = vunpack.c.h.b16 %v2623
      %v3944 = vunpack.c.h.b16 %v2624
      %v3945 = vunpack.c.h.b16 %v2625
      %v3946 = vunpack.c.h.b16 %v2626
      %v3947 = vunpack.c.h.b16 %v2627
      %v3948 = vunpack.c.h.b16 %v2628
      %v3949 = vunpack.c.h.b16 %v2629
      %v3950 = vunpack.c.l.b16 %v2630
      %v3951 = vunpack.c.l.b16 %v2631
      %v3952 = vunpack.c.l.b16 %v2632
      %v3953 = vunpack.c.l.b16 %v2633
      %v3954 = vunpack.c.l.b16 %v2634
      %v3955 = vunpack.c.l.b16 %v2635
      %v3956 = vunpack.c.l.b16 %v2636
      %v3957 = vunpack.c.l.b16 %v2637
      %v3958 = vunpack.c.h.b16 %v2630
      %v3959 = vunpack.c.h.b16 %v2631
      %v3960 = vunpack.c.h.b16 %v2632
      %v3961 = vunpack.c.h.b16 %v2633
      %v3962 = vunpack.c.h.b16 %v2634
      %v3963 = vunpack.c.h.b16 %v2635
      %v3964 = vunpack.c.h.b16 %v2636
      %v3965 = vunpack.c.h.b16 %v2637
      %v3966 = vunpack.c.l.b16 %v2638
      %v3967 = vunpack.c.l.b16 %v2639
      %v3968 = vunpack.c.l.b16 %v2640
      %v3969 = vunpack.c.l.b16 %v2641
      %v3970 = vunpack.c.l.b16 %v2642
      %v3971 = vunpack.c.l.b16 %v2643
      %v3972 = vunpack.c.l.b16 %v2644
      %v3973 = vunpack.c.l.b16 %v2645
      %v3974 = vunpack.c.h.b16 %v2638
      %v3975 = vunpack.c.h.b16 %v2639
      %v3976 = vunpack.c.h.b16 %v2640
      %v3977 = vunpack.c.h.b16 %v2641
      %v3978 = vunpack.c.h.b16 %v2642
      %v3979 = vunpack.c.h.b16 %v2643
      %v3980 = vunpack.c.h.b16 %v2644
      %v3981 = vunpack.c.h.b16 %v2645
      %v3982 = vunpack.c.l.b16 %v2646
      %v3983 = vunpack.c.l.b16 %v2647
      %v3984 = vunpack.c.l.b16 %v2648
      %v3985 = vunpack.c.l.b16 %v2649
      %v3986 = vunpack.c.l.b16 %v2650
      %v3987 = vunpack.c.l.b16 %v2651
      %v3988 = vunpack.c.l.b16 %v2652
      %v3989 = vunpack.c.l.b16 %v2653
      %v3990 = vunpack.c.h.b16 %v2646
      %v3991 = vunpack.c.h.b16 %v2647
      %v3992 = vunpack.c.h.b16 %v2648
      %v3993 = vunpack.c.h.b16 %v2649
      %v3994 = vunpack.c.h.b16 %v2650
      %v3995 = vunpack.c.h.b16 %v2651
      %v3996 = vunpack.c.h.b16 %v2652
      %v3997 = vunpack.c.h.b16 %v2653
      %v3998 = vunpack.c.l.b16 %v2654
      %v3999 = vunpack.c.l.b16 %v2655
      %v4000 = vunpack.c.l.b16 %v2656
      %v4001 = vunpack.c.l.b16 %v2657
      %v4002 = vunpack.c.l.b16 %v2658
      %v4003 = vunpack.c.l.b16 %v2659
      %v4004 = vunpack.c.l.b16 %v2660
      %v4005 = vunpack.c.l.b16 %v2661
      %v4006 = vunpack.c.h.b16 %v2654
      %v4007 = vunpack.c.h.b16 %v2655
      %v4008 = vunpack.c.h.b16 %v2656
      %v4009 = vunpack.c.h.b16 %v2657
      %v4010 = vunpack.c.h.b16 %v2658
      %v4011 = vunpack.c.h.b16 %v2659
      %v4012 = vunpack.c.h.b16 %v2660
      %v4013 = vunpack.c.h.b16 %v2661
      %v4014 = vunpack.c.l.b16 %v2662
      %v4015 = vunpack.c.l.b16 %v2663
      %v4016 = vunpack.c.l.b16 %v2664
      %v4017 = vunpack.c.l.b16 %v2665
      %v4018 = vunpack.c.l.b16 %v2666
      %v4019 = vunpack.c.l.b16 %v2667
      %v4020 = vunpack.c.l.b16 %v2668
      %v4021 = vunpack.c.l.b16 %v2669
      %v4022 = vunpack.c.h.b16 %v2662
      %v4023 = vunpack.c.h.b16 %v2663
      %v4024 = vunpack.c.h.b16 %v2664
      %v4025 = vunpack.c.h.b16 %v2665
      %v4026 = vunpack.c.h.b16 %v2666
      %v4027 = vunpack.c.h.b16 %v2667
      %v4028 = vunpack.c.h.b16 %v2668
      %v4029 = vunpack.c.h.b16 %v2669
      %v4030 = vunpack.c.l.b16 %v2670
      %v4031 = vunpack.c.l.b16 %v2671
      %v4032 = vunpack.c.l.b16 %v2672
      %v4033 = vunpack.c.l.b16 %v2673
      %v4034 = vunpack.c.l.b16 %v2674
      %v4035 = vunpack.c.l.b16 %v2675
      %v4036 = vunpack.c.l.b16 %v2676
      %v4037 = vunpack.c.l.b16 %v2677
      %v4038 = vunpack.c.h.b16 %v2670
      %v4039 = vunpack.c.h.b16 %v2671
      %v4040 = vunpack.c.h.b16 %v2672
      %v4041 = vunpack.c.h.b16 %v2673
      %v4042 = vunpack.c.h.b16 %v2674
      %v4043 = vunpack.c.h.b16 %v2675
      %v4044 = vunpack.c.h.b16 %v2676
      %v4045 = vunpack.c.h.b16 %v2677
      %v4046 = vunpack.c.l.b16 %v2678
      %v4047 = vunpack.c.l.b16 %v2679
      %v4048 = vunpack.c.l.b16 %v2680
      %v4049 = vunpack.c.l.b16 %v2681
      %v4050 = vunpack.c.l.b16 %v2682
      %v4051 = vunpack.c.l.b16 %v2683
      %v4052 = vunpack.c.l.b16 %v2684
      %v4053 = vunpack.c.l.b16 %v2685
      %v4054 = vunpack.c.h.b16 %v2678
      %v4055 = vunpack.c.h.b16 %v2679
      %v4056 = vunpack.c.h.b16 %v2680
      %v4057 = vunpack.c.h.b16 %v2681
      %v4058 = vunpack.c.h.b16 %v2682
      %v4059 = vunpack.c.h.b16 %v2683
      %v4060 = vunpack.c.h.b16 %v2684
      %v4061 = vunpack.c.h.b16 %v2685
      %v4062 = vunpack.c.l.b16 %v2686
      %v4063 = vunpack.c.l.b16 %v2687
      %v4064 = vunpack.c.l.b16 %v2688
      %v4065 = vunpack.c.l.b16 %v2689
      %v4066 = vunpack.c.l.b16 %v2690
      %v4067 = vunpack.c.l.b16 %v2691
      %v4068 = vunpack.c.l.b16 %v2692
      %v4069 = vunpack.c.l.b16 %v2693
      %v4070 = vunpack.c.h.b16 %v2686
      %v4071 = vunpack.c.h.b16 %v2687
      %v4072 = vunpack.c.h.b16 %v2688
      %v4073 = vunpack.c.h.b16 %v2689
      %v4074 = vunpack.c.h.b16 %v2690
      %v4075 = vunpack.c.h.b16 %v2691
      %v4076 = vunpack.c.h.b16 %v2692
      %v4077 = vunpack.c.h.b16 %v2693
      %v4078 = vunpack.c.l.b16 %v2694
      %v4079 = vunpack.c.l.b16 %v2695
      %v4080 = vunpack.c.l.b16 %v2696
      %v4081 = vunpack.c.l.b16 %v2697
      %v4082 = vunpack.c.l.b16 %v2698
      %v4083 = vunpack.c.l.b16 %v2699
      %v4084 = vunpack.c.l.b16 %v2700
      %v4085 = vunpack.c.l.b16 %v2701
      %v4086 = vunpack.c.h.b16 %v2694
      %v4087 = vunpack.c.h.b16 %v2695
      %v4088 = vunpack.c.h.b16 %v2696
      %v4089 = vunpack.c.h.b16 %v2697
      %v4090 = vunpack.c.h.b16 %v2698
      %v4091 = vunpack.c.h.b16 %v2699
      %v4092 = vunpack.c.h.b16 %v2700
      %v4093 = vunpack.c.h.b16 %v2701
      %v4094 = vunpack.c.l.b16 %v2702
      %v4095 = vunpack.c.l.b16 %v2703
      %v4096 = vunpack.c.l.b16 %v2704
      %v4097 = vunpack.c.l.b16 %v2705
      %v4098 = vunpack.c.l.b16 %v2706
      %v4099 = vunpack.c.l.b16 %v2707
      %v4100 = vunpack.c.l.b16 %v2708
      %v4101 = vunpack.c.l.b16 %v2709
      %v4102 = vunpack.c.h.b16 %v2702
      %v4103 = vunpack.c.h.b16 %v2703
      %v4104 = vunpack.c.h.b16 %v2704
      %v4105 = vunpack.c.h.b16 %v2705
      %v4106 = vunpack.c.h.b16 %v2706
      %v4107 = vunpack.c.h.b16 %v2707
      %v4108 = vunpack.c.h.b16 %v2708
      %v4109 = vunpack.c.h.b16 %v2709
      %v4110 = vunpack.c.l.b16 %v2710
      %v4111 = vunpack.c.l.b16 %v2711
      %v4112 = vunpack.c.l.b16 %v2712
      %v4113 = vunpack.c.l.b16 %v2713
      %v4114 = vunpack.c.l.b16 %v2714
      %v4115 = vunpack.c.l.b16 %v2715
      %v4116 = vunpack.c.l.b16 %v2716
      %v4117 = vunpack.c.l.b16 %v2717
      %v4118 = vunpack.c.h.b16 %v2710
      %v4119 = vunpack.c.h.b16 %v2711
      %v4120 = vunpack.c.h.b16 %v2712
      %v4121 = vunpack.c.h.b16 %v2713
      %v4122 = vunpack.c.h.b16 %v2714
      %v4123 = vunpack.c.h.b16 %v2715
      %v4124 = vunpack.c.h.b16 %v2716
      %v4125 = vunpack.c.h.b16 %v2717
      %v4126 = vunpack.c.l.b16 %v2718
      %v4127 = vunpack.c.l.b16 %v2719
      %v4128 = vunpack.c.l.b16 %v2720
      %v4129 = vunpack.c.l.b16 %v2721
      %v4130 = vunpack.c.l.b16 %v2722
      %v4131 = vunpack.c.l.b16 %v2723
      %v4132 = vunpack.c.l.b16 %v2724
      %v4133 = vunpack.c.l.b16 %v2725
      %v4134 = vunpack.c.h.b16 %v2718
      %v4135 = vunpack.c.h.b16 %v2719
      %v4136 = vunpack.c.h.b16 %v2720
      %v4137 = vunpack.c.h.b16 %v2721
      %v4138 = vunpack.c.h.b16 %v2722
      %v4139 = vunpack.c.h.b16 %v2723
      %v4140 = vunpack.c.h.b16 %v2724
      %v4141 = vunpack.c.h.b16 %v2725
      %v4142 = vunpack.c.l.b16 %v2726
      %v4143 = vunpack.c.l.b16 %v2727
      %v4144 = vunpack.c.l.b16 %v2728
      %v4145 = vunpack.c.l.b16 %v2729
      %v4146 = vunpack.c.l.b16 %v2730
      %v4147 = vunpack.c.l.b16 %v2731
      %v4148 = vunpack.c.l.b16 %v2732
      %v4149 = vunpack.c.l.b16 %v2733
      %v4150 = vunpack.c.h.b16 %v2726
      %v4151 = vunpack.c.h.b16 %v2727
      %v4152 = vunpack.c.h.b16 %v2728
      %v4153 = vunpack.c.h.b16 %v2729
      %v4154 = vunpack.c.h.b16 %v2730
      %v4155 = vunpack.c.h.b16 %v2731
      %v4156 = vunpack.c.h.b16 %v2732
      %v4157 = vunpack.c.h.b16 %v2733
      %v4158 = vunpack.c.l.b16 %v2734
      %v4159 = vunpack.c.l.b16 %v2735
      %v4160 = vunpack.c.l.b16 %v2736
      %v4161 = vunpack.c.l.b16 %v2737
      %v4162 = vunpack.c.l.b16 %v2738
      %v4163 = vunpack.c.l.b16 %v2739
      %v4164 = vunpack.c.l.b16 %v2740
      %v4165 = vunpack.c.l.b16 %v2741
      %v4166 = vunpack.c.h.b16 %v2734
      %v4167 = vunpack.c.h.b16 %v2735
      %v4168 = vunpack.c.h.b16 %v2736
      %v4169 = vunpack.c.h.b16 %v2737
      %v4170 = vunpack.c.h.b16 %v2738
      %v4171 = vunpack.c.h.b16 %v2739
      %v4172 = vunpack.c.h.b16 %v2740
      %v4173 = vunpack.c.h.b16 %v2741
      %v4174 = vunpack.c.l.b16 %v2742
      %v4175 = vunpack.c.l.b16 %v2743
      %v4176 = vunpack.c.l.b16 %v2744
      %v4177 = vunpack.c.l.b16 %v2745
      %v4178 = vunpack.c.l.b16 %v2746
      %v4179 = vunpack.c.l.b16 %v2747
      %v4180 = vunpack.c.l.b16 %v2748
      %v4181 = vunpack.c.l.b16 %v2749
      %v4182 = vunpack.c.h.b16 %v2742
      %v4183 = vunpack.c.h.b16 %v2743
      %v4184 = vunpack.c.h.b16 %v2744
      %v4185 = vunpack.c.h.b16 %v2745
      %v4186 = vunpack.c.h.b16 %v2746
      %v4187 = vunpack.c.h.b16 %v2747
      %v4188 = vunpack.c.h.b16 %v2748
      %v4189 = vunpack.c.h.b16 %v2749
      %v4190 = vunpack.c.l.b16 %v2750
      %v4191 = vunpack.c.l.b16 %v2751
      %v4192 = vunpack.c.l.b16 %v2752
      %v4193 = vunpack.c.l.b16 %v2753
      %v4194 = vunpack.c.l.b16 %v2754
      %v4195 = vunpack.c.l.b16 %v2755
      %v4196 = vunpack.c.l.b16 %v2756
      %v4197 = vunpack.c.l.b16 %v2757
      %v4198 = vunpack.c.h.b16 %v2750
      %v4199 = vunpack.c.h.b16 %v2751
      %v4200 = vunpack.c.h.b16 %v2752
      %v4201 = vunpack.c.h.b16 %v2753
      %v4202 = vunpack.c.h.b16 %v2754
      %v4203 = vunpack.c.h.b16 %v2755
      %v4204 = vunpack.c.h.b16 %v2756
      %v4205 = vunpack.c.h.b16 %v2757
      %v4206 = vunpack.c.l.b16 %v2758
      %v4207 = vunpack.c.l.b16 %v2759
      %v4208 = vunpack.c.l.b16 %v2760
      %v4209 = vunpack.c.l.b16 %v2761
      %v4210 = vunpack.c.l.b16 %v2762
      %v4211 = vunpack.c.l.b16 %v2763
      %v4212 = vunpack.c.l.b16 %v2764
      %v4213 = vunpack.c.l.b16 %v2765
      %v4214 = vunpack.c.h.b16 %v2758
      %v4215 = vunpack.c.h.b16 %v2759
      %v4216 = vunpack.c.h.b16 %v2760
      %v4217 = vunpack.c.h.b16 %v2761
      %v4218 = vunpack.c.h.b16 %v2762
      %v4219 = vunpack.c.h.b16 %v2763
      %v4220 = vunpack.c.h.b16 %v2764
      %v4221 = vunpack.c.h.b16 %v2765
      %v4222 = vunpack.c.l.b16 %v2766
      %v4223 = vunpack.c.l.b16 %v2767
      %v4224 = vunpack.c.l.b16 %v2768
      %v4225 = vunpack.c.l.b16 %v2769
      %v4226 = vunpack.c.l.b16 %v2770
      %v4227 = vunpack.c.l.b16 %v2771
      %v4228 = vunpack.c.l.b16 %v2772
      %v4229 = vunpack.c.l.b16 %v2773
      %v4230 = vunpack.c.h.b16 %v2766
      %v4231 = vunpack.c.h.b16 %v2767
      %v4232 = vunpack.c.h.b16 %v2768
      %v4233 = vunpack.c.h.b16 %v2769
      %v4234 = vunpack.c.h.b16 %v2770
      %v4235 = vunpack.c.h.b16 %v2771
      %v4236 = vunpack.c.h.b16 %v2772
      %v4237 = vunpack.c.h.b16 %v2773
      %v4238 = vunpack.c.l.b16 %v2774
      %v4239 = vunpack.c.l.b16 %v2775
      %v4240 = vunpack.c.l.b16 %v2776
      %v4241 = vunpack.c.l.b16 %v2777
      %v4242 = vunpack.c.l.b16 %v2778
      %v4243 = vunpack.c.l.b16 %v2779
      %v4244 = vunpack.c.l.b16 %v2780
      %v4245 = vunpack.c.l.b16 %v2781
      %v4246 = vunpack.c.h.b16 %v2774
      %v4247 = vunpack.c.h.b16 %v2775
      %v4248 = vunpack.c.h.b16 %v2776
      %v4249 = vunpack.c.h.b16 %v2777
      %v4250 = vunpack.c.h.b16 %v2778
      %v4251 = vunpack.c.h.b16 %v2779
      %v4252 = vunpack.c.h.b16 %v2780
      %v4253 = vunpack.c.h.b16 %v2781
      %v4254 = vunpack.c.l.b16 %v2782
      %v4255 = vunpack.c.l.b16 %v2783
      %v4256 = vunpack.c.l.b16 %v2784
      %v4257 = vunpack.c.l.b16 %v2785
      %v4258 = vunpack.c.l.b16 %v2786
      %v4259 = vunpack.c.l.b16 %v2787
      %v4260 = vunpack.c.l.b16 %v2788
      %v4261 = vunpack.c.l.b16 %v2789
      %v4262 = vunpack.c.h.b16 %v2782
      %v4263 = vunpack.c.h.b16 %v2783
      %v4264 = vunpack.c.h.b16 %v2784
      %v4265 = vunpack.c.h.b16 %v2785
      %v4266 = vunpack.c.h.b16 %v2786
      %v4267 = vunpack.c.h.b16 %v2787
      %v4268 = vunpack.c.h.b16 %v2788
      %v4269 = vunpack.c.h.b16 %v2789
      %v4270 = vunpack.c.l.b16 %v2790
      %v4271 = vunpack.c.l.b16 %v2791
      %v4272 = vunpack.c.l.b16 %v2792
      %v4273 = vunpack.c.l.b16 %v2793
      %v4274 = vunpack.c.l.b16 %v2794
      %v4275 = vunpack.c.l.b16 %v2795
      %v4276 = vunpack.c.l.b16 %v2796
      %v4277 = vunpack.c.l.b16 %v2797
      %v4278 = vunpack.c.h.b16 %v2790
      %v4279 = vunpack.c.h.b16 %v2791
      %v4280 = vunpack.c.h.b16 %v2792
      %v4281 = vunpack.c.h.b16 %v2793
      %v4282 = vunpack.c.h.b16 %v2794
      %v4283 = vunpack.c.h.b16 %v2795
      %v4284 = vunpack.c.h.b16 %v2796
      %v4285 = vunpack.c.h.b16 %v2797
      %v4286 = vunpack.c.l.b16 %v2798
      %v4287 = vunpack.c.l.b16 %v2799
      %v4288 = vunpack.c.l.b16 %v2800
      %v4289 = vunpack.c.l.b16 %v2801
      %v4290 = vunpack.c.l.b16 %v2802
      %v4291 = vunpack.c.l.b16 %v2803
      %v4292 = vunpack.c.l.b16 %v2804
      %v4293 = vunpack.c.l.b16 %v2805
      %v4294 = vunpack.c.h.b16 %v2798
      %v4295 = vunpack.c.h.b16 %v2799
      %v4296 = vunpack.c.h.b16 %v2800
      %v4297 = vunpack.c.h.b16 %v2801
      %v4298 = vunpack.c.h.b16 %v2802
      %v4299 = vunpack.c.h.b16 %v2803
      %v4300 = vunpack.c.h.b16 %v2804
      %v4301 = vunpack.c.h.b16 %v2805
      %v4302 = vunpack.c.l.b16 %v2806
      %v4303 = vunpack.c.l.b16 %v2807
      %v4304 = vunpack.c.l.b16 %v2808
      %v4305 = vunpack.c.l.b16 %v2809
      %v4306 = vunpack.c.l.b16 %v2810
      %v4307 = vunpack.c.l.b16 %v2811
      %v4308 = vunpack.c.l.b16 %v2812
      %v4309 = vunpack.c.l.b16 %v2813
      %v4310 = vunpack.c.h.b16 %v2806
      %v4311 = vunpack.c.h.b16 %v2807
      %v4312 = vunpack.c.h.b16 %v2808
      %v4313 = vunpack.c.h.b16 %v2809
      %v4314 = vunpack.c.h.b16 %v2810
      %v4315 = vunpack.c.h.b16 %v2811
      %v4316 = vunpack.c.h.b16 %v2812
      %v4317 = vunpack.c.h.b16 %v2813
      %v4318 = vunpack.c.l.b16 %v2814
      %v4319 = vunpack.c.l.b16 %v2815
      %v4320 = vunpack.c.l.b16 %v2816
      %v4321 = vunpack.c.l.b16 %v2817
      %v4322 = vunpack.c.l.b16 %v2818
      %v4323 = vunpack.c.l.b16 %v2819
      %v4324 = vunpack.c.l.b16 %v2820
      %v4325 = vunpack.c.l.b16 %v2821
      %v4326 = vunpack.c.h.b16 %v2814
      %v4327 = vunpack.c.h.b16 %v2815
      %v4328 = vunpack.c.h.b16 %v2816
      %v4329 = vunpack.c.h.b16 %v2817
      %v4330 = vunpack.c.h.b16 %v2818
      %v4331 = vunpack.c.h.b16 %v2819
      %v4332 = vunpack.c.h.b16 %v2820
      %v4333 = vunpack.c.h.b16 %v2821
      %v4334 = vunpack.c.l.b16 %v2822
      %v4335 = vunpack.c.l.b16 %v2823
      %v4336 = vunpack.c.l.b16 %v2824
      %v4337 = vunpack.c.l.b16 %v2825
      %v4338 = vunpack.c.l.b16 %v2826
      %v4339 = vunpack.c.l.b16 %v2827
      %v4340 = vunpack.c.l.b16 %v2828
      %v4341 = vunpack.c.l.b16 %v2829
      %v4342 = vunpack.c.h.b16 %v2822
      %v4343 = vunpack.c.h.b16 %v2823
      %v4344 = vunpack.c.h.b16 %v2824
      %v4345 = vunpack.c.h.b16 %v2825
      %v4346 = vunpack.c.h.b16 %v2826
      %v4347 = vunpack.c.h.b16 %v2827
      %v4348 = vunpack.c.h.b16 %v2828
      %v4349 = vunpack.c.h.b16 %v2829
      %v4350 = vunpack.c.l.b16 %v2830
      %v4351 = vunpack.c.l.b16 %v2831
      %v4352 = vunpack.c.l.b16 %v2832
      %v4353 = vunpack.c.l.b16 %v2833
      %v4354 = vunpack.c.l.b16 %v2834
      %v4355 = vunpack.c.l.b16 %v2835
      %v4356 = vunpack.c.l.b16 %v2836
      %v4357 = vunpack.c.l.b16 %v2837
      %v4358 = vunpack.c.h.b16 %v2830
      %v4359 = vunpack.c.h.b16 %v2831
      %v4360 = vunpack.c.h.b16 %v2832
      %v4361 = vunpack.c.h.b16 %v2833
      %v4362 = vunpack.c.h.b16 %v2834
      %v4363 = vunpack.c.h.b16 %v2835
      %v4364 = vunpack.c.h.b16 %v2836
      %v4365 = vunpack.c.h.b16 %v2837
      %v4366 = vunpack.c.l.b16 %v2838
      %v4367 = vunpack.c.l.b16 %v2839
      %v4368 = vunpack.c.l.b16 %v2840
      %v4369 = vunpack.c.l.b16 %v2841
      %v4370 = vunpack.c.l.b16 %v2842
      %v4371 = vunpack.c.l.b16 %v2843
      %v4372 = vunpack.c.l.b16 %v2844
      %v4373 = vunpack.c.l.b16 %v2845
      %v4374 = vunpack.c.h.b16 %v2838
      %v4375 = vunpack.c.h.b16 %v2839
      %v4376 = vunpack.c.h.b16 %v2840
      %v4377 = vunpack.c.h.b16 %v2841
      %v4378 = vunpack.c.h.b16 %v2842
      %v4379 = vunpack.c.h.b16 %v2843
      %v4380 = vunpack.c.h.b16 %v2844
      %v4381 = vunpack.c.h.b16 %v2845
      %v4382 = vpack.c.b16 %v3359, %v3358
      %v4383 = vpack.c.b16 %v3361, %v3360
      %v4384 = vpack.c.b16 %v3363, %v3362
      %v4385 = vpack.c.b16 %v3365, %v3364
      %v4386 = vpack.c.b16 %v3367, %v3366
      %v4387 = vpack.c.b16 %v3369, %v3368
      %v4388 = vpack.c.b16 %v3371, %v3370
      %v4389 = vpack.c.b16 %v3373, %v3372
      %v4390 = vpack.c.b16 %v3375, %v3374
      %v4391 = vpack.c.b16 %v3377, %v3376
      %v4392 = vpack.c.b16 %v3379, %v3378
      %v4393 = vpack.c.b16 %v3381, %v3380
      %v4394 = vpack.c.b16 %v3383, %v3382
      %v4395 = vpack.c.b16 %v3385, %v3384
      %v4396 = vpack.c.b16 %v3387, %v3386
      %v4397 = vpack.c.b16 %v3389, %v3388
      %v4398 = vpack.c.b16 %v3391, %v3390
      %v4399 = vpack.c.b16 %v3393, %v3392
      %v4400 = vpack.c.b16 %v3395, %v3394
      %v4401 = vpack.c.b16 %v3397, %v3396
      %v4402 = vpack.c.b16 %v3399, %v3398
      %v4403 = vpack.c.b16 %v3401, %v3400
      %v4404 = vpack.c.b16 %v3403, %v3402
      %v4405 = vpack.c.b16 %v3405, %v3404
      %v4406 = vpack.c.b16 %v3407, %v3406
      %v4407 = vpack.c.b16 %v3409, %v3408
      %v4408 = vpack.c.b16 %v3411, %v3410
      %v4409 = vpack.c.b16 %v3413, %v3412
      %v4410 = vpack.c.b16 %v3415, %v3414
      %v4411 = vpack.c.b16 %v3417, %v3416
      %v4412 = vpack.c.b16 %v3419, %v3418
      %v4413 = vpack.c.b16 %v3421, %v3420
      %v4414 = vpack.c.b16 %v3423, %v3422
      %v4415 = vpack.c.b16 %v3425, %v3424
      %v4416 = vpack.c.b16 %v3427, %v3426
      %v4417 = vpack.c.b16 %v3429, %v3428
      %v4418 = vpack.c.b16 %v3431, %v3430
      %v4419 = vpack.c.b16 %v3433, %v3432
      %v4420 = vpack.c.b16 %v3435, %v3434
      %v4421 = vpack.c.b16 %v3437, %v3436
      %v4422 = vpack.c.b16 %v3439, %v3438
      %v4423 = vpack.c.b16 %v3441, %v3440
      %v4424 = vpack.c.b16 %v3443, %v3442
      %v4425 = vpack.c.b16 %v3445, %v3444
      %v4426 = vpack.c.b16 %v3447, %v3446
      %v4427 = vpack.c.b16 %v3449, %v3448
      %v4428 = vpack.c.b16 %v3451, %v3450
      %v4429 = vpack.c.b16 %v3453, %v3452
      %v4430 = vpack.c.b16 %v3455, %v3454
      %v4431 = vpack.c.b16 %v3457, %v3456
      %v4432 = vpack.c.b16 %v3459, %v3458
      %v4433 = vpack.c.b16 %v3461, %v3460
      %v4434 = vpack.c.b16 %v3463, %v3462
      %v4435 = vpack.c.b16 %v3465, %v3464
      %v4436 = vpack.c.b16 %v3467, %v3466
      %v4437 = vpack.c.b16 %v3469, %v3468
      %v4438 = vpack.c.b16 %v3471, %v3470
      %v4439 = vpack.c.b16 %v3473, %v3472
      %v4440 = vpack.c.b16 %v3475, %v3474
      %v4441 = vpack.c.b16 %v3477, %v3476
      %v4442 = vpack.c.b16 %v3479, %v3478
      %v4443 = vpack.c.b16 %v3481, %v3480
      %v4444 = vpack.c.b16 %v3483, %v3482
      %v4445 = vpack.c.b16 %v3485, %v3484
      %v4446 = vpack.c.b16 %v3487, %v3486
      %v4447 = vpack.c.b16 %v3489, %v3488
      %v4448 = vpack.c.b16 %v3491, %v3490
      %v4449 = vpack.c.b16 %v3493, %v3492
      %v4450 = vpack.c.b16 %v3495, %v3494
      %v4451 = vpack.c.b16 %v3497, %v3496
      %v4452 = vpack.c.b16 %v3499, %v3498
      %v4453 = vpack.c.b16 %v3501, %v3500
      %v4454 = vpack.c.b16 %v3503, %v3502
      %v4455 = vpack.c.b16 %v3505, %v3504
      %v4456 = vpack.c.b16 %v3507, %v3506
      %v4457 = vpack.c.b16 %v3509, %v3508
      %v4458 = vpack.c.b16 %v3511, %v3510
      %v4459 = vpack.c.b16 %v3513, %v3512
      %v4460 = vpack.c.b16 %v3515, %v3514
      %v4461 = vpack.c.b16 %v3517, %v3516
      %v4462 = vpack.c.b16 %v3519, %v3518
      %v4463 = vpack.c.b16 %v3521, %v3520
      %v4464 = vpack.c.b16 %v3523, %v3522
      %v4465 = vpack.c.b16 %v3525, %v3524
      %v4466 = vpack.c.b16 %v3527, %v3526
      %v4467 = vpack.c.b16 %v3529, %v3528
      %v4468 = vpack.c.b16 %v3531, %v3530
      %v4469 = vpack.c.b16 %v3533, %v3532
      %v4470 = vpack.c.b16 %v3535, %v3534
      %v4471 = vpack.c.b16 %v3537, %v3536
      %v4472 = vpack.c.b16 %v3539, %v3538
      %v4473 = vpack.c.b16 %v3541, %v3540
      %v4474 = vpack.c.b16 %v3543, %v3542
      %v4475 = vpack.c.b16 %v3545, %v3544
      %v4476 = vpack.c.b16 %v3547, %v3546
      %v4477 = vpack.c.b16 %v3549, %v3548
      %v4478 = vpack.c.b16 %v3551, %v3550
      %v4479 = vpack.c.b16 %v3553, %v3552
      %v4480 = vpack.c.b16 %v3555, %v3554
      %v4481 = vpack.c.b16 %v3557, %v3556
      %v4482 = vpack.c.b16 %v3559, %v3558
      %v4483 = vpack.c.b16 %v3561, %v3560
      %v4484 = vpack.c.b16 %v3563, %v3562
      %v4485 = vpack.c.b16 %v3565, %v3564
      %v4486 = vpack.c.b16 %v3567, %v3566
      %v4487 = vpack.c.b16 %v3569, %v3568
      %v4488 = vpack.c.b16 %v3571, %v3570
      %v4489 = vpack.c.b16 %v3573, %v3572
      %v4490 = vpack.c.b16 %v3575, %v3574
      %v4491 = vpack.c.b16 %v3577, %v3576
      %v4492 = vpack.c.b16 %v3579, %v3578
      %v4493 = vpack.c.b16 %v3581, %v3580
      %v4494 = vpack.c.b16 %v3583, %v3582
      %v4495 = vpack.c.b16 %v3585, %v3584
      %v4496 = vpack.c.b16 %v3587, %v3586
      %v4497 = vpack.c.b16 %v3589, %v3588
      %v4498 = vpack.c.b16 %v3591, %v3590
      %v4499 = vpack.c.b16 %v3593, %v3592
      %v4500 = vpack.c.b16 %v3595, %v3594
      %v4501 = vpack.c.b16 %v3597, %v3596
      %v4502 = vpack.c.b16 %v3599, %v3598
      %v4503 = vpack.c.b16 %v3601, %v3600
      %v4504 = vpack.c.b16 %v3603, %v3602
      %v4505 = vpack.c.b16 %v3605, %v3604
      %v4506 = vpack.c.b16 %v3607, %v3606
      %v4507 = vpack.c.b16 %v3609, %v3608
      %v4508 = vpack.c.b16 %v3611, %v3610
      %v4509 = vpack.c.b16 %v3613, %v3612
      %v4510 = vpack.c.b16 %v3615, %v3614
      %v4511 = vpack.c.b16 %v3617, %v3616
      %v4512 = vpack.c.b16 %v3619, %v3618
      %v4513 = vpack.c.b16 %v3621, %v3620
      %v4514 = vpack.c.b16 %v3623, %v3622
      %v4515 = vpack.c.b16 %v3625, %v3624
      %v4516 = vpack.c.b16 %v3627, %v3626
      %v4517 = vpack.c.b16 %v3629, %v3628
      %v4518 = vpack.c.b16 %v3631, %v3630
      %v4519 = vpack.c.b16 %v3633, %v3632
      %v4520 = vpack.c.b16 %v3635, %v3634
      %v4521 = vpack.c.b16 %v3637, %v3636
      %v4522 = vpack.c.b16 %v3639, %v3638
      %v4523 = vpack.c.b16 %v3641, %v3640
      %v4524 = vpack.c.b16 %v3643, %v3642
      %v4525 = vpack.c.b16 %v3645, %v3644
      %v4526 = vpack.c.b16 %v3647, %v3646
      %v4527 = vpack.c.b16 %v3649, %v3648
      %v4528 = vpack.c.b16 %v3651, %v3650
      %v4529 = vpack.c.b16 %v3653, %v3652
      %v4530 = vpack.c.b16 %v3655, %v3654
      %v4531 = vpack.c.b16 %v3657, %v3656
      %v4532 = vpack.c.b16 %v3659, %v3658
      %v4533 = vpack.c.b16 %v3661, %v3660
      %v4534 = vpack.c.b16 %v3663, %v3662
      %v4535 = vpack.c.b16 %v3665, %v3664
      %v4536 = vpack.c.b16 %v3667, %v3666
      %v4537 = vpack.c.b16 %v3669, %v3668
      %v4538 = vpack.c.b16 %v3671, %v3670
      %v4539 = vpack.c.b16 %v3673, %v3672
      %v4540 = vpack.c.b16 %v3675, %v3674
      %v4541 = vpack.c.b16 %v3677, %v3676
      %v4542 = vpack.c.b16 %v3679, %v3678
      %v4543 = vpack.c.b16 %v3681, %v3680
      %v4544 = vpack.c.b16 %v3683, %v3682
      %v4545 = vpack.c.b16 %v3685, %v3684
      %v4546 = vpack.c.b16 %v3687, %v3686
      %v4547 = vpack.c.b16 %v3689, %v3688
      %v4548 = vpack.c.b16 %v3691, %v3690
      %v4549 = vpack.c.b16 %v3693, %v3692
      %v4550 = vpack.c.b16 %v3695, %v3694
      %v4551 = vpack.c.b16 %v3697, %v3696
      %v4552 = vpack.c.b16 %v3699, %v3698
      %v4553 = vpack.c.b16 %v3701, %v3700
      %v4554 = vpack.c.b16 %v3703, %v3702
      %v4555 = vpack.c.b16 %v3705, %v3704
      %v4556 = vpack.c.b16 %v3707, %v3706
      %v4557 = vpack.c.b16 %v3709, %v3708
      %v4558 = vpack.c.b16 %v3711, %v3710
      %v4559 = vpack.c.b16 %v3713, %v3712
      %v4560 = vpack.c.b16 %v3715, %v3714
      %v4561 = vpack.c.b16 %v3717, %v3716
      %v4562 = vpack.c.b16 %v3719, %v3718
      %v4563 = vpack.c.b16 %v3721, %v3720
      %v4564 = vpack.c.b16 %v3723, %v3722
      %v4565 = vpack.c.b16 %v3725, %v3724
      %v4566 = vpack.c.b16 %v3727, %v3726
      %v4567 = vpack.c.b16 %v3729, %v3728
      %v4568 = vpack.c.b16 %v3731, %v3730
      %v4569 = vpack.c.b16 %v3733, %v3732
      %v4570 = vpack.c.b16 %v3735, %v3734
      %v4571 = vpack.c.b16 %v3737, %v3736
      %v4572 = vpack.c.b16 %v3739, %v3738
      %v4573 = vpack.c.b16 %v3741, %v3740
      %v4574 = vpack.c.b16 %v3743, %v3742
      %v4575 = vpack.c.b16 %v3745, %v3744
      %v4576 = vpack.c.b16 %v3747, %v3746
      %v4577 = vpack.c.b16 %v3749, %v3748
      %v4578 = vpack.c.b16 %v3751, %v3750
      %v4579 = vpack.c.b16 %v3753, %v3752
      %v4580 = vpack.c.b16 %v3755, %v3754
      %v4581 = vpack.c.b16 %v3757, %v3756
      %v4582 = vpack.c.b16 %v3759, %v3758
      %v4583 = vpack.c.b16 %v3761, %v3760
      %v4584 = vpack.c.b16 %v3763, %v3762
      %v4585 = vpack.c.b16 %v3765, %v3764
      %v4586 = vpack.c.b16 %v3767, %v3766
      %v4587 = vpack.c.b16 %v3769, %v3768
      %v4588 = vpack.c.b16 %v3771, %v3770
      %v4589 = vpack.c.b16 %v3773, %v3772
      %v4590 = vpack.c.b16 %v3775, %v3774
      %v4591 = vpack.c.b16 %v3777, %v3776
      %v4592 = vpack.c.b16 %v3779, %v3778
      %v4593 = vpack.c.b16 %v3781, %v3780
      %v4594 = vpack.c.b16 %v3783, %v3782
      %v4595 = vpack.c.b16 %v3785, %v3784
      %v4596 = vpack.c.b16 %v3787, %v3786
      %v4597 = vpack.c.b16 %v3789, %v3788
      %v4598 = vpack.c.b16 %v3791, %v3790
      %v4599 = vpack.c.b16 %v3793, %v3792
      %v4600 = vpack.c.b16 %v3795, %v3794
      %v4601 = vpack.c.b16 %v3797, %v3796
      %v4602 = vpack.c.b16 %v3799, %v3798
      %v4603 = vpack.c.b16 %v3801, %v3800
      %v4604 = vpack.c.b16 %v3803, %v3802
      %v4605 = vpack.c.b16 %v3805, %v3804
      %v4606 = vpack.c.b16 %v3807, %v3806
      %v4607 = vpack.c.b16 %v3809, %v3808
      %v4608 = vpack.c.b16 %v3811, %v3810
      %v4609 = vpack.c.b16 %v3813, %v3812
      %v4610 = vpack.c.b16 %v3815, %v3814
      %v4611 = vpack.c.b16 %v3817, %v3816
      %v4612 = vpack.c.b16 %v3819, %v3818
      %v4613 = vpack.c.b16 %v3821, %v3820
      %v4614 = vpack.c.b16 %v3823, %v3822
      %v4615 = vpack.c.b16 %v3825, %v3824
      %v4616 = vpack.c.b16 %v3827, %v3826
      %v4617 = vpack.c.b16 %v3829, %v3828
      %v4618 = vpack.c.b16 %v3831, %v3830
      %v4619 = vpack.c.b16 %v3833, %v3832
      %v4620 = vpack.c.b16 %v3835, %v3834
      %v4621 = vpack.c.b16 %v3837, %v3836
      %v4622 = vpack.c.b16 %v3839, %v3838
      %v4623 = vpack.c.b16 %v3841, %v3840
      %v4624 = vpack.c.b16 %v3843, %v3842
      %v4625 = vpack.c.b16 %v3845, %v3844
      %v4626 = vpack.c.b16 %v3847, %v3846
      %v4627 = vpack.c.b16 %v3849, %v3848
      %v4628 = vpack.c.b16 %v3851, %v3850
      %v4629 = vpack.c.b16 %v3853, %v3852
      %v4630 = vpack.c.b16 %v3855, %v3854
      %v4631 = vpack.c.b16 %v3857, %v3856
      %v4632 = vpack.c.b16 %v3859, %v3858
      %v4633 = vpack.c.b16 %v3861, %v3860
      %v4634 = vpack.c.b16 %v3863, %v3862
      %v4635 = vpack.c.b16 %v3865, %v3864
      %v4636 = vpack.c.b16 %v3867, %v3866
      %v4637 = vpack.c.b16 %v3869, %v3868
      %v4638 = vpack.c.b16 %v3871, %v3870
      %v4639 = vpack.c.b16 %v3873, %v3872
      %v4640 = vpack.c.b16 %v3875, %v3874
      %v4641 = vpack.c.b16 %v3877, %v3876
      %v4642 = vpack.c.b16 %v3879, %v3878
      %v4643 = vpack.c.b16 %v3881, %v3880
      %v4644 = vpack.c.b16 %v3883, %v3882
      %v4645 = vpack.c.b16 %v3885, %v3884
      %v4646 = vpack.c.b16 %v3887, %v3886
      %v4647 = vpack.c.b16 %v3889, %v3888
      %v4648 = vpack.c.b16 %v3891, %v3890
      %v4649 = vpack.c.b16 %v3893, %v3892
      %v4650 = vpack.c.b16 %v3895, %v3894
      %v4651 = vpack.c.b16 %v3897, %v3896
      %v4652 = vpack.c.b16 %v3899, %v3898
      %v4653 = vpack.c.b16 %v3901, %v3900
      %v4654 = vpack.c.b16 %v3903, %v3902
      %v4655 = vpack.c.b16 %v3905, %v3904
      %v4656 = vpack.c.b16 %v3907, %v3906
      %v4657 = vpack.c.b16 %v3909, %v3908
      %v4658 = vpack.c.b16 %v3911, %v3910
      %v4659 = vpack.c.b16 %v3913, %v3912
      %v4660 = vpack.c.b16 %v3915, %v3914
      %v4661 = vpack.c.b16 %v3917, %v3916
      %v4662 = vpack.c.b16 %v3919, %v3918
      %v4663 = vpack.c.b16 %v3921, %v3920
      %v4664 = vpack.c.b16 %v3923, %v3922
      %v4665 = vpack.c.b16 %v3925, %v3924
      %v4666 = vpack.c.b16 %v3927, %v3926
      %v4667 = vpack.c.b16 %v3929, %v3928
      %v4668 = vpack.c.b16 %v3931, %v3930
      %v4669 = vpack.c.b16 %v3933, %v3932
      %v4670 = vpack.c.b16 %v3935, %v3934
      %v4671 = vpack.c.b16 %v3937, %v3936
      %v4672 = vpack.c.b16 %v3939, %v3938
      %v4673 = vpack.c.b16 %v3941, %v3940
      %v4674 = vpack.c.b16 %v3943, %v3942
      %v4675 = vpack.c.b16 %v3945, %v3944
      %v4676 = vpack.c.b16 %v3947, %v3946
      %v4677 = vpack.c.b16 %v3949, %v3948
      %v4678 = vpack.c.b16 %v3951, %v3950
      %v4679 = vpack.c.b16 %v3953, %v3952
      %v4680 = vpack.c.b16 %v3955, %v3954
      %v4681 = vpack.c.b16 %v3957, %v3956
      %v4682 = vpack.c.b16 %v3959, %v3958
      %v4683 = vpack.c.b16 %v3961, %v3960
      %v4684 = vpack.c.b16 %v3963, %v3962
      %v4685 = vpack.c.b16 %v3965, %v3964
      %v4686 = vpack.c.b16 %v3967, %v3966
      %v4687 = vpack.c.b16 %v3969, %v3968
      %v4688 = vpack.c.b16 %v3971, %v3970
      %v4689 = vpack.c.b16 %v3973, %v3972
      %v4690 = vpack.c.b16 %v3975, %v3974
      %v4691 = vpack.c.b16 %v3977, %v3976
      %v4692 = vpack.c.b16 %v3979, %v3978
      %v4693 = vpack.c.b16 %v3981, %v3980
      %v4694 = vpack.c.b16 %v3983, %v3982
      %v4695 = vpack.c.b16 %v3985, %v3984
      %v4696 = vpack.c.b16 %v3987, %v3986
      %v4697 = vpack.c.b16 %v3989, %v3988
      %v4698 = vpack.c.b16 %v3991, %v3990
      %v4699 = vpack.c.b16 %v3993, %v3992
      %v4700 = vpack.c.b16 %v3995, %v3994
      %v4701 = vpack.c.b16 %v3997, %v3996
      %v4702 = vpack.c.b16 %v3999, %v3998
      %v4703 = vpack.c.b16 %v4001, %v4000
      %v4704 = vpack.c.b16 %v4003, %v4002
      %v4705 = vpack.c.b16 %v4005, %v4004
      %v4706 = vpack.c.b16 %v4007, %v4006
      %v4707 = vpack.c.b16 %v4009, %v4008
      %v4708 = vpack.c.b16 %v4011, %v4010
      %v4709 = vpack.c.b16 %v4013, %v4012
      %v4710 = vpack.c.b16 %v4015, %v4014
      %v4711 = vpack.c.b16 %v4017, %v4016
      %v4712 = vpack.c.b16 %v4019, %v4018
      %v4713 = vpack.c.b16 %v4021, %v4020
      %v4714 = vpack.c.b16 %v4023, %v4022
      %v4715 = vpack.c.b16 %v4025, %v4024
      %v4716 = vpack.c.b16 %v4027, %v4026
      %v4717 = vpack.c.b16 %v4029, %v4028
      %v4718 = vpack.c.b16 %v4031, %v4030
      %v4719 = vpack.c.b16 %v4033, %v4032
      %v4720 = vpack.c.b16 %v4035, %v4034
      %v4721 = vpack.c.b16 %v4037, %v4036
      %v4722 = vpack.c.b16 %v4039, %v4038
      %v4723 = vpack.c.b16 %v4041, %v4040
      %v4724 = vpack.c.b16 %v4043, %v4042
      %v4725 = vpack.c.b16 %v4045, %v4044
      %v4726 = vpack.c.b16 %v4047, %v4046
      %v4727 = vpack.c.b16 %v4049, %v4048
      %v4728 = vpack.c.b16 %v4051, %v4050
      %v4729 = vpack.c.b16 %v4053, %v4052
      %v4730 = vpack.c.b16 %v4055, %v4054
      %v4731 = vpack.c.b16 %v4057, %v4056
      %v4732 = vpack.c.b16 %v4059, %v4058
      %v4733 = vpack.c.b16 %v4061, %v4060
      %v4734 = vpack.c.b16 %v4063, %v4062
      %v4735 = vpack.c.b16 %v4065, %v4064
      %v4736 = vpack.c.b16 %v4067, %v4066
      %v4737 = vpack.c.b16 %v4069, %v4068
      %v4738 = vpack.c.b16 %v4071, %v4070
      %v4739 = vpack.c.b16 %v4073, %v4072
      %v4740 = vpack.c.b16 %v4075, %v4074
      %v4741 = vpack.c.b16 %v4077, %v4076
      %v4742 = vpack.c.b16 %v4079, %v4078
      %v4743 = vpack.c.b16 %v4081, %v4080
      %v4744 = vpack.c.b16 %v4083, %v4082
      %v4745 = vpack.c.b16 %v4085, %v4084
      %v4746 = vpack.c.b16 %v4087, %v4086
      %v4747 = vpack.c.b16 %v4089, %v4088
      %v4748 = vpack.c.b16 %v4091, %v4090
      %v4749 = vpack.c.b16 %v4093, %v4092
      %v4750 = vpack.c.b16 %v4095, %v4094
      %v4751 = vpack.c.b16 %v4097, %v4096
      %v4752 = vpack.c.b16 %v4099, %v4098
      %v4753 = vpack.c.b16 %v4101, %v4100
      %v4754 = vpack.c.b16 %v4103, %v4102
      %v4755 = vpack.c.b16 %v4105, %v4104
      %v4756 = vpack.c.b16 %v4107, %v4106
      %v4757 = vpack.c.b16 %v4109, %v4108
      %v4758 = vpack.c.b16 %v4111, %v4110
      %v4759 = vpack.c.b16 %v4113, %v4112
      %v4760 = vpack.c.b16 %v4115, %v4114
      %v4761 = vpack.c.b16 %v4117, %v4116
      %v4762 = vpack.c.b16 %v4119, %v4118
      %v4763 = vpack.c.b16 %v4121, %v4120
      %v4764 = vpack.c.b16 %v4123, %v4122
      %v4765 = vpack.c.b16 %v4125, %v4124
      %v4766 = vpack.c.b16 %v4127, %v4126
      %v4767 = vpack.c.b16 %v4129, %v4128
      %v4768 = vpack.c.b16 %v4131, %v4130
      %v4769 = vpack.c.b16 %v4133, %v4132
      %v4770 = vpack.c.b16 %v4135, %v4134
      %v4771 = vpack.c.b16 %v4137, %v4136
      %v4772 = vpack.c.b16 %v4139, %v4138
      %v4773 = vpack.c.b16 %v4141, %v4140
      %v4774 = vpack.c.b16 %v4143, %v4142
      %v4775 = vpack.c.b16 %v4145, %v4144
      %v4776 = vpack.c.b16 %v4147, %v4146
      %v4777 = vpack.c.b16 %v4149, %v4148
      %v4778 = vpack.c.b16 %v4151, %v4150
      %v4779 = vpack.c.b16 %v4153, %v4152
      %v4780 = vpack.c.b16 %v4155, %v4154
      %v4781 = vpack.c.b16 %v4157, %v4156
      %v4782 = vpack.c.b16 %v4159, %v4158
      %v4783 = vpack.c.b16 %v4161, %v4160
      %v4784 = vpack.c.b16 %v4163, %v4162
      %v4785 = vpack.c.b16 %v4165, %v4164
      %v4786 = vpack.c.b16 %v4167, %v4166
      %v4787 = vpack.c.b16 %v4169, %v4168
      %v4788 = vpack.c.b16 %v4171, %v4170
      %v4789 = vpack.c.b16 %v4173, %v4172
      %v4790 = vpack.c.b16 %v4175, %v4174
      %v4791 = vpack.c.b16 %v4177, %v4176
      %v4792 = vpack.c.b16 %v4179, %v4178
      %v4793 = vpack.c.b16 %v4181, %v4180
      %v4794 = vpack.c.b16 %v4183, %v4182
      %v4795 = vpack.c.b16 %v4185, %v4184
      %v4796 = vpack.c.b16 %v4187, %v4186
      %v4797 = vpack.c.b16 %v4189, %v4188
      %v4798 = vpack.c.b16 %v4191, %v4190
      %v4799 = vpack.c.b16 %v4193, %v4192
      %v4800 = vpack.c.b16 %v4195, %v4194
      %v4801 = vpack.c.b16 %v4197, %v4196
      %v4802 = vpack.c.b16 %v4199, %v4198
      %v4803 = vpack.c.b16 %v4201, %v4200
      %v4804 = vpack.c.b16 %v4203, %v4202
      %v4805 = vpack.c.b16 %v4205, %v4204
      %v4806 = vpack.c.b16 %v4207, %v4206
      %v4807 = vpack.c.b16 %v4209, %v4208
      %v4808 = vpack.c.b16 %v4211, %v4210
      %v4809 = vpack.c.b16 %v4213, %v4212
      %v4810 = vpack.c.b16 %v4215, %v4214
      %v4811 = vpack.c.b16 %v4217, %v4216
      %v4812 = vpack.c.b16 %v4219, %v4218
      %v4813 = vpack.c.b16 %v4221, %v4220
      %v4814 = vpack.c.b16 %v4223, %v4222
      %v4815 = vpack.c.b16 %v4225, %v4224
      %v4816 = vpack.c.b16 %v4227, %v4226
      %v4817 = vpack.c.b16 %v4229, %v4228
      %v4818 = vpack.c.b16 %v4231, %v4230
      %v4819 = vpack.c.b16 %v4233, %v4232
      %v4820 = vpack.c.b16 %v4235, %v4234
      %v4821 = vpack.c.b16 %v4237, %v4236
      %v4822 = vpack.c.b16 %v4239, %v4238
      %v4823 = vpack.c.b16 %v4241, %v4240
      %v4824 = vpack.c.b16 %v4243, %v4242
      %v4825 = vpack.c.b16 %v4245, %v4244
      %v4826 = vpack.c.b16 %v4247, %v4246
      %v4827 = vpack.c.b16 %v4249, %v4248
      %v4828 = vpack.c.b16 %v4251, %v4250
      %v4829 = vpack.c.b16 %v4253, %v4252
      %v4830 = vpack.c.b16 %v4255, %v4254
      %v4831 = vpack.c.b16 %v4257, %v4256
      %v4832 = vpack.c.b16 %v4259, %v4258
      %v4833 = vpack.c.b16 %v4261, %v4260
      %v4834 = vpack.c.b16 %v4263, %v4262
      %v4835 = vpack.c.b16 %v4265, %v4264
      %v4836 = vpack.c.b16 %v4267, %v4266
      %v4837 = vpack.c.b16 %v4269, %v4268
      %v4838 = vpack.c.b16 %v4271, %v4270
      %v4839 = vpack.c.b16 %v4273, %v4272
      %v4840 = vpack.c.b16 %v4275, %v4274
      %v4841 = vpack.c.b16 %v4277, %v4276
      %v4842 = vpack.c.b16 %v4279, %v4278
      %v4843 = vpack.c.b16 %v4281, %v4280
      %v4844 = vpack.c.b16 %v4283, %v4282
      %v4845 = vpack.c.b16 %v4285, %v4284
      %v4846 = vpack.c.b16 %v4287, %v4286
      %v4847 = vpack.c.b16 %v4289, %v4288
      %v4848 = vpack.c.b16 %v4291, %v4290
      %v4849 = vpack.c.b16 %v4293, %v4292
      %v4850 = vpack.c.b16 %v4295, %v4294
      %v4851 = vpack.c.b16 %v4297, %v4296
      %v4852 = vpack.c.b16 %v4299, %v4298
      %v4853 = vpack.c.b16 %v4301, %v4300
      %v4854 = vpack.c.b16 %v4303, %v4302
      %v4855 = vpack.c.b16 %v4305, %v4304
      %v4856 = vpack.c.b16 %v4307, %v4306
      %v4857 = vpack.c.b16 %v4309, %v4308
      %v4858 = vpack.c.b16 %v4311, %v4310
      %v4859 = vpack.c.b16 %v4313, %v4312
      %v4860 = vpack.c.b16 %v4315, %v4314
      %v4861 = vpack.c.b16 %v4317, %v4316
      %v4862 = vpack.c.b16 %v4319, %v4318
      %v4863 = vpack.c.b16 %v4321, %v4320
      %v4864 = vpack.c.b16 %v4323, %v4322
      %v4865 = vpack.c.b16 %v4325, %v4324
      %v4866 = vpack.c.b16 %v4327, %v4326
      %v4867 = vpack.c.b16 %v4329, %v4328
      %v4868 = vpack.c.b16 %v4331, %v4330
      %v4869 = vpack.c.b16 %v4333, %v4332
      %v4870 = vpack.c.b16 %v4335, %v4334
      %v4871 = vpack.c.b16 %v4337, %v4336
      %v4872 = vpack.c.b16 %v4339, %v4338
      %v4873 = vpack.c.b16 %v4341, %v4340
      %v4874 = vpack.c.b16 %v4343, %v4342
      %v4875 = vpack.c.b16 %v4345, %v4344
      %v4876 = vpack.c.b16 %v4347, %v4346
      %v4877 = vpack.c.b16 %v4349, %v4348
      %v4878 = vpack.c.b16 %v4351, %v4350
      %v4879 = vpack.c.b16 %v4353, %v4352
      %v4880 = vpack.c.b16 %v4355, %v4354
      %v4881 = vpack.c.b16 %v4357, %v4356
      %v4882 = vpack.c.b16 %v4359, %v4358
      %v4883 = vpack.c.b16 %v4361, %v4360
      %v4884 = vpack.c.b16 %v4363, %v4362
      %v4885 = vpack.c.b16 %v4365, %v4364
      %v4886 = vpack.c.b16 %v4367, %v4366
      %v4887 = vpack.c.b16 %v4369, %v4368
      %v4888 = vpack.c.b16 %v4371, %v4370
      %v4889 = vpack.c.b16 %v4373, %v4372
      %v4890 = vpack.c.b16 %v4375, %v4374
      %v4891 = vpack.c.b16 %v4377, %v4376
      %v4892 = vpack.c.b16 %v4379, %v4378
      %v4893 = vpack.c.b16 %v4381, %v4380
      %5406 = vst [vmem:[#allocation3] sm:$0xff] %v4382
      %5407 = vst [vmem:[#allocation3 + $0x8] sm:$0xff] %v4383
      %5408 = vst [vmem:[#allocation3 + $0x10] sm:$0xff] %v4384
      %5409 = vst [vmem:[#allocation3 + $0x18] sm:$0xff] %v4385
      %5410 = vst [vmem:[#allocation3 + $0x20] sm:$0xff] %v4386
      %5411 = vst [vmem:[#allocation3 + $0x28] sm:$0xff] %v4387
      %5412 = vst [vmem:[#allocation3 + $0x30] sm:$0xff] %v4388
      %5413 = vst [vmem:[#allocation3 + $0x38] sm:$0xff] %v4389
      %5414 = vst [vmem:[#allocation3 + $0x40] sm:$0xff] %v4390
      %5415 = vst [vmem:[#allocation3 + $0x48] sm:$0xff] %v4391
      %5416 = vst [vmem:[#allocation3 + $0x50] sm:$0xff] %v4392
      %5417 = vst [vmem:[#allocation3 + $0x58] sm:$0xff] %v4393
      %5418 = vst [vmem:[#allocation3 + $0x60] sm:$0xff] %v4394
      %5419 = vst [vmem:[#allocation3 + $0x68] sm:$0xff] %v4395
      %5420 = vst [vmem:[#allocation3 + $0x70] sm:$0xff] %v4396
      %5421 = vst [vmem:[#allocation3 + $0x78] sm:$0xff] %v4397
      %5422 = vst [vmem:[#allocation3 + $0x80] sm:$0xff] %v4398
      %5423 = vst [vmem:[#allocation3 + $0x88] sm:$0xff] %v4399
      %5424 = vst [vmem:[#allocation3 + $0x90] sm:$0xff] %v4400
      %5425 = vst [vmem:[#allocation3 + $0x98] sm:$0xff] %v4401
      %5426 = vst [vmem:[#allocation3 + $0xa0] sm:$0xff] %v4402
      %5427 = vst [vmem:[#allocation3 + $0xa8] sm:$0xff] %v4403
      %5428 = vst [vmem:[#allocation3 + $0xb0] sm:$0xff] %v4404
      %5429 = vst [vmem:[#allocation3 + $0xb8] sm:$0xff] %v4405
      %5430 = vst [vmem:[#allocation3 + $0xc0] sm:$0xff] %v4406
      %5431 = vst [vmem:[#allocation3 + $0xc8] sm:$0xff] %v4407
      %5432 = vst [vmem:[#allocation3 + $0xd0] sm:$0xff] %v4408
      %5433 = vst [vmem:[#allocation3 + $0xd8] sm:$0xff] %v4409
      %5434 = vst [vmem:[#allocation3 + $0xe0] sm:$0xff] %v4410
      %5435 = vst [vmem:[#allocation3 + $0xe8] sm:$0xff] %v4411
      %5436 = vst [vmem:[#allocation3 + $0xf0] sm:$0xff] %v4412
      %5437 = vst [vmem:[#allocation3 + $0xf8] sm:$0xff] %v4413
      %5438 = vst [vmem:[#allocation3 + $0x100] sm:$0xff] %v4414
      %5439 = vst [vmem:[#allocation3 + $0x108] sm:$0xff] %v4415
      %5440 = vst [vmem:[#allocation3 + $0x110] sm:$0xff] %v4416
      %5441 = vst [vmem:[#allocation3 + $0x118] sm:$0xff] %v4417
      %5442 = vst [vmem:[#allocation3 + $0x120] sm:$0xff] %v4418
      %5443 = vst [vmem:[#allocation3 + $0x128] sm:$0xff] %v4419
      %5444 = vst [vmem:[#allocation3 + $0x130] sm:$0xff] %v4420
      %5445 = vst [vmem:[#allocation3 + $0x138] sm:$0xff] %v4421
      %5446 = vst [vmem:[#allocation3 + $0x140] sm:$0xff] %v4422
      %5447 = vst [vmem:[#allocation3 + $0x148] sm:$0xff] %v4423
      %5448 = vst [vmem:[#allocation3 + $0x150] sm:$0xff] %v4424
      %5449 = vst [vmem:[#allocation3 + $0x158] sm:$0xff] %v4425
      %5450 = vst [vmem:[#allocation3 + $0x160] sm:$0xff] %v4426
      %5451 = vst [vmem:[#allocation3 + $0x168] sm:$0xff] %v4427
      %5452 = vst [vmem:[#allocation3 + $0x170] sm:$0xff] %v4428
      %5453 = vst [vmem:[#allocation3 + $0x178] sm:$0xff] %v4429
      %5454 = vst [vmem:[#allocation3 + $0x180] sm:$0xff] %v4430
      %5455 = vst [vmem:[#allocation3 + $0x188] sm:$0xff] %v4431
      %5456 = vst [vmem:[#allocation3 + $0x190] sm:$0xff] %v4432
      %5457 = vst [vmem:[#allocation3 + $0x198] sm:$0xff] %v4433
      %5458 = vst [vmem:[#allocation3 + $0x1a0] sm:$0xff] %v4434
      %5459 = vst [vmem:[#allocation3 + $0x1a8] sm:$0xff] %v4435
      %5460 = vst [vmem:[#allocation3 + $0x1b0] sm:$0xff] %v4436
      %5461 = vst [vmem:[#allocation3 + $0x1b8] sm:$0xff] %v4437
      %5462 = vst [vmem:[#allocation3 + $0x1c0] sm:$0xff] %v4438
      %5463 = vst [vmem:[#allocation3 + $0x1c8] sm:$0xff] %v4439
      %5464 = vst [vmem:[#allocation3 + $0x1d0] sm:$0xff] %v4440
      %5465 = vst [vmem:[#allocation3 + $0x1d8] sm:$0xff] %v4441
      %5466 = vst [vmem:[#allocation3 + $0x1e0] sm:$0xff] %v4442
      %5467 = vst [vmem:[#allocation3 + $0x1e8] sm:$0xff] %v4443
      %5468 = vst [vmem:[#allocation3 + $0x1f0] sm:$0xff] %v4444
      %5469 = vst [vmem:[#allocation3 + $0x1f8] sm:$0xff] %v4445
      %5470 = vst [vmem:[#allocation3 + $0x200] sm:$0xff] %v4446
      %5471 = vst [vmem:[#allocation3 + $0x208] sm:$0xff] %v4447
      %5472 = vst [vmem:[#allocation3 + $0x210] sm:$0xff] %v4448
      %5473 = vst [vmem:[#allocation3 + $0x218] sm:$0xff] %v4449
      %5474 = vst [vmem:[#allocation3 + $0x220] sm:$0xff] %v4450
      %5475 = vst [vmem:[#allocation3 + $0x228] sm:$0xff] %v4451
      %5476 = vst [vmem:[#allocation3 + $0x230] sm:$0xff] %v4452
      %5477 = vst [vmem:[#allocation3 + $0x238] sm:$0xff] %v4453
      %5478 = vst [vmem:[#allocation3 + $0x240] sm:$0xff] %v4454
      %5479 = vst [vmem:[#allocation3 + $0x248] sm:$0xff] %v4455
      %5480 = vst [vmem:[#allocation3 + $0x250] sm:$0xff] %v4456
      %5481 = vst [vmem:[#allocation3 + $0x258] sm:$0xff] %v4457
      %5482 = vst [vmem:[#allocation3 + $0x260] sm:$0xff] %v4458
      %5483 = vst [vmem:[#allocation3 + $0x268] sm:$0xff] %v4459
      %5484 = vst [vmem:[#allocation3 + $0x270] sm:$0xff] %v4460
      %5485 = vst [vmem:[#allocation3 + $0x278] sm:$0xff] %v4461
      %5486 = vst [vmem:[#allocation3 + $0x280] sm:$0xff] %v4462
      %5487 = vst [vmem:[#allocation3 + $0x288] sm:$0xff] %v4463
      %5488 = vst [vmem:[#allocation3 + $0x290] sm:$0xff] %v4464
      %5489 = vst [vmem:[#allocation3 + $0x298] sm:$0xff] %v4465
      %5490 = vst [vmem:[#allocation3 + $0x2a0] sm:$0xff] %v4466
      %5491 = vst [vmem:[#allocation3 + $0x2a8] sm:$0xff] %v4467
      %5492 = vst [vmem:[#allocation3 + $0x2b0] sm:$0xff] %v4468
      %5493 = vst [vmem:[#allocation3 + $0x2b8] sm:$0xff] %v4469
      %5494 = vst [vmem:[#allocation3 + $0x2c0] sm:$0xff] %v4470
      %5495 = vst [vmem:[#allocation3 + $0x2c8] sm:$0xff] %v4471
      %5496 = vst [vmem:[#allocation3 + $0x2d0] sm:$0xff] %v4472
      %5497 = vst [vmem:[#allocation3 + $0x2d8] sm:$0xff] %v4473
      %5498 = vst [vmem:[#allocation3 + $0x2e0] sm:$0xff] %v4474
      %5499 = vst [vmem:[#allocation3 + $0x2e8] sm:$0xff] %v4475
      %5500 = vst [vmem:[#allocation3 + $0x2f0] sm:$0xff] %v4476
      %5501 = vst [vmem:[#allocation3 + $0x2f8] sm:$0xff] %v4477
      %5502 = vst [vmem:[#allocation3 + $0x300] sm:$0xff] %v4478
      %5503 = vst [vmem:[#allocation3 + $0x308] sm:$0xff] %v4479
      %5504 = vst [vmem:[#allocation3 + $0x310] sm:$0xff] %v4480
      %5505 = vst [vmem:[#allocation3 + $0x318] sm:$0xff] %v4481
      %5506 = vst [vmem:[#allocation3 + $0x320] sm:$0xff] %v4482
      %5507 = vst [vmem:[#allocation3 + $0x328] sm:$0xff] %v4483
      %5508 = vst [vmem:[#allocation3 + $0x330] sm:$0xff] %v4484
      %5509 = vst [vmem:[#allocation3 + $0x338] sm:$0xff] %v4485
      %5510 = vst [vmem:[#allocation3 + $0x340] sm:$0xff] %v4486
      %5511 = vst [vmem:[#allocation3 + $0x348] sm:$0xff] %v4487
      %5512 = vst [vmem:[#allocation3 + $0x350] sm:$0xff] %v4488
      %5513 = vst [vmem:[#allocation3 + $0x358] sm:$0xff] %v4489
      %5514 = vst [vmem:[#allocation3 + $0x360] sm:$0xff] %v4490
      %5515 = vst [vmem:[#allocation3 + $0x368] sm:$0xff] %v4491
      %5516 = vst [vmem:[#allocation3 + $0x370] sm:$0xff] %v4492
      %5517 = vst [vmem:[#allocation3 + $0x378] sm:$0xff] %v4493
      %5518 = vst [vmem:[#allocation3 + $0x380] sm:$0xff] %v4494
      %5519 = vst [vmem:[#allocation3 + $0x388] sm:$0xff] %v4495
      %5520 = vst [vmem:[#allocation3 + $0x390] sm:$0xff] %v4496
      %5521 = vst [vmem:[#allocation3 + $0x398] sm:$0xff] %v4497
      %5522 = vst [vmem:[#allocation3 + $0x3a0] sm:$0xff] %v4498
      %5523 = vst [vmem:[#allocation3 + $0x3a8] sm:$0xff] %v4499
      %5524 = vst [vmem:[#allocation3 + $0x3b0] sm:$0xff] %v4500
      %5525 = vst [vmem:[#allocation3 + $0x3b8] sm:$0xff] %v4501
      %5526 = vst [vmem:[#allocation3 + $0x3c0] sm:$0xff] %v4502
      %5527 = vst [vmem:[#allocation3 + $0x3c8] sm:$0xff] %v4503
      %5528 = vst [vmem:[#allocation3 + $0x3d0] sm:$0xff] %v4504
      %5529 = vst [vmem:[#allocation3 + $0x3d8] sm:$0xff] %v4505
      %5530 = vst [vmem:[#allocation3 + $0x3e0] sm:$0xff] %v4506
      %5531 = vst [vmem:[#allocation3 + $0x3e8] sm:$0xff] %v4507
      %5532 = vst [vmem:[#allocation3 + $0x3f0] sm:$0xff] %v4508
      %5533 = vst [vmem:[#allocation3 + $0x3f8] sm:$0xff] %v4509
      %5534 = vst [vmem:[#allocation3 + $0x400] sm:$0xff] %v4510
      %5535 = vst [vmem:[#allocation3 + $0x408] sm:$0xff] %v4511
      %5536 = vst [vmem:[#allocation3 + $0x410] sm:$0xff] %v4512
      %5537 = vst [vmem:[#allocation3 + $0x418] sm:$0xff] %v4513
      %5538 = vst [vmem:[#allocation3 + $0x420] sm:$0xff] %v4514
      %5539 = vst [vmem:[#allocation3 + $0x428] sm:$0xff] %v4515
      %5540 = vst [vmem:[#allocation3 + $0x430] sm:$0xff] %v4516
      %5541 = vst [vmem:[#allocation3 + $0x438] sm:$0xff] %v4517
      %5542 = vst [vmem:[#allocation3 + $0x440] sm:$0xff] %v4518
      %5543 = vst [vmem:[#allocation3 + $0x448] sm:$0xff] %v4519
      %5544 = vst [vmem:[#allocation3 + $0x450] sm:$0xff] %v4520
      %5545 = vst [vmem:[#allocation3 + $0x458] sm:$0xff] %v4521
      %5546 = vst [vmem:[#allocation3 + $0x460] sm:$0xff] %v4522
      %5547 = vst [vmem:[#allocation3 + $0x468] sm:$0xff] %v4523
      %5548 = vst [vmem:[#allocation3 + $0x470] sm:$0xff] %v4524
      %5549 = vst [vmem:[#allocation3 + $0x478] sm:$0xff] %v4525
      %5550 = vst [vmem:[#allocation3 + $0x480] sm:$0xff] %v4526
      %5551 = vst [vmem:[#allocation3 + $0x488] sm:$0xff] %v4527
      %5552 = vst [vmem:[#allocation3 + $0x490] sm:$0xff] %v4528
      %5553 = vst [vmem:[#allocation3 + $0x498] sm:$0xff] %v4529
      %5554 = vst [vmem:[#allocation3 + $0x4a0] sm:$0xff] %v4530
      %5555 = vst [vmem:[#allocation3 + $0x4a8] sm:$0xff] %v4531
      %5556 = vst [vmem:[#allocation3 + $0x4b0] sm:$0xff] %v4532
      %5557 = vst [vmem:[#allocation3 + $0x4b8] sm:$0xff] %v4533
      %5558 = vst [vmem:[#allocation3 + $0x4c0] sm:$0xff] %v4534
      %5559 = vst [vmem:[#allocation3 + $0x4c8] sm:$0xff] %v4535
      %5560 = vst [vmem:[#allocation3 + $0x4d0] sm:$0xff] %v4536
      %5561 = vst [vmem:[#allocation3 + $0x4d8] sm:$0xff] %v4537
      %5562 = vst [vmem:[#allocation3 + $0x4e0] sm:$0xff] %v4538
      %5563 = vst [vmem:[#allocation3 + $0x4e8] sm:$0xff] %v4539
      %5564 = vst [vmem:[#allocation3 + $0x4f0] sm:$0xff] %v4540
      %5565 = vst [vmem:[#allocation3 + $0x4f8] sm:$0xff] %v4541
      %5566 = vst [vmem:[#allocation3 + $0x500] sm:$0xff] %v4542
      %5567 = vst [vmem:[#allocation3 + $0x508] sm:$0xff] %v4543
      %5568 = vst [vmem:[#allocation3 + $0x510] sm:$0xff] %v4544
      %5569 = vst [vmem:[#allocation3 + $0x518] sm:$0xff] %v4545
      %5570 = vst [vmem:[#allocation3 + $0x520] sm:$0xff] %v4546
      %5571 = vst [vmem:[#allocation3 + $0x528] sm:$0xff] %v4547
      %5572 = vst [vmem:[#allocation3 + $0x530] sm:$0xff] %v4548
      %5573 = vst [vmem:[#allocation3 + $0x538] sm:$0xff] %v4549
      %5574 = vst [vmem:[#allocation3 + $0x540] sm:$0xff] %v4550
      %5575 = vst [vmem:[#allocation3 + $0x548] sm:$0xff] %v4551
      %5576 = vst [vmem:[#allocation3 + $0x550] sm:$0xff] %v4552
      %5577 = vst [vmem:[#allocation3 + $0x558] sm:$0xff] %v4553
      %5578 = vst [vmem:[#allocation3 + $0x560] sm:$0xff] %v4554
      %5579 = vst [vmem:[#allocation3 + $0x568] sm:$0xff] %v4555
      %5580 = vst [vmem:[#allocation3 + $0x570] sm:$0xff] %v4556
      %5581 = vst [vmem:[#allocation3 + $0x578] sm:$0xff] %v4557
      %5582 = vst [vmem:[#allocation3 + $0x580] sm:$0xff] %v4558
      %5583 = vst [vmem:[#allocation3 + $0x588] sm:$0xff] %v4559
      %5584 = vst [vmem:[#allocation3 + $0x590] sm:$0xff] %v4560
      %5585 = vst [vmem:[#allocation3 + $0x598] sm:$0xff] %v4561
      %5586 = vst [vmem:[#allocation3 + $0x5a0] sm:$0xff] %v4562
      %5587 = vst [vmem:[#allocation3 + $0x5a8] sm:$0xff] %v4563
      %5588 = vst [vmem:[#allocation3 + $0x5b0] sm:$0xff] %v4564
      %5589 = vst [vmem:[#allocation3 + $0x5b8] sm:$0xff] %v4565
      %5590 = vst [vmem:[#allocation3 + $0x5c0] sm:$0xff] %v4566
      %5591 = vst [vmem:[#allocation3 + $0x5c8] sm:$0xff] %v4567
      %5592 = vst [vmem:[#allocation3 + $0x5d0] sm:$0xff] %v4568
      %5593 = vst [vmem:[#allocation3 + $0x5d8] sm:$0xff] %v4569
      %5594 = vst [vmem:[#allocation3 + $0x5e0] sm:$0xff] %v4570
      %5595 = vst [vmem:[#allocation3 + $0x5e8] sm:$0xff] %v4571
      %5596 = vst [vmem:[#allocation3 + $0x5f0] sm:$0xff] %v4572
      %5597 = vst [vmem:[#allocation3 + $0x5f8] sm:$0xff] %v4573
      %5598 = vst [vmem:[#allocation3 + $0x600] sm:$0xff] %v4574
      %5599 = vst [vmem:[#allocation3 + $0x608] sm:$0xff] %v4575
      %5600 = vst [vmem:[#allocation3 + $0x610] sm:$0xff] %v4576
      %5601 = vst [vmem:[#allocation3 + $0x618] sm:$0xff] %v4577
      %5602 = vst [vmem:[#allocation3 + $0x620] sm:$0xff] %v4578
      %5603 = vst [vmem:[#allocation3 + $0x628] sm:$0xff] %v4579
      %5604 = vst [vmem:[#allocation3 + $0x630] sm:$0xff] %v4580
      %5605 = vst [vmem:[#allocation3 + $0x638] sm:$0xff] %v4581
      %5606 = vst [vmem:[#allocation3 + $0x640] sm:$0xff] %v4582
      %5607 = vst [vmem:[#allocation3 + $0x648] sm:$0xff] %v4583
      %5608 = vst [vmem:[#allocation3 + $0x650] sm:$0xff] %v4584
      %5609 = vst [vmem:[#allocation3 + $0x658] sm:$0xff] %v4585
      %5610 = vst [vmem:[#allocation3 + $0x660] sm:$0xff] %v4586
      %5611 = vst [vmem:[#allocation3 + $0x668] sm:$0xff] %v4587
      %5612 = vst [vmem:[#allocation3 + $0x670] sm:$0xff] %v4588
      %5613 = vst [vmem:[#allocation3 + $0x678] sm:$0xff] %v4589
      %5614 = vst [vmem:[#allocation3 + $0x680] sm:$0xff] %v4590
      %5615 = vst [vmem:[#allocation3 + $0x688] sm:$0xff] %v4591
      %5616 = vst [vmem:[#allocation3 + $0x690] sm:$0xff] %v4592
      %5617 = vst [vmem:[#allocation3 + $0x698] sm:$0xff] %v4593
      %5618 = vst [vmem:[#allocation3 + $0x6a0] sm:$0xff] %v4594
      %5619 = vst [vmem:[#allocation3 + $0x6a8] sm:$0xff] %v4595
      %5620 = vst [vmem:[#allocation3 + $0x6b0] sm:$0xff] %v4596
      %5621 = vst [vmem:[#allocation3 + $0x6b8] sm:$0xff] %v4597
      %5622 = vst [vmem:[#allocation3 + $0x6c0] sm:$0xff] %v4598
      %5623 = vst [vmem:[#allocation3 + $0x6c8] sm:$0xff] %v4599
      %5624 = vst [vmem:[#allocation3 + $0x6d0] sm:$0xff] %v4600
      %5625 = vst [vmem:[#allocation3 + $0x6d8] sm:$0xff] %v4601
      %5626 = vst [vmem:[#allocation3 + $0x6e0] sm:$0xff] %v4602
      %5627 = vst [vmem:[#allocation3 + $0x6e8] sm:$0xff] %v4603
      %5628 = vst [vmem:[#allocation3 + $0x6f0] sm:$0xff] %v4604
      %5629 = vst [vmem:[#allocation3 + $0x6f8] sm:$0xff] %v4605
      %5630 = vst [vmem:[#allocation3 + $0x700] sm:$0xff] %v4606
      %5631 = vst [vmem:[#allocation3 + $0x708] sm:$0xff] %v4607
      %5632 = vst [vmem:[#allocation3 + $0x710] sm:$0xff] %v4608
      %5633 = vst [vmem:[#allocation3 + $0x718] sm:$0xff] %v4609
      %5634 = vst [vmem:[#allocation3 + $0x720] sm:$0xff] %v4610
      %5635 = vst [vmem:[#allocation3 + $0x728] sm:$0xff] %v4611
      %5636 = vst [vmem:[#allocation3 + $0x730] sm:$0xff] %v4612
      %5637 = vst [vmem:[#allocation3 + $0x738] sm:$0xff] %v4613
      %5638 = vst [vmem:[#allocation3 + $0x740] sm:$0xff] %v4614
      %5639 = vst [vmem:[#allocation3 + $0x748] sm:$0xff] %v4615
      %5640 = vst [vmem:[#allocation3 + $0x750] sm:$0xff] %v4616
      %5641 = vst [vmem:[#allocation3 + $0x758] sm:$0xff] %v4617
      %5642 = vst [vmem:[#allocation3 + $0x760] sm:$0xff] %v4618
      %5643 = vst [vmem:[#allocation3 + $0x768] sm:$0xff] %v4619
      %5644 = vst [vmem:[#allocation3 + $0x770] sm:$0xff] %v4620
      %5645 = vst [vmem:[#allocation3 + $0x778] sm:$0xff] %v4621
      %5646 = vst [vmem:[#allocation3 + $0x780] sm:$0xff] %v4622
      %5647 = vst [vmem:[#allocation3 + $0x788] sm:$0xff] %v4623
      %5648 = vst [vmem:[#allocation3 + $0x790] sm:$0xff] %v4624
      %5649 = vst [vmem:[#allocation3 + $0x798] sm:$0xff] %v4625
      %5650 = vst [vmem:[#allocation3 + $0x7a0] sm:$0xff] %v4626
      %5651 = vst [vmem:[#allocation3 + $0x7a8] sm:$0xff] %v4627
      %5652 = vst [vmem:[#allocation3 + $0x7b0] sm:$0xff] %v4628
      %5653 = vst [vmem:[#allocation3 + $0x7b8] sm:$0xff] %v4629
      %5654 = vst [vmem:[#allocation3 + $0x7c0] sm:$0xff] %v4630
      %5655 = vst [vmem:[#allocation3 + $0x7c8] sm:$0xff] %v4631
      %5656 = vst [vmem:[#allocation3 + $0x7d0] sm:$0xff] %v4632
      %5657 = vst [vmem:[#allocation3 + $0x7d8] sm:$0xff] %v4633
      %5658 = vst [vmem:[#allocation3 + $0x7e0] sm:$0xff] %v4634
      %5659 = vst [vmem:[#allocation3 + $0x7e8] sm:$0xff] %v4635
      %5660 = vst [vmem:[#allocation3 + $0x7f0] sm:$0xff] %v4636
      %5661 = vst [vmem:[#allocation3 + $0x7f8] sm:$0xff] %v4637
      %5662 = vst [vmem:[#allocation3 + $0x800] sm:$0xff] %v4638
      %5663 = vst [vmem:[#allocation3 + $0x808] sm:$0xff] %v4639
      %5664 = vst [vmem:[#allocation3 + $0x810] sm:$0xff] %v4640
      %5665 = vst [vmem:[#allocation3 + $0x818] sm:$0xff] %v4641
      %5666 = vst [vmem:[#allocation3 + $0x820] sm:$0xff] %v4642
      %5667 = vst [vmem:[#allocation3 + $0x828] sm:$0xff] %v4643
      %5668 = vst [vmem:[#allocation3 + $0x830] sm:$0xff] %v4644
      %5669 = vst [vmem:[#allocation3 + $0x838] sm:$0xff] %v4645
      %5670 = vst [vmem:[#allocation3 + $0x840] sm:$0xff] %v4646
      %5671 = vst [vmem:[#allocation3 + $0x848] sm:$0xff] %v4647
      %5672 = vst [vmem:[#allocation3 + $0x850] sm:$0xff] %v4648
      %5673 = vst [vmem:[#allocation3 + $0x858] sm:$0xff] %v4649
      %5674 = vst [vmem:[#allocation3 + $0x860] sm:$0xff] %v4650
      %5675 = vst [vmem:[#allocation3 + $0x868] sm:$0xff] %v4651
      %5676 = vst [vmem:[#allocation3 + $0x870] sm:$0xff] %v4652
      %5677 = vst [vmem:[#allocation3 + $0x878] sm:$0xff] %v4653
      %5678 = vst [vmem:[#allocation3 + $0x880] sm:$0xff] %v4654
      %5679 = vst [vmem:[#allocation3 + $0x888] sm:$0xff] %v4655
      %5680 = vst [vmem:[#allocation3 + $0x890] sm:$0xff] %v4656
      %5681 = vst [vmem:[#allocation3 + $0x898] sm:$0xff] %v4657
      %5682 = vst [vmem:[#allocation3 + $0x8a0] sm:$0xff] %v4658
      %5683 = vst [vmem:[#allocation3 + $0x8a8] sm:$0xff] %v4659
      %5684 = vst [vmem:[#allocation3 + $0x8b0] sm:$0xff] %v4660
      %5685 = vst [vmem:[#allocation3 + $0x8b8] sm:$0xff] %v4661
      %5686 = vst [vmem:[#allocation3 + $0x8c0] sm:$0xff] %v4662
      %5687 = vst [vmem:[#allocation3 + $0x8c8] sm:$0xff] %v4663
      %5688 = vst [vmem:[#allocation3 + $0x8d0] sm:$0xff] %v4664
      %5689 = vst [vmem:[#allocation3 + $0x8d8] sm:$0xff] %v4665
      %5690 = vst [vmem:[#allocation3 + $0x8e0] sm:$0xff] %v4666
      %5691 = vst [vmem:[#allocation3 + $0x8e8] sm:$0xff] %v4667
      %5692 = vst [vmem:[#allocation3 + $0x8f0] sm:$0xff] %v4668
      %5693 = vst [vmem:[#allocation3 + $0x8f8] sm:$0xff] %v4669
      %5694 = vst [vmem:[#allocation3 + $0x900] sm:$0xff] %v4670
      %5695 = vst [vmem:[#allocation3 + $0x908] sm:$0xff] %v4671
      %5696 = vst [vmem:[#allocation3 + $0x910] sm:$0xff] %v4672
      %5697 = vst [vmem:[#allocation3 + $0x918] sm:$0xff] %v4673
      %5698 = vst [vmem:[#allocation3 + $0x920] sm:$0xff] %v4674
      %5699 = vst [vmem:[#allocation3 + $0x928] sm:$0xff] %v4675
      %5700 = vst [vmem:[#allocation3 + $0x930] sm:$0xff] %v4676
      %5701 = vst [vmem:[#allocation3 + $0x938] sm:$0xff] %v4677
      %5702 = vst [vmem:[#allocation3 + $0x940] sm:$0xff] %v4678
      %5703 = vst [vmem:[#allocation3 + $0x948] sm:$0xff] %v4679
      %5704 = vst [vmem:[#allocation3 + $0x950] sm:$0xff] %v4680
      %5705 = vst [vmem:[#allocation3 + $0x958] sm:$0xff] %v4681
      %5706 = vst [vmem:[#allocation3 + $0x960] sm:$0xff] %v4682
      %5707 = vst [vmem:[#allocation3 + $0x968] sm:$0xff] %v4683
      %5708 = vst [vmem:[#allocation3 + $0x970] sm:$0xff] %v4684
      %5709 = vst [vmem:[#allocation3 + $0x978] sm:$0xff] %v4685
      %5710 = vst [vmem:[#allocation3 + $0x980] sm:$0xff] %v4686
      %5711 = vst [vmem:[#allocation3 + $0x988] sm:$0xff] %v4687
      %5712 = vst [vmem:[#allocation3 + $0x990] sm:$0xff] %v4688
      %5713 = vst [vmem:[#allocation3 + $0x998] sm:$0xff] %v4689
      %5714 = vst [vmem:[#allocation3 + $0x9a0] sm:$0xff] %v4690
      %5715 = vst [vmem:[#allocation3 + $0x9a8] sm:$0xff] %v4691
      %5716 = vst [vmem:[#allocation3 + $0x9b0] sm:$0xff] %v4692
      %5717 = vst [vmem:[#allocation3 + $0x9b8] sm:$0xff] %v4693
      %5718 = vst [vmem:[#allocation3 + $0x9c0] sm:$0xff] %v4694
      %5719 = vst [vmem:[#allocation3 + $0x9c8] sm:$0xff] %v4695
      %5720 = vst [vmem:[#allocation3 + $0x9d0] sm:$0xff] %v4696
      %5721 = vst [vmem:[#allocation3 + $0x9d8] sm:$0xff] %v4697
      %5722 = vst [vmem:[#allocation3 + $0x9e0] sm:$0xff] %v4698
      %5723 = vst [vmem:[#allocation3 + $0x9e8] sm:$0xff] %v4699
      %5724 = vst [vmem:[#allocation3 + $0x9f0] sm:$0xff] %v4700
      %5725 = vst [vmem:[#allocation3 + $0x9f8] sm:$0xff] %v4701
      %5726 = vst [vmem:[#allocation3 + $0xa00] sm:$0xff] %v4702
      %5727 = vst [vmem:[#allocation3 + $0xa08] sm:$0xff] %v4703
      %5728 = vst [vmem:[#allocation3 + $0xa10] sm:$0xff] %v4704
      %5729 = vst [vmem:[#allocation3 + $0xa18] sm:$0xff] %v4705
      %5730 = vst [vmem:[#allocation3 + $0xa20] sm:$0xff] %v4706
      %5731 = vst [vmem:[#allocation3 + $0xa28] sm:$0xff] %v4707
      %5732 = vst [vmem:[#allocation3 + $0xa30] sm:$0xff] %v4708
      %5733 = vst [vmem:[#allocation3 + $0xa38] sm:$0xff] %v4709
      %5734 = vst [vmem:[#allocation3 + $0xa40] sm:$0xff] %v4710
      %5735 = vst [vmem:[#allocation3 + $0xa48] sm:$0xff] %v4711
      %5736 = vst [vmem:[#allocation3 + $0xa50] sm:$0xff] %v4712
      %5737 = vst [vmem:[#allocation3 + $0xa58] sm:$0xff] %v4713
      %5738 = vst [vmem:[#allocation3 + $0xa60] sm:$0xff] %v4714
      %5739 = vst [vmem:[#allocation3 + $0xa68] sm:$0xff] %v4715
      %5740 = vst [vmem:[#allocation3 + $0xa70] sm:$0xff] %v4716
      %5741 = vst [vmem:[#allocation3 + $0xa78] sm:$0xff] %v4717
      %5742 = vst [vmem:[#allocation3 + $0xa80] sm:$0xff] %v4718
      %5743 = vst [vmem:[#allocation3 + $0xa88] sm:$0xff] %v4719
      %5744 = vst [vmem:[#allocation3 + $0xa90] sm:$0xff] %v4720
      %5745 = vst [vmem:[#allocation3 + $0xa98] sm:$0xff] %v4721
      %5746 = vst [vmem:[#allocation3 + $0xaa0] sm:$0xff] %v4722
      %5747 = vst [vmem:[#allocation3 + $0xaa8] sm:$0xff] %v4723
      %5748 = vst [vmem:[#allocation3 + $0xab0] sm:$0xff] %v4724
      %5749 = vst [vmem:[#allocation3 + $0xab8] sm:$0xff] %v4725
      %5750 = vst [vmem:[#allocation3 + $0xac0] sm:$0xff] %v4726
      %5751 = vst [vmem:[#allocation3 + $0xac8] sm:$0xff] %v4727
      %5752 = vst [vmem:[#allocation3 + $0xad0] sm:$0xff] %v4728
      %5753 = vst [vmem:[#allocation3 + $0xad8] sm:$0xff] %v4729
      %5754 = vst [vmem:[#allocation3 + $0xae0] sm:$0xff] %v4730
      %5755 = vst [vmem:[#allocation3 + $0xae8] sm:$0xff] %v4731
      %5756 = vst [vmem:[#allocation3 + $0xaf0] sm:$0xff] %v4732
      %5757 = vst [vmem:[#allocation3 + $0xaf8] sm:$0xff] %v4733
      %5758 = vst [vmem:[#allocation3 + $0xb00] sm:$0xff] %v4734
      %5759 = vst [vmem:[#allocation3 + $0xb08] sm:$0xff] %v4735
      %5760 = vst [vmem:[#allocation3 + $0xb10] sm:$0xff] %v4736
      %5761 = vst [vmem:[#allocation3 + $0xb18] sm:$0xff] %v4737
      %5762 = vst [vmem:[#allocation3 + $0xb20] sm:$0xff] %v4738
      %5763 = vst [vmem:[#allocation3 + $0xb28] sm:$0xff] %v4739
      %5764 = vst [vmem:[#allocation3 + $0xb30] sm:$0xff] %v4740
      %5765 = vst [vmem:[#allocation3 + $0xb38] sm:$0xff] %v4741
      %5766 = vst [vmem:[#allocation3 + $0xb40] sm:$0xff] %v4742
      %5767 = vst [vmem:[#allocation3 + $0xb48] sm:$0xff] %v4743
      %5768 = vst [vmem:[#allocation3 + $0xb50] sm:$0xff] %v4744
      %5769 = vst [vmem:[#allocation3 + $0xb58] sm:$0xff] %v4745
      %5770 = vst [vmem:[#allocation3 + $0xb60] sm:$0xff] %v4746
      %5771 = vst [vmem:[#allocation3 + $0xb68] sm:$0xff] %v4747
      %5772 = vst [vmem:[#allocation3 + $0xb70] sm:$0xff] %v4748
      %5773 = vst [vmem:[#allocation3 + $0xb78] sm:$0xff] %v4749
      %5774 = vst [vmem:[#allocation3 + $0xb80] sm:$0xff] %v4750
      %5775 = vst [vmem:[#allocation3 + $0xb88] sm:$0xff] %v4751
      %5776 = vst [vmem:[#allocation3 + $0xb90] sm:$0xff] %v4752
      %5777 = vst [vmem:[#allocation3 + $0xb98] sm:$0xff] %v4753
      %5778 = vst [vmem:[#allocation3 + $0xba0] sm:$0xff] %v4754
      %5779 = vst [vmem:[#allocation3 + $0xba8] sm:$0xff] %v4755
      %5780 = vst [vmem:[#allocation3 + $0xbb0] sm:$0xff] %v4756
      %5781 = vst [vmem:[#allocation3 + $0xbb8] sm:$0xff] %v4757
      %5782 = vst [vmem:[#allocation3 + $0xbc0] sm:$0xff] %v4758
      %5783 = vst [vmem:[#allocation3 + $0xbc8] sm:$0xff] %v4759
      %5784 = vst [vmem:[#allocation3 + $0xbd0] sm:$0xff] %v4760
      %5785 = vst [vmem:[#allocation3 + $0xbd8] sm:$0xff] %v4761
      %5786 = vst [vmem:[#allocation3 + $0xbe0] sm:$0xff] %v4762
      %5787 = vst [vmem:[#allocation3 + $0xbe8] sm:$0xff] %v4763
      %5788 = vst [vmem:[#allocation3 + $0xbf0] sm:$0xff] %v4764
      %5789 = vst [vmem:[#allocation3 + $0xbf8] sm:$0xff] %v4765
      %5790 = vst [vmem:[#allocation3 + $0xc00] sm:$0xff] %v4766
      %5791 = vst [vmem:[#allocation3 + $0xc08] sm:$0xff] %v4767
      %5792 = vst [vmem:[#allocation3 + $0xc10] sm:$0xff] %v4768
      %5793 = vst [vmem:[#allocation3 + $0xc18] sm:$0xff] %v4769
      %5794 = vst [vmem:[#allocation3 + $0xc20] sm:$0xff] %v4770
      %5795 = vst [vmem:[#allocation3 + $0xc28] sm:$0xff] %v4771
      %5796 = vst [vmem:[#allocation3 + $0xc30] sm:$0xff] %v4772
      %5797 = vst [vmem:[#allocation3 + $0xc38] sm:$0xff] %v4773
      %5798 = vst [vmem:[#allocation3 + $0xc40] sm:$0xff] %v4774
      %5799 = vst [vmem:[#allocation3 + $0xc48] sm:$0xff] %v4775
      %5800 = vst [vmem:[#allocation3 + $0xc50] sm:$0xff] %v4776
      %5801 = vst [vmem:[#allocation3 + $0xc58] sm:$0xff] %v4777
      %5802 = vst [vmem:[#allocation3 + $0xc60] sm:$0xff] %v4778
      %5803 = vst [vmem:[#allocation3 + $0xc68] sm:$0xff] %v4779
      %5804 = vst [vmem:[#allocation3 + $0xc70] sm:$0xff] %v4780
      %5805 = vst [vmem:[#allocation3 + $0xc78] sm:$0xff] %v4781
      %5806 = vst [vmem:[#allocation3 + $0xc80] sm:$0xff] %v4782
      %5807 = vst [vmem:[#allocation3 + $0xc88] sm:$0xff] %v4783
      %5808 = vst [vmem:[#allocation3 + $0xc90] sm:$0xff] %v4784
      %5809 = vst [vmem:[#allocation3 + $0xc98] sm:$0xff] %v4785
      %5810 = vst [vmem:[#allocation3 + $0xca0] sm:$0xff] %v4786
      %5811 = vst [vmem:[#allocation3 + $0xca8] sm:$0xff] %v4787
      %5812 = vst [vmem:[#allocation3 + $0xcb0] sm:$0xff] %v4788
      %5813 = vst [vmem:[#allocation3 + $0xcb8] sm:$0xff] %v4789
      %5814 = vst [vmem:[#allocation3 + $0xcc0] sm:$0xff] %v4790
      %5815 = vst [vmem:[#allocation3 + $0xcc8] sm:$0xff] %v4791
      %5816 = vst [vmem:[#allocation3 + $0xcd0] sm:$0xff] %v4792
      %5817 = vst [vmem:[#allocation3 + $0xcd8] sm:$0xff] %v4793
      %5818 = vst [vmem:[#allocation3 + $0xce0] sm:$0xff] %v4794
      %5819 = vst [vmem:[#allocation3 + $0xce8] sm:$0xff] %v4795
      %5820 = vst [vmem:[#allocation3 + $0xcf0] sm:$0xff] %v4796
      %5821 = vst [vmem:[#allocation3 + $0xcf8] sm:$0xff] %v4797
      %5822 = vst [vmem:[#allocation3 + $0xd00] sm:$0xff] %v4798
      %5823 = vst [vmem:[#allocation3 + $0xd08] sm:$0xff] %v4799
      %5824 = vst [vmem:[#allocation3 + $0xd10] sm:$0xff] %v4800
      %5825 = vst [vmem:[#allocation3 + $0xd18] sm:$0xff] %v4801
      %5826 = vst [vmem:[#allocation3 + $0xd20] sm:$0xff] %v4802
      %5827 = vst [vmem:[#allocation3 + $0xd28] sm:$0xff] %v4803
      %5828 = vst [vmem:[#allocation3 + $0xd30] sm:$0xff] %v4804
      %5829 = vst [vmem:[#allocation3 + $0xd38] sm:$0xff] %v4805
      %5830 = vst [vmem:[#allocation3 + $0xd40] sm:$0xff] %v4806
      %5831 = vst [vmem:[#allocation3 + $0xd48] sm:$0xff] %v4807
      %5832 = vst [vmem:[#allocation3 + $0xd50] sm:$0xff] %v4808
      %5833 = vst [vmem:[#allocation3 + $0xd58] sm:$0xff] %v4809
      %5834 = vst [vmem:[#allocation3 + $0xd60] sm:$0xff] %v4810
      %5835 = vst [vmem:[#allocation3 + $0xd68] sm:$0xff] %v4811
      %5836 = vst [vmem:[#allocation3 + $0xd70] sm:$0xff] %v4812
      %5837 = vst [vmem:[#allocation3 + $0xd78] sm:$0xff] %v4813
      %5838 = vst [vmem:[#allocation3 + $0xd80] sm:$0xff] %v4814
      %5839 = vst [vmem:[#allocation3 + $0xd88] sm:$0xff] %v4815
      %5840 = vst [vmem:[#allocation3 + $0xd90] sm:$0xff] %v4816
      %5841 = vst [vmem:[#allocation3 + $0xd98] sm:$0xff] %v4817
      %5842 = vst [vmem:[#allocation3 + $0xda0] sm:$0xff] %v4818
      %5843 = vst [vmem:[#allocation3 + $0xda8] sm:$0xff] %v4819
      %5844 = vst [vmem:[#allocation3 + $0xdb0] sm:$0xff] %v4820
      %5845 = vst [vmem:[#allocation3 + $0xdb8] sm:$0xff] %v4821
      %5846 = vst [vmem:[#allocation3 + $0xdc0] sm:$0xff] %v4822
      %5847 = vst [vmem:[#allocation3 + $0xdc8] sm:$0xff] %v4823
      %5848 = vst [vmem:[#allocation3 + $0xdd0] sm:$0xff] %v4824
      %5849 = vst [vmem:[#allocation3 + $0xdd8] sm:$0xff] %v4825
      %5850 = vst [vmem:[#allocation3 + $0xde0] sm:$0xff] %v4826
      %5851 = vst [vmem:[#allocation3 + $0xde8] sm:$0xff] %v4827
      %5852 = vst [vmem:[#allocation3 + $0xdf0] sm:$0xff] %v4828
      %5853 = vst [vmem:[#allocation3 + $0xdf8] sm:$0xff] %v4829
      %5854 = vst [vmem:[#allocation3 + $0xe00] sm:$0xff] %v4830
      %5855 = vst [vmem:[#allocation3 + $0xe08] sm:$0xff] %v4831
      %5856 = vst [vmem:[#allocation3 + $0xe10] sm:$0xff] %v4832
      %5857 = vst [vmem:[#allocation3 + $0xe18] sm:$0xff] %v4833
      %5858 = vst [vmem:[#allocation3 + $0xe20] sm:$0xff] %v4834
      %5859 = vst [vmem:[#allocation3 + $0xe28] sm:$0xff] %v4835
      %5860 = vst [vmem:[#allocation3 + $0xe30] sm:$0xff] %v4836
      %5861 = vst [vmem:[#allocation3 + $0xe38] sm:$0xff] %v4837
      %5862 = vst [vmem:[#allocation3 + $0xe40] sm:$0xff] %v4838
      %5863 = vst [vmem:[#allocation3 + $0xe48] sm:$0xff] %v4839
      %5864 = vst [vmem:[#allocation3 + $0xe50] sm:$0xff] %v4840
      %5865 = vst [vmem:[#allocation3 + $0xe58] sm:$0xff] %v4841
      %5866 = vst [vmem:[#allocation3 + $0xe60] sm:$0xff] %v4842
      %5867 = vst [vmem:[#allocation3 + $0xe68] sm:$0xff] %v4843
      %5868 = vst [vmem:[#allocation3 + $0xe70] sm:$0xff] %v4844
      %5869 = vst [vmem:[#allocation3 + $0xe78] sm:$0xff] %v4845
      %5870 = vst [vmem:[#allocation3 + $0xe80] sm:$0xff] %v4846
      %5871 = vst [vmem:[#allocation3 + $0xe88] sm:$0xff] %v4847
      %5872 = vst [vmem:[#allocation3 + $0xe90] sm:$0xff] %v4848
      %5873 = vst [vmem:[#allocation3 + $0xe98] sm:$0xff] %v4849
      %5874 = vst [vmem:[#allocation3 + $0xea0] sm:$0xff] %v4850
      %5875 = vst [vmem:[#allocation3 + $0xea8] sm:$0xff] %v4851
      %5876 = vst [vmem:[#allocation3 + $0xeb0] sm:$0xff] %v4852
      %5877 = vst [vmem:[#allocation3 + $0xeb8] sm:$0xff] %v4853
      %5878 = vst [vmem:[#allocation3 + $0xec0] sm:$0xff] %v4854
      %5879 = vst [vmem:[#allocation3 + $0xec8] sm:$0xff] %v4855
      %5880 = vst [vmem:[#allocation3 + $0xed0] sm:$0xff] %v4856
      %5881 = vst [vmem:[#allocation3 + $0xed8] sm:$0xff] %v4857
      %5882 = vst [vmem:[#allocation3 + $0xee0] sm:$0xff] %v4858
      %5883 = vst [vmem:[#allocation3 + $0xee8] sm:$0xff] %v4859
      %5884 = vst [vmem:[#allocation3 + $0xef0] sm:$0xff] %v4860
      %5885 = vst [vmem:[#allocation3 + $0xef8] sm:$0xff] %v4861
      %5886 = vst [vmem:[#allocation3 + $0xf00] sm:$0xff] %v4862
      %5887 = vst [vmem:[#allocation3 + $0xf08] sm:$0xff] %v4863
      %5888 = vst [vmem:[#allocation3 + $0xf10] sm:$0xff] %v4864
      %5889 = vst [vmem:[#allocation3 + $0xf18] sm:$0xff] %v4865
      %5890 = vst [vmem:[#allocation3 + $0xf20] sm:$0xff] %v4866
      %5891 = vst [vmem:[#allocation3 + $0xf28] sm:$0xff] %v4867
      %5892 = vst [vmem:[#allocation3 + $0xf30] sm:$0xff] %v4868
      %5893 = vst [vmem:[#allocation3 + $0xf38] sm:$0xff] %v4869
      %5894 = vst [vmem:[#allocation3 + $0xf40] sm:$0xff] %v4870
      %5895 = vst [vmem:[#allocation3 + $0xf48] sm:$0xff] %v4871
      %5896 = vst [vmem:[#allocation3 + $0xf50] sm:$0xff] %v4872
      %5897 = vst [vmem:[#allocation3 + $0xf58] sm:$0xff] %v4873
      %5898 = vst [vmem:[#allocation3 + $0xf60] sm:$0xff] %v4874
      %5899 = vst [vmem:[#allocation3 + $0xf68] sm:$0xff] %v4875
      %5900 = vst [vmem:[#allocation3 + $0xf70] sm:$0xff] %v4876
      %5901 = vst [vmem:[#allocation3 + $0xf78] sm:$0xff] %v4877
      %5902 = vst [vmem:[#allocation3 + $0xf80] sm:$0xff] %v4878
      %5903 = vst [vmem:[#allocation3 + $0xf88] sm:$0xff] %v4879
      %5904 = vst [vmem:[#allocation3 + $0xf90] sm:$0xff] %v4880
      %5905 = vst [vmem:[#allocation3 + $0xf98] sm:$0xff] %v4881
      %5906 = vst [vmem:[#allocation3 + $0xfa0] sm:$0xff] %v4882
      %5907 = vst [vmem:[#allocation3 + $0xfa8] sm:$0xff] %v4883
      %5908 = vst [vmem:[#allocation3 + $0xfb0] sm:$0xff] %v4884
      %5909 = vst [vmem:[#allocation3 + $0xfb8] sm:$0xff] %v4885
      %5910 = vst [vmem:[#allocation3 + $0xfc0] sm:$0xff] %v4886
      %5911 = vst [vmem:[#allocation3 + $0xfc8] sm:$0xff] %v4887
      %5912 = vst [vmem:[#allocation3 + $0xfd0] sm:$0xff] %v4888
      %5913 = vst [vmem:[#allocation3 + $0xfd8] sm:$0xff] %v4889
      %5914 = vst [vmem:[#allocation3 + $0xfe0] sm:$0xff] %v4890
      %5915 = vst [vmem:[#allocation3 + $0xfe8] sm:$0xff] %v4891
      %5916 = vst [vmem:[#allocation3 + $0xff0] sm:$0xff] %v4892
      %5917 = vst [vmem:[#allocation3 + $0xff8] sm:$0xff] %v4893
    $region85: #{_generator_forward_padded.1} parent=1 // pred_fallthru
      _
    %v5918 = vld [vmem:[#allocation4] sm:$0xf]
    %v5919 = vld [vmem:[#allocation4 + $0x4] sm:$0xf]
    %v5920 = vld [vmem:[#allocation7] sm:$0xff]
    %v5921 = vld [vmem:[#allocation7 + $0x8] sm:$0xff]
    %v5922 = vld [vmem:[#allocation7 + $0x10] sm:$0xff]
    %v5923 = vld [vmem:[#allocation7 + $0x18] sm:$0xff]
    %v5924 = vld [vmem:[#allocation7 + $0x20] sm:$0xff]
    %v5925 = vld [vmem:[#allocation7 + $0x28] sm:$0xff]
    %v5926 = vld [vmem:[#allocation7 + $0x30] sm:$0xff]
    %v5927 = vld [vmem:[#allocation7 + $0x38] sm:$0xff]
    %v5928 = vld [vmem:[#allocation7 + $0x40] sm:$0xff]
    %v5929 = vld [vmem:[#allocation7 + $0x48] sm:$0xff]
    %v5930 = vld [vmem:[#allocation7 + $0x50] sm:$0xff]
    %v5931 = vld [vmem:[#allocation7 + $0x58] sm:$0xff]
    %v5932 = vld [vmem:[#allocation7 + $0x60] sm:$0xff]
    %v5933 = vld [vmem:[#allocation7 + $0x68] sm:$0xff]
    %v5934 = vld [vmem:[#allocation7 + $0x70] sm:$0xff]
    %v5935 = vld [vmem:[#allocation7 + $0x78] sm:$0xff]
    %v5936 = vld [vmem:[#allocation9] sm:$0x3]
    %v5938 = vlaneseq
    %v5939 = vshrl.u32 %v5938, 7
    %v5940 = vsub.s32 0, %v5939
    %v5941 = vrot.slane %v5936, %v5940
    %v5942 = vlaneseq
    %v5943 = vshrl.u32 %v5942, 7
    %v5944 = vsub.s32 1, %v5943
    %v5945 = vrot.slane %v5936, %v5944
    %v5950 = vunpack.c.l.b16 %v5918
    %v5951 = vunpack.c.l.b16 %v5919
    %v5952 = vpack.c.b16 %v5951, %v5950
    %v5970 = vunpack.c.l.b16 %v5920
    %v5971 = vunpack.c.h.b16 %v5920
    %v5972 = vunpack.c.l.b16 %v5921
    %v5973 = vunpack.c.h.b16 %v5921
    %v5974 = vunpack.c.l.b16 %v5922
    %v5975 = vunpack.c.h.b16 %v5922
    %v5976 = vunpack.c.l.b16 %v5923
    %v5977 = vunpack.c.h.b16 %v5923
    %v5978 = vunpack.c.l.b16 %v5924
    %v5979 = vunpack.c.h.b16 %v5924
    %v5980 = vunpack.c.l.b16 %v5925
    %v5981 = vunpack.c.h.b16 %v5925
    %v5982 = vunpack.c.l.b16 %v5926
    %v5983 = vunpack.c.h.b16 %v5926
    %v5984 = vunpack.c.l.b16 %v5927
    %v5985 = vunpack.c.h.b16 %v5927
    %v5986 = vunpack.c.l.b16 %v5928
    %v5987 = vunpack.c.h.b16 %v5928
    %v5988 = vunpack.c.l.b16 %v5929
    %v5989 = vunpack.c.h.b16 %v5929
    %v5990 = vunpack.c.l.b16 %v5930
    %v5991 = vunpack.c.h.b16 %v5930
    %v5992 = vunpack.c.l.b16 %v5931
    %v5993 = vunpack.c.h.b16 %v5931
    %v5994 = vunpack.c.l.b16 %v5932
    %v5995 = vunpack.c.h.b16 %v5932
    %v5996 = vunpack.c.l.b16 %v5933
    %v5997 = vunpack.c.h.b16 %v5933
    %v5998 = vunpack.c.l.b16 %v5934
    %v5999 = vunpack.c.h.b16 %v5934
    %v6000 = vunpack.c.l.b16 %v5935
    %v6001 = vunpack.c.h.b16 %v5935
    %v6002 = vpack.c.b16 %v5972, %v5970
    %v6003 = vpack.c.b16 %v5973, %v5971
    %v6004 = vpack.c.b16 %v5976, %v5974
    %v6005 = vpack.c.b16 %v5977, %v5975
    %v6006 = vpack.c.b16 %v5980, %v5978
    %v6007 = vpack.c.b16 %v5981, %v5979
    %v6008 = vpack.c.b16 %v5984, %v5982
    %v6009 = vpack.c.b16 %v5985, %v5983
    %v6010 = vpack.c.b16 %v5988, %v5986
    %v6011 = vpack.c.b16 %v5989, %v5987
    %v6012 = vpack.c.b16 %v5992, %v5990
    %v6013 = vpack.c.b16 %v5993, %v5991
    %v6014 = vpack.c.b16 %v5996, %v5994
    %v6015 = vpack.c.b16 %v5997, %v5995
    %v6016 = vpack.c.b16 %v6000, %v5998
    %v6017 = vpack.c.b16 %v6001, %v5999
    %6034 = vmatprep.subr.bf16.mxu0 %v6017
    %6035 = vmatpush1.bf16.msra.mxu0 %v6016
    %6036 = vmatprep.subr.bf16.mxu0 %v6015
    %6037 = vmatpush1.bf16.msra.mxu0 %v6014
    %6038 = vmatprep.subr.bf16.mxu0 %v6013
    %6039 = vmatpush1.bf16.msra.mxu0 %v6012
    %6040 = vmatprep.subr.bf16.mxu0 %v6011
    %6041 = vmatpush1.bf16.msra.mxu0 %v6010
    %6042 = vmatprep.subr.bf16.mxu0 %v6009
    %6043 = vmatpush1.bf16.msra.mxu0 %v6008
    %6044 = vmatprep.subr.bf16.mxu0 %v6007
    %6045 = vmatpush1.bf16.msra.mxu0 %v6006
    %6046 = vmatprep.subr.bf16.mxu0 %v6005
    %6047 = vmatpush1.bf16.msra.mxu0 %v6004
    %6048 = vmatprep.subr.bf16.mxu0 %v6003
    %6049 = vmatpush1.bf16.msra.mxu0 %v6002
    %6050 = vmatprep.subr.bf16.mxu0 0
    %6051 = vmatpush2.bf16.msra.mxu0 0
    %6052 = vmatprep.subr.bf16.mxu0 0
    %6053 = vmatpush2.bf16.msra.mxu0 0
    %6054 = vmatprep.subr.bf16.mxu0 0
    %6055 = vmatpush2.bf16.msra.mxu0 0
    %6056 = vmatprep.subr.bf16.mxu0 0
    %6057 = vmatpush2.bf16.msra.mxu0 0
    %6058 = vmatprep.subr.bf16.mxu0 0
    %6059 = vmatpush2.bf16.msra.mxu0 0
    %6060 = vmatprep.subr.bf16.mxu0 0
    %6061 = vmatpush2.bf16.msra.mxu0 0
    %6062 = vmatprep.subr.bf16.mxu0 0
    %6063 = vmatpush2.bf16.msra.mxu0 0
    %6064 = vmatprep.subr.bf16.mxu0 0
    %6065 = vmatpush2.bf16.msra.mxu0 0
    %6066 = vmatprep.mubr.bf16.mxu0 0
    %6067 = vmatmul.mubr.bf16.gmra.mxu0 %v5952
    %v6068 = vpop.f32.mrf.mxu0
    %v6069 = vadd.f32 %v5941, %v6068
    %v6070 = vpop.f32.mrf.mxu0
    %v6071 = vadd.f32 %v5945, %v6070
    %v6072 = vpop.f32.mrf.mxu0
    %v6073 = vadd.f32 %v5941, %v6072
    %v6074 = vpop.f32.mrf.mxu0
    %v6075 = vadd.f32 %v5945, %v6074
    %6076 = vdwg.mxu0
    %v6077 = vmax.f32 %v6069, 0.0
    %v6078 = vmax.f32 %v6071, 0.0
    %v6079 = vmax.f32 %v6073, 0.0
    %v6080 = vmax.f32 %v6075, 0.0
    %v6081 = vpack.c.bf16 %v6079, %v6077
    %v6082 = vpack.c.bf16 %v6080, %v6078
    %v6083 = vld [vmem:[#allocation10] sm:$0xff]
    %v6084 = vld [vmem:[#allocation10 + $0x8] sm:$0xff]
    %v6085 = vld [vmem:[#allocation10 + $0x10] sm:$0xff]
    %v6086 = vld [vmem:[#allocation10 + $0x18] sm:$0xff]
    %v6087 = vld [vmem:[#allocation10 + $0x20] sm:$0xff]
    %v6088 = vld [vmem:[#allocation10 + $0x28] sm:$0xff]
    %v6089 = vld [vmem:[#allocation10 + $0x30] sm:$0xff]
    %v6090 = vld [vmem:[#allocation10 + $0x38] sm:$0xff]
    %v6091 = vld [vmem:[#allocation10 + $0x40] sm:$0xff]
    %v6092 = vld [vmem:[#allocation10 + $0x48] sm:$0xff]
    %v6093 = vld [vmem:[#allocation10 + $0x50] sm:$0xff]
    %v6094 = vld [vmem:[#allocation10 + $0x58] sm:$0xff]
    %v6095 = vld [vmem:[#allocation10 + $0x60] sm:$0xff]
    %v6096 = vld [vmem:[#allocation10 + $0x68] sm:$0xff]
    %v6097 = vld [vmem:[#allocation10 + $0x70] sm:$0xff]
    %v6098 = vld [vmem:[#allocation10 + $0x78] sm:$0xff]
    %v6099 = vld [vmem:[#allocation10 + $0x80] sm:$0xff]
    %v6100 = vld [vmem:[#allocation10 + $0x88] sm:$0xff]
    %v6101 = vld [vmem:[#allocation10 + $0x90] sm:$0xff]
    %v6102 = vld [vmem:[#allocation10 + $0x98] sm:$0xff]
    %v6103 = vld [vmem:[#allocation10 + $0xa0] sm:$0xff]
    %v6104 = vld [vmem:[#allocation10 + $0xa8] sm:$0xff]
    %v6105 = vld [vmem:[#allocation10 + $0xb0] sm:$0xff]
    %v6106 = vld [vmem:[#allocation10 + $0xb8] sm:$0xff]
    %v6107 = vld [vmem:[#allocation10 + $0xc0] sm:$0xff]
    %v6108 = vld [vmem:[#allocation10 + $0xc8] sm:$0xff]
    %v6109 = vld [vmem:[#allocation10 + $0xd0] sm:$0xff]
    %v6110 = vld [vmem:[#allocation10 + $0xd8] sm:$0xff]
    %v6111 = vld [vmem:[#allocation10 + $0xe0] sm:$0xff]
    %v6112 = vld [vmem:[#allocation10 + $0xe8] sm:$0xff]
    %v6113 = vld [vmem:[#allocation10 + $0xf0] sm:$0xff]
    %v6114 = vld [vmem:[#allocation10 + $0xf8] sm:$0xff]
    %v6115 = vld [vmem:[#allocation10 + $0x100] sm:$0xff]
    %v6116 = vld [vmem:[#allocation10 + $0x108] sm:$0xff]
    %v6117 = vld [vmem:[#allocation10 + $0x110] sm:$0xff]
    %v6118 = vld [vmem:[#allocation10 + $0x118] sm:$0xff]
    %v6119 = vld [vmem:[#allocation10 + $0x120] sm:$0xff]
    %v6120 = vld [vmem:[#allocation10 + $0x128] sm:$0xff]
    %v6121 = vld [vmem:[#allocation10 + $0x130] sm:$0xff]
    %v6122 = vld [vmem:[#allocation10 + $0x138] sm:$0xff]
    %v6123 = vld [vmem:[#allocation10 + $0x140] sm:$0xff]
    %v6124 = vld [vmem:[#allocation10 + $0x148] sm:$0xff]
    %v6125 = vld [vmem:[#allocation10 + $0x150] sm:$0xff]
    %v6126 = vld [vmem:[#allocation10 + $0x158] sm:$0xff]
    %v6127 = vld [vmem:[#allocation10 + $0x160] sm:$0xff]
    %v6128 = vld [vmem:[#allocation10 + $0x168] sm:$0xff]
    %v6129 = vld [vmem:[#allocation10 + $0x170] sm:$0xff]
    %v6130 = vld [vmem:[#allocation10 + $0x178] sm:$0xff]
    %v6131 = vld [vmem:[#allocation10 + $0x180] sm:$0xff]
    %v6132 = vld [vmem:[#allocation10 + $0x188] sm:$0xff]
    %v6133 = vld [vmem:[#allocation10 + $0x190] sm:$0xff]
    %v6134 = vld [vmem:[#allocation10 + $0x198] sm:$0xff]
    %v6135 = vld [vmem:[#allocation10 + $0x1a0] sm:$0xff]
    %v6136 = vld [vmem:[#allocation10 + $0x1a8] sm:$0xff]
    %v6137 = vld [vmem:[#allocation10 + $0x1b0] sm:$0xff]
    %v6138 = vld [vmem:[#allocation10 + $0x1b8] sm:$0xff]
    %v6139 = vld [vmem:[#allocation10 + $0x1c0] sm:$0xff]
    %v6140 = vld [vmem:[#allocation10 + $0x1c8] sm:$0xff]
    %v6141 = vld [vmem:[#allocation10 + $0x1d0] sm:$0xff]
    %v6142 = vld [vmem:[#allocation10 + $0x1d8] sm:$0xff]
    %v6143 = vld [vmem:[#allocation10 + $0x1e0] sm:$0xff]
    %v6144 = vld [vmem:[#allocation10 + $0x1e8] sm:$0xff]
    %v6145 = vld [vmem:[#allocation10 + $0x1f0] sm:$0xff]
    %v6146 = vld [vmem:[#allocation10 + $0x1f8] sm:$0xff]
    %v6147 = vld [vmem:[#allocation12] sm:$0xf]
    %v6149 = vlaneseq
    %v6150 = vshrl.u32 %v6149, 7
    %v6151 = vsub.s32 0, %v6150
    %v6152 = vrot.slane %v6147, %v6151
    %v6153 = vlaneseq
    %v6154 = vshrl.u32 %v6153, 7
    %v6155 = vsub.s32 1, %v6154
    %v6156 = vrot.slane %v6147, %v6155
    %v6157 = vlaneseq
    %v6158 = vshrl.u32 %v6157, 7
    %v6159 = vsub.s32 2, %v6158
    %v6160 = vrot.slane %v6147, %v6159
    %v6161 = vlaneseq
    %v6162 = vshrl.u32 %v6161, 7
    %v6163 = vsub.s32 3, %v6162
    %v6164 = vrot.slane %v6147, %v6163
    %v6233 = vunpack.c.l.b16 %v6083
    %v6234 = vunpack.c.h.b16 %v6083
    %v6235 = vunpack.c.l.b16 %v6084
    %v6236 = vunpack.c.h.b16 %v6084
    %v6237 = vunpack.c.l.b16 %v6085
    %v6238 = vunpack.c.h.b16 %v6085
    %v6239 = vunpack.c.l.b16 %v6086
    %v6240 = vunpack.c.h.b16 %v6086
    %v6241 = vunpack.c.l.b16 %v6087
    %v6242 = vunpack.c.h.b16 %v6087
    %v6243 = vunpack.c.l.b16 %v6088
    %v6244 = vunpack.c.h.b16 %v6088
    %v6245 = vunpack.c.l.b16 %v6089
    %v6246 = vunpack.c.h.b16 %v6089
    %v6247 = vunpack.c.l.b16 %v6090
    %v6248 = vunpack.c.h.b16 %v6090
    %v6249 = vunpack.c.l.b16 %v6091
    %v6250 = vunpack.c.h.b16 %v6091
    %v6251 = vunpack.c.l.b16 %v6092
    %v6252 = vunpack.c.h.b16 %v6092
    %v6253 = vunpack.c.l.b16 %v6093
    %v6254 = vunpack.c.h.b16 %v6093
    %v6255 = vunpack.c.l.b16 %v6094
    %v6256 = vunpack.c.h.b16 %v6094
    %v6257 = vunpack.c.l.b16 %v6095
    %v6258 = vunpack.c.h.b16 %v6095
    %v6259 = vunpack.c.l.b16 %v6096
    %v6260 = vunpack.c.h.b16 %v6096
    %v6261 = vunpack.c.l.b16 %v6097
    %v6262 = vunpack.c.h.b16 %v6097
    %v6263 = vunpack.c.l.b16 %v6098
    %v6264 = vunpack.c.h.b16 %v6098
    %v6265 = vunpack.c.l.b16 %v6099
    %v6266 = vunpack.c.h.b16 %v6099
    %v6267 = vunpack.c.l.b16 %v6100
    %v6268 = vunpack.c.h.b16 %v6100
    %v6269 = vunpack.c.l.b16 %v6101
    %v6270 = vunpack.c.h.b16 %v6101
    %v6271 = vunpack.c.l.b16 %v6102
    %v6272 = vunpack.c.h.b16 %v6102
    %v6273 = vunpack.c.l.b16 %v6103
    %v6274 = vunpack.c.h.b16 %v6103
    %v6275 = vunpack.c.l.b16 %v6104
    %v6276 = vunpack.c.h.b16 %v6104
    %v6277 = vunpack.c.l.b16 %v6105
    %v6278 = vunpack.c.h.b16 %v6105
    %v6279 = vunpack.c.l.b16 %v6106
    %v6280 = vunpack.c.h.b16 %v6106
    %v6281 = vunpack.c.l.b16 %v6107
    %v6282 = vunpack.c.h.b16 %v6107
    %v6283 = vunpack.c.l.b16 %v6108
    %v6284 = vunpack.c.h.b16 %v6108
    %v6285 = vunpack.c.l.b16 %v6109
    %v6286 = vunpack.c.h.b16 %v6109
    %v6287 = vunpack.c.l.b16 %v6110
    %v6288 = vunpack.c.h.b16 %v6110
    %v6289 = vunpack.c.l.b16 %v6111
    %v6290 = vunpack.c.h.b16 %v6111
    %v6291 = vunpack.c.l.b16 %v6112
    %v6292 = vunpack.c.h.b16 %v6112
    %v6293 = vunpack.c.l.b16 %v6113
    %v6294 = vunpack.c.h.b16 %v6113
    %v6295 = vunpack.c.l.b16 %v6114
    %v6296 = vunpack.c.h.b16 %v6114
    %v6297 = vunpack.c.l.b16 %v6115
    %v6298 = vunpack.c.h.b16 %v6115
    %v6299 = vunpack.c.l.b16 %v6116
    %v6300 = vunpack.c.h.b16 %v6116
    %v6301 = vunpack.c.l.b16 %v6117
    %v6302 = vunpack.c.h.b16 %v6117
    %v6303 = vunpack.c.l.b16 %v6118
    %v6304 = vunpack.c.h.b16 %v6118
    %v6305 = vunpack.c.l.b16 %v6119
    %v6306 = vunpack.c.h.b16 %v6119
    %v6307 = vunpack.c.l.b16 %v6120
    %v6308 = vunpack.c.h.b16 %v6120
    %v6309 = vunpack.c.l.b16 %v6121
    %v6310 = vunpack.c.h.b16 %v6121
    %v6311 = vunpack.c.l.b16 %v6122
    %v6312 = vunpack.c.h.b16 %v6122
    %v6313 = vunpack.c.l.b16 %v6123
    %v6314 = vunpack.c.h.b16 %v6123
    %v6315 = vunpack.c.l.b16 %v6124
    %v6316 = vunpack.c.h.b16 %v6124
    %v6317 = vunpack.c.l.b16 %v6125
    %v6318 = vunpack.c.h.b16 %v6125
    %v6319 = vunpack.c.l.b16 %v6126
    %v6320 = vunpack.c.h.b16 %v6126
    %v6321 = vunpack.c.l.b16 %v6127
    %v6322 = vunpack.c.h.b16 %v6127
    %v6323 = vunpack.c.l.b16 %v6128
    %v6324 = vunpack.c.h.b16 %v6128
    %v6325 = vunpack.c.l.b16 %v6129
    %v6326 = vunpack.c.h.b16 %v6129
    %v6327 = vunpack.c.l.b16 %v6130
    %v6328 = vunpack.c.h.b16 %v6130
    %v6329 = vunpack.c.l.b16 %v6131
    %v6330 = vunpack.c.h.b16 %v6131
    %v6331 = vunpack.c.l.b16 %v6132
    %v6332 = vunpack.c.h.b16 %v6132
    %v6333 = vunpack.c.l.b16 %v6133
    %v6334 = vunpack.c.h.b16 %v6133
    %v6335 = vunpack.c.l.b16 %v6134
    %v6336 = vunpack.c.h.b16 %v6134
    %v6337 = vunpack.c.l.b16 %v6135
    %v6338 = vunpack.c.h.b16 %v6135
    %v6339 = vunpack.c.l.b16 %v6136
    %v6340 = vunpack.c.h.b16 %v6136
    %v6341 = vunpack.c.l.b16 %v6137
    %v6342 = vunpack.c.h.b16 %v6137
    %v6343 = vunpack.c.l.b16 %v6138
    %v6344 = vunpack.c.h.b16 %v6138
    %v6345 = vunpack.c.l.b16 %v6139
    %v6346 = vunpack.c.h.b16 %v6139
    %v6347 = vunpack.c.l.b16 %v6140
    %v6348 = vunpack.c.h.b16 %v6140
    %v6349 = vunpack.c.l.b16 %v6141
    %v6350 = vunpack.c.h.b16 %v6141
    %v6351 = vunpack.c.l.b16 %v6142
    %v6352 = vunpack.c.h.b16 %v6142
    %v6353 = vunpack.c.l.b16 %v6143
    %v6354 = vunpack.c.h.b16 %v6143
    %v6355 = vunpack.c.l.b16 %v6144
    %v6356 = vunpack.c.h.b16 %v6144
    %v6357 = vunpack.c.l.b16 %v6145
    %v6358 = vunpack.c.h.b16 %v6145
    %v6359 = vunpack.c.l.b16 %v6146
    %v6360 = vunpack.c.h.b16 %v6146
    %v6361 = vpack.c.b16 %v6237, %v6233
    %v6362 = vpack.c.b16 %v6238, %v6234
    %v6363 = vpack.c.b16 %v6239, %v6235
    %v6364 = vpack.c.b16 %v6240, %v6236
    %v6365 = vpack.c.b16 %v6245, %v6241
    %v6366 = vpack.c.b16 %v6246, %v6242
    %v6367 = vpack.c.b16 %v6247, %v6243
    %v6368 = vpack.c.b16 %v6248, %v6244
    %v6369 = vpack.c.b16 %v6253, %v6249
    %v6370 = vpack.c.b16 %v6254, %v6250
    %v6371 = vpack.c.b16 %v6255, %v6251
    %v6372 = vpack.c.b16 %v6256, %v6252
    %v6373 = vpack.c.b16 %v6261, %v6257
    %v6374 = vpack.c.b16 %v6262, %v6258
    %v6375 = vpack.c.b16 %v6263, %v6259
    %v6376 = vpack.c.b16 %v6264, %v6260
    %v6377 = vpack.c.b16 %v6269, %v6265
    %v6378 = vpack.c.b16 %v6270, %v6266
    %v6379 = vpack.c.b16 %v6271, %v6267
    %v6380 = vpack.c.b16 %v6272, %v6268
    %v6381 = vpack.c.b16 %v6277, %v6273
    %v6382 = vpack.c.b16 %v6278, %v6274
    %v6383 = vpack.c.b16 %v6279, %v6275
    %v6384 = vpack.c.b16 %v6280, %v6276
    %v6385 = vpack.c.b16 %v6285, %v6281
    %v6386 = vpack.c.b16 %v6286, %v6282
    %v6387 = vpack.c.b16 %v6287, %v6283
    %v6388 = vpack.c.b16 %v6288, %v6284
    %v6389 = vpack.c.b16 %v6293, %v6289
    %v6390 = vpack.c.b16 %v6294, %v6290
    %v6391 = vpack.c.b16 %v6295, %v6291
    %v6392 = vpack.c.b16 %v6296, %v6292
    %v6393 = vpack.c.b16 %v6301, %v6297
    %v6394 = vpack.c.b16 %v6302, %v6298
    %v6395 = vpack.c.b16 %v6303, %v6299
    %v6396 = vpack.c.b16 %v6304, %v6300
    %v6397 = vpack.c.b16 %v6309, %v6305
    %v6398 = vpack.c.b16 %v6310, %v6306
    %v6399 = vpack.c.b16 %v6311, %v6307
    %v6400 = vpack.c.b16 %v6312, %v6308
    %v6401 = vpack.c.b16 %v6317, %v6313
    %v6402 = vpack.c.b16 %v6318, %v6314
    %v6403 = vpack.c.b16 %v6319, %v6315
    %v6404 = vpack.c.b16 %v6320, %v6316
    %v6405 = vpack.c.b16 %v6325, %v6321
    %v6406 = vpack.c.b16 %v6326, %v6322
    %v6407 = vpack.c.b16 %v6327, %v6323
    %v6408 = vpack.c.b16 %v6328, %v6324
    %v6409 = vpack.c.b16 %v6333, %v6329
    %v6410 = vpack.c.b16 %v6334, %v6330
    %v6411 = vpack.c.b16 %v6335, %v6331
    %v6412 = vpack.c.b16 %v6336, %v6332
    %v6413 = vpack.c.b16 %v6341, %v6337
    %v6414 = vpack.c.b16 %v6342, %v6338
    %v6415 = vpack.c.b16 %v6343, %v6339
    %v6416 = vpack.c.b16 %v6344, %v6340
    %v6417 = vpack.c.b16 %v6349, %v6345
    %v6418 = vpack.c.b16 %v6350, %v6346
    %v6419 = vpack.c.b16 %v6351, %v6347
    %v6420 = vpack.c.b16 %v6352, %v6348
    %v6421 = vpack.c.b16 %v6357, %v6353
    %v6422 = vpack.c.b16 %v6358, %v6354
    %v6423 = vpack.c.b16 %v6359, %v6355
    %v6424 = vpack.c.b16 %v6360, %v6356
    %6489 = vmatprep.subr.bf16.mxu0 %v6390
    %6490 = vmatpush1.bf16.msra.mxu0 %v6389
    %6491 = vmatprep.subr.bf16.mxu0 %v6386
    %6492 = vmatpush1.bf16.msra.mxu0 %v6385
    %6493 = vmatprep.subr.bf16.mxu0 %v6382
    %6494 = vmatpush1.bf16.msra.mxu0 %v6381
    %6495 = vmatprep.subr.bf16.mxu0 %v6378
    %6496 = vmatpush1.bf16.msra.mxu0 %v6377
    %6497 = vmatprep.subr.bf16.mxu0 %v6374
    %6498 = vmatpush1.bf16.msra.mxu0 %v6373
    %6499 = vmatprep.subr.bf16.mxu0 %v6370
    %6500 = vmatpush1.bf16.msra.mxu0 %v6369
    %6501 = vmatprep.subr.bf16.mxu0 %v6366
    %6502 = vmatpush1.bf16.msra.mxu0 %v6365
    %6503 = vmatprep.subr.bf16.mxu0 %v6362
    %6504 = vmatpush1.bf16.msra.mxu0 %v6361
    %6505 = vmatprep.subr.bf16.mxu0 %v6422
    %6506 = vmatpush2.bf16.msra.mxu0 %v6421
    %6507 = vmatprep.subr.bf16.mxu0 %v6418
    %6508 = vmatpush2.bf16.msra.mxu0 %v6417
    %6509 = vmatprep.subr.bf16.mxu0 %v6414
    %6510 = vmatpush2.bf16.msra.mxu0 %v6413
    %6511 = vmatprep.subr.bf16.mxu0 %v6410
    %6512 = vmatpush2.bf16.msra.mxu0 %v6409
    %6513 = vmatprep.subr.bf16.mxu0 %v6406
    %6514 = vmatpush2.bf16.msra.mxu0 %v6405
    %6515 = vmatprep.subr.bf16.mxu0 %v6402
    %6516 = vmatpush2.bf16.msra.mxu0 %v6401
    %6517 = vmatprep.subr.bf16.mxu0 %v6398
    %6518 = vmatpush2.bf16.msra.mxu0 %v6397
    %6519 = vmatprep.subr.bf16.mxu0 %v6394
    %6520 = vmatpush2.bf16.msra.mxu0 %v6393
    %6521 = vmatprep.mubr.bf16.mxu0 %v6082
    %6522 = vmatmul.mubr.bf16.gmra.mxu0 %v6081
    %v6523 = vpop.f32.mrf.mxu0
    %v6524 = vadd.f32 %v6152, %v6523
    %v6525 = vpop.f32.mrf.mxu0
    %v6526 = vadd.f32 %v6156, %v6525
    %v6527 = vpop.f32.mrf.mxu0
    %v6528 = vadd.f32 %v6152, %v6527
    %v6529 = vpop.f32.mrf.mxu0
    %v6530 = vadd.f32 %v6156, %v6529
    %6531 = vdwg.mxu0
    %6532 = vmatprep.subr.bf16.mxu0 %v6392
    %6533 = vmatpush1.bf16.msra.mxu0 %v6391
    %6534 = vmatprep.subr.bf16.mxu0 %v6388
    %6535 = vmatpush1.bf16.msra.mxu0 %v6387
    %6536 = vmatprep.subr.bf16.mxu0 %v6384
    %6537 = vmatpush1.bf16.msra.mxu0 %v6383
    %6538 = vmatprep.subr.bf16.mxu0 %v6380
    %6539 = vmatpush1.bf16.msra.mxu0 %v6379
    %6540 = vmatprep.subr.bf16.mxu0 %v6376
    %6541 = vmatpush1.bf16.msra.mxu0 %v6375
    %6542 = vmatprep.subr.bf16.mxu0 %v6372
    %6543 = vmatpush1.bf16.msra.mxu0 %v6371
    %6544 = vmatprep.subr.bf16.mxu0 %v6368
    %6545 = vmatpush1.bf16.msra.mxu0 %v6367
    %6546 = vmatprep.subr.bf16.mxu0 %v6364
    %6547 = vmatpush1.bf16.msra.mxu0 %v6363
    %6548 = vmatprep.subr.bf16.mxu0 %v6424
    %6549 = vmatpush2.bf16.msra.mxu0 %v6423
    %6550 = vmatprep.subr.bf16.mxu0 %v6420
    %6551 = vmatpush2.bf16.msra.mxu0 %v6419
    %6552 = vmatprep.subr.bf16.mxu0 %v6416
    %6553 = vmatpush2.bf16.msra.mxu0 %v6415
    %6554 = vmatprep.subr.bf16.mxu0 %v6412
    %6555 = vmatpush2.bf16.msra.mxu0 %v6411
    %6556 = vmatprep.subr.bf16.mxu0 %v6408
    %6557 = vmatpush2.bf16.msra.mxu0 %v6407
    %6558 = vmatprep.subr.bf16.mxu0 %v6404
    %6559 = vmatpush2.bf16.msra.mxu0 %v6403
    %6560 = vmatprep.subr.bf16.mxu0 %v6400
    %6561 = vmatpush2.bf16.msra.mxu0 %v6399
    %6562 = vmatprep.subr.bf16.mxu0 %v6396
    %6563 = vmatpush2.bf16.msra.mxu0 %v6395
    %6564 = vmatprep.mubr.bf16.mxu0 %v6082
    %6565 = vmatmul.mubr.bf16.gmra.mxu0 %v6081
    %v6566 = vpop.f32.mrf.mxu0
    %v6567 = vadd.f32 %v6160, %v6566
    %v6568 = vpop.f32.mrf.mxu0
    %v6569 = vadd.f32 %v6164, %v6568
    %v6570 = vpop.f32.mrf.mxu0
    %v6571 = vadd.f32 %v6160, %v6570
    %v6572 = vpop.f32.mrf.mxu0
    %v6573 = vadd.f32 %v6164, %v6572
    %6574 = vdwg.mxu0
    %v6575 = vmax.f32 %v6524, 0.0
    %v6576 = vmax.f32 %v6526, 0.0
    %v6577 = vmax.f32 %v6567, 0.0
    %v6578 = vmax.f32 %v6569, 0.0
    %v6579 = vmax.f32 %v6528, 0.0
    %v6580 = vmax.f32 %v6530, 0.0
    %v6581 = vmax.f32 %v6571, 0.0
    %v6582 = vmax.f32 %v6573, 0.0
    %v6583 = vpack.c.bf16 %v6579, %v6575
    %v6584 = vpack.c.bf16 %v6580, %v6576
    %v6585 = vpack.c.bf16 %v6581, %v6577
    %v6586 = vpack.c.bf16 %v6582, %v6578
    %v6587 = vld [vmem:[#allocation2] sm:$0xff]
    %v6588 = vld [vmem:[#allocation2 + $0x8] sm:$0xff]
    %v6589 = vld [vmem:[#allocation2 + $0x10] sm:$0xff]
    %v6590 = vld [vmem:[#allocation2 + $0x18] sm:$0xff]
    %v6591 = vld [vmem:[#allocation2 + $0x20] sm:$0xff]
    %v6592 = vld [vmem:[#allocation2 + $0x28] sm:$0xff]
    %v6593 = vld [vmem:[#allocation2 + $0x30] sm:$0xff]
    %v6594 = vld [vmem:[#allocation2 + $0x38] sm:$0xff]
    %v6595 = vld [vmem:[#allocation2 + $0x40] sm:$0xff]
    %v6596 = vld [vmem:[#allocation2 + $0x48] sm:$0xff]
    %v6597 = vld [vmem:[#allocation2 + $0x50] sm:$0xff]
    %v6598 = vld [vmem:[#allocation2 + $0x58] sm:$0xff]
    %v6599 = vld [vmem:[#allocation2 + $0x60] sm:$0xff]
    %v6600 = vld [vmem:[#allocation2 + $0x68] sm:$0xff]
    %v6601 = vld [vmem:[#allocation2 + $0x70] sm:$0xff]
    %v6602 = vld [vmem:[#allocation2 + $0x78] sm:$0xff]
    %v6603 = vld [vmem:[#allocation2 + $0x80] sm:$0xff]
    %v6604 = vld [vmem:[#allocation2 + $0x88] sm:$0xff]
    %v6605 = vld [vmem:[#allocation2 + $0x90] sm:$0xff]
    %v6606 = vld [vmem:[#allocation2 + $0x98] sm:$0xff]
    %v6607 = vld [vmem:[#allocation2 + $0xa0] sm:$0xff]
    %v6608 = vld [vmem:[#allocation2 + $0xa8] sm:$0xff]
    %v6609 = vld [vmem:[#allocation2 + $0xb0] sm:$0xff]
    %v6610 = vld [vmem:[#allocation2 + $0xb8] sm:$0xff]
    %v6611 = vld [vmem:[#allocation2 + $0xc0] sm:$0xff]
    %v6612 = vld [vmem:[#allocation2 + $0xc8] sm:$0xff]
    %v6613 = vld [vmem:[#allocation2 + $0xd0] sm:$0xff]
    %v6614 = vld [vmem:[#allocation2 + $0xd8] sm:$0xff]
    %v6615 = vld [vmem:[#allocation2 + $0xe0] sm:$0xff]
    %v6616 = vld [vmem:[#allocation2 + $0xe8] sm:$0xff]
    %v6617 = vld [vmem:[#allocation2 + $0xf0] sm:$0xff]
    %v6618 = vld [vmem:[#allocation2 + $0xf8] sm:$0xff]
    %v6619 = vld [vmem:[#allocation2 + $0x100] sm:$0xff]
    %v6620 = vld [vmem:[#allocation2 + $0x108] sm:$0xff]
    %v6621 = vld [vmem:[#allocation2 + $0x110] sm:$0xff]
    %v6622 = vld [vmem:[#allocation2 + $0x118] sm:$0xff]
    %v6623 = vld [vmem:[#allocation2 + $0x120] sm:$0xff]
    %v6624 = vld [vmem:[#allocation2 + $0x128] sm:$0xff]
    %v6625 = vld [vmem:[#allocation2 + $0x130] sm:$0xff]
    %v6626 = vld [vmem:[#allocation2 + $0x138] sm:$0xff]
    %v6627 = vld [vmem:[#allocation2 + $0x140] sm:$0xff]
    %v6628 = vld [vmem:[#allocation2 + $0x148] sm:$0xff]
    %v6629 = vld [vmem:[#allocation2 + $0x150] sm:$0xff]
    %v6630 = vld [vmem:[#allocation2 + $0x158] sm:$0xff]
    %v6631 = vld [vmem:[#allocation2 + $0x160] sm:$0xff]
    %v6632 = vld [vmem:[#allocation2 + $0x168] sm:$0xff]
    %v6633 = vld [vmem:[#allocation2 + $0x170] sm:$0xff]
    %v6634 = vld [vmem:[#allocation2 + $0x178] sm:$0xff]
    %v6635 = vld [vmem:[#allocation2 + $0x180] sm:$0xff]
    %v6636 = vld [vmem:[#allocation2 + $0x188] sm:$0xff]
    %v6637 = vld [vmem:[#allocation2 + $0x190] sm:$0xff]
    %v6638 = vld [vmem:[#allocation2 + $0x198] sm:$0xff]
    %v6639 = vld [vmem:[#allocation2 + $0x1a0] sm:$0xff]
    %v6640 = vld [vmem:[#allocation2 + $0x1a8] sm:$0xff]
    %v6641 = vld [vmem:[#allocation2 + $0x1b0] sm:$0xff]
    %v6642 = vld [vmem:[#allocation2 + $0x1b8] sm:$0xff]
    %v6643 = vld [vmem:[#allocation2 + $0x1c0] sm:$0xff]
    %v6644 = vld [vmem:[#allocation2 + $0x1c8] sm:$0xff]
    %v6645 = vld [vmem:[#allocation2 + $0x1d0] sm:$0xff]
    %v6646 = vld [vmem:[#allocation2 + $0x1d8] sm:$0xff]
    %v6647 = vld [vmem:[#allocation2 + $0x1e0] sm:$0xff]
    %v6648 = vld [vmem:[#allocation2 + $0x1e8] sm:$0xff]
    %v6649 = vld [vmem:[#allocation2 + $0x1f0] sm:$0xff]
    %v6650 = vld [vmem:[#allocation2 + $0x1f8] sm:$0xff]
    %v6651 = vld [vmem:[#allocation2 + $0x200] sm:$0xff]
    %v6652 = vld [vmem:[#allocation2 + $0x208] sm:$0xff]
    %v6653 = vld [vmem:[#allocation2 + $0x210] sm:$0xff]
    %v6654 = vld [vmem:[#allocation2 + $0x218] sm:$0xff]
    %v6655 = vld [vmem:[#allocation2 + $0x220] sm:$0xff]
    %v6656 = vld [vmem:[#allocation2 + $0x228] sm:$0xff]
    %v6657 = vld [vmem:[#allocation2 + $0x230] sm:$0xff]
    %v6658 = vld [vmem:[#allocation2 + $0x238] sm:$0xff]
    %v6659 = vld [vmem:[#allocation2 + $0x240] sm:$0xff]
    %v6660 = vld [vmem:[#allocation2 + $0x248] sm:$0xff]
    %v6661 = vld [vmem:[#allocation2 + $0x250] sm:$0xff]
    %v6662 = vld [vmem:[#allocation2 + $0x258] sm:$0xff]
    %v6663 = vld [vmem:[#allocation2 + $0x260] sm:$0xff]
    %v6664 = vld [vmem:[#allocation2 + $0x268] sm:$0xff]
    %v6665 = vld [vmem:[#allocation2 + $0x270] sm:$0xff]
    %v6666 = vld [vmem:[#allocation2 + $0x278] sm:$0xff]
    %v6667 = vld [vmem:[#allocation2 + $0x280] sm:$0xff]
    %v6668 = vld [vmem:[#allocation2 + $0x288] sm:$0xff]
    %v6669 = vld [vmem:[#allocation2 + $0x290] sm:$0xff]
    %v6670 = vld [vmem:[#allocation2 + $0x298] sm:$0xff]
    %v6671 = vld [vmem:[#allocation2 + $0x2a0] sm:$0xff]
    %v6672 = vld [vmem:[#allocation2 + $0x2a8] sm:$0xff]
    %v6673 = vld [vmem:[#allocation2 + $0x2b0] sm:$0xff]
    %v6674 = vld [vmem:[#allocation2 + $0x2b8] sm:$0xff]
    %v6675 = vld [vmem:[#allocation2 + $0x2c0] sm:$0xff]
    %v6676 = vld [vmem:[#allocation2 + $0x2c8] sm:$0xff]
    %v6677 = vld [vmem:[#allocation2 + $0x2d0] sm:$0xff]
    %v6678 = vld [vmem:[#allocation2 + $0x2d8] sm:$0xff]
    %v6679 = vld [vmem:[#allocation2 + $0x2e0] sm:$0xff]
    %v6680 = vld [vmem:[#allocation2 + $0x2e8] sm:$0xff]
    %v6681 = vld [vmem:[#allocation2 + $0x2f0] sm:$0xff]
    %v6682 = vld [vmem:[#allocation2 + $0x2f8] sm:$0xff]
    %v6683 = vld [vmem:[#allocation2 + $0x300] sm:$0xff]
    %v6684 = vld [vmem:[#allocation2 + $0x308] sm:$0xff]
    %v6685 = vld [vmem:[#allocation2 + $0x310] sm:$0xff]
    %v6686 = vld [vmem:[#allocation2 + $0x318] sm:$0xff]
    %v6687 = vld [vmem:[#allocation2 + $0x320] sm:$0xff]
    %v6688 = vld [vmem:[#allocation2 + $0x328] sm:$0xff]
    %v6689 = vld [vmem:[#allocation2 + $0x330] sm:$0xff]
    %v6690 = vld [vmem:[#allocation2 + $0x338] sm:$0xff]
    %v6691 = vld [vmem:[#allocation2 + $0x340] sm:$0xff]
    %v6692 = vld [vmem:[#allocation2 + $0x348] sm:$0xff]
    %v6693 = vld [vmem:[#allocation2 + $0x350] sm:$0xff]
    %v6694 = vld [vmem:[#allocation2 + $0x358] sm:$0xff]
    %v6695 = vld [vmem:[#allocation2 + $0x360] sm:$0xff]
    %v6696 = vld [vmem:[#allocation2 + $0x368] sm:$0xff]
    %v6697 = vld [vmem:[#allocation2 + $0x370] sm:$0xff]
    %v6698 = vld [vmem:[#allocation2 + $0x378] sm:$0xff]
    %v6699 = vld [vmem:[#allocation2 + $0x380] sm:$0xff]
    %v6700 = vld [vmem:[#allocation2 + $0x388] sm:$0xff]
    %v6701 = vld [vmem:[#allocation2 + $0x390] sm:$0xff]
    %v6702 = vld [vmem:[#allocation2 + $0x398] sm:$0xff]
    %v6703 = vld [vmem:[#allocation2 + $0x3a0] sm:$0xff]
    %v6704 = vld [vmem:[#allocation2 + $0x3a8] sm:$0xff]
    %v6705 = vld [vmem:[#allocation2 + $0x3b0] sm:$0xff]
    %v6706 = vld [vmem:[#allocation2 + $0x3b8] sm:$0xff]
    %v6707 = vld [vmem:[#allocation2 + $0x3c0] sm:$0xff]
    %v6708 = vld [vmem:[#allocation2 + $0x3c8] sm:$0xff]
    %v6709 = vld [vmem:[#allocation2 + $0x3d0] sm:$0xff]
    %v6710 = vld [vmem:[#allocation2 + $0x3d8] sm:$0xff]
    %v6711 = vld [vmem:[#allocation2 + $0x3e0] sm:$0xff]
    %v6712 = vld [vmem:[#allocation2 + $0x3e8] sm:$0xff]
    %v6713 = vld [vmem:[#allocation2 + $0x3f0] sm:$0xff]
    %v6714 = vld [vmem:[#allocation2 + $0x3f8] sm:$0xff]
    %v6715 = vld [vmem:[#allocation2 + $0x400] sm:$0xff]
    %v6716 = vld [vmem:[#allocation2 + $0x408] sm:$0xff]
    %v6717 = vld [vmem:[#allocation2 + $0x410] sm:$0xff]
    %v6718 = vld [vmem:[#allocation2 + $0x418] sm:$0xff]
    %v6719 = vld [vmem:[#allocation2 + $0x420] sm:$0xff]
    %v6720 = vld [vmem:[#allocation2 + $0x428] sm:$0xff]
    %v6721 = vld [vmem:[#allocation2 + $0x430] sm:$0xff]
    %v6722 = vld [vmem:[#allocation2 + $0x438] sm:$0xff]
    %v6723 = vld [vmem:[#allocation2 + $0x440] sm:$0xff]
    %v6724 = vld [vmem:[#allocation2 + $0x448] sm:$0xff]
    %v6725 = vld [vmem:[#allocation2 + $0x450] sm:$0xff]
    %v6726 = vld [vmem:[#allocation2 + $0x458] sm:$0xff]
    %v6727 = vld [vmem:[#allocation2 + $0x460] sm:$0xff]
    %v6728 = vld [vmem:[#allocation2 + $0x468] sm:$0xff]
    %v6729 = vld [vmem:[#allocation2 + $0x470] sm:$0xff]
    %v6730 = vld [vmem:[#allocation2 + $0x478] sm:$0xff]
    %v6731 = vld [vmem:[#allocation2 + $0x480] sm:$0xff]
    %v6732 = vld [vmem:[#allocation2 + $0x488] sm:$0xff]
    %v6733 = vld [vmem:[#allocation2 + $0x490] sm:$0xff]
    %v6734 = vld [vmem:[#allocation2 + $0x498] sm:$0xff]
    %v6735 = vld [vmem:[#allocation2 + $0x4a0] sm:$0xff]
    %v6736 = vld [vmem:[#allocation2 + $0x4a8] sm:$0xff]
    %v6737 = vld [vmem:[#allocation2 + $0x4b0] sm:$0xff]
    %v6738 = vld [vmem:[#allocation2 + $0x4b8] sm:$0xff]
    %v6739 = vld [vmem:[#allocation2 + $0x4c0] sm:$0xff]
    %v6740 = vld [vmem:[#allocation2 + $0x4c8] sm:$0xff]
    %v6741 = vld [vmem:[#allocation2 + $0x4d0] sm:$0xff]
    %v6742 = vld [vmem:[#allocation2 + $0x4d8] sm:$0xff]
    %v6743 = vld [vmem:[#allocation2 + $0x4e0] sm:$0xff]
    %v6744 = vld [vmem:[#allocation2 + $0x4e8] sm:$0xff]
    %v6745 = vld [vmem:[#allocation2 + $0x4f0] sm:$0xff]
    %v6746 = vld [vmem:[#allocation2 + $0x4f8] sm:$0xff]
    %v6747 = vld [vmem:[#allocation2 + $0x500] sm:$0xff]
    %v6748 = vld [vmem:[#allocation2 + $0x508] sm:$0xff]
    %v6749 = vld [vmem:[#allocation2 + $0x510] sm:$0xff]
    %v6750 = vld [vmem:[#allocation2 + $0x518] sm:$0xff]
    %v6751 = vld [vmem:[#allocation2 + $0x520] sm:$0xff]
    %v6752 = vld [vmem:[#allocation2 + $0x528] sm:$0xff]
    %v6753 = vld [vmem:[#allocation2 + $0x530] sm:$0xff]
    %v6754 = vld [vmem:[#allocation2 + $0x538] sm:$0xff]
    %v6755 = vld [vmem:[#allocation2 + $0x540] sm:$0xff]
    %v6756 = vld [vmem:[#allocation2 + $0x548] sm:$0xff]
    %v6757 = vld [vmem:[#allocation2 + $0x550] sm:$0xff]
    %v6758 = vld [vmem:[#allocation2 + $0x558] sm:$0xff]
    %v6759 = vld [vmem:[#allocation2 + $0x560] sm:$0xff]
    %v6760 = vld [vmem:[#allocation2 + $0x568] sm:$0xff]
    %v6761 = vld [vmem:[#allocation2 + $0x570] sm:$0xff]
    %v6762 = vld [vmem:[#allocation2 + $0x578] sm:$0xff]
    %v6763 = vld [vmem:[#allocation2 + $0x580] sm:$0xff]
    %v6764 = vld [vmem:[#allocation2 + $0x588] sm:$0xff]
    %v6765 = vld [vmem:[#allocation2 + $0x590] sm:$0xff]
    %v6766 = vld [vmem:[#allocation2 + $0x598] sm:$0xff]
    %v6767 = vld [vmem:[#allocation2 + $0x5a0] sm:$0xff]
    %v6768 = vld [vmem:[#allocation2 + $0x5a8] sm:$0xff]
    %v6769 = vld [vmem:[#allocation2 + $0x5b0] sm:$0xff]
    %v6770 = vld [vmem:[#allocation2 + $0x5b8] sm:$0xff]
    %v6771 = vld [vmem:[#allocation2 + $0x5c0] sm:$0xff]
    %v6772 = vld [vmem:[#allocation2 + $0x5c8] sm:$0xff]
    %v6773 = vld [vmem:[#allocation2 + $0x5d0] sm:$0xff]
    %v6774 = vld [vmem:[#allocation2 + $0x5d8] sm:$0xff]
    %v6775 = vld [vmem:[#allocation2 + $0x5e0] sm:$0xff]
    %v6776 = vld [vmem:[#allocation2 + $0x5e8] sm:$0xff]
    %v6777 = vld [vmem:[#allocation2 + $0x5f0] sm:$0xff]
    %v6778 = vld [vmem:[#allocation2 + $0x5f8] sm:$0xff]
    %v6779 = vld [vmem:[#allocation2 + $0x600] sm:$0xff]
    %v6780 = vld [vmem:[#allocation2 + $0x608] sm:$0xff]
    %v6781 = vld [vmem:[#allocation2 + $0x610] sm:$0xff]
    %v6782 = vld [vmem:[#allocation2 + $0x618] sm:$0xff]
    %v6783 = vld [vmem:[#allocation2 + $0x620] sm:$0xff]
    %v6784 = vld [vmem:[#allocation2 + $0x628] sm:$0xff]
    %v6785 = vld [vmem:[#allocation2 + $0x630] sm:$0xff]
    %v6786 = vld [vmem:[#allocation2 + $0x638] sm:$0xff]
    %v6787 = vld [vmem:[#allocation2 + $0x640] sm:$0xff]
    %v6788 = vld [vmem:[#allocation2 + $0x648] sm:$0xff]
    %v6789 = vld [vmem:[#allocation2 + $0x650] sm:$0xff]
    %v6790 = vld [vmem:[#allocation2 + $0x658] sm:$0xff]
    %v6791 = vld [vmem:[#allocation2 + $0x660] sm:$0xff]
    %v6792 = vld [vmem:[#allocation2 + $0x668] sm:$0xff]
    %v6793 = vld [vmem:[#allocation2 + $0x670] sm:$0xff]
    %v6794 = vld [vmem:[#allocation2 + $0x678] sm:$0xff]
    %v6795 = vld [vmem:[#allocation2 + $0x680] sm:$0xff]
    %v6796 = vld [vmem:[#allocation2 + $0x688] sm:$0xff]
    %v6797 = vld [vmem:[#allocation2 + $0x690] sm:$0xff]
    %v6798 = vld [vmem:[#allocation2 + $0x698] sm:$0xff]
    %v6799 = vld [vmem:[#allocation2 + $0x6a0] sm:$0xff]
    %v6800 = vld [vmem:[#allocation2 + $0x6a8] sm:$0xff]
    %v6801 = vld [vmem:[#allocation2 + $0x6b0] sm:$0xff]
    %v6802 = vld [vmem:[#allocation2 + $0x6b8] sm:$0xff]
    %v6803 = vld [vmem:[#allocation2 + $0x6c0] sm:$0xff]
    %v6804 = vld [vmem:[#allocation2 + $0x6c8] sm:$0xff]
    %v6805 = vld [vmem:[#allocation2 + $0x6d0] sm:$0xff]
    %v6806 = vld [vmem:[#allocation2 + $0x6d8] sm:$0xff]
    %v6807 = vld [vmem:[#allocation2 + $0x6e0] sm:$0xff]
    %v6808 = vld [vmem:[#allocation2 + $0x6e8] sm:$0xff]
    %v6809 = vld [vmem:[#allocation2 + $0x6f0] sm:$0xff]
    %v6810 = vld [vmem:[#allocation2 + $0x6f8] sm:$0xff]
    %v6811 = vld [vmem:[#allocation2 + $0x700] sm:$0xff]
    %v6812 = vld [vmem:[#allocation2 + $0x708] sm:$0xff]
    %v6813 = vld [vmem:[#allocation2 + $0x710] sm:$0xff]
    %v6814 = vld [vmem:[#allocation2 + $0x718] sm:$0xff]
    %v6815 = vld [vmem:[#allocation2 + $0x720] sm:$0xff]
    %v6816 = vld [vmem:[#allocation2 + $0x728] sm:$0xff]
    %v6817 = vld [vmem:[#allocation2 + $0x730] sm:$0xff]
    %v6818 = vld [vmem:[#allocation2 + $0x738] sm:$0xff]
    %v6819 = vld [vmem:[#allocation2 + $0x740] sm:$0xff]
    %v6820 = vld [vmem:[#allocation2 + $0x748] sm:$0xff]
    %v6821 = vld [vmem:[#allocation2 + $0x750] sm:$0xff]
    %v6822 = vld [vmem:[#allocation2 + $0x758] sm:$0xff]
    %v6823 = vld [vmem:[#allocation2 + $0x760] sm:$0xff]
    %v6824 = vld [vmem:[#allocation2 + $0x768] sm:$0xff]
    %v6825 = vld [vmem:[#allocation2 + $0x770] sm:$0xff]
    %v6826 = vld [vmem:[#allocation2 + $0x778] sm:$0xff]
    %v6827 = vld [vmem:[#allocation2 + $0x780] sm:$0xff]
    %v6828 = vld [vmem:[#allocation2 + $0x788] sm:$0xff]
    %v6829 = vld [vmem:[#allocation2 + $0x790] sm:$0xff]
    %v6830 = vld [vmem:[#allocation2 + $0x798] sm:$0xff]
    %v6831 = vld [vmem:[#allocation2 + $0x7a0] sm:$0xff]
    %v6832 = vld [vmem:[#allocation2 + $0x7a8] sm:$0xff]
    %v6833 = vld [vmem:[#allocation2 + $0x7b0] sm:$0xff]
    %v6834 = vld [vmem:[#allocation2 + $0x7b8] sm:$0xff]
    %v6835 = vld [vmem:[#allocation2 + $0x7c0] sm:$0xff]
    %v6836 = vld [vmem:[#allocation2 + $0x7c8] sm:$0xff]
    %v6837 = vld [vmem:[#allocation2 + $0x7d0] sm:$0xff]
    %v6838 = vld [vmem:[#allocation2 + $0x7d8] sm:$0xff]
    %v6839 = vld [vmem:[#allocation2 + $0x7e0] sm:$0xff]
    %v6840 = vld [vmem:[#allocation2 + $0x7e8] sm:$0xff]
    %v6841 = vld [vmem:[#allocation2 + $0x7f0] sm:$0xff]
    %v6842 = vld [vmem:[#allocation2 + $0x7f8] sm:$0xff]
    %v7099 = vunpack.c.l.b16 %v6587
    %v7100 = vunpack.c.h.b16 %v6587
    %v7101 = vunpack.c.l.b16 %v6588
    %v7102 = vunpack.c.h.b16 %v6588
    %v7103 = vunpack.c.l.b16 %v6589
    %v7104 = vunpack.c.h.b16 %v6589
    %v7105 = vunpack.c.l.b16 %v6590
    %v7106 = vunpack.c.h.b16 %v6590
    %v7107 = vunpack.c.l.b16 %v6591
    %v7108 = vunpack.c.h.b16 %v6591
    %v7109 = vunpack.c.l.b16 %v6592
    %v7110 = vunpack.c.h.b16 %v6592
    %v7111 = vunpack.c.l.b16 %v6593
    %v7112 = vunpack.c.h.b16 %v6593
    %v7113 = vunpack.c.l.b16 %v6594
    %v7114 = vunpack.c.h.b16 %v6594
    %v7115 = vunpack.c.l.b16 %v6595
    %v7116 = vunpack.c.h.b16 %v6595
    %v7117 = vunpack.c.l.b16 %v6596
    %v7118 = vunpack.c.h.b16 %v6596
    %v7119 = vunpack.c.l.b16 %v6597
    %v7120 = vunpack.c.h.b16 %v6597
    %v7121 = vunpack.c.l.b16 %v6598
    %v7122 = vunpack.c.h.b16 %v6598
    %v7123 = vunpack.c.l.b16 %v6599
    %v7124 = vunpack.c.h.b16 %v6599
    %v7125 = vunpack.c.l.b16 %v6600
    %v7126 = vunpack.c.h.b16 %v6600
    %v7127 = vunpack.c.l.b16 %v6601
    %v7128 = vunpack.c.h.b16 %v6601
    %v7129 = vunpack.c.l.b16 %v6602
    %v7130 = vunpack.c.h.b16 %v6602
    %v7131 = vunpack.c.l.b16 %v6603
    %v7132 = vunpack.c.h.b16 %v6603
    %v7133 = vunpack.c.l.b16 %v6604
    %v7134 = vunpack.c.h.b16 %v6604
    %v7135 = vunpack.c.l.b16 %v6605
    %v7136 = vunpack.c.h.b16 %v6605
    %v7137 = vunpack.c.l.b16 %v6606
    %v7138 = vunpack.c.h.b16 %v6606
    %v7139 = vunpack.c.l.b16 %v6607
    %v7140 = vunpack.c.h.b16 %v6607
    %v7141 = vunpack.c.l.b16 %v6608
    %v7142 = vunpack.c.h.b16 %v6608
    %v7143 = vunpack.c.l.b16 %v6609
    %v7144 = vunpack.c.h.b16 %v6609
    %v7145 = vunpack.c.l.b16 %v6610
    %v7146 = vunpack.c.h.b16 %v6610
    %v7147 = vunpack.c.l.b16 %v6611
    %v7148 = vunpack.c.h.b16 %v6611
    %v7149 = vunpack.c.l.b16 %v6612
    %v7150 = vunpack.c.h.b16 %v6612
    %v7151 = vunpack.c.l.b16 %v6613
    %v7152 = vunpack.c.h.b16 %v6613
    %v7153 = vunpack.c.l.b16 %v6614
    %v7154 = vunpack.c.h.b16 %v6614
    %v7155 = vunpack.c.l.b16 %v6615
    %v7156 = vunpack.c.h.b16 %v6615
    %v7157 = vunpack.c.l.b16 %v6616
    %v7158 = vunpack.c.h.b16 %v6616
    %v7159 = vunpack.c.l.b16 %v6617
    %v7160 = vunpack.c.h.b16 %v6617
    %v7161 = vunpack.c.l.b16 %v6618
    %v7162 = vunpack.c.h.b16 %v6618
    %v7163 = vunpack.c.l.b16 %v6619
    %v7164 = vunpack.c.h.b16 %v6619
    %v7165 = vunpack.c.l.b16 %v6620
    %v7166 = vunpack.c.h.b16 %v6620
    %v7167 = vunpack.c.l.b16 %v6621
    %v7168 = vunpack.c.h.b16 %v6621
    %v7169 = vunpack.c.l.b16 %v6622
    %v7170 = vunpack.c.h.b16 %v6622
    %v7171 = vunpack.c.l.b16 %v6623
    %v7172 = vunpack.c.h.b16 %v6623
    %v7173 = vunpack.c.l.b16 %v6624
    %v7174 = vunpack.c.h.b16 %v6624
    %v7175 = vunpack.c.l.b16 %v6625
    %v7176 = vunpack.c.h.b16 %v6625
    %v7177 = vunpack.c.l.b16 %v6626
    %v7178 = vunpack.c.h.b16 %v6626
    %v7179 = vunpack.c.l.b16 %v6627
    %v7180 = vunpack.c.h.b16 %v6627
    %v7181 = vunpack.c.l.b16 %v6628
    %v7182 = vunpack.c.h.b16 %v6628
    %v7183 = vunpack.c.l.b16 %v6629
    %v7184 = vunpack.c.h.b16 %v6629
    %v7185 = vunpack.c.l.b16 %v6630
    %v7186 = vunpack.c.h.b16 %v6630
    %v7187 = vunpack.c.l.b16 %v6631
    %v7188 = vunpack.c.h.b16 %v6631
    %v7189 = vunpack.c.l.b16 %v6632
    %v7190 = vunpack.c.h.b16 %v6632
    %v7191 = vunpack.c.l.b16 %v6633
    %v7192 = vunpack.c.h.b16 %v6633
    %v7193 = vunpack.c.l.b16 %v6634
    %v7194 = vunpack.c.h.b16 %v6634
    %v7195 = vunpack.c.l.b16 %v6635
    %v7196 = vunpack.c.h.b16 %v6635
    %v7197 = vunpack.c.l.b16 %v6636
    %v7198 = vunpack.c.h.b16 %v6636
    %v7199 = vunpack.c.l.b16 %v6637
    %v7200 = vunpack.c.h.b16 %v6637
    %v7201 = vunpack.c.l.b16 %v6638
    %v7202 = vunpack.c.h.b16 %v6638
    %v7203 = vunpack.c.l.b16 %v6639
    %v7204 = vunpack.c.h.b16 %v6639
    %v7205 = vunpack.c.l.b16 %v6640
    %v7206 = vunpack.c.h.b16 %v6640
    %v7207 = vunpack.c.l.b16 %v6641
    %v7208 = vunpack.c.h.b16 %v6641
    %v7209 = vunpack.c.l.b16 %v6642
    %v7210 = vunpack.c.h.b16 %v6642
    %v7211 = vunpack.c.l.b16 %v6643
    %v7212 = vunpack.c.h.b16 %v6643
    %v7213 = vunpack.c.l.b16 %v6644
    %v7214 = vunpack.c.h.b16 %v6644
    %v7215 = vunpack.c.l.b16 %v6645
    %v7216 = vunpack.c.h.b16 %v6645
    %v7217 = vunpack.c.l.b16 %v6646
    %v7218 = vunpack.c.h.b16 %v6646
    %v7219 = vunpack.c.l.b16 %v6647
    %v7220 = vunpack.c.h.b16 %v6647
    %v7221 = vunpack.c.l.b16 %v6648
    %v7222 = vunpack.c.h.b16 %v6648
    %v7223 = vunpack.c.l.b16 %v6649
    %v7224 = vunpack.c.h.b16 %v6649
    %v7225 = vunpack.c.l.b16 %v6650
    %v7226 = vunpack.c.h.b16 %v6650
    %v7227 = vunpack.c.l.b16 %v6651
    %v7228 = vunpack.c.h.b16 %v6651
    %v7229 = vunpack.c.l.b16 %v6652
    %v7230 = vunpack.c.h.b16 %v6652
    %v7231 = vunpack.c.l.b16 %v6653
    %v7232 = vunpack.c.h.b16 %v6653
    %v7233 = vunpack.c.l.b16 %v6654
    %v7234 = vunpack.c.h.b16 %v6654
    %v7235 = vunpack.c.l.b16 %v6655
    %v7236 = vunpack.c.h.b16 %v6655
    %v7237 = vunpack.c.l.b16 %v6656
    %v7238 = vunpack.c.h.b16 %v6656
    %v7239 = vunpack.c.l.b16 %v6657
    %v7240 = vunpack.c.h.b16 %v6657
    %v7241 = vunpack.c.l.b16 %v6658
    %v7242 = vunpack.c.h.b16 %v6658
    %v7243 = vunpack.c.l.b16 %v6659
    %v7244 = vunpack.c.h.b16 %v6659
    %v7245 = vunpack.c.l.b16 %v6660
    %v7246 = vunpack.c.h.b16 %v6660
    %v7247 = vunpack.c.l.b16 %v6661
    %v7248 = vunpack.c.h.b16 %v6661
    %v7249 = vunpack.c.l.b16 %v6662
    %v7250 = vunpack.c.h.b16 %v6662
    %v7251 = vunpack.c.l.b16 %v6663
    %v7252 = vunpack.c.h.b16 %v6663
    %v7253 = vunpack.c.l.b16 %v6664
    %v7254 = vunpack.c.h.b16 %v6664
    %v7255 = vunpack.c.l.b16 %v6665
    %v7256 = vunpack.c.h.b16 %v6665
    %v7257 = vunpack.c.l.b16 %v6666
    %v7258 = vunpack.c.h.b16 %v6666
    %v7259 = vunpack.c.l.b16 %v6667
    %v7260 = vunpack.c.h.b16 %v6667
    %v7261 = vunpack.c.l.b16 %v6668
    %v7262 = vunpack.c.h.b16 %v6668
    %v7263 = vunpack.c.l.b16 %v6669
    %v7264 = vunpack.c.h.b16 %v6669
    %v7265 = vunpack.c.l.b16 %v6670
    %v7266 = vunpack.c.h.b16 %v6670
    %v7267 = vunpack.c.l.b16 %v6671
    %v7268 = vunpack.c.h.b16 %v6671
    %v7269 = vunpack.c.l.b16 %v6672
    %v7270 = vunpack.c.h.b16 %v6672
    %v7271 = vunpack.c.l.b16 %v6673
    %v7272 = vunpack.c.h.b16 %v6673
    %v7273 = vunpack.c.l.b16 %v6674
    %v7274 = vunpack.c.h.b16 %v6674
    %v7275 = vunpack.c.l.b16 %v6675
    %v7276 = vunpack.c.h.b16 %v6675
    %v7277 = vunpack.c.l.b16 %v6676
    %v7278 = vunpack.c.h.b16 %v6676
    %v7279 = vunpack.c.l.b16 %v6677
    %v7280 = vunpack.c.h.b16 %v6677
    %v7281 = vunpack.c.l.b16 %v6678
    %v7282 = vunpack.c.h.b16 %v6678
    %v7283 = vunpack.c.l.b16 %v6679
    %v7284 = vunpack.c.h.b16 %v6679
    %v7285 = vunpack.c.l.b16 %v6680
    %v7286 = vunpack.c.h.b16 %v6680
    %v7287 = vunpack.c.l.b16 %v6681
    %v7288 = vunpack.c.h.b16 %v6681
    %v7289 = vunpack.c.l.b16 %v6682
    %v7290 = vunpack.c.h.b16 %v6682
    %v7291 = vunpack.c.l.b16 %v6683
    %v7292 = vunpack.c.h.b16 %v6683
    %v7293 = vunpack.c.l.b16 %v6684
    %v7294 = vunpack.c.h.b16 %v6684
    %v7295 = vunpack.c.l.b16 %v6685
    %v7296 = vunpack.c.h.b16 %v6685
    %v7297 = vunpack.c.l.b16 %v6686
    %v7298 = vunpack.c.h.b16 %v6686
    %v7299 = vunpack.c.l.b16 %v6687
    %v7300 = vunpack.c.h.b16 %v6687
    %v7301 = vunpack.c.l.b16 %v6688
    %v7302 = vunpack.c.h.b16 %v6688
    %v7303 = vunpack.c.l.b16 %v6689
    %v7304 = vunpack.c.h.b16 %v6689
    %v7305 = vunpack.c.l.b16 %v6690
    %v7306 = vunpack.c.h.b16 %v6690
    %v7307 = vunpack.c.l.b16 %v6691
    %v7308 = vunpack.c.h.b16 %v6691
    %v7309 = vunpack.c.l.b16 %v6692
    %v7310 = vunpack.c.h.b16 %v6692
    %v7311 = vunpack.c.l.b16 %v6693
    %v7312 = vunpack.c.h.b16 %v6693
    %v7313 = vunpack.c.l.b16 %v6694
    %v7314 = vunpack.c.h.b16 %v6694
    %v7315 = vunpack.c.l.b16 %v6695
    %v7316 = vunpack.c.h.b16 %v6695
    %v7317 = vunpack.c.l.b16 %v6696
    %v7318 = vunpack.c.h.b16 %v6696
    %v7319 = vunpack.c.l.b16 %v6697
    %v7320 = vunpack.c.h.b16 %v6697
    %v7321 = vunpack.c.l.b16 %v6698
    %v7322 = vunpack.c.h.b16 %v6698
    %v7323 = vunpack.c.l.b16 %v6699
    %v7324 = vunpack.c.h.b16 %v6699
    %v7325 = vunpack.c.l.b16 %v6700
    %v7326 = vunpack.c.h.b16 %v6700
    %v7327 = vunpack.c.l.b16 %v6701
    %v7328 = vunpack.c.h.b16 %v6701
    %v7329 = vunpack.c.l.b16 %v6702
    %v7330 = vunpack.c.h.b16 %v6702
    %v7331 = vunpack.c.l.b16 %v6703
    %v7332 = vunpack.c.h.b16 %v6703
    %v7333 = vunpack.c.l.b16 %v6704
    %v7334 = vunpack.c.h.b16 %v6704
    %v7335 = vunpack.c.l.b16 %v6705
    %v7336 = vunpack.c.h.b16 %v6705
    %v7337 = vunpack.c.l.b16 %v6706
    %v7338 = vunpack.c.h.b16 %v6706
    %v7339 = vunpack.c.l.b16 %v6707
    %v7340 = vunpack.c.h.b16 %v6707
    %v7341 = vunpack.c.l.b16 %v6708
    %v7342 = vunpack.c.h.b16 %v6708
    %v7343 = vunpack.c.l.b16 %v6709
    %v7344 = vunpack.c.h.b16 %v6709
    %v7345 = vunpack.c.l.b16 %v6710
    %v7346 = vunpack.c.h.b16 %v6710
    %v7347 = vunpack.c.l.b16 %v6711
    %v7348 = vunpack.c.h.b16 %v6711
    %v7349 = vunpack.c.l.b16 %v6712
    %v7350 = vunpack.c.h.b16 %v6712
    %v7351 = vunpack.c.l.b16 %v6713
    %v7352 = vunpack.c.h.b16 %v6713
    %v7353 = vunpack.c.l.b16 %v6714
    %v7354 = vunpack.c.h.b16 %v6714
    %v7355 = vunpack.c.l.b16 %v6715
    %v7356 = vunpack.c.h.b16 %v6715
    %v7357 = vunpack.c.l.b16 %v6716
    %v7358 = vunpack.c.h.b16 %v6716
    %v7359 = vunpack.c.l.b16 %v6717
    %v7360 = vunpack.c.h.b16 %v6717
    %v7361 = vunpack.c.l.b16 %v6718
    %v7362 = vunpack.c.h.b16 %v6718
    %v7363 = vunpack.c.l.b16 %v6719
    %v7364 = vunpack.c.h.b16 %v6719
    %v7365 = vunpack.c.l.b16 %v6720
    %v7366 = vunpack.c.h.b16 %v6720
    %v7367 = vunpack.c.l.b16 %v6721
    %v7368 = vunpack.c.h.b16 %v6721
    %v7369 = vunpack.c.l.b16 %v6722
    %v7370 = vunpack.c.h.b16 %v6722
    %v7371 = vunpack.c.l.b16 %v6723
    %v7372 = vunpack.c.h.b16 %v6723
    %v7373 = vunpack.c.l.b16 %v6724
    %v7374 = vunpack.c.h.b16 %v6724
    %v7375 = vunpack.c.l.b16 %v6725
    %v7376 = vunpack.c.h.b16 %v6725
    %v7377 = vunpack.c.l.b16 %v6726
    %v7378 = vunpack.c.h.b16 %v6726
    %v7379 = vunpack.c.l.b16 %v6727
    %v7380 = vunpack.c.h.b16 %v6727
    %v7381 = vunpack.c.l.b16 %v6728
    %v7382 = vunpack.c.h.b16 %v6728
    %v7383 = vunpack.c.l.b16 %v6729
    %v7384 = vunpack.c.h.b16 %v6729
    %v7385 = vunpack.c.l.b16 %v6730
    %v7386 = vunpack.c.h.b16 %v6730
    %v7387 = vunpack.c.l.b16 %v6731
    %v7388 = vunpack.c.h.b16 %v6731
    %v7389 = vunpack.c.l.b16 %v6732
    %v7390 = vunpack.c.h.b16 %v6732
    %v7391 = vunpack.c.l.b16 %v6733
    %v7392 = vunpack.c.h.b16 %v6733
    %v7393 = vunpack.c.l.b16 %v6734
    %v7394 = vunpack.c.h.b16 %v6734
    %v7395 = vunpack.c.l.b16 %v6735
    %v7396 = vunpack.c.h.b16 %v6735
    %v7397 = vunpack.c.l.b16 %v6736
    %v7398 = vunpack.c.h.b16 %v6736
    %v7399 = vunpack.c.l.b16 %v6737
    %v7400 = vunpack.c.h.b16 %v6737
    %v7401 = vunpack.c.l.b16 %v6738
    %v7402 = vunpack.c.h.b16 %v6738
    %v7403 = vunpack.c.l.b16 %v6739
    %v7404 = vunpack.c.h.b16 %v6739
    %v7405 = vunpack.c.l.b16 %v6740
    %v7406 = vunpack.c.h.b16 %v6740
    %v7407 = vunpack.c.l.b16 %v6741
    %v7408 = vunpack.c.h.b16 %v6741
    %v7409 = vunpack.c.l.b16 %v6742
    %v7410 = vunpack.c.h.b16 %v6742
    %v7411 = vunpack.c.l.b16 %v6743
    %v7412 = vunpack.c.h.b16 %v6743
    %v7413 = vunpack.c.l.b16 %v6744
    %v7414 = vunpack.c.h.b16 %v6744
    %v7415 = vunpack.c.l.b16 %v6745
    %v7416 = vunpack.c.h.b16 %v6745
    %v7417 = vunpack.c.l.b16 %v6746
    %v7418 = vunpack.c.h.b16 %v6746
    %v7419 = vunpack.c.l.b16 %v6747
    %v7420 = vunpack.c.h.b16 %v6747
    %v7421 = vunpack.c.l.b16 %v6748
    %v7422 = vunpack.c.h.b16 %v6748
    %v7423 = vunpack.c.l.b16 %v6749
    %v7424 = vunpack.c.h.b16 %v6749
    %v7425 = vunpack.c.l.b16 %v6750
    %v7426 = vunpack.c.h.b16 %v6750
    %v7427 = vunpack.c.l.b16 %v6751
    %v7428 = vunpack.c.h.b16 %v6751
    %v7429 = vunpack.c.l.b16 %v6752
    %v7430 = vunpack.c.h.b16 %v6752
    %v7431 = vunpack.c.l.b16 %v6753
    %v7432 = vunpack.c.h.b16 %v6753
    %v7433 = vunpack.c.l.b16 %v6754
    %v7434 = vunpack.c.h.b16 %v6754
    %v7435 = vunpack.c.l.b16 %v6755
    %v7436 = vunpack.c.h.b16 %v6755
    %v7437 = vunpack.c.l.b16 %v6756
    %v7438 = vunpack.c.h.b16 %v6756
    %v7439 = vunpack.c.l.b16 %v6757
    %v7440 = vunpack.c.h.b16 %v6757
    %v7441 = vunpack.c.l.b16 %v6758
    %v7442 = vunpack.c.h.b16 %v6758
    %v7443 = vunpack.c.l.b16 %v6759
    %v7444 = vunpack.c.h.b16 %v6759
    %v7445 = vunpack.c.l.b16 %v6760
    %v7446 = vunpack.c.h.b16 %v6760
    %v7447 = vunpack.c.l.b16 %v6761
    %v7448 = vunpack.c.h.b16 %v6761
    %v7449 = vunpack.c.l.b16 %v6762
    %v7450 = vunpack.c.h.b16 %v6762
    %v7451 = vunpack.c.l.b16 %v6763
    %v7452 = vunpack.c.h.b16 %v6763
    %v7453 = vunpack.c.l.b16 %v6764
    %v7454 = vunpack.c.h.b16 %v6764
    %v7455 = vunpack.c.l.b16 %v6765
    %v7456 = vunpack.c.h.b16 %v6765
    %v7457 = vunpack.c.l.b16 %v6766
    %v7458 = vunpack.c.h.b16 %v6766
    %v7459 = vunpack.c.l.b16 %v6767
    %v7460 = vunpack.c.h.b16 %v6767
    %v7461 = vunpack.c.l.b16 %v6768
    %v7462 = vunpack.c.h.b16 %v6768
    %v7463 = vunpack.c.l.b16 %v6769
    %v7464 = vunpack.c.h.b16 %v6769
    %v7465 = vunpack.c.l.b16 %v6770
    %v7466 = vunpack.c.h.b16 %v6770
    %v7467 = vunpack.c.l.b16 %v6771
    %v7468 = vunpack.c.h.b16 %v6771
    %v7469 = vunpack.c.l.b16 %v6772
    %v7470 = vunpack.c.h.b16 %v6772
    %v7471 = vunpack.c.l.b16 %v6773
    %v7472 = vunpack.c.h.b16 %v6773
    %v7473 = vunpack.c.l.b16 %v6774
    %v7474 = vunpack.c.h.b16 %v6774
    %v7475 = vunpack.c.l.b16 %v6775
    %v7476 = vunpack.c.h.b16 %v6775
    %v7477 = vunpack.c.l.b16 %v6776
    %v7478 = vunpack.c.h.b16 %v6776
    %v7479 = vunpack.c.l.b16 %v6777
    %v7480 = vunpack.c.h.b16 %v6777
    %v7481 = vunpack.c.l.b16 %v6778
    %v7482 = vunpack.c.h.b16 %v6778
    %v7483 = vunpack.c.l.b16 %v6779
    %v7484 = vunpack.c.h.b16 %v6779
    %v7485 = vunpack.c.l.b16 %v6780
    %v7486 = vunpack.c.h.b16 %v6780
    %v7487 = vunpack.c.l.b16 %v6781
    %v7488 = vunpack.c.h.b16 %v6781
    %v7489 = vunpack.c.l.b16 %v6782
    %v7490 = vunpack.c.h.b16 %v6782
    %v7491 = vunpack.c.l.b16 %v6783
    %v7492 = vunpack.c.h.b16 %v6783
    %v7493 = vunpack.c.l.b16 %v6784
    %v7494 = vunpack.c.h.b16 %v6784
    %v7495 = vunpack.c.l.b16 %v6785
    %v7496 = vunpack.c.h.b16 %v6785
    %v7497 = vunpack.c.l.b16 %v6786
    %v7498 = vunpack.c.h.b16 %v6786
    %v7499 = vunpack.c.l.b16 %v6787
    %v7500 = vunpack.c.h.b16 %v6787
    %v7501 = vunpack.c.l.b16 %v6788
    %v7502 = vunpack.c.h.b16 %v6788
    %v7503 = vunpack.c.l.b16 %v6789
    %v7504 = vunpack.c.h.b16 %v6789
    %v7505 = vunpack.c.l.b16 %v6790
    %v7506 = vunpack.c.h.b16 %v6790
    %v7507 = vunpack.c.l.b16 %v6791
    %v7508 = vunpack.c.h.b16 %v6791
    %v7509 = vunpack.c.l.b16 %v6792
    %v7510 = vunpack.c.h.b16 %v6792
    %v7511 = vunpack.c.l.b16 %v6793
    %v7512 = vunpack.c.h.b16 %v6793
    %v7513 = vunpack.c.l.b16 %v6794
    %v7514 = vunpack.c.h.b16 %v6794
    %v7515 = vunpack.c.l.b16 %v6795
    %v7516 = vunpack.c.h.b16 %v6795
    %v7517 = vunpack.c.l.b16 %v6796
    %v7518 = vunpack.c.h.b16 %v6796
    %v7519 = vunpack.c.l.b16 %v6797
    %v7520 = vunpack.c.h.b16 %v6797
    %v7521 = vunpack.c.l.b16 %v6798
    %v7522 = vunpack.c.h.b16 %v6798
    %v7523 = vunpack.c.l.b16 %v6799
    %v7524 = vunpack.c.h.b16 %v6799
    %v7525 = vunpack.c.l.b16 %v6800
    %v7526 = vunpack.c.h.b16 %v6800
    %v7527 = vunpack.c.l.b16 %v6801
    %v7528 = vunpack.c.h.b16 %v6801
    %v7529 = vunpack.c.l.b16 %v6802
    %v7530 = vunpack.c.h.b16 %v6802
    %v7531 = vunpack.c.l.b16 %v6803
    %v7532 = vunpack.c.h.b16 %v6803
    %v7533 = vunpack.c.l.b16 %v6804
    %v7534 = vunpack.c.h.b16 %v6804
    %v7535 = vunpack.c.l.b16 %v6805
    %v7536 = vunpack.c.h.b16 %v6805
    %v7537 = vunpack.c.l.b16 %v6806
    %v7538 = vunpack.c.h.b16 %v6806
    %v7539 = vunpack.c.l.b16 %v6807
    %v7540 = vunpack.c.h.b16 %v6807
    %v7541 = vunpack.c.l.b16 %v6808
    %v7542 = vunpack.c.h.b16 %v6808
    %v7543 = vunpack.c.l.b16 %v6809
    %v7544 = vunpack.c.h.b16 %v6809
    %v7545 = vunpack.c.l.b16 %v6810
    %v7546 = vunpack.c.h.b16 %v6810
    %v7547 = vunpack.c.l.b16 %v6811
    %v7548 = vunpack.c.h.b16 %v6811
    %v7549 = vunpack.c.l.b16 %v6812
    %v7550 = vunpack.c.h.b16 %v6812
    %v7551 = vunpack.c.l.b16 %v6813
    %v7552 = vunpack.c.h.b16 %v6813
    %v7553 = vunpack.c.l.b16 %v6814
    %v7554 = vunpack.c.h.b16 %v6814
    %v7555 = vunpack.c.l.b16 %v6815
    %v7556 = vunpack.c.h.b16 %v6815
    %v7557 = vunpack.c.l.b16 %v6816
    %v7558 = vunpack.c.h.b16 %v6816
    %v7559 = vunpack.c.l.b16 %v6817
    %v7560 = vunpack.c.h.b16 %v6817
    %v7561 = vunpack.c.l.b16 %v6818
    %v7562 = vunpack.c.h.b16 %v6818
    %v7563 = vunpack.c.l.b16 %v6819
    %v7564 = vunpack.c.h.b16 %v6819
    %v7565 = vunpack.c.l.b16 %v6820
    %v7566 = vunpack.c.h.b16 %v6820
    %v7567 = vunpack.c.l.b16 %v6821
    %v7568 = vunpack.c.h.b16 %v6821
    %v7569 = vunpack.c.l.b16 %v6822
    %v7570 = vunpack.c.h.b16 %v6822
    %v7571 = vunpack.c.l.b16 %v6823
    %v7572 = vunpack.c.h.b16 %v6823
    %v7573 = vunpack.c.l.b16 %v6824
    %v7574 = vunpack.c.h.b16 %v6824
    %v7575 = vunpack.c.l.b16 %v6825
    %v7576 = vunpack.c.h.b16 %v6825
    %v7577 = vunpack.c.l.b16 %v6826
    %v7578 = vunpack.c.h.b16 %v6826
    %v7579 = vunpack.c.l.b16 %v6827
    %v7580 = vunpack.c.h.b16 %v6827
    %v7581 = vunpack.c.l.b16 %v6828
    %v7582 = vunpack.c.h.b16 %v6828
    %v7583 = vunpack.c.l.b16 %v6829
    %v7584 = vunpack.c.h.b16 %v6829
    %v7585 = vunpack.c.l.b16 %v6830
    %v7586 = vunpack.c.h.b16 %v6830
    %v7587 = vunpack.c.l.b16 %v6831
    %v7588 = vunpack.c.h.b16 %v6831
    %v7589 = vunpack.c.l.b16 %v6832
    %v7590 = vunpack.c.h.b16 %v6832
    %v7591 = vunpack.c.l.b16 %v6833
    %v7592 = vunpack.c.h.b16 %v6833
    %v7593 = vunpack.c.l.b16 %v6834
    %v7594 = vunpack.c.h.b16 %v6834
    %v7595 = vunpack.c.l.b16 %v6835
    %v7596 = vunpack.c.h.b16 %v6835
    %v7597 = vunpack.c.l.b16 %v6836
    %v7598 = vunpack.c.h.b16 %v6836
    %v7599 = vunpack.c.l.b16 %v6837
    %v7600 = vunpack.c.h.b16 %v6837
    %v7601 = vunpack.c.l.b16 %v6838
    %v7602 = vunpack.c.h.b16 %v6838
    %v7603 = vunpack.c.l.b16 %v6839
    %v7604 = vunpack.c.h.b16 %v6839
    %v7605 = vunpack.c.l.b16 %v6840
    %v7606 = vunpack.c.h.b16 %v6840
    %v7607 = vunpack.c.l.b16 %v6841
    %v7608 = vunpack.c.h.b16 %v6841
    %v7609 = vunpack.c.l.b16 %v6842
    %v7610 = vunpack.c.h.b16 %v6842
    %v7611 = vpack.c.b16 %v7107, %v7099
    %v7612 = vpack.c.b16 %v7108, %v7100
    %v7613 = vpack.c.b16 %v7109, %v7101
    %v7614 = vpack.c.b16 %v7110, %v7102
    %v7615 = vpack.c.b16 %v7111, %v7103
    %v7616 = vpack.c.b16 %v7112, %v7104
    %v7617 = vpack.c.b16 %v7113, %v7105
    %v7618 = vpack.c.b16 %v7114, %v7106
    %v7619 = vpack.c.b16 %v7123, %v7115
    %v7620 = vpack.c.b16 %v7124, %v7116
    %v7621 = vpack.c.b16 %v7125, %v7117
    %v7622 = vpack.c.b16 %v7126, %v7118
    %v7623 = vpack.c.b16 %v7127, %v7119
    %v7624 = vpack.c.b16 %v7128, %v7120
    %v7625 = vpack.c.b16 %v7129, %v7121
    %v7626 = vpack.c.b16 %v7130, %v7122
    %v7627 = vpack.c.b16 %v7139, %v7131
    %v7628 = vpack.c.b16 %v7140, %v7132
    %v7629 = vpack.c.b16 %v7141, %v7133
    %v7630 = vpack.c.b16 %v7142, %v7134
    %v7631 = vpack.c.b16 %v7143, %v7135
    %v7632 = vpack.c.b16 %v7144, %v7136
    %v7633 = vpack.c.b16 %v7145, %v7137
    %v7634 = vpack.c.b16 %v7146, %v7138
    %v7635 = vpack.c.b16 %v7155, %v7147
    %v7636 = vpack.c.b16 %v7156, %v7148
    %v7637 = vpack.c.b16 %v7157, %v7149
    %v7638 = vpack.c.b16 %v7158, %v7150
    %v7639 = vpack.c.b16 %v7159, %v7151
    %v7640 = vpack.c.b16 %v7160, %v7152
    %v7641 = vpack.c.b16 %v7161, %v7153
    %v7642 = vpack.c.b16 %v7162, %v7154
    %v7643 = vpack.c.b16 %v7171, %v7163
    %v7644 = vpack.c.b16 %v7172, %v7164
    %v7645 = vpack.c.b16 %v7173, %v7165
    %v7646 = vpack.c.b16 %v7174, %v7166
    %v7647 = vpack.c.b16 %v7175, %v7167
    %v7648 = vpack.c.b16 %v7176, %v7168
    %v7649 = vpack.c.b16 %v7177, %v7169
    %v7650 = vpack.c.b16 %v7178, %v7170
    %v7651 = vpack.c.b16 %v7187, %v7179
    %v7652 = vpack.c.b16 %v7188, %v7180
    %v7653 = vpack.c.b16 %v7189, %v7181
    %v7654 = vpack.c.b16 %v7190, %v7182
    %v7655 = vpack.c.b16 %v7191, %v7183
    %v7656 = vpack.c.b16 %v7192, %v7184
    %v7657 = vpack.c.b16 %v7193, %v7185
    %v7658 = vpack.c.b16 %v7194, %v7186
    %v7659 = vpack.c.b16 %v7203, %v7195
    %v7660 = vpack.c.b16 %v7204, %v7196
    %v7661 = vpack.c.b16 %v7205, %v7197
    %v7662 = vpack.c.b16 %v7206, %v7198
    %v7663 = vpack.c.b16 %v7207, %v7199
    %v7664 = vpack.c.b16 %v7208, %v7200
    %v7665 = vpack.c.b16 %v7209, %v7201
    %v7666 = vpack.c.b16 %v7210, %v7202
    %v7667 = vpack.c.b16 %v7219, %v7211
    %v7668 = vpack.c.b16 %v7220, %v7212
    %v7669 = vpack.c.b16 %v7221, %v7213
    %v7670 = vpack.c.b16 %v7222, %v7214
    %v7671 = vpack.c.b16 %v7223, %v7215
    %v7672 = vpack.c.b16 %v7224, %v7216
    %v7673 = vpack.c.b16 %v7225, %v7217
    %v7674 = vpack.c.b16 %v7226, %v7218
    %v7675 = vpack.c.b16 %v7235, %v7227
    %v7676 = vpack.c.b16 %v7236, %v7228
    %v7677 = vpack.c.b16 %v7237, %v7229
    %v7678 = vpack.c.b16 %v7238, %v7230
    %v7679 = vpack.c.b16 %v7239, %v7231
    %v7680 = vpack.c.b16 %v7240, %v7232
    %v7681 = vpack.c.b16 %v7241, %v7233
    %v7682 = vpack.c.b16 %v7242, %v7234
    %v7683 = vpack.c.b16 %v7251, %v7243
    %v7684 = vpack.c.b16 %v7252, %v7244
    %v7685 = vpack.c.b16 %v7253, %v7245
    %v7686 = vpack.c.b16 %v7254, %v7246
    %v7687 = vpack.c.b16 %v7255, %v7247
    %v7688 = vpack.c.b16 %v7256, %v7248
    %v7689 = vpack.c.b16 %v7257, %v7249
    %v7690 = vpack.c.b16 %v7258, %v7250
    %v7691 = vpack.c.b16 %v7267, %v7259
    %v7692 = vpack.c.b16 %v7268, %v7260
    %v7693 = vpack.c.b16 %v7269, %v7261
    %v7694 = vpack.c.b16 %v7270, %v7262
    %v7695 = vpack.c.b16 %v7271, %v7263
    %v7696 = vpack.c.b16 %v7272, %v7264
    %v7697 = vpack.c.b16 %v7273, %v7265
    %v7698 = vpack.c.b16 %v7274, %v7266
    %v7699 = vpack.c.b16 %v7283, %v7275
    %v7700 = vpack.c.b16 %v7284, %v7276
    %v7701 = vpack.c.b16 %v7285, %v7277
    %v7702 = vpack.c.b16 %v7286, %v7278
    %v7703 = vpack.c.b16 %v7287, %v7279
    %v7704 = vpack.c.b16 %v7288, %v7280
    %v7705 = vpack.c.b16 %v7289, %v7281
    %v7706 = vpack.c.b16 %v7290, %v7282
    %v7707 = vpack.c.b16 %v7299, %v7291
    %v7708 = vpack.c.b16 %v7300, %v7292
    %v7709 = vpack.c.b16 %v7301, %v7293
    %v7710 = vpack.c.b16 %v7302, %v7294
    %v7711 = vpack.c.b16 %v7303, %v7295
    %v7712 = vpack.c.b16 %v7304, %v7296
    %v7713 = vpack.c.b16 %v7305, %v7297
    %v7714 = vpack.c.b16 %v7306, %v7298
    %v7715 = vpack.c.b16 %v7315, %v7307
    %v7716 = vpack.c.b16 %v7316, %v7308
    %v7717 = vpack.c.b16 %v7317, %v7309
    %v7718 = vpack.c.b16 %v7318, %v7310
    %v7719 = vpack.c.b16 %v7319, %v7311
    %v7720 = vpack.c.b16 %v7320, %v7312
    %v7721 = vpack.c.b16 %v7321, %v7313
    %v7722 = vpack.c.b16 %v7322, %v7314
    %v7723 = vpack.c.b16 %v7331, %v7323
    %v7724 = vpack.c.b16 %v7332, %v7324
    %v7725 = vpack.c.b16 %v7333, %v7325
    %v7726 = vpack.c.b16 %v7334, %v7326
    %v7727 = vpack.c.b16 %v7335, %v7327
    %v7728 = vpack.c.b16 %v7336, %v7328
    %v7729 = vpack.c.b16 %v7337, %v7329
    %v7730 = vpack.c.b16 %v7338, %v7330
    %v7731 = vpack.c.b16 %v7347, %v7339
    %v7732 = vpack.c.b16 %v7348, %v7340
    %v7733 = vpack.c.b16 %v7349, %v7341
    %v7734 = vpack.c.b16 %v7350, %v7342
    %v7735 = vpack.c.b16 %v7351, %v7343
    %v7736 = vpack.c.b16 %v7352, %v7344
    %v7737 = vpack.c.b16 %v7353, %v7345
    %v7738 = vpack.c.b16 %v7354, %v7346
    %v7739 = vpack.c.b16 %v7363, %v7355
    %v7740 = vpack.c.b16 %v7364, %v7356
    %v7741 = vpack.c.b16 %v7365, %v7357
    %v7742 = vpack.c.b16 %v7366, %v7358
    %v7743 = vpack.c.b16 %v7367, %v7359
    %v7744 = vpack.c.b16 %v7368, %v7360
    %v7745 = vpack.c.b16 %v7369, %v7361
    %v7746 = vpack.c.b16 %v7370, %v7362
    %v7747 = vpack.c.b16 %v7379, %v7371
    %v7748 = vpack.c.b16 %v7380, %v7372
    %v7749 = vpack.c.b16 %v7381, %v7373
    %v7750 = vpack.c.b16 %v7382, %v7374
    %v7751 = vpack.c.b16 %v7383, %v7375
    %v7752 = vpack.c.b16 %v7384, %v7376
    %v7753 = vpack.c.b16 %v7385, %v7377
    %v7754 = vpack.c.b16 %v7386, %v7378
    %v7755 = vpack.c.b16 %v7395, %v7387
    %v7756 = vpack.c.b16 %v7396, %v7388
    %v7757 = vpack.c.b16 %v7397, %v7389
    %v7758 = vpack.c.b16 %v7398, %v7390
    %v7759 = vpack.c.b16 %v7399, %v7391
    %v7760 = vpack.c.b16 %v7400, %v7392
    %v7761 = vpack.c.b16 %v7401, %v7393
    %v7762 = vpack.c.b16 %v7402, %v7394
    %v7763 = vpack.c.b16 %v7411, %v7403
    %v7764 = vpack.c.b16 %v7412, %v7404
    %v7765 = vpack.c.b16 %v7413, %v7405
    %v7766 = vpack.c.b16 %v7414, %v7406
    %v7767 = vpack.c.b16 %v7415, %v7407
    %v7768 = vpack.c.b16 %v7416, %v7408
    %v7769 = vpack.c.b16 %v7417, %v7409
    %v7770 = vpack.c.b16 %v7418, %v7410
    %v7771 = vpack.c.b16 %v7427, %v7419
    %v7772 = vpack.c.b16 %v7428, %v7420
    %v7773 = vpack.c.b16 %v7429, %v7421
    %v7774 = vpack.c.b16 %v7430, %v7422
    %v7775 = vpack.c.b16 %v7431, %v7423
    %v7776 = vpack.c.b16 %v7432, %v7424
    %v7777 = vpack.c.b16 %v7433, %v7425
    %v7778 = vpack.c.b16 %v7434, %v7426
    %v7779 = vpack.c.b16 %v7443, %v7435
    %v7780 = vpack.c.b16 %v7444, %v7436
    %v7781 = vpack.c.b16 %v7445, %v7437
    %v7782 = vpack.c.b16 %v7446, %v7438
    %v7783 = vpack.c.b16 %v7447, %v7439
    %v7784 = vpack.c.b16 %v7448, %v7440
    %v7785 = vpack.c.b16 %v7449, %v7441
    %v7786 = vpack.c.b16 %v7450, %v7442
    %v7787 = vpack.c.b16 %v7459, %v7451
    %v7788 = vpack.c.b16 %v7460, %v7452
    %v7789 = vpack.c.b16 %v7461, %v7453
    %v7790 = vpack.c.b16 %v7462, %v7454
    %v7791 = vpack.c.b16 %v7463, %v7455
    %v7792 = vpack.c.b16 %v7464, %v7456
    %v7793 = vpack.c.b16 %v7465, %v7457
    %v7794 = vpack.c.b16 %v7466, %v7458
    %v7795 = vpack.c.b16 %v7475, %v7467
    %v7796 = vpack.c.b16 %v7476, %v7468
    %v7797 = vpack.c.b16 %v7477, %v7469
    %v7798 = vpack.c.b16 %v7478, %v7470
    %v7799 = vpack.c.b16 %v7479, %v7471
    %v7800 = vpack.c.b16 %v7480, %v7472
    %v7801 = vpack.c.b16 %v7481, %v7473
    %v7802 = vpack.c.b16 %v7482, %v7474
    %v7803 = vpack.c.b16 %v7491, %v7483
    %v7804 = vpack.c.b16 %v7492, %v7484
    %v7805 = vpack.c.b16 %v7493, %v7485
    %v7806 = vpack.c.b16 %v7494, %v7486
    %v7807 = vpack.c.b16 %v7495, %v7487
    %v7808 = vpack.c.b16 %v7496, %v7488
    %v7809 = vpack.c.b16 %v7497, %v7489
    %v7810 = vpack.c.b16 %v7498, %v7490
    %v7811 = vpack.c.b16 %v7507, %v7499
    %v7812 = vpack.c.b16 %v7508, %v7500
    %v7813 = vpack.c.b16 %v7509, %v7501
    %v7814 = vpack.c.b16 %v7510, %v7502
    %v7815 = vpack.c.b16 %v7511, %v7503
    %v7816 = vpack.c.b16 %v7512, %v7504
    %v7817 = vpack.c.b16 %v7513, %v7505
    %v7818 = vpack.c.b16 %v7514, %v7506
    %v7819 = vpack.c.b16 %v7523, %v7515
    %v7820 = vpack.c.b16 %v7524, %v7516
    %v7821 = vpack.c.b16 %v7525, %v7517
    %v7822 = vpack.c.b16 %v7526, %v7518
    %v7823 = vpack.c.b16 %v7527, %v7519
    %v7824 = vpack.c.b16 %v7528, %v7520
    %v7825 = vpack.c.b16 %v7529, %v7521
    %v7826 = vpack.c.b16 %v7530, %v7522
    %v7827 = vpack.c.b16 %v7539, %v7531
    %v7828 = vpack.c.b16 %v7540, %v7532
    %v7829 = vpack.c.b16 %v7541, %v7533
    %v7830 = vpack.c.b16 %v7542, %v7534
    %v7831 = vpack.c.b16 %v7543, %v7535
    %v7832 = vpack.c.b16 %v7544, %v7536
    %v7833 = vpack.c.b16 %v7545, %v7537
    %v7834 = vpack.c.b16 %v7546, %v7538
    %v7835 = vpack.c.b16 %v7555, %v7547
    %v7836 = vpack.c.b16 %v7556, %v7548
    %v7837 = vpack.c.b16 %v7557, %v7549
    %v7838 = vpack.c.b16 %v7558, %v7550
    %v7839 = vpack.c.b16 %v7559, %v7551
    %v7840 = vpack.c.b16 %v7560, %v7552
    %v7841 = vpack.c.b16 %v7561, %v7553
    %v7842 = vpack.c.b16 %v7562, %v7554
    %v7843 = vpack.c.b16 %v7571, %v7563
    %v7844 = vpack.c.b16 %v7572, %v7564
    %v7845 = vpack.c.b16 %v7573, %v7565
    %v7846 = vpack.c.b16 %v7574, %v7566
    %v7847 = vpack.c.b16 %v7575, %v7567
    %v7848 = vpack.c.b16 %v7576, %v7568
    %v7849 = vpack.c.b16 %v7577, %v7569
    %v7850 = vpack.c.b16 %v7578, %v7570
    %v7851 = vpack.c.b16 %v7587, %v7579
    %v7852 = vpack.c.b16 %v7588, %v7580
    %v7853 = vpack.c.b16 %v7589, %v7581
    %v7854 = vpack.c.b16 %v7590, %v7582
    %v7855 = vpack.c.b16 %v7591, %v7583
    %v7856 = vpack.c.b16 %v7592, %v7584
    %v7857 = vpack.c.b16 %v7593, %v7585
    %v7858 = vpack.c.b16 %v7594, %v7586
    %v7859 = vpack.c.b16 %v7603, %v7595
    %v7860 = vpack.c.b16 %v7604, %v7596
    %v7861 = vpack.c.b16 %v7605, %v7597
    %v7862 = vpack.c.b16 %v7606, %v7598
    %v7863 = vpack.c.b16 %v7607, %v7599
    %v7864 = vpack.c.b16 %v7608, %v7600
    %v7865 = vpack.c.b16 %v7609, %v7601
    %v7866 = vpack.c.b16 %v7610, %v7602
    %8123 = vmatprep.subr.bf16.mxu0 %v7668
    %8124 = vmatpush1.bf16.msra.mxu0 %v7667
    %8125 = vmatprep.subr.bf16.mxu0 %v7660
    %8126 = vmatpush1.bf16.msra.mxu0 %v7659
    %8127 = vmatprep.subr.bf16.mxu0 %v7652
    %8128 = vmatpush1.bf16.msra.mxu0 %v7651
    %8129 = vmatprep.subr.bf16.mxu0 %v7644
    %8130 = vmatpush1.bf16.msra.mxu0 %v7643
    %8131 = vmatprep.subr.bf16.mxu0 %v7636
    %8132 = vmatpush1.bf16.msra.mxu0 %v7635
    %8133 = vmatprep.subr.bf16.mxu0 %v7628
    %8134 = vmatpush1.bf16.msra.mxu0 %v7627
    %8135 = vmatprep.subr.bf16.mxu0 %v7620
    %8136 = vmatpush1.bf16.msra.mxu0 %v7619
    %8137 = vmatprep.subr.bf16.mxu0 %v7612
    %8138 = vmatpush1.bf16.msra.mxu0 %v7611
    %8139 = vmatprep.subr.bf16.mxu0 %v7732
    %8140 = vmatpush2.bf16.msra.mxu0 %v7731
    %8141 = vmatprep.subr.bf16.mxu0 %v7724
    %8142 = vmatpush2.bf16.msra.mxu0 %v7723
    %8143 = vmatprep.subr.bf16.mxu0 %v7716
    %8144 = vmatpush2.bf16.msra.mxu0 %v7715
    %8145 = vmatprep.subr.bf16.mxu0 %v7708
    %8146 = vmatpush2.bf16.msra.mxu0 %v7707
    %8147 = vmatprep.subr.bf16.mxu0 %v7700
    %8148 = vmatpush2.bf16.msra.mxu0 %v7699
    %8149 = vmatprep.subr.bf16.mxu0 %v7692
    %8150 = vmatpush2.bf16.msra.mxu0 %v7691
    %8151 = vmatprep.subr.bf16.mxu0 %v7684
    %8152 = vmatpush2.bf16.msra.mxu0 %v7683
    %8153 = vmatprep.subr.bf16.mxu0 %v7676
    %8154 = vmatpush2.bf16.msra.mxu0 %v7675
    %8155 = vmatprep.mubr.bf16.mxu0 %v6584
    %8156 = vmatmul.mubr.bf16.gmra.mxu0 %v6583
    %v8157 = vpop.f32.mrf.mxu0
    %v8158 = vadd.f32 0.0, %v8157
    %v8159 = vpop.f32.mrf.mxu0
    %v8160 = vadd.f32 0.0, %v8159
    %v8161 = vpop.f32.mrf.mxu0
    %v8162 = vadd.f32 0.0, %v8161
    %v8163 = vpop.f32.mrf.mxu0
    %v8164 = vadd.f32 0.0, %v8163
    %8165 = vdwg.mxu0
    %8166 = vmatprep.subr.bf16.mxu0 %v7796
    %8167 = vmatpush1.bf16.msra.mxu0 %v7795
    %8168 = vmatprep.subr.bf16.mxu0 %v7788
    %8169 = vmatpush1.bf16.msra.mxu0 %v7787
    %8170 = vmatprep.subr.bf16.mxu0 %v7780
    %8171 = vmatpush1.bf16.msra.mxu0 %v7779
    %8172 = vmatprep.subr.bf16.mxu0 %v7772
    %8173 = vmatpush1.bf16.msra.mxu0 %v7771
    %8174 = vmatprep.subr.bf16.mxu0 %v7764
    %8175 = vmatpush1.bf16.msra.mxu0 %v7763
    %8176 = vmatprep.subr.bf16.mxu0 %v7756
    %8177 = vmatpush1.bf16.msra.mxu0 %v7755
    %8178 = vmatprep.subr.bf16.mxu0 %v7748
    %8179 = vmatpush1.bf16.msra.mxu0 %v7747
    %8180 = vmatprep.subr.bf16.mxu0 %v7740
    %8181 = vmatpush1.bf16.msra.mxu0 %v7739
    %8182 = vmatprep.subr.bf16.mxu0 %v7860
    %8183 = vmatpush2.bf16.msra.mxu0 %v7859
    %8184 = vmatprep.subr.bf16.mxu0 %v7852
    %8185 = vmatpush2.bf16.msra.mxu0 %v7851
    %8186 = vmatprep.subr.bf16.mxu0 %v7844
    %8187 = vmatpush2.bf16.msra.mxu0 %v7843
    %8188 = vmatprep.subr.bf16.mxu0 %v7836
    %8189 = vmatpush2.bf16.msra.mxu0 %v7835
    %8190 = vmatprep.subr.bf16.mxu0 %v7828
    %8191 = vmatpush2.bf16.msra.mxu0 %v7827
    %8192 = vmatprep.subr.bf16.mxu0 %v7820
    %8193 = vmatpush2.bf16.msra.mxu0 %v7819
    %8194 = vmatprep.subr.bf16.mxu0 %v7812
    %8195 = vmatpush2.bf16.msra.mxu0 %v7811
    %8196 = vmatprep.subr.bf16.mxu0 %v7804
    %8197 = vmatpush2.bf16.msra.mxu0 %v7803
    %8198 = vmatprep.mubr.bf16.mxu0 %v6586
    %8199 = vmatmul.mubr.bf16.gmra.mxu0 %v6585
    %v8200 = vpop.f32.mrf.mxu0
    %v8201 = vadd.f32 %v8158, %v8200
    %v8202 = vpop.f32.mrf.mxu0
    %v8203 = vadd.f32 %v8160, %v8202
    %v8204 = vpop.f32.mrf.mxu0
    %v8205 = vadd.f32 %v8162, %v8204
    %v8206 = vpop.f32.mrf.mxu0
    %v8207 = vadd.f32 %v8164, %v8206
    %8208 = vdwg.mxu0
    %8209 = vmatprep.subr.bf16.mxu0 %v7670
    %8210 = vmatpush1.bf16.msra.mxu0 %v7669
    %8211 = vmatprep.subr.bf16.mxu0 %v7662
    %8212 = vmatpush1.bf16.msra.mxu0 %v7661
    %8213 = vmatprep.subr.bf16.mxu0 %v7654
    %8214 = vmatpush1.bf16.msra.mxu0 %v7653
    %8215 = vmatprep.subr.bf16.mxu0 %v7646
    %8216 = vmatpush1.bf16.msra.mxu0 %v7645
    %8217 = vmatprep.subr.bf16.mxu0 %v7638
    %8218 = vmatpush1.bf16.msra.mxu0 %v7637
    %8219 = vmatprep.subr.bf16.mxu0 %v7630
    %8220 = vmatpush1.bf16.msra.mxu0 %v7629
    %8221 = vmatprep.subr.bf16.mxu0 %v7622
    %8222 = vmatpush1.bf16.msra.mxu0 %v7621
    %8223 = vmatprep.subr.bf16.mxu0 %v7614
    %8224 = vmatpush1.bf16.msra.mxu0 %v7613
    %8225 = vmatprep.subr.bf16.mxu0 %v7734
    %8226 = vmatpush2.bf16.msra.mxu0 %v7733
    %8227 = vmatprep.subr.bf16.mxu0 %v7726
    %8228 = vmatpush2.bf16.msra.mxu0 %v7725
    %8229 = vmatprep.subr.bf16.mxu0 %v7718
    %8230 = vmatpush2.bf16.msra.mxu0 %v7717
    %8231 = vmatprep.subr.bf16.mxu0 %v7710
    %8232 = vmatpush2.bf16.msra.mxu0 %v7709
    %8233 = vmatprep.subr.bf16.mxu0 %v7702
    %8234 = vmatpush2.bf16.msra.mxu0 %v7701
    %8235 = vmatprep.subr.bf16.mxu0 %v7694
    %8236 = vmatpush2.bf16.msra.mxu0 %v7693
    %8237 = vmatprep.subr.bf16.mxu0 %v7686
    %8238 = vmatpush2.bf16.msra.mxu0 %v7685
    %8239 = vmatprep.subr.bf16.mxu0 %v7678
    %8240 = vmatpush2.bf16.msra.mxu0 %v7677
    %8241 = vmatprep.mubr.bf16.mxu0 %v6584
    %8242 = vmatmul.mubr.bf16.gmra.mxu0 %v6583
    %v8243 = vpop.f32.mrf.mxu0
    %v8244 = vadd.f32 0.0, %v8243
    %v8245 = vpop.f32.mrf.mxu0
    %v8246 = vadd.f32 0.0, %v8245
    %v8247 = vpop.f32.mrf.mxu0
    %v8248 = vadd.f32 0.0, %v8247
    %v8249 = vpop.f32.mrf.mxu0
    %v8250 = vadd.f32 0.0, %v8249
    %8251 = vdwg.mxu0
    %8252 = vmatprep.subr.bf16.mxu0 %v7798
    %8253 = vmatpush1.bf16.msra.mxu0 %v7797
    %8254 = vmatprep.subr.bf16.mxu0 %v7790
    %8255 = vmatpush1.bf16.msra.mxu0 %v7789
    %8256 = vmatprep.subr.bf16.mxu0 %v7782
    %8257 = vmatpush1.bf16.msra.mxu0 %v7781
    %8258 = vmatprep.subr.bf16.mxu0 %v7774
    %8259 = vmatpush1.bf16.msra.mxu0 %v7773
    %8260 = vmatprep.subr.bf16.mxu0 %v7766
    %8261 = vmatpush1.bf16.msra.mxu0 %v7765
    %8262 = vmatprep.subr.bf16.mxu0 %v7758
    %8263 = vmatpush1.bf16.msra.mxu0 %v7757
    %8264 = vmatprep.subr.bf16.mxu0 %v7750
    %8265 = vmatpush1.bf16.msra.mxu0 %v7749
    %8266 = vmatprep.subr.bf16.mxu0 %v7742
    %8267 = vmatpush1.bf16.msra.mxu0 %v7741
    %8268 = vmatprep.subr.bf16.mxu0 %v7862
    %8269 = vmatpush2.bf16.msra.mxu0 %v7861
    %8270 = vmatprep.subr.bf16.mxu0 %v7854
    %8271 = vmatpush2.bf16.msra.mxu0 %v7853
    %8272 = vmatprep.subr.bf16.mxu0 %v7846
    %8273 = vmatpush2.bf16.msra.mxu0 %v7845
    %8274 = vmatprep.subr.bf16.mxu0 %v7838
    %8275 = vmatpush2.bf16.msra.mxu0 %v7837
    %8276 = vmatprep.subr.bf16.mxu0 %v7830
    %8277 = vmatpush2.bf16.msra.mxu0 %v7829
    %8278 = vmatprep.subr.bf16.mxu0 %v7822
    %8279 = vmatpush2.bf16.msra.mxu0 %v7821
    %8280 = vmatprep.subr.bf16.mxu0 %v7814
    %8281 = vmatpush2.bf16.msra.mxu0 %v7813
    %8282 = vmatprep.subr.bf16.mxu0 %v7806
    %8283 = vmatpush2.bf16.msra.mxu0 %v7805
    %8284 = vmatprep.mubr.bf16.mxu0 %v6586
    %8285 = vmatmul.mubr.bf16.gmra.mxu0 %v6585
    %v8286 = vpop.f32.mrf.mxu0
    %v8287 = vadd.f32 %v8244, %v8286
    %v8288 = vpop.f32.mrf.mxu0
    %v8289 = vadd.f32 %v8246, %v8288
    %v8290 = vpop.f32.mrf.mxu0
    %v8291 = vadd.f32 %v8248, %v8290
    %v8292 = vpop.f32.mrf.mxu0
    %v8293 = vadd.f32 %v8250, %v8292
    %8294 = vdwg.mxu0
    %8295 = vmatprep.subr.bf16.mxu0 %v7672
    %8296 = vmatpush1.bf16.msra.mxu0 %v7671
    %8297 = vmatprep.subr.bf16.mxu0 %v7664
    %8298 = vmatpush1.bf16.msra.mxu0 %v7663
    %8299 = vmatprep.subr.bf16.mxu0 %v7656
    %8300 = vmatpush1.bf16.msra.mxu0 %v7655
    %8301 = vmatprep.subr.bf16.mxu0 %v7648
    %8302 = vmatpush1.bf16.msra.mxu0 %v7647
    %8303 = vmatprep.subr.bf16.mxu0 %v7640
    %8304 = vmatpush1.bf16.msra.mxu0 %v7639
    %8305 = vmatprep.subr.bf16.mxu0 %v7632
    %8306 = vmatpush1.bf16.msra.mxu0 %v7631
    %8307 = vmatprep.subr.bf16.mxu0 %v7624
    %8308 = vmatpush1.bf16.msra.mxu0 %v7623
    %8309 = vmatprep.subr.bf16.mxu0 %v7616
    %8310 = vmatpush1.bf16.msra.mxu0 %v7615
    %8311 = vmatprep.subr.bf16.mxu0 %v7736
    %8312 = vmatpush2.bf16.msra.mxu0 %v7735
    %8313 = vmatprep.subr.bf16.mxu0 %v7728
    %8314 = vmatpush2.bf16.msra.mxu0 %v7727
    %8315 = vmatprep.subr.bf16.mxu0 %v7720
    %8316 = vmatpush2.bf16.msra.mxu0 %v7719
    %8317 = vmatprep.subr.bf16.mxu0 %v7712
    %8318 = vmatpush2.bf16.msra.mxu0 %v7711
    %8319 = vmatprep.subr.bf16.mxu0 %v7704
    %8320 = vmatpush2.bf16.msra.mxu0 %v7703
    %8321 = vmatprep.subr.bf16.mxu0 %v7696
    %8322 = vmatpush2.bf16.msra.mxu0 %v7695
    %8323 = vmatprep.subr.bf16.mxu0 %v7688
    %8324 = vmatpush2.bf16.msra.mxu0 %v7687
    %8325 = vmatprep.subr.bf16.mxu0 %v7680
    %8326 = vmatpush2.bf16.msra.mxu0 %v7679
    %8327 = vmatprep.mubr.bf16.mxu0 %v6584
    %8328 = vmatmul.mubr.bf16.gmra.mxu0 %v6583
    %v8329 = vpop.f32.mrf.mxu0
    %v8330 = vadd.f32 0.0, %v8329
    %v8331 = vpop.f32.mrf.mxu0
    %v8332 = vadd.f32 0.0, %v8331
    %v8333 = vpop.f32.mrf.mxu0
    %v8334 = vadd.f32 0.0, %v8333
    %v8335 = vpop.f32.mrf.mxu0
    %v8336 = vadd.f32 0.0, %v8335
    %8337 = vdwg.mxu0
    %8338 = vmatprep.subr.bf16.mxu0 %v7800
    %8339 = vmatpush1.bf16.msra.mxu0 %v7799
    %8340 = vmatprep.subr.bf16.mxu0 %v7792
    %8341 = vmatpush1.bf16.msra.mxu0 %v7791
    %8342 = vmatprep.subr.bf16.mxu0 %v7784
    %8343 = vmatpush1.bf16.msra.mxu0 %v7783
    %8344 = vmatprep.subr.bf16.mxu0 %v7776
    %8345 = vmatpush1.bf16.msra.mxu0 %v7775
    %8346 = vmatprep.subr.bf16.mxu0 %v7768
    %8347 = vmatpush1.bf16.msra.mxu0 %v7767
    %8348 = vmatprep.subr.bf16.mxu0 %v7760
    %8349 = vmatpush1.bf16.msra.mxu0 %v7759
    %8350 = vmatprep.subr.bf16.mxu0 %v7752
    %8351 = vmatpush1.bf16.msra.mxu0 %v7751
    %8352 = vmatprep.subr.bf16.mxu0 %v7744
    %8353 = vmatpush1.bf16.msra.mxu0 %v7743
    %8354 = vmatprep.subr.bf16.mxu0 %v7864
    %8355 = vmatpush2.bf16.msra.mxu0 %v7863
    %8356 = vmatprep.subr.bf16.mxu0 %v7856
    %8357 = vmatpush2.bf16.msra.mxu0 %v7855
    %8358 = vmatprep.subr.bf16.mxu0 %v7848
    %8359 = vmatpush2.bf16.msra.mxu0 %v7847
    %8360 = vmatprep.subr.bf16.mxu0 %v7840
    %8361 = vmatpush2.bf16.msra.mxu0 %v7839
    %8362 = vmatprep.subr.bf16.mxu0 %v7832
    %8363 = vmatpush2.bf16.msra.mxu0 %v7831
    %8364 = vmatprep.subr.bf16.mxu0 %v7824
    %8365 = vmatpush2.bf16.msra.mxu0 %v7823
    %8366 = vmatprep.subr.bf16.mxu0 %v7816
    %8367 = vmatpush2.bf16.msra.mxu0 %v7815
    %8368 = vmatprep.subr.bf16.mxu0 %v7808
    %8369 = vmatpush2.bf16.msra.mxu0 %v7807
    %8370 = vmatprep.mubr.bf16.mxu0 %v6586
    %8371 = vmatmul.mubr.bf16.gmra.mxu0 %v6585
    %v8372 = vpop.f32.mrf.mxu0
    %v8373 = vadd.f32 %v8330, %v8372
    %v8374 = vpop.f32.mrf.mxu0
    %v8375 = vadd.f32 %v8332, %v8374
    %v8376 = vpop.f32.mrf.mxu0
    %v8377 = vadd.f32 %v8334, %v8376
    %v8378 = vpop.f32.mrf.mxu0
    %v8379 = vadd.f32 %v8336, %v8378
    %8380 = vdwg.mxu0
    %8381 = vmatprep.subr.bf16.mxu0 %v7674
    %8382 = vmatpush1.bf16.msra.mxu0 %v7673
    %8383 = vmatprep.subr.bf16.mxu0 %v7666
    %8384 = vmatpush1.bf16.msra.mxu0 %v7665
    %8385 = vmatprep.subr.bf16.mxu0 %v7658
    %8386 = vmatpush1.bf16.msra.mxu0 %v7657
    %8387 = vmatprep.subr.bf16.mxu0 %v7650
    %8388 = vmatpush1.bf16.msra.mxu0 %v7649
    %8389 = vmatprep.subr.bf16.mxu0 %v7642
    %8390 = vmatpush1.bf16.msra.mxu0 %v7641
    %8391 = vmatprep.subr.bf16.mxu0 %v7634
    %8392 = vmatpush1.bf16.msra.mxu0 %v7633
    %8393 = vmatprep.subr.bf16.mxu0 %v7626
    %8394 = vmatpush1.bf16.msra.mxu0 %v7625
    %8395 = vmatprep.subr.bf16.mxu0 %v7618
    %8396 = vmatpush1.bf16.msra.mxu0 %v7617
    %8397 = vmatprep.subr.bf16.mxu0 %v7738
    %8398 = vmatpush2.bf16.msra.mxu0 %v7737
    %8399 = vmatprep.subr.bf16.mxu0 %v7730
    %8400 = vmatpush2.bf16.msra.mxu0 %v7729
    %8401 = vmatprep.subr.bf16.mxu0 %v7722
    %8402 = vmatpush2.bf16.msra.mxu0 %v7721
    %8403 = vmatprep.subr.bf16.mxu0 %v7714
    %8404 = vmatpush2.bf16.msra.mxu0 %v7713
    %8405 = vmatprep.subr.bf16.mxu0 %v7706
    %8406 = vmatpush2.bf16.msra.mxu0 %v7705
    %8407 = vmatprep.subr.bf16.mxu0 %v7698
    %8408 = vmatpush2.bf16.msra.mxu0 %v7697
    %8409 = vmatprep.subr.bf16.mxu0 %v7690
    %8410 = vmatpush2.bf16.msra.mxu0 %v7689
    %8411 = vmatprep.subr.bf16.mxu0 %v7682
    %8412 = vmatpush2.bf16.msra.mxu0 %v7681
    %8413 = vmatprep.mubr.bf16.mxu0 %v6584
    %8414 = vmatmul.mubr.bf16.gmra.mxu0 %v6583
    %v8415 = vpop.f32.mrf.mxu0
    %v8416 = vadd.f32 0.0, %v8415
    %v8417 = vpop.f32.mrf.mxu0
    %v8418 = vadd.f32 0.0, %v8417
    %v8419 = vpop.f32.mrf.mxu0
    %v8420 = vadd.f32 0.0, %v8419
    %v8421 = vpop.f32.mrf.mxu0
    %v8422 = vadd.f32 0.0, %v8421
    %8423 = vdwg.mxu0
    %8424 = vmatprep.subr.bf16.mxu0 %v7802
    %8425 = vmatpush1.bf16.msra.mxu0 %v7801
    %8426 = vmatprep.subr.bf16.mxu0 %v7794
    %8427 = vmatpush1.bf16.msra.mxu0 %v7793
    %8428 = vmatprep.subr.bf16.mxu0 %v7786
    %8429 = vmatpush1.bf16.msra.mxu0 %v7785
    %8430 = vmatprep.subr.bf16.mxu0 %v7778
    %8431 = vmatpush1.bf16.msra.mxu0 %v7777
    %8432 = vmatprep.subr.bf16.mxu0 %v7770
    %8433 = vmatpush1.bf16.msra.mxu0 %v7769
    %8434 = vmatprep.subr.bf16.mxu0 %v7762
    %8435 = vmatpush1.bf16.msra.mxu0 %v7761
    %8436 = vmatprep.subr.bf16.mxu0 %v7754
    %8437 = vmatpush1.bf16.msra.mxu0 %v7753
    %8438 = vmatprep.subr.bf16.mxu0 %v7746
    %8439 = vmatpush1.bf16.msra.mxu0 %v7745
    %8440 = vmatprep.subr.bf16.mxu0 %v7866
    %8441 = vmatpush2.bf16.msra.mxu0 %v7865
    %8442 = vmatprep.subr.bf16.mxu0 %v7858
    %8443 = vmatpush2.bf16.msra.mxu0 %v7857
    %8444 = vmatprep.subr.bf16.mxu0 %v7850
    %8445 = vmatpush2.bf16.msra.mxu0 %v7849
    %8446 = vmatprep.subr.bf16.mxu0 %v7842
    %8447 = vmatpush2.bf16.msra.mxu0 %v7841
    %8448 = vmatprep.subr.bf16.mxu0 %v7834
    %8449 = vmatpush2.bf16.msra.mxu0 %v7833
    %8450 = vmatprep.subr.bf16.mxu0 %v7826
    %8451 = vmatpush2.bf16.msra.mxu0 %v7825
    %8452 = vmatprep.subr.bf16.mxu0 %v7818
    %8453 = vmatpush2.bf16.msra.mxu0 %v7817
    %8454 = vmatprep.subr.bf16.mxu0 %v7810
    %8455 = vmatpush2.bf16.msra.mxu0 %v7809
    %8456 = vmatprep.mubr.bf16.mxu0 %v6586
    %8457 = vmatmul.mubr.bf16.gmra.mxu0 %v6585
    %v8458 = vpop.f32.mrf.mxu0
    %v8459 = vadd.f32 %v8416, %v8458
    %v8460 = vpop.f32.mrf.mxu0
    %v8461 = vadd.f32 %v8418, %v8460
    %v8462 = vpop.f32.mrf.mxu0
    %v8463 = vadd.f32 %v8420, %v8462
    %v8464 = vpop.f32.mrf.mxu0
    %v8465 = vadd.f32 %v8422, %v8464
    %8466 = vdwg.mxu0
    %v8467 = vld [vmem:[%s6] sm:$0xff]
    %v8469 = vlaneseq
    %v8470 = vshrl.u32 %v8469, 7
    %v8471 = vsub.s32 0, %v8470
    %v8472 = vrot.slane %v8467, %v8471
    %v8473 = vlaneseq
    %v8474 = vshrl.u32 %v8473, 7
    %v8475 = vsub.s32 1, %v8474
    %v8476 = vrot.slane %v8467, %v8475
    %v8477 = vlaneseq
    %v8478 = vshrl.u32 %v8477, 7
    %v8479 = vsub.s32 2, %v8478
    %v8480 = vrot.slane %v8467, %v8479
    %v8481 = vlaneseq
    %v8482 = vshrl.u32 %v8481, 7
    %v8483 = vsub.s32 3, %v8482
    %v8484 = vrot.slane %v8467, %v8483
    %v8485 = vlaneseq
    %v8486 = vshrl.u32 %v8485, 7
    %v8487 = vsub.s32 4, %v8486
    %v8488 = vrot.slane %v8467, %v8487
    %v8489 = vlaneseq
    %v8490 = vshrl.u32 %v8489, 7
    %v8491 = vsub.s32 5, %v8490
    %v8492 = vrot.slane %v8467, %v8491
    %v8493 = vlaneseq
    %v8494 = vshrl.u32 %v8493, 7
    %v8495 = vsub.s32 6, %v8494
    %v8496 = vrot.slane %v8467, %v8495
    %v8497 = vlaneseq
    %v8498 = vshrl.u32 %v8497, 7
    %v8499 = vsub.s32 7, %v8498
    %v8500 = vrot.slane %v8467, %v8499
    %v8509 = vmul.f32 %v8201, %v8472
    %v8510 = vmul.f32 %v8203, %v8476
    %v8511 = vmul.f32 %v8287, %v8480
    %v8512 = vmul.f32 %v8289, %v8484
    %v8513 = vmul.f32 %v8373, %v8488
    %v8514 = vmul.f32 %v8375, %v8492
    %v8515 = vmul.f32 %v8459, %v8496
    %v8516 = vmul.f32 %v8461, %v8500
    %v8517 = vmul.f32 %v8205, %v8472
    %v8518 = vmul.f32 %v8207, %v8476
    %v8519 = vmul.f32 %v8291, %v8480
    %v8520 = vmul.f32 %v8293, %v8484
    %v8521 = vmul.f32 %v8377, %v8488
    %v8522 = vmul.f32 %v8379, %v8492
    %v8523 = vmul.f32 %v8463, %v8496
    %v8524 = vmul.f32 %v8465, %v8500
    %v8525 = vld [vmem:[#allocation15] sm:$0xff]
    %v8527 = vlaneseq
    %v8528 = vshrl.u32 %v8527, 7
    %v8529 = vsub.s32 0, %v8528
    %v8530 = vrot.slane %v8525, %v8529
    %v8531 = vlaneseq
    %v8532 = vshrl.u32 %v8531, 7
    %v8533 = vsub.s32 1, %v8532
    %v8534 = vrot.slane %v8525, %v8533
    %v8535 = vlaneseq
    %v8536 = vshrl.u32 %v8535, 7
    %v8537 = vsub.s32 2, %v8536
    %v8538 = vrot.slane %v8525, %v8537
    %v8539 = vlaneseq
    %v8540 = vshrl.u32 %v8539, 7
    %v8541 = vsub.s32 3, %v8540
    %v8542 = vrot.slane %v8525, %v8541
    %v8543 = vlaneseq
    %v8544 = vshrl.u32 %v8543, 7
    %v8545 = vsub.s32 4, %v8544
    %v8546 = vrot.slane %v8525, %v8545
    %v8547 = vlaneseq
    %v8548 = vshrl.u32 %v8547, 7
    %v8549 = vsub.s32 5, %v8548
    %v8550 = vrot.slane %v8525, %v8549
    %v8551 = vlaneseq
    %v8552 = vshrl.u32 %v8551, 7
    %v8553 = vsub.s32 6, %v8552
    %v8554 = vrot.slane %v8525, %v8553
    %v8555 = vlaneseq
    %v8556 = vshrl.u32 %v8555, 7
    %v8557 = vsub.s32 7, %v8556
    %v8558 = vrot.slane %v8525, %v8557
    %v8567 = vadd.f32 %v8509, %v8530
    %v8568 = vadd.f32 %v8510, %v8534
    %v8569 = vadd.f32 %v8511, %v8538
    %v8570 = vadd.f32 %v8512, %v8542
    %v8571 = vadd.f32 %v8513, %v8546
    %v8572 = vadd.f32 %v8514, %v8550
    %v8573 = vadd.f32 %v8515, %v8554
    %v8574 = vadd.f32 %v8516, %v8558
    %v8575 = vadd.f32 %v8517, %v8530
    %v8576 = vadd.f32 %v8518, %v8534
    %v8577 = vadd.f32 %v8519, %v8538
    %v8578 = vadd.f32 %v8520, %v8542
    %v8579 = vadd.f32 %v8521, %v8546
    %v8580 = vadd.f32 %v8522, %v8550
    %v8581 = vadd.f32 %v8523, %v8554
    %v8582 = vadd.f32 %v8524, %v8558
    %v8583 = vmax.f32 %v8567, 0.0
    %v8584 = vmax.f32 %v8568, 0.0
    %v8585 = vmax.f32 %v8569, 0.0
    %v8586 = vmax.f32 %v8570, 0.0
    %v8587 = vmax.f32 %v8571, 0.0
    %v8588 = vmax.f32 %v8572, 0.0
    %v8589 = vmax.f32 %v8573, 0.0
    %v8590 = vmax.f32 %v8574, 0.0
    %v8591 = vmax.f32 %v8575, 0.0
    %v8592 = vmax.f32 %v8576, 0.0
    %v8593 = vmax.f32 %v8577, 0.0
    %v8594 = vmax.f32 %v8578, 0.0
    %v8595 = vmax.f32 %v8579, 0.0
    %v8596 = vmax.f32 %v8580, 0.0
    %v8597 = vmax.f32 %v8581, 0.0
    %v8598 = vmax.f32 %v8582, 0.0
    %v8599 = vpack.c.bf16 %v8591, %v8583
    %v8600 = vpack.c.bf16 %v8592, %v8584
    %v8601 = vpack.c.bf16 %v8593, %v8585
    %v8602 = vpack.c.bf16 %v8594, %v8586
    %v8603 = vpack.c.bf16 %v8595, %v8587
    %v8604 = vpack.c.bf16 %v8596, %v8588
    %v8605 = vpack.c.bf16 %v8597, %v8589
    %v8606 = vpack.c.bf16 %v8598, %v8590
    %v8607 = vld [vmem:[#allocation3] sm:$0xff]
    %v8608 = vld [vmem:[#allocation3 + $0x8] sm:$0xff]
    %v8609 = vld [vmem:[#allocation3 + $0x10] sm:$0xff]
    %v8610 = vld [vmem:[#allocation3 + $0x18] sm:$0xff]
    %v8611 = vld [vmem:[#allocation3 + $0x20] sm:$0xff]
    %v8612 = vld [vmem:[#allocation3 + $0x28] sm:$0xff]
    %v8613 = vld [vmem:[#allocation3 + $0x30] sm:$0xff]
    %v8614 = vld [vmem:[#allocation3 + $0x38] sm:$0xff]
    %v8615 = vld [vmem:[#allocation3 + $0x40] sm:$0xff]
    %v8616 = vld [vmem:[#allocation3 + $0x48] sm:$0xff]
    %v8617 = vld [vmem:[#allocation3 + $0x50] sm:$0xff]
    %v8618 = vld [vmem:[#allocation3 + $0x58] sm:$0xff]
    %v8619 = vld [vmem:[#allocation3 + $0x60] sm:$0xff]
    %v8620 = vld [vmem:[#allocation3 + $0x68] sm:$0xff]
    %v8621 = vld [vmem:[#allocation3 + $0x70] sm:$0xff]
    %v8622 = vld [vmem:[#allocation3 + $0x78] sm:$0xff]
    %v8623 = vld [vmem:[#allocation3 + $0x80] sm:$0xff]
    %v8624 = vld [vmem:[#allocation3 + $0x88] sm:$0xff]
    %v8625 = vld [vmem:[#allocation3 + $0x90] sm:$0xff]
    %v8626 = vld [vmem:[#allocation3 + $0x98] sm:$0xff]
    %v8627 = vld [vmem:[#allocation3 + $0xa0] sm:$0xff]
    %v8628 = vld [vmem:[#allocation3 + $0xa8] sm:$0xff]
    %v8629 = vld [vmem:[#allocation3 + $0xb0] sm:$0xff]
    %v8630 = vld [vmem:[#allocation3 + $0xb8] sm:$0xff]
    %v8631 = vld [vmem:[#allocation3 + $0xc0] sm:$0xff]
    %v8632 = vld [vmem:[#allocation3 + $0xc8] sm:$0xff]
    %v8633 = vld [vmem:[#allocation3 + $0xd0] sm:$0xff]
    %v8634 = vld [vmem:[#allocation3 + $0xd8] sm:$0xff]
    %v8635 = vld [vmem:[#allocation3 + $0xe0] sm:$0xff]
    %v8636 = vld [vmem:[#allocation3 + $0xe8] sm:$0xff]
    %v8637 = vld [vmem:[#allocation3 + $0xf0] sm:$0xff]
    %v8638 = vld [vmem:[#allocation3 + $0xf8] sm:$0xff]
    %v8639 = vld [vmem:[#allocation3 + $0x100] sm:$0xff]
    %v8640 = vld [vmem:[#allocation3 + $0x108] sm:$0xff]
    %v8641 = vld [vmem:[#allocation3 + $0x110] sm:$0xff]
    %v8642 = vld [vmem:[#allocation3 + $0x118] sm:$0xff]
    %v8643 = vld [vmem:[#allocation3 + $0x120] sm:$0xff]
    %v8644 = vld [vmem:[#allocation3 + $0x128] sm:$0xff]
    %v8645 = vld [vmem:[#allocation3 + $0x130] sm:$0xff]
    %v8646 = vld [vmem:[#allocation3 + $0x138] sm:$0xff]
    %v8647 = vld [vmem:[#allocation3 + $0x140] sm:$0xff]
    %v8648 = vld [vmem:[#allocation3 + $0x148] sm:$0xff]
    %v8649 = vld [vmem:[#allocation3 + $0x150] sm:$0xff]
    %v8650 = vld [vmem:[#allocation3 + $0x158] sm:$0xff]
    %v8651 = vld [vmem:[#allocation3 + $0x160] sm:$0xff]
    %v8652 = vld [vmem:[#allocation3 + $0x168] sm:$0xff]
    %v8653 = vld [vmem:[#allocation3 + $0x170] sm:$0xff]
    %v8654 = vld [vmem:[#allocation3 + $0x178] sm:$0xff]
    %v8655 = vld [vmem:[#allocation3 + $0x180] sm:$0xff]
    %v8656 = vld [vmem:[#allocation3 + $0x188] sm:$0xff]
    %v8657 = vld [vmem:[#allocation3 + $0x190] sm:$0xff]
    %v8658 = vld [vmem:[#allocation3 + $0x198] sm:$0xff]
    %v8659 = vld [vmem:[#allocation3 + $0x1a0] sm:$0xff]
    %v8660 = vld [vmem:[#allocation3 + $0x1a8] sm:$0xff]
    %v8661 = vld [vmem:[#allocation3 + $0x1b0] sm:$0xff]
    %v8662 = vld [vmem:[#allocation3 + $0x1b8] sm:$0xff]
    %v8663 = vld [vmem:[#allocation3 + $0x1c0] sm:$0xff]
    %v8664 = vld [vmem:[#allocation3 + $0x1c8] sm:$0xff]
    %v8665 = vld [vmem:[#allocation3 + $0x1d0] sm:$0xff]
    %v8666 = vld [vmem:[#allocation3 + $0x1d8] sm:$0xff]
    %v8667 = vld [vmem:[#allocation3 + $0x1e0] sm:$0xff]
    %v8668 = vld [vmem:[#allocation3 + $0x1e8] sm:$0xff]
    %v8669 = vld [vmem:[#allocation3 + $0x1f0] sm:$0xff]
    %v8670 = vld [vmem:[#allocation3 + $0x1f8] sm:$0xff]
    %v8671 = vld [vmem:[#allocation3 + $0x200] sm:$0xff]
    %v8672 = vld [vmem:[#allocation3 + $0x208] sm:$0xff]
    %v8673 = vld [vmem:[#allocation3 + $0x210] sm:$0xff]
    %v8674 = vld [vmem:[#allocation3 + $0x218] sm:$0xff]
    %v8675 = vld [vmem:[#allocation3 + $0x220] sm:$0xff]
    %v8676 = vld [vmem:[#allocation3 + $0x228] sm:$0xff]
    %v8677 = vld [vmem:[#allocation3 + $0x230] sm:$0xff]
    %v8678 = vld [vmem:[#allocation3 + $0x238] sm:$0xff]
    %v8679 = vld [vmem:[#allocation3 + $0x240] sm:$0xff]
    %v8680 = vld [vmem:[#allocation3 + $0x248] sm:$0xff]
    %v8681 = vld [vmem:[#allocation3 + $0x250] sm:$0xff]
    %v8682 = vld [vmem:[#allocation3 + $0x258] sm:$0xff]
    %v8683 = vld [vmem:[#allocation3 + $0x260] sm:$0xff]
    %v8684 = vld [vmem:[#allocation3 + $0x268] sm:$0xff]
    %v8685 = vld [vmem:[#allocation3 + $0x270] sm:$0xff]
    %v8686 = vld [vmem:[#allocation3 + $0x278] sm:$0xff]
    %v8687 = vld [vmem:[#allocation3 + $0x280] sm:$0xff]
    %v8688 = vld [vmem:[#allocation3 + $0x288] sm:$0xff]
    %v8689 = vld [vmem:[#allocation3 + $0x290] sm:$0xff]
    %v8690 = vld [vmem:[#allocation3 + $0x298] sm:$0xff]
    %v8691 = vld [vmem:[#allocation3 + $0x2a0] sm:$0xff]
    %v8692 = vld [vmem:[#allocation3 + $0x2a8] sm:$0xff]
    %v8693 = vld [vmem:[#allocation3 + $0x2b0] sm:$0xff]
    %v8694 = vld [vmem:[#allocation3 + $0x2b8] sm:$0xff]
    %v8695 = vld [vmem:[#allocation3 + $0x2c0] sm:$0xff]
    %v8696 = vld [vmem:[#allocation3 + $0x2c8] sm:$0xff]
    %v8697 = vld [vmem:[#allocation3 + $0x2d0] sm:$0xff]
    %v8698 = vld [vmem:[#allocation3 + $0x2d8] sm:$0xff]
    %v8699 = vld [vmem:[#allocation3 + $0x2e0] sm:$0xff]
    %v8700 = vld [vmem:[#allocation3 + $0x2e8] sm:$0xff]
    %v8701 = vld [vmem:[#allocation3 + $0x2f0] sm:$0xff]
    %v8702 = vld [vmem:[#allocation3 + $0x2f8] sm:$0xff]
    %v8703 = vld [vmem:[#allocation3 + $0x300] sm:$0xff]
    %v8704 = vld [vmem:[#allocation3 + $0x308] sm:$0xff]
    %v8705 = vld [vmem:[#allocation3 + $0x310] sm:$0xff]
    %v8706 = vld [vmem:[#allocation3 + $0x318] sm:$0xff]
    %v8707 = vld [vmem:[#allocation3 + $0x320] sm:$0xff]
    %v8708 = vld [vmem:[#allocation3 + $0x328] sm:$0xff]
    %v8709 = vld [vmem:[#allocation3 + $0x330] sm:$0xff]
    %v8710 = vld [vmem:[#allocation3 + $0x338] sm:$0xff]
    %v8711 = vld [vmem:[#allocation3 + $0x340] sm:$0xff]
    %v8712 = vld [vmem:[#allocation3 + $0x348] sm:$0xff]
    %v8713 = vld [vmem:[#allocation3 + $0x350] sm:$0xff]
    %v8714 = vld [vmem:[#allocation3 + $0x358] sm:$0xff]
    %v8715 = vld [vmem:[#allocation3 + $0x360] sm:$0xff]
    %v8716 = vld [vmem:[#allocation3 + $0x368] sm:$0xff]
    %v8717 = vld [vmem:[#allocation3 + $0x370] sm:$0xff]
    %v8718 = vld [vmem:[#allocation3 + $0x378] sm:$0xff]
    %v8719 = vld [vmem:[#allocation3 + $0x380] sm:$0xff]
    %v8720 = vld [vmem:[#allocation3 + $0x388] sm:$0xff]
    %v8721 = vld [vmem:[#allocation3 + $0x390] sm:$0xff]
    %v8722 = vld [vmem:[#allocation3 + $0x398] sm:$0xff]
    %v8723 = vld [vmem:[#allocation3 + $0x3a0] sm:$0xff]
    %v8724 = vld [vmem:[#allocation3 + $0x3a8] sm:$0xff]
    %v8725 = vld [vmem:[#allocation3 + $0x3b0] sm:$0xff]
    %v8726 = vld [vmem:[#allocation3 + $0x3b8] sm:$0xff]
    %v8727 = vld [vmem:[#allocation3 + $0x3c0] sm:$0xff]
    %v8728 = vld [vmem:[#allocation3 + $0x3c8] sm:$0xff]
    %v8729 = vld [vmem:[#allocation3 + $0x3d0] sm:$0xff]
    %v8730 = vld [vmem:[#allocation3 + $0x3d8] sm:$0xff]
    %v8731 = vld [vmem:[#allocation3 + $0x3e0] sm:$0xff]
    %v8732 = vld [vmem:[#allocation3 + $0x3e8] sm:$0xff]
    %v8733 = vld [vmem:[#allocation3 + $0x3f0] sm:$0xff]
    %v8734 = vld [vmem:[#allocation3 + $0x3f8] sm:$0xff]
    %v8735 = vld [vmem:[#allocation3 + $0x400] sm:$0xff]
    %v8736 = vld [vmem:[#allocation3 + $0x408] sm:$0xff]
    %v8737 = vld [vmem:[#allocation3 + $0x410] sm:$0xff]
    %v8738 = vld [vmem:[#allocation3 + $0x418] sm:$0xff]
    %v8739 = vld [vmem:[#allocation3 + $0x420] sm:$0xff]
    %v8740 = vld [vmem:[#allocation3 + $0x428] sm:$0xff]
    %v8741 = vld [vmem:[#allocation3 + $0x430] sm:$0xff]
    %v8742 = vld [vmem:[#allocation3 + $0x438] sm:$0xff]
    %v8743 = vld [vmem:[#allocation3 + $0x440] sm:$0xff]
    %v8744 = vld [vmem:[#allocation3 + $0x448] sm:$0xff]
    %v8745 = vld [vmem:[#allocation3 + $0x450] sm:$0xff]
    %v8746 = vld [vmem:[#allocation3 + $0x458] sm:$0xff]
    %v8747 = vld [vmem:[#allocation3 + $0x460] sm:$0xff]
    %v8748 = vld [vmem:[#allocation3 + $0x468] sm:$0xff]
    %v8749 = vld [vmem:[#allocation3 + $0x470] sm:$0xff]
    %v8750 = vld [vmem:[#allocation3 + $0x478] sm:$0xff]
    %v8751 = vld [vmem:[#allocation3 + $0x480] sm:$0xff]
    %v8752 = vld [vmem:[#allocation3 + $0x488] sm:$0xff]
    %v8753 = vld [vmem:[#allocation3 + $0x490] sm:$0xff]
    %v8754 = vld [vmem:[#allocation3 + $0x498] sm:$0xff]
    %v8755 = vld [vmem:[#allocation3 + $0x4a0] sm:$0xff]
    %v8756 = vld [vmem:[#allocation3 + $0x4a8] sm:$0xff]
    %v8757 = vld [vmem:[#allocation3 + $0x4b0] sm:$0xff]
    %v8758 = vld [vmem:[#allocation3 + $0x4b8] sm:$0xff]
    %v8759 = vld [vmem:[#allocation3 + $0x4c0] sm:$0xff]
    %v8760 = vld [vmem:[#allocation3 + $0x4c8] sm:$0xff]
    %v8761 = vld [vmem:[#allocation3 + $0x4d0] sm:$0xff]
    %v8762 = vld [vmem:[#allocation3 + $0x4d8] sm:$0xff]
    %v8763 = vld [vmem:[#allocation3 + $0x4e0] sm:$0xff]
    %v8764 = vld [vmem:[#allocation3 + $0x4e8] sm:$0xff]
    %v8765 = vld [vmem:[#allocation3 + $0x4f0] sm:$0xff]
    %v8766 = vld [vmem:[#allocation3 + $0x4f8] sm:$0xff]
    %v8767 = vld [vmem:[#allocation3 + $0x500] sm:$0xff]
    %v8768 = vld [vmem:[#allocation3 + $0x508] sm:$0xff]
    %v8769 = vld [vmem:[#allocation3 + $0x510] sm:$0xff]
    %v8770 = vld [vmem:[#allocation3 + $0x518] sm:$0xff]
    %v8771 = vld [vmem:[#allocation3 + $0x520] sm:$0xff]
    %v8772 = vld [vmem:[#allocation3 + $0x528] sm:$0xff]
    %v8773 = vld [vmem:[#allocation3 + $0x530] sm:$0xff]
    %v8774 = vld [vmem:[#allocation3 + $0x538] sm:$0xff]
    %v8775 = vld [vmem:[#allocation3 + $0x540] sm:$0xff]
    %v8776 = vld [vmem:[#allocation3 + $0x548] sm:$0xff]
    %v8777 = vld [vmem:[#allocation3 + $0x550] sm:$0xff]
    %v8778 = vld [vmem:[#allocation3 + $0x558] sm:$0xff]
    %v8779 = vld [vmem:[#allocation3 + $0x560] sm:$0xff]
    %v8780 = vld [vmem:[#allocation3 + $0x568] sm:$0xff]
    %v8781 = vld [vmem:[#allocation3 + $0x570] sm:$0xff]
    %v8782 = vld [vmem:[#allocation3 + $0x578] sm:$0xff]
    %v8783 = vld [vmem:[#allocation3 + $0x580] sm:$0xff]
    %v8784 = vld [vmem:[#allocation3 + $0x588] sm:$0xff]
    %v8785 = vld [vmem:[#allocation3 + $0x590] sm:$0xff]
    %v8786 = vld [vmem:[#allocation3 + $0x598] sm:$0xff]
    %v8787 = vld [vmem:[#allocation3 + $0x5a0] sm:$0xff]
    %v8788 = vld [vmem:[#allocation3 + $0x5a8] sm:$0xff]
    %v8789 = vld [vmem:[#allocation3 + $0x5b0] sm:$0xff]
    %v8790 = vld [vmem:[#allocation3 + $0x5b8] sm:$0xff]
    %v8791 = vld [vmem:[#allocation3 + $0x5c0] sm:$0xff]
    %v8792 = vld [vmem:[#allocation3 + $0x5c8] sm:$0xff]
    %v8793 = vld [vmem:[#allocation3 + $0x5d0] sm:$0xff]
    %v8794 = vld [vmem:[#allocation3 + $0x5d8] sm:$0xff]
    %v8795 = vld [vmem:[#allocation3 + $0x5e0] sm:$0xff]
    %v8796 = vld [vmem:[#allocation3 + $0x5e8] sm:$0xff]
    %v8797 = vld [vmem:[#allocation3 + $0x5f0] sm:$0xff]
    %v8798 = vld [vmem:[#allocation3 + $0x5f8] sm:$0xff]
    %v8799 = vld [vmem:[#allocation3 + $0x600] sm:$0xff]
    %v8800 = vld [vmem:[#allocation3 + $0x608] sm:$0xff]
    %v8801 = vld [vmem:[#allocation3 + $0x610] sm:$0xff]
    %v8802 = vld [vmem:[#allocation3 + $0x618] sm:$0xff]
    %v8803 = vld [vmem:[#allocation3 + $0x620] sm:$0xff]
    %v8804 = vld [vmem:[#allocation3 + $0x628] sm:$0xff]
    %v8805 = vld [vmem:[#allocation3 + $0x630] sm:$0xff]
    %v8806 = vld [vmem:[#allocation3 + $0x638] sm:$0xff]
    %v8807 = vld [vmem:[#allocation3 + $0x640] sm:$0xff]
    %v8808 = vld [vmem:[#allocation3 + $0x648] sm:$0xff]
    %v8809 = vld [vmem:[#allocation3 + $0x650] sm:$0xff]
    %v8810 = vld [vmem:[#allocation3 + $0x658] sm:$0xff]
    %v8811 = vld [vmem:[#allocation3 + $0x660] sm:$0xff]
    %v8812 = vld [vmem:[#allocation3 + $0x668] sm:$0xff]
    %v8813 = vld [vmem:[#allocation3 + $0x670] sm:$0xff]
    %v8814 = vld [vmem:[#allocation3 + $0x678] sm:$0xff]
    %v8815 = vld [vmem:[#allocation3 + $0x680] sm:$0xff]
    %v8816 = vld [vmem:[#allocation3 + $0x688] sm:$0xff]
    %v8817 = vld [vmem:[#allocation3 + $0x690] sm:$0xff]
    %v8818 = vld [vmem:[#allocation3 + $0x698] sm:$0xff]
    %v8819 = vld [vmem:[#allocation3 + $0x6a0] sm:$0xff]
    %v8820 = vld [vmem:[#allocation3 + $0x6a8] sm:$0xff]
    %v8821 = vld [vmem:[#allocation3 + $0x6b0] sm:$0xff]
    %v8822 = vld [vmem:[#allocation3 + $0x6b8] sm:$0xff]
    %v8823 = vld [vmem:[#allocation3 + $0x6c0] sm:$0xff]
    %v8824 = vld [vmem:[#allocation3 + $0x6c8] sm:$0xff]
    %v8825 = vld [vmem:[#allocation3 + $0x6d0] sm:$0xff]
    %v8826 = vld [vmem:[#allocation3 + $0x6d8] sm:$0xff]
    %v8827 = vld [vmem:[#allocation3 + $0x6e0] sm:$0xff]
    %v8828 = vld [vmem:[#allocation3 + $0x6e8] sm:$0xff]
    %v8829 = vld [vmem:[#allocation3 + $0x6f0] sm:$0xff]
    %v8830 = vld [vmem:[#allocation3 + $0x6f8] sm:$0xff]
    %v8831 = vld [vmem:[#allocation3 + $0x700] sm:$0xff]
    %v8832 = vld [vmem:[#allocation3 + $0x708] sm:$0xff]
    %v8833 = vld [vmem:[#allocation3 + $0x710] sm:$0xff]
    %v8834 = vld [vmem:[#allocation3 + $0x718] sm:$0xff]
    %v8835 = vld [vmem:[#allocation3 + $0x720] sm:$0xff]
    %v8836 = vld [vmem:[#allocation3 + $0x728] sm:$0xff]
    %v8837 = vld [vmem:[#allocation3 + $0x730] sm:$0xff]
    %v8838 = vld [vmem:[#allocation3 + $0x738] sm:$0xff]
    %v8839 = vld [vmem:[#allocation3 + $0x740] sm:$0xff]
    %v8840 = vld [vmem:[#allocation3 + $0x748] sm:$0xff]
    %v8841 = vld [vmem:[#allocation3 + $0x750] sm:$0xff]
    %v8842 = vld [vmem:[#allocation3 + $0x758] sm:$0xff]
    %v8843 = vld [vmem:[#allocation3 + $0x760] sm:$0xff]
    %v8844 = vld [vmem:[#allocation3 + $0x768] sm:$0xff]
    %v8845 = vld [vmem:[#allocation3 + $0x770] sm:$0xff]
    %v8846 = vld [vmem:[#allocation3 + $0x778] sm:$0xff]
    %v8847 = vld [vmem:[#allocation3 + $0x780] sm:$0xff]
    %v8848 = vld [vmem:[#allocation3 + $0x788] sm:$0xff]
    %v8849 = vld [vmem:[#allocation3 + $0x790] sm:$0xff]
    %v8850 = vld [vmem:[#allocation3 + $0x798] sm:$0xff]
    %v8851 = vld [vmem:[#allocation3 + $0x7a0] sm:$0xff]
    %v8852 = vld [vmem:[#allocation3 + $0x7a8] sm:$0xff]
    %v8853 = vld [vmem:[#allocation3 + $0x7b0] sm:$0xff]
    %v8854 = vld [vmem:[#allocation3 + $0x7b8] sm:$0xff]
    %v8855 = vld [vmem:[#allocation3 + $0x7c0] sm:$0xff]
    %v8856 = vld [vmem:[#allocation3 + $0x7c8] sm:$0xff]
    %v8857 = vld [vmem:[#allocation3 + $0x7d0] sm:$0xff]
    %v8858 = vld [vmem:[#allocation3 + $0x7d8] sm:$0xff]
    %v8859 = vld [vmem:[#allocation3 + $0x7e0] sm:$0xff]
    %v8860 = vld [vmem:[#allocation3 + $0x7e8] sm:$0xff]
    %v8861 = vld [vmem:[#allocation3 + $0x7f0] sm:$0xff]
    %v8862 = vld [vmem:[#allocation3 + $0x7f8] sm:$0xff]
    %v8863 = vld [vmem:[#allocation3 + $0x800] sm:$0xff]
    %v8864 = vld [vmem:[#allocation3 + $0x808] sm:$0xff]
    %v8865 = vld [vmem:[#allocation3 + $0x810] sm:$0xff]
    %v8866 = vld [vmem:[#allocation3 + $0x818] sm:$0xff]
    %v8867 = vld [vmem:[#allocation3 + $0x820] sm:$0xff]
    %v8868 = vld [vmem:[#allocation3 + $0x828] sm:$0xff]
    %v8869 = vld [vmem:[#allocation3 + $0x830] sm:$0xff]
    %v8870 = vld [vmem:[#allocation3 + $0x838] sm:$0xff]
    %v8871 = vld [vmem:[#allocation3 + $0x840] sm:$0xff]
    %v8872 = vld [vmem:[#allocation3 + $0x848] sm:$0xff]
    %v8873 = vld [vmem:[#allocation3 + $0x850] sm:$0xff]
    %v8874 = vld [vmem:[#allocation3 + $0x858] sm:$0xff]
    %v8875 = vld [vmem:[#allocation3 + $0x860] sm:$0xff]
    %v8876 = vld [vmem:[#allocation3 + $0x868] sm:$0xff]
    %v8877 = vld [vmem:[#allocation3 + $0x870] sm:$0xff]
    %v8878 = vld [vmem:[#allocation3 + $0x878] sm:$0xff]
    %v8879 = vld [vmem:[#allocation3 + $0x880] sm:$0xff]
    %v8880 = vld [vmem:[#allocation3 + $0x888] sm:$0xff]
    %v8881 = vld [vmem:[#allocation3 + $0x890] sm:$0xff]
    %v8882 = vld [vmem:[#allocation3 + $0x898] sm:$0xff]
    %v8883 = vld [vmem:[#allocation3 + $0x8a0] sm:$0xff]
    %v8884 = vld [vmem:[#allocation3 + $0x8a8] sm:$0xff]
    %v8885 = vld [vmem:[#allocation3 + $0x8b0] sm:$0xff]
    %v8886 = vld [vmem:[#allocation3 + $0x8b8] sm:$0xff]
    %v8887 = vld [vmem:[#allocation3 + $0x8c0] sm:$0xff]
    %v8888 = vld [vmem:[#allocation3 + $0x8c8] sm:$0xff]
    %v8889 = vld [vmem:[#allocation3 + $0x8d0] sm:$0xff]
    %v8890 = vld [vmem:[#allocation3 + $0x8d8] sm:$0xff]
    %v8891 = vld [vmem:[#allocation3 + $0x8e0] sm:$0xff]
    %v8892 = vld [vmem:[#allocation3 + $0x8e8] sm:$0xff]
    %v8893 = vld [vmem:[#allocation3 + $0x8f0] sm:$0xff]
    %v8894 = vld [vmem:[#allocation3 + $0x8f8] sm:$0xff]
    %v8895 = vld [vmem:[#allocation3 + $0x900] sm:$0xff]
    %v8896 = vld [vmem:[#allocation3 + $0x908] sm:$0xff]
    %v8897 = vld [vmem:[#allocation3 + $0x910] sm:$0xff]
    %v8898 = vld [vmem:[#allocation3 + $0x918] sm:$0xff]
    %v8899 = vld [vmem:[#allocation3 + $0x920] sm:$0xff]
    %v8900 = vld [vmem:[#allocation3 + $0x928] sm:$0xff]
    %v8901 = vld [vmem:[#allocation3 + $0x930] sm:$0xff]
    %v8902 = vld [vmem:[#allocation3 + $0x938] sm:$0xff]
    %v8903 = vld [vmem:[#allocation3 + $0x940] sm:$0xff]
    %v8904 = vld [vmem:[#allocation3 + $0x948] sm:$0xff]
    %v8905 = vld [vmem:[#allocation3 + $0x950] sm:$0xff]
    %v8906 = vld [vmem:[#allocation3 + $0x958] sm:$0xff]
    %v8907 = vld [vmem:[#allocation3 + $0x960] sm:$0xff]
    %v8908 = vld [vmem:[#allocation3 + $0x968] sm:$0xff]
    %v8909 = vld [vmem:[#allocation3 + $0x970] sm:$0xff]
    %v8910 = vld [vmem:[#allocation3 + $0x978] sm:$0xff]
    %v8911 = vld [vmem:[#allocation3 + $0x980] sm:$0xff]
    %v8912 = vld [vmem:[#allocation3 + $0x988] sm:$0xff]
    %v8913 = vld [vmem:[#allocation3 + $0x990] sm:$0xff]
    %v8914 = vld [vmem:[#allocation3 + $0x998] sm:$0xff]
    %v8915 = vld [vmem:[#allocation3 + $0x9a0] sm:$0xff]
    %v8916 = vld [vmem:[#allocation3 + $0x9a8] sm:$0xff]
    %v8917 = vld [vmem:[#allocation3 + $0x9b0] sm:$0xff]
    %v8918 = vld [vmem:[#allocation3 + $0x9b8] sm:$0xff]
    %v8919 = vld [vmem:[#allocation3 + $0x9c0] sm:$0xff]
    %v8920 = vld [vmem:[#allocation3 + $0x9c8] sm:$0xff]
    %v8921 = vld [vmem:[#allocation3 + $0x9d0] sm:$0xff]
    %v8922 = vld [vmem:[#allocation3 + $0x9d8] sm:$0xff]
    %v8923 = vld [vmem:[#allocation3 + $0x9e0] sm:$0xff]
    %v8924 = vld [vmem:[#allocation3 + $0x9e8] sm:$0xff]
    %v8925 = vld [vmem:[#allocation3 + $0x9f0] sm:$0xff]
    %v8926 = vld [vmem:[#allocation3 + $0x9f8] sm:$0xff]
    %v8927 = vld [vmem:[#allocation3 + $0xa00] sm:$0xff]
    %v8928 = vld [vmem:[#allocation3 + $0xa08] sm:$0xff]
    %v8929 = vld [vmem:[#allocation3 + $0xa10] sm:$0xff]
    %v8930 = vld [vmem:[#allocation3 + $0xa18] sm:$0xff]
    %v8931 = vld [vmem:[#allocation3 + $0xa20] sm:$0xff]
    %v8932 = vld [vmem:[#allocation3 + $0xa28] sm:$0xff]
    %v8933 = vld [vmem:[#allocation3 + $0xa30] sm:$0xff]
    %v8934 = vld [vmem:[#allocation3 + $0xa38] sm:$0xff]
    %v8935 = vld [vmem:[#allocation3 + $0xa40] sm:$0xff]
    %v8936 = vld [vmem:[#allocation3 + $0xa48] sm:$0xff]
    %v8937 = vld [vmem:[#allocation3 + $0xa50] sm:$0xff]
    %v8938 = vld [vmem:[#allocation3 + $0xa58] sm:$0xff]
    %v8939 = vld [vmem:[#allocation3 + $0xa60] sm:$0xff]
    %v8940 = vld [vmem:[#allocation3 + $0xa68] sm:$0xff]
    %v8941 = vld [vmem:[#allocation3 + $0xa70] sm:$0xff]
    %v8942 = vld [vmem:[#allocation3 + $0xa78] sm:$0xff]
    %v8943 = vld [vmem:[#allocation3 + $0xa80] sm:$0xff]
    %v8944 = vld [vmem:[#allocation3 + $0xa88] sm:$0xff]
    %v8945 = vld [vmem:[#allocation3 + $0xa90] sm:$0xff]
    %v8946 = vld [vmem:[#allocation3 + $0xa98] sm:$0xff]
    %v8947 = vld [vmem:[#allocation3 + $0xaa0] sm:$0xff]
    %v8948 = vld [vmem:[#allocation3 + $0xaa8] sm:$0xff]
    %v8949 = vld [vmem:[#allocation3 + $0xab0] sm:$0xff]
    %v8950 = vld [vmem:[#allocation3 + $0xab8] sm:$0xff]
    %v8951 = vld [vmem:[#allocation3 + $0xac0] sm:$0xff]
    %v8952 = vld [vmem:[#allocation3 + $0xac8] sm:$0xff]
    %v8953 = vld [vmem:[#allocation3 + $0xad0] sm:$0xff]
    %v8954 = vld [vmem:[#allocation3 + $0xad8] sm:$0xff]
    %v8955 = vld [vmem:[#allocation3 + $0xae0] sm:$0xff]
    %v8956 = vld [vmem:[#allocation3 + $0xae8] sm:$0xff]
    %v8957 = vld [vmem:[#allocation3 + $0xaf0] sm:$0xff]
    %v8958 = vld [vmem:[#allocation3 + $0xaf8] sm:$0xff]
    %v8959 = vld [vmem:[#allocation3 + $0xb00] sm:$0xff]
    %v8960 = vld [vmem:[#allocation3 + $0xb08] sm:$0xff]
    %v8961 = vld [vmem:[#allocation3 + $0xb10] sm:$0xff]
    %v8962 = vld [vmem:[#allocation3 + $0xb18] sm:$0xff]
    %v8963 = vld [vmem:[#allocation3 + $0xb20] sm:$0xff]
    %v8964 = vld [vmem:[#allocation3 + $0xb28] sm:$0xff]
    %v8965 = vld [vmem:[#allocation3 + $0xb30] sm:$0xff]
    %v8966 = vld [vmem:[#allocation3 + $0xb38] sm:$0xff]
    %v8967 = vld [vmem:[#allocation3 + $0xb40] sm:$0xff]
    %v8968 = vld [vmem:[#allocation3 + $0xb48] sm:$0xff]
    %v8969 = vld [vmem:[#allocation3 + $0xb50] sm:$0xff]
    %v8970 = vld [vmem:[#allocation3 + $0xb58] sm:$0xff]
    %v8971 = vld [vmem:[#allocation3 + $0xb60] sm:$0xff]
    %v8972 = vld [vmem:[#allocation3 + $0xb68] sm:$0xff]
    %v8973 = vld [vmem:[#allocation3 + $0xb70] sm:$0xff]
    %v8974 = vld [vmem:[#allocation3 + $0xb78] sm:$0xff]
    %v8975 = vld [vmem:[#allocation3 + $0xb80] sm:$0xff]
    %v8976 = vld [vmem:[#allocation3 + $0xb88] sm:$0xff]
    %v8977 = vld [vmem:[#allocation3 + $0xb90] sm:$0xff]
    %v8978 = vld [vmem:[#allocation3 + $0xb98] sm:$0xff]
    %v8979 = vld [vmem:[#allocation3 + $0xba0] sm:$0xff]
    %v8980 = vld [vmem:[#allocation3 + $0xba8] sm:$0xff]
    %v8981 = vld [vmem:[#allocation3 + $0xbb0] sm:$0xff]
    %v8982 = vld [vmem:[#allocation3 + $0xbb8] sm:$0xff]
    %v8983 = vld [vmem:[#allocation3 + $0xbc0] sm:$0xff]
    %v8984 = vld [vmem:[#allocation3 + $0xbc8] sm:$0xff]
    %v8985 = vld [vmem:[#allocation3 + $0xbd0] sm:$0xff]
    %v8986 = vld [vmem:[#allocation3 + $0xbd8] sm:$0xff]
    %v8987 = vld [vmem:[#allocation3 + $0xbe0] sm:$0xff]
    %v8988 = vld [vmem:[#allocation3 + $0xbe8] sm:$0xff]
    %v8989 = vld [vmem:[#allocation3 + $0xbf0] sm:$0xff]
    %v8990 = vld [vmem:[#allocation3 + $0xbf8] sm:$0xff]
    %v8991 = vld [vmem:[#allocation3 + $0xc00] sm:$0xff]
    %v8992 = vld [vmem:[#allocation3 + $0xc08] sm:$0xff]
    %v8993 = vld [vmem:[#allocation3 + $0xc10] sm:$0xff]
    %v8994 = vld [vmem:[#allocation3 + $0xc18] sm:$0xff]
    %v8995 = vld [vmem:[#allocation3 + $0xc20] sm:$0xff]
    %v8996 = vld [vmem:[#allocation3 + $0xc28] sm:$0xff]
    %v8997 = vld [vmem:[#allocation3 + $0xc30] sm:$0xff]
    %v8998 = vld [vmem:[#allocation3 + $0xc38] sm:$0xff]
    %v8999 = vld [vmem:[#allocation3 + $0xc40] sm:$0xff]
    %v9000 = vld [vmem:[#allocation3 + $0xc48] sm:$0xff]
    %v9001 = vld [vmem:[#allocation3 + $0xc50] sm:$0xff]
    %v9002 = vld [vmem:[#allocation3 + $0xc58] sm:$0xff]
    %v9003 = vld [vmem:[#allocation3 + $0xc60] sm:$0xff]
    %v9004 = vld [vmem:[#allocation3 + $0xc68] sm:$0xff]
    %v9005 = vld [vmem:[#allocation3 + $0xc70] sm:$0xff]
    %v9006 = vld [vmem:[#allocation3 + $0xc78] sm:$0xff]
    %v9007 = vld [vmem:[#allocation3 + $0xc80] sm:$0xff]
    %v9008 = vld [vmem:[#allocation3 + $0xc88] sm:$0xff]
    %v9009 = vld [vmem:[#allocation3 + $0xc90] sm:$0xff]
    %v9010 = vld [vmem:[#allocation3 + $0xc98] sm:$0xff]
    %v9011 = vld [vmem:[#allocation3 + $0xca0] sm:$0xff]
    %v9012 = vld [vmem:[#allocation3 + $0xca8] sm:$0xff]
    %v9013 = vld [vmem:[#allocation3 + $0xcb0] sm:$0xff]
    %v9014 = vld [vmem:[#allocation3 + $0xcb8] sm:$0xff]
    %v9015 = vld [vmem:[#allocation3 + $0xcc0] sm:$0xff]
    %v9016 = vld [vmem:[#allocation3 + $0xcc8] sm:$0xff]
    %v9017 = vld [vmem:[#allocation3 + $0xcd0] sm:$0xff]
    %v9018 = vld [vmem:[#allocation3 + $0xcd8] sm:$0xff]
    %v9019 = vld [vmem:[#allocation3 + $0xce0] sm:$0xff]
    %v9020 = vld [vmem:[#allocation3 + $0xce8] sm:$0xff]
    %v9021 = vld [vmem:[#allocation3 + $0xcf0] sm:$0xff]
    %v9022 = vld [vmem:[#allocation3 + $0xcf8] sm:$0xff]
    %v9023 = vld [vmem:[#allocation3 + $0xd00] sm:$0xff]
    %v9024 = vld [vmem:[#allocation3 + $0xd08] sm:$0xff]
    %v9025 = vld [vmem:[#allocation3 + $0xd10] sm:$0xff]
    %v9026 = vld [vmem:[#allocation3 + $0xd18] sm:$0xff]
    %v9027 = vld [vmem:[#allocation3 + $0xd20] sm:$0xff]
    %v9028 = vld [vmem:[#allocation3 + $0xd28] sm:$0xff]
    %v9029 = vld [vmem:[#allocation3 + $0xd30] sm:$0xff]
    %v9030 = vld [vmem:[#allocation3 + $0xd38] sm:$0xff]
    %v9031 = vld [vmem:[#allocation3 + $0xd40] sm:$0xff]
    %v9032 = vld [vmem:[#allocation3 + $0xd48] sm:$0xff]
    %v9033 = vld [vmem:[#allocation3 + $0xd50] sm:$0xff]
    %v9034 = vld [vmem:[#allocation3 + $0xd58] sm:$0xff]
    %v9035 = vld [vmem:[#allocation3 + $0xd60] sm:$0xff]
    %v9036 = vld [vmem:[#allocation3 + $0xd68] sm:$0xff]
    %v9037 = vld [vmem:[#allocation3 + $0xd70] sm:$0xff]
    %v9038 = vld [vmem:[#allocation3 + $0xd78] sm:$0xff]
    %v9039 = vld [vmem:[#allocation3 + $0xd80] sm:$0xff]
    %v9040 = vld [vmem:[#allocation3 + $0xd88] sm:$0xff]
    %v9041 = vld [vmem:[#allocation3 + $0xd90] sm:$0xff]
    %v9042 = vld [vmem:[#allocation3 + $0xd98] sm:$0xff]
    %v9043 = vld [vmem:[#allocation3 + $0xda0] sm:$0xff]
    %v9044 = vld [vmem:[#allocation3 + $0xda8] sm:$0xff]
    %v9045 = vld [vmem:[#allocation3 + $0xdb0] sm:$0xff]
    %v9046 = vld [vmem:[#allocation3 + $0xdb8] sm:$0xff]
    %v9047 = vld [vmem:[#allocation3 + $0xdc0] sm:$0xff]
    %v9048 = vld [vmem:[#allocation3 + $0xdc8] sm:$0xff]
    %v9049 = vld [vmem:[#allocation3 + $0xdd0] sm:$0xff]
    %v9050 = vld [vmem:[#allocation3 + $0xdd8] sm:$0xff]
    %v9051 = vld [vmem:[#allocation3 + $0xde0] sm:$0xff]
    %v9052 = vld [vmem:[#allocation3 + $0xde8] sm:$0xff]
    %v9053 = vld [vmem:[#allocation3 + $0xdf0] sm:$0xff]
    %v9054 = vld [vmem:[#allocation3 + $0xdf8] sm:$0xff]
    %v9055 = vld [vmem:[#allocation3 + $0xe00] sm:$0xff]
    %v9056 = vld [vmem:[#allocation3 + $0xe08] sm:$0xff]
    %v9057 = vld [vmem:[#allocation3 + $0xe10] sm:$0xff]
    %v9058 = vld [vmem:[#allocation3 + $0xe18] sm:$0xff]
    %v9059 = vld [vmem:[#allocation3 + $0xe20] sm:$0xff]
    %v9060 = vld [vmem:[#allocation3 + $0xe28] sm:$0xff]
    %v9061 = vld [vmem:[#allocation3 + $0xe30] sm:$0xff]
    %v9062 = vld [vmem:[#allocation3 + $0xe38] sm:$0xff]
    %v9063 = vld [vmem:[#allocation3 + $0xe40] sm:$0xff]
    %v9064 = vld [vmem:[#allocation3 + $0xe48] sm:$0xff]
    %v9065 = vld [vmem:[#allocation3 + $0xe50] sm:$0xff]
    %v9066 = vld [vmem:[#allocation3 + $0xe58] sm:$0xff]
    %v9067 = vld [vmem:[#allocation3 + $0xe60] sm:$0xff]
    %v9068 = vld [vmem:[#allocation3 + $0xe68] sm:$0xff]
    %v9069 = vld [vmem:[#allocation3 + $0xe70] sm:$0xff]
    %v9070 = vld [vmem:[#allocation3 + $0xe78] sm:$0xff]
    %v9071 = vld [vmem:[#allocation3 + $0xe80] sm:$0xff]
    %v9072 = vld [vmem:[#allocation3 + $0xe88] sm:$0xff]
    %v9073 = vld [vmem:[#allocation3 + $0xe90] sm:$0xff]
    %v9074 = vld [vmem:[#allocation3 + $0xe98] sm:$0xff]
    %v9075 = vld [vmem:[#allocation3 + $0xea0] sm:$0xff]
    %v9076 = vld [vmem:[#allocation3 + $0xea8] sm:$0xff]
    %v9077 = vld [vmem:[#allocation3 + $0xeb0] sm:$0xff]
    %v9078 = vld [vmem:[#allocation3 + $0xeb8] sm:$0xff]
    %v9079 = vld [vmem:[#allocation3 + $0xec0] sm:$0xff]
    %v9080 = vld [vmem:[#allocation3 + $0xec8] sm:$0xff]
    %v9081 = vld [vmem:[#allocation3 + $0xed0] sm:$0xff]
    %v9082 = vld [vmem:[#allocation3 + $0xed8] sm:$0xff]
    %v9083 = vld [vmem:[#allocation3 + $0xee0] sm:$0xff]
    %v9084 = vld [vmem:[#allocation3 + $0xee8] sm:$0xff]
    %v9085 = vld [vmem:[#allocation3 + $0xef0] sm:$0xff]
    %v9086 = vld [vmem:[#allocation3 + $0xef8] sm:$0xff]
    %v9087 = vld [vmem:[#allocation3 + $0xf00] sm:$0xff]
    %v9088 = vld [vmem:[#allocation3 + $0xf08] sm:$0xff]
    %v9089 = vld [vmem:[#allocation3 + $0xf10] sm:$0xff]
    %v9090 = vld [vmem:[#allocation3 + $0xf18] sm:$0xff]
    %v9091 = vld [vmem:[#allocation3 + $0xf20] sm:$0xff]
    %v9092 = vld [vmem:[#allocation3 + $0xf28] sm:$0xff]
    %v9093 = vld [vmem:[#allocation3 + $0xf30] sm:$0xff]
    %v9094 = vld [vmem:[#allocation3 + $0xf38] sm:$0xff]
    %v9095 = vld [vmem:[#allocation3 + $0xf40] sm:$0xff]
    %v9096 = vld [vmem:[#allocation3 + $0xf48] sm:$0xff]
    %v9097 = vld [vmem:[#allocation3 + $0xf50] sm:$0xff]
    %v9098 = vld [vmem:[#allocation3 + $0xf58] sm:$0xff]
    %v9099 = vld [vmem:[#allocation3 + $0xf60] sm:$0xff]
    %v9100 = vld [vmem:[#allocation3 + $0xf68] sm:$0xff]
    %v9101 = vld [vmem:[#allocation3 + $0xf70] sm:$0xff]
    %v9102 = vld [vmem:[#allocation3 + $0xf78] sm:$0xff]
    %v9103 = vld [vmem:[#allocation3 + $0xf80] sm:$0xff]
    %v9104 = vld [vmem:[#allocation3 + $0xf88] sm:$0xff]
    %v9105 = vld [vmem:[#allocation3 + $0xf90] sm:$0xff]
    %v9106 = vld [vmem:[#allocation3 + $0xf98] sm:$0xff]
    %v9107 = vld [vmem:[#allocation3 + $0xfa0] sm:$0xff]
    %v9108 = vld [vmem:[#allocation3 + $0xfa8] sm:$0xff]
    %v9109 = vld [vmem:[#allocation3 + $0xfb0] sm:$0xff]
    %v9110 = vld [vmem:[#allocation3 + $0xfb8] sm:$0xff]
    %v9111 = vld [vmem:[#allocation3 + $0xfc0] sm:$0xff]
    %v9112 = vld [vmem:[#allocation3 + $0xfc8] sm:$0xff]
    %v9113 = vld [vmem:[#allocation3 + $0xfd0] sm:$0xff]
    %v9114 = vld [vmem:[#allocation3 + $0xfd8] sm:$0xff]
    %v9115 = vld [vmem:[#allocation3 + $0xfe0] sm:$0xff]
    %v9116 = vld [vmem:[#allocation3 + $0xfe8] sm:$0xff]
    %v9117 = vld [vmem:[#allocation3 + $0xff0] sm:$0xff]
    %v9118 = vld [vmem:[#allocation3 + $0xff8] sm:$0xff]
    %v9631 = vunpack.c.l.b16 %v8607
    %v9632 = vunpack.c.h.b16 %v8607
    %v9633 = vunpack.c.l.b16 %v8608
    %v9634 = vunpack.c.h.b16 %v8608
    %v9635 = vunpack.c.l.b16 %v8609
    %v9636 = vunpack.c.h.b16 %v8609
    %v9637 = vunpack.c.l.b16 %v8610
    %v9638 = vunpack.c.h.b16 %v8610
    %v9639 = vunpack.c.l.b16 %v8611
    %v9640 = vunpack.c.h.b16 %v8611
    %v9641 = vunpack.c.l.b16 %v8612
    %v9642 = vunpack.c.h.b16 %v8612
    %v9643 = vunpack.c.l.b16 %v8613
    %v9644 = vunpack.c.h.b16 %v8613
    %v9645 = vunpack.c.l.b16 %v8614
    %v9646 = vunpack.c.h.b16 %v8614
    %v9647 = vunpack.c.l.b16 %v8615
    %v9648 = vunpack.c.h.b16 %v8615
    %v9649 = vunpack.c.l.b16 %v8616
    %v9650 = vunpack.c.h.b16 %v8616
    %v9651 = vunpack.c.l.b16 %v8617
    %v9652 = vunpack.c.h.b16 %v8617
    %v9653 = vunpack.c.l.b16 %v8618
    %v9654 = vunpack.c.h.b16 %v8618
    %v9655 = vunpack.c.l.b16 %v8619
    %v9656 = vunpack.c.h.b16 %v8619
    %v9657 = vunpack.c.l.b16 %v8620
    %v9658 = vunpack.c.h.b16 %v8620
    %v9659 = vunpack.c.l.b16 %v8621
    %v9660 = vunpack.c.h.b16 %v8621
    %v9661 = vunpack.c.l.b16 %v8622
    %v9662 = vunpack.c.h.b16 %v8622
    %v9663 = vunpack.c.l.b16 %v8623
    %v9664 = vunpack.c.h.b16 %v8623
    %v9665 = vunpack.c.l.b16 %v8624
    %v9666 = vunpack.c.h.b16 %v8624
    %v9667 = vunpack.c.l.b16 %v8625
    %v9668 = vunpack.c.h.b16 %v8625
    %v9669 = vunpack.c.l.b16 %v8626
    %v9670 = vunpack.c.h.b16 %v8626
    %v9671 = vunpack.c.l.b16 %v8627
    %v9672 = vunpack.c.h.b16 %v8627
    %v9673 = vunpack.c.l.b16 %v8628
    %v9674 = vunpack.c.h.b16 %v8628
    %v9675 = vunpack.c.l.b16 %v8629
    %v9676 = vunpack.c.h.b16 %v8629
    %v9677 = vunpack.c.l.b16 %v8630
    %v9678 = vunpack.c.h.b16 %v8630
    %v9679 = vunpack.c.l.b16 %v8631
    %v9680 = vunpack.c.h.b16 %v8631
    %v9681 = vunpack.c.l.b16 %v8632
    %v9682 = vunpack.c.h.b16 %v8632
    %v9683 = vunpack.c.l.b16 %v8633
    %v9684 = vunpack.c.h.b16 %v8633
    %v9685 = vunpack.c.l.b16 %v8634
    %v9686 = vunpack.c.h.b16 %v8634
    %v9687 = vunpack.c.l.b16 %v8635
    %v9688 = vunpack.c.h.b16 %v8635
    %v9689 = vunpack.c.l.b16 %v8636
    %v9690 = vunpack.c.h.b16 %v8636
    %v9691 = vunpack.c.l.b16 %v8637
    %v9692 = vunpack.c.h.b16 %v8637
    %v9693 = vunpack.c.l.b16 %v8638
    %v9694 = vunpack.c.h.b16 %v8638
    %v9695 = vunpack.c.l.b16 %v8639
    %v9696 = vunpack.c.h.b16 %v8639
    %v9697 = vunpack.c.l.b16 %v8640
    %v9698 = vunpack.c.h.b16 %v8640
    %v9699 = vunpack.c.l.b16 %v8641
    %v9700 = vunpack.c.h.b16 %v8641
    %v9701 = vunpack.c.l.b16 %v8642
    %v9702 = vunpack.c.h.b16 %v8642
    %v9703 = vunpack.c.l.b16 %v8643
    %v9704 = vunpack.c.h.b16 %v8643
    %v9705 = vunpack.c.l.b16 %v8644
    %v9706 = vunpack.c.h.b16 %v8644
    %v9707 = vunpack.c.l.b16 %v8645
    %v9708 = vunpack.c.h.b16 %v8645
    %v9709 = vunpack.c.l.b16 %v8646
    %v9710 = vunpack.c.h.b16 %v8646
    %v9711 = vunpack.c.l.b16 %v8647
    %v9712 = vunpack.c.h.b16 %v8647
    %v9713 = vunpack.c.l.b16 %v8648
    %v9714 = vunpack.c.h.b16 %v8648
    %v9715 = vunpack.c.l.b16 %v8649
    %v9716 = vunpack.c.h.b16 %v8649
    %v9717 = vunpack.c.l.b16 %v8650
    %v9718 = vunpack.c.h.b16 %v8650
    %v9719 = vunpack.c.l.b16 %v8651
    %v9720 = vunpack.c.h.b16 %v8651
    %v9721 = vunpack.c.l.b16 %v8652
    %v9722 = vunpack.c.h.b16 %v8652
    %v9723 = vunpack.c.l.b16 %v8653
    %v9724 = vunpack.c.h.b16 %v8653
    %v9725 = vunpack.c.l.b16 %v8654
    %v9726 = vunpack.c.h.b16 %v8654
    %v9727 = vunpack.c.l.b16 %v8655
    %v9728 = vunpack.c.h.b16 %v8655
    %v9729 = vunpack.c.l.b16 %v8656
    %v9730 = vunpack.c.h.b16 %v8656
    %v9731 = vunpack.c.l.b16 %v8657
    %v9732 = vunpack.c.h.b16 %v8657
    %v9733 = vunpack.c.l.b16 %v8658
    %v9734 = vunpack.c.h.b16 %v8658
    %v9735 = vunpack.c.l.b16 %v8659
    %v9736 = vunpack.c.h.b16 %v8659
    %v9737 = vunpack.c.l.b16 %v8660
    %v9738 = vunpack.c.h.b16 %v8660
    %v9739 = vunpack.c.l.b16 %v8661
    %v9740 = vunpack.c.h.b16 %v8661
    %v9741 = vunpack.c.l.b16 %v8662
    %v9742 = vunpack.c.h.b16 %v8662
    %v9743 = vunpack.c.l.b16 %v8663
    %v9744 = vunpack.c.h.b16 %v8663
    %v9745 = vunpack.c.l.b16 %v8664
    %v9746 = vunpack.c.h.b16 %v8664
    %v9747 = vunpack.c.l.b16 %v8665
    %v9748 = vunpack.c.h.b16 %v8665
    %v9749 = vunpack.c.l.b16 %v8666
    %v9750 = vunpack.c.h.b16 %v8666
    %v9751 = vunpack.c.l.b16 %v8667
    %v9752 = vunpack.c.h.b16 %v8667
    %v9753 = vunpack.c.l.b16 %v8668
    %v9754 = vunpack.c.h.b16 %v8668
    %v9755 = vunpack.c.l.b16 %v8669
    %v9756 = vunpack.c.h.b16 %v8669
    %v9757 = vunpack.c.l.b16 %v8670
    %v9758 = vunpack.c.h.b16 %v8670
    %v9759 = vunpack.c.l.b16 %v8671
    %v9760 = vunpack.c.h.b16 %v8671
    %v9761 = vunpack.c.l.b16 %v8672
    %v9762 = vunpack.c.h.b16 %v8672
    %v9763 = vunpack.c.l.b16 %v8673
    %v9764 = vunpack.c.h.b16 %v8673
    %v9765 = vunpack.c.l.b16 %v8674
    %v9766 = vunpack.c.h.b16 %v8674
    %v9767 = vunpack.c.l.b16 %v8675
    %v9768 = vunpack.c.h.b16 %v8675
    %v9769 = vunpack.c.l.b16 %v8676
    %v9770 = vunpack.c.h.b16 %v8676
    %v9771 = vunpack.c.l.b16 %v8677
    %v9772 = vunpack.c.h.b16 %v8677
    %v9773 = vunpack.c.l.b16 %v8678
    %v9774 = vunpack.c.h.b16 %v8678
    %v9775 = vunpack.c.l.b16 %v8679
    %v9776 = vunpack.c.h.b16 %v8679
    %v9777 = vunpack.c.l.b16 %v8680
    %v9778 = vunpack.c.h.b16 %v8680
    %v9779 = vunpack.c.l.b16 %v8681
    %v9780 = vunpack.c.h.b16 %v8681
    %v9781 = vunpack.c.l.b16 %v8682
    %v9782 = vunpack.c.h.b16 %v8682
    %v9783 = vunpack.c.l.b16 %v8683
    %v9784 = vunpack.c.h.b16 %v8683
    %v9785 = vunpack.c.l.b16 %v8684
    %v9786 = vunpack.c.h.b16 %v8684
    %v9787 = vunpack.c.l.b16 %v8685
    %v9788 = vunpack.c.h.b16 %v8685
    %v9789 = vunpack.c.l.b16 %v8686
    %v9790 = vunpack.c.h.b16 %v8686
    %v9791 = vunpack.c.l.b16 %v8687
    %v9792 = vunpack.c.h.b16 %v8687
    %v9793 = vunpack.c.l.b16 %v8688
    %v9794 = vunpack.c.h.b16 %v8688
    %v9795 = vunpack.c.l.b16 %v8689
    %v9796 = vunpack.c.h.b16 %v8689
    %v9797 = vunpack.c.l.b16 %v8690
    %v9798 = vunpack.c.h.b16 %v8690
    %v9799 = vunpack.c.l.b16 %v8691
    %v9800 = vunpack.c.h.b16 %v8691
    %v9801 = vunpack.c.l.b16 %v8692
    %v9802 = vunpack.c.h.b16 %v8692
    %v9803 = vunpack.c.l.b16 %v8693
    %v9804 = vunpack.c.h.b16 %v8693
    %v9805 = vunpack.c.l.b16 %v8694
    %v9806 = vunpack.c.h.b16 %v8694
    %v9807 = vunpack.c.l.b16 %v8695
    %v9808 = vunpack.c.h.b16 %v8695
    %v9809 = vunpack.c.l.b16 %v8696
    %v9810 = vunpack.c.h.b16 %v8696
    %v9811 = vunpack.c.l.b16 %v8697
    %v9812 = vunpack.c.h.b16 %v8697
    %v9813 = vunpack.c.l.b16 %v8698
    %v9814 = vunpack.c.h.b16 %v8698
    %v9815 = vunpack.c.l.b16 %v8699
    %v9816 = vunpack.c.h.b16 %v8699
    %v9817 = vunpack.c.l.b16 %v8700
    %v9818 = vunpack.c.h.b16 %v8700
    %v9819 = vunpack.c.l.b16 %v8701
    %v9820 = vunpack.c.h.b16 %v8701
    %v9821 = vunpack.c.l.b16 %v8702
    %v9822 = vunpack.c.h.b16 %v8702
    %v9823 = vunpack.c.l.b16 %v8703
    %v9824 = vunpack.c.h.b16 %v8703
    %v9825 = vunpack.c.l.b16 %v8704
    %v9826 = vunpack.c.h.b16 %v8704
    %v9827 = vunpack.c.l.b16 %v8705
    %v9828 = vunpack.c.h.b16 %v8705
    %v9829 = vunpack.c.l.b16 %v8706
    %v9830 = vunpack.c.h.b16 %v8706
    %v9831 = vunpack.c.l.b16 %v8707
    %v9832 = vunpack.c.h.b16 %v8707
    %v9833 = vunpack.c.l.b16 %v8708
    %v9834 = vunpack.c.h.b16 %v8708
    %v9835 = vunpack.c.l.b16 %v8709
    %v9836 = vunpack.c.h.b16 %v8709
    %v9837 = vunpack.c.l.b16 %v8710
    %v9838 = vunpack.c.h.b16 %v8710
    %v9839 = vunpack.c.l.b16 %v8711
    %v9840 = vunpack.c.h.b16 %v8711
    %v9841 = vunpack.c.l.b16 %v8712
    %v9842 = vunpack.c.h.b16 %v8712
    %v9843 = vunpack.c.l.b16 %v8713
    %v9844 = vunpack.c.h.b16 %v8713
    %v9845 = vunpack.c.l.b16 %v8714
    %v9846 = vunpack.c.h.b16 %v8714
    %v9847 = vunpack.c.l.b16 %v8715
    %v9848 = vunpack.c.h.b16 %v8715
    %v9849 = vunpack.c.l.b16 %v8716
    %v9850 = vunpack.c.h.b16 %v8716
    %v9851 = vunpack.c.l.b16 %v8717
    %v9852 = vunpack.c.h.b16 %v8717
    %v9853 = vunpack.c.l.b16 %v8718
    %v9854 = vunpack.c.h.b16 %v8718
    %v9855 = vunpack.c.l.b16 %v8719
    %v9856 = vunpack.c.h.b16 %v8719
    %v9857 = vunpack.c.l.b16 %v8720
    %v9858 = vunpack.c.h.b16 %v8720
    %v9859 = vunpack.c.l.b16 %v8721
    %v9860 = vunpack.c.h.b16 %v8721
    %v9861 = vunpack.c.l.b16 %v8722
    %v9862 = vunpack.c.h.b16 %v8722
    %v9863 = vunpack.c.l.b16 %v8723
    %v9864 = vunpack.c.h.b16 %v8723
    %v9865 = vunpack.c.l.b16 %v8724
    %v9866 = vunpack.c.h.b16 %v8724
    %v9867 = vunpack.c.l.b16 %v8725
    %v9868 = vunpack.c.h.b16 %v8725
    %v9869 = vunpack.c.l.b16 %v8726
    %v9870 = vunpack.c.h.b16 %v8726
    %v9871 = vunpack.c.l.b16 %v8727
    %v9872 = vunpack.c.h.b16 %v8727
    %v9873 = vunpack.c.l.b16 %v8728
    %v9874 = vunpack.c.h.b16 %v8728
    %v9875 = vunpack.c.l.b16 %v8729
    %v9876 = vunpack.c.h.b16 %v8729
    %v9877 = vunpack.c.l.b16 %v8730
    %v9878 = vunpack.c.h.b16 %v8730
    %v9879 = vunpack.c.l.b16 %v8731
    %v9880 = vunpack.c.h.b16 %v8731
    %v9881 = vunpack.c.l.b16 %v8732
    %v9882 = vunpack.c.h.b16 %v8732
    %v9883 = vunpack.c.l.b16 %v8733
    %v9884 = vunpack.c.h.b16 %v8733
    %v9885 = vunpack.c.l.b16 %v8734
    %v9886 = vunpack.c.h.b16 %v8734
    %v9887 = vunpack.c.l.b16 %v8735
    %v9888 = vunpack.c.h.b16 %v8735
    %v9889 = vunpack.c.l.b16 %v8736
    %v9890 = vunpack.c.h.b16 %v8736
    %v9891 = vunpack.c.l.b16 %v8737
    %v9892 = vunpack.c.h.b16 %v8737
    %v9893 = vunpack.c.l.b16 %v8738
    %v9894 = vunpack.c.h.b16 %v8738
    %v9895 = vunpack.c.l.b16 %v8739
    %v9896 = vunpack.c.h.b16 %v8739
    %v9897 = vunpack.c.l.b16 %v8740
    %v9898 = vunpack.c.h.b16 %v8740
    %v9899 = vunpack.c.l.b16 %v8741
    %v9900 = vunpack.c.h.b16 %v8741
    %v9901 = vunpack.c.l.b16 %v8742
    %v9902 = vunpack.c.h.b16 %v8742
    %v9903 = vunpack.c.l.b16 %v8743
    %v9904 = vunpack.c.h.b16 %v8743
    %v9905 = vunpack.c.l.b16 %v8744
    %v9906 = vunpack.c.h.b16 %v8744
    %v9907 = vunpack.c.l.b16 %v8745
    %v9908 = vunpack.c.h.b16 %v8745
    %v9909 = vunpack.c.l.b16 %v8746
    %v9910 = vunpack.c.h.b16 %v8746
    %v9911 = vunpack.c.l.b16 %v8747
    %v9912 = vunpack.c.h.b16 %v8747
    %v9913 = vunpack.c.l.b16 %v8748
    %v9914 = vunpack.c.h.b16 %v8748
    %v9915 = vunpack.c.l.b16 %v8749
    %v9916 = vunpack.c.h.b16 %v8749
    %v9917 = vunpack.c.l.b16 %v8750
    %v9918 = vunpack.c.h.b16 %v8750
    %v9919 = vunpack.c.l.b16 %v8751
    %v9920 = vunpack.c.h.b16 %v8751
    %v9921 = vunpack.c.l.b16 %v8752
    %v9922 = vunpack.c.h.b16 %v8752
    %v9923 = vunpack.c.l.b16 %v8753
    %v9924 = vunpack.c.h.b16 %v8753
    %v9925 = vunpack.c.l.b16 %v8754
    %v9926 = vunpack.c.h.b16 %v8754
    %v9927 = vunpack.c.l.b16 %v8755
    %v9928 = vunpack.c.h.b16 %v8755
    %v9929 = vunpack.c.l.b16 %v8756
    %v9930 = vunpack.c.h.b16 %v8756
    %v9931 = vunpack.c.l.b16 %v8757
    %v9932 = vunpack.c.h.b16 %v8757
    %v9933 = vunpack.c.l.b16 %v8758
    %v9934 = vunpack.c.h.b16 %v8758
    %v9935 = vunpack.c.l.b16 %v8759
    %v9936 = vunpack.c.h.b16 %v8759
    %v9937 = vunpack.c.l.b16 %v8760
    %v9938 = vunpack.c.h.b16 %v8760
    %v9939 = vunpack.c.l.b16 %v8761
    %v9940 = vunpack.c.h.b16 %v8761
    %v9941 = vunpack.c.l.b16 %v8762
    %v9942 = vunpack.c.h.b16 %v8762
    %v9943 = vunpack.c.l.b16 %v8763
    %v9944 = vunpack.c.h.b16 %v8763
    %v9945 = vunpack.c.l.b16 %v8764
    %v9946 = vunpack.c.h.b16 %v8764
    %v9947 = vunpack.c.l.b16 %v8765
    %v9948 = vunpack.c.h.b16 %v8765
    %v9949 = vunpack.c.l.b16 %v8766
    %v9950 = vunpack.c.h.b16 %v8766
    %v9951 = vunpack.c.l.b16 %v8767
    %v9952 = vunpack.c.h.b16 %v8767
    %v9953 = vunpack.c.l.b16 %v8768
    %v9954 = vunpack.c.h.b16 %v8768
    %v9955 = vunpack.c.l.b16 %v8769
    %v9956 = vunpack.c.h.b16 %v8769
    %v9957 = vunpack.c.l.b16 %v8770
    %v9958 = vunpack.c.h.b16 %v8770
    %v9959 = vunpack.c.l.b16 %v8771
    %v9960 = vunpack.c.h.b16 %v8771
    %v9961 = vunpack.c.l.b16 %v8772
    %v9962 = vunpack.c.h.b16 %v8772
    %v9963 = vunpack.c.l.b16 %v8773
    %v9964 = vunpack.c.h.b16 %v8773
    %v9965 = vunpack.c.l.b16 %v8774
    %v9966 = vunpack.c.h.b16 %v8774
    %v9967 = vunpack.c.l.b16 %v8775
    %v9968 = vunpack.c.h.b16 %v8775
    %v9969 = vunpack.c.l.b16 %v8776
    %v9970 = vunpack.c.h.b16 %v8776
    %v9971 = vunpack.c.l.b16 %v8777
    %v9972 = vunpack.c.h.b16 %v8777
    %v9973 = vunpack.c.l.b16 %v8778
    %v9974 = vunpack.c.h.b16 %v8778
    %v9975 = vunpack.c.l.b16 %v8779
    %v9976 = vunpack.c.h.b16 %v8779
    %v9977 = vunpack.c.l.b16 %v8780
    %v9978 = vunpack.c.h.b16 %v8780
    %v9979 = vunpack.c.l.b16 %v8781
    %v9980 = vunpack.c.h.b16 %v8781
    %v9981 = vunpack.c.l.b16 %v8782
    %v9982 = vunpack.c.h.b16 %v8782
    %v9983 = vunpack.c.l.b16 %v8783
    %v9984 = vunpack.c.h.b16 %v8783
    %v9985 = vunpack.c.l.b16 %v8784
    %v9986 = vunpack.c.h.b16 %v8784
    %v9987 = vunpack.c.l.b16 %v8785
    %v9988 = vunpack.c.h.b16 %v8785
    %v9989 = vunpack.c.l.b16 %v8786
    %v9990 = vunpack.c.h.b16 %v8786
    %v9991 = vunpack.c.l.b16 %v8787
    %v9992 = vunpack.c.h.b16 %v8787
    %v9993 = vunpack.c.l.b16 %v8788
    %v9994 = vunpack.c.h.b16 %v8788
    %v9995 = vunpack.c.l.b16 %v8789
    %v9996 = vunpack.c.h.b16 %v8789
    %v9997 = vunpack.c.l.b16 %v8790
    %v9998 = vunpack.c.h.b16 %v8790
    %v9999 = vunpack.c.l.b16 %v8791
    %v10000 = vunpack.c.h.b16 %v8791
    %v10001 = vunpack.c.l.b16 %v8792
    %v10002 = vunpack.c.h.b16 %v8792
    %v10003 = vunpack.c.l.b16 %v8793
    %v10004 = vunpack.c.h.b16 %v8793
    %v10005 = vunpack.c.l.b16 %v8794
    %v10006 = vunpack.c.h.b16 %v8794
    %v10007 = vunpack.c.l.b16 %v8795
    %v10008 = vunpack.c.h.b16 %v8795
    %v10009 = vunpack.c.l.b16 %v8796
    %v10010 = vunpack.c.h.b16 %v8796
    %v10011 = vunpack.c.l.b16 %v8797
    %v10012 = vunpack.c.h.b16 %v8797
    %v10013 = vunpack.c.l.b16 %v8798
    %v10014 = vunpack.c.h.b16 %v8798
    %v10015 = vunpack.c.l.b16 %v8799
    %v10016 = vunpack.c.h.b16 %v8799
    %v10017 = vunpack.c.l.b16 %v8800
    %v10018 = vunpack.c.h.b16 %v8800
    %v10019 = vunpack.c.l.b16 %v8801
    %v10020 = vunpack.c.h.b16 %v8801
    %v10021 = vunpack.c.l.b16 %v8802
    %v10022 = vunpack.c.h.b16 %v8802
    %v10023 = vunpack.c.l.b16 %v8803
    %v10024 = vunpack.c.h.b16 %v8803
    %v10025 = vunpack.c.l.b16 %v8804
    %v10026 = vunpack.c.h.b16 %v8804
    %v10027 = vunpack.c.l.b16 %v8805
    %v10028 = vunpack.c.h.b16 %v8805
    %v10029 = vunpack.c.l.b16 %v8806
    %v10030 = vunpack.c.h.b16 %v8806
    %v10031 = vunpack.c.l.b16 %v8807
    %v10032 = vunpack.c.h.b16 %v8807
    %v10033 = vunpack.c.l.b16 %v8808
    %v10034 = vunpack.c.h.b16 %v8808
    %v10035 = vunpack.c.l.b16 %v8809
    %v10036 = vunpack.c.h.b16 %v8809
    %v10037 = vunpack.c.l.b16 %v8810
    %v10038 = vunpack.c.h.b16 %v8810
    %v10039 = vunpack.c.l.b16 %v8811
    %v10040 = vunpack.c.h.b16 %v8811
    %v10041 = vunpack.c.l.b16 %v8812
    %v10042 = vunpack.c.h.b16 %v8812
    %v10043 = vunpack.c.l.b16 %v8813
    %v10044 = vunpack.c.h.b16 %v8813
    %v10045 = vunpack.c.l.b16 %v8814
    %v10046 = vunpack.c.h.b16 %v8814
    %v10047 = vunpack.c.l.b16 %v8815
    %v10048 = vunpack.c.h.b16 %v8815
    %v10049 = vunpack.c.l.b16 %v8816
    %v10050 = vunpack.c.h.b16 %v8816
    %v10051 = vunpack.c.l.b16 %v8817
    %v10052 = vunpack.c.h.b16 %v8817
    %v10053 = vunpack.c.l.b16 %v8818
    %v10054 = vunpack.c.h.b16 %v8818
    %v10055 = vunpack.c.l.b16 %v8819
    %v10056 = vunpack.c.h.b16 %v8819
    %v10057 = vunpack.c.l.b16 %v8820
    %v10058 = vunpack.c.h.b16 %v8820
    %v10059 = vunpack.c.l.b16 %v8821
    %v10060 = vunpack.c.h.b16 %v8821
    %v10061 = vunpack.c.l.b16 %v8822
    %v10062 = vunpack.c.h.b16 %v8822
    %v10063 = vunpack.c.l.b16 %v8823
    %v10064 = vunpack.c.h.b16 %v8823
    %v10065 = vunpack.c.l.b16 %v8824
    %v10066 = vunpack.c.h.b16 %v8824
    %v10067 = vunpack.c.l.b16 %v8825
    %v10068 = vunpack.c.h.b16 %v8825
    %v10069 = vunpack.c.l.b16 %v8826
    %v10070 = vunpack.c.h.b16 %v8826
    %v10071 = vunpack.c.l.b16 %v8827
    %v10072 = vunpack.c.h.b16 %v8827
    %v10073 = vunpack.c.l.b16 %v8828
    %v10074 = vunpack.c.h.b16 %v8828
    %v10075 = vunpack.c.l.b16 %v8829
    %v10076 = vunpack.c.h.b16 %v8829
    %v10077 = vunpack.c.l.b16 %v8830
    %v10078 = vunpack.c.h.b16 %v8830
    %v10079 = vunpack.c.l.b16 %v8831
    %v10080 = vunpack.c.h.b16 %v8831
    %v10081 = vunpack.c.l.b16 %v8832
    %v10082 = vunpack.c.h.b16 %v8832
    %v10083 = vunpack.c.l.b16 %v8833
    %v10084 = vunpack.c.h.b16 %v8833
    %v10085 = vunpack.c.l.b16 %v8834
    %v10086 = vunpack.c.h.b16 %v8834
    %v10087 = vunpack.c.l.b16 %v8835
    %v10088 = vunpack.c.h.b16 %v8835
    %v10089 = vunpack.c.l.b16 %v8836
    %v10090 = vunpack.c.h.b16 %v8836
    %v10091 = vunpack.c.l.b16 %v8837
    %v10092 = vunpack.c.h.b16 %v8837
    %v10093 = vunpack.c.l.b16 %v8838
    %v10094 = vunpack.c.h.b16 %v8838
    %v10095 = vunpack.c.l.b16 %v8839
    %v10096 = vunpack.c.h.b16 %v8839
    %v10097 = vunpack.c.l.b16 %v8840
    %v10098 = vunpack.c.h.b16 %v8840
    %v10099 = vunpack.c.l.b16 %v8841
    %v10100 = vunpack.c.h.b16 %v8841
    %v10101 = vunpack.c.l.b16 %v8842
    %v10102 = vunpack.c.h.b16 %v8842
    %v10103 = vunpack.c.l.b16 %v8843
    %v10104 = vunpack.c.h.b16 %v8843
    %v10105 = vunpack.c.l.b16 %v8844
    %v10106 = vunpack.c.h.b16 %v8844
    %v10107 = vunpack.c.l.b16 %v8845
    %v10108 = vunpack.c.h.b16 %v8845
    %v10109 = vunpack.c.l.b16 %v8846
    %v10110 = vunpack.c.h.b16 %v8846
    %v10111 = vunpack.c.l.b16 %v8847
    %v10112 = vunpack.c.h.b16 %v8847
    %v10113 = vunpack.c.l.b16 %v8848
    %v10114 = vunpack.c.h.b16 %v8848
    %v10115 = vunpack.c.l.b16 %v8849
    %v10116 = vunpack.c.h.b16 %v8849
    %v10117 = vunpack.c.l.b16 %v8850
    %v10118 = vunpack.c.h.b16 %v8850
    %v10119 = vunpack.c.l.b16 %v8851
    %v10120 = vunpack.c.h.b16 %v8851
    %v10121 = vunpack.c.l.b16 %v8852
    %v10122 = vunpack.c.h.b16 %v8852
    %v10123 = vunpack.c.l.b16 %v8853
    %v10124 = vunpack.c.h.b16 %v8853
    %v10125 = vunpack.c.l.b16 %v8854
    %v10126 = vunpack.c.h.b16 %v8854
    %v10127 = vunpack.c.l.b16 %v8855
    %v10128 = vunpack.c.h.b16 %v8855
    %v10129 = vunpack.c.l.b16 %v8856
    %v10130 = vunpack.c.h.b16 %v8856
    %v10131 = vunpack.c.l.b16 %v8857
    %v10132 = vunpack.c.h.b16 %v8857
    %v10133 = vunpack.c.l.b16 %v8858
    %v10134 = vunpack.c.h.b16 %v8858
    %v10135 = vunpack.c.l.b16 %v8859
    %v10136 = vunpack.c.h.b16 %v8859
    %v10137 = vunpack.c.l.b16 %v8860
    %v10138 = vunpack.c.h.b16 %v8860
    %v10139 = vunpack.c.l.b16 %v8861
    %v10140 = vunpack.c.h.b16 %v8861
    %v10141 = vunpack.c.l.b16 %v8862
    %v10142 = vunpack.c.h.b16 %v8862
    %v10143 = vunpack.c.l.b16 %v8863
    %v10144 = vunpack.c.h.b16 %v8863
    %v10145 = vunpack.c.l.b16 %v8864
    %v10146 = vunpack.c.h.b16 %v8864
    %v10147 = vunpack.c.l.b16 %v8865
    %v10148 = vunpack.c.h.b16 %v8865
    %v10149 = vunpack.c.l.b16 %v8866
    %v10150 = vunpack.c.h.b16 %v8866
    %v10151 = vunpack.c.l.b16 %v8867
    %v10152 = vunpack.c.h.b16 %v8867
    %v10153 = vunpack.c.l.b16 %v8868
    %v10154 = vunpack.c.h.b16 %v8868
    %v10155 = vunpack.c.l.b16 %v8869
    %v10156 = vunpack.c.h.b16 %v8869
    %v10157 = vunpack.c.l.b16 %v8870
    %v10158 = vunpack.c.h.b16 %v8870
    %v10159 = vunpack.c.l.b16 %v8871
    %v10160 = vunpack.c.h.b16 %v8871
    %v10161 = vunpack.c.l.b16 %v8872
    %v10162 = vunpack.c.h.b16 %v8872
    %v10163 = vunpack.c.l.b16 %v8873
    %v10164 = vunpack.c.h.b16 %v8873
    %v10165 = vunpack.c.l.b16 %v8874
    %v10166 = vunpack.c.h.b16 %v8874
    %v10167 = vunpack.c.l.b16 %v8875
    %v10168 = vunpack.c.h.b16 %v8875
    %v10169 = vunpack.c.l.b16 %v8876
    %v10170 = vunpack.c.h.b16 %v8876
    %v10171 = vunpack.c.l.b16 %v8877
    %v10172 = vunpack.c.h.b16 %v8877
    %v10173 = vunpack.c.l.b16 %v8878
    %v10174 = vunpack.c.h.b16 %v8878
    %v10175 = vunpack.c.l.b16 %v8879
    %v10176 = vunpack.c.h.b16 %v8879
    %v10177 = vunpack.c.l.b16 %v8880
    %v10178 = vunpack.c.h.b16 %v8880
    %v10179 = vunpack.c.l.b16 %v8881
    %v10180 = vunpack.c.h.b16 %v8881
    %v10181 = vunpack.c.l.b16 %v8882
    %v10182 = vunpack.c.h.b16 %v8882
    %v10183 = vunpack.c.l.b16 %v8883
    %v10184 = vunpack.c.h.b16 %v8883
    %v10185 = vunpack.c.l.b16 %v8884
    %v10186 = vunpack.c.h.b16 %v8884
    %v10187 = vunpack.c.l.b16 %v8885
    %v10188 = vunpack.c.h.b16 %v8885
    %v10189 = vunpack.c.l.b16 %v8886
    %v10190 = vunpack.c.h.b16 %v8886
    %v10191 = vunpack.c.l.b16 %v8887
    %v10192 = vunpack.c.h.b16 %v8887
    %v10193 = vunpack.c.l.b16 %v8888
    %v10194 = vunpack.c.h.b16 %v8888
    %v10195 = vunpack.c.l.b16 %v8889
    %v10196 = vunpack.c.h.b16 %v8889
    %v10197 = vunpack.c.l.b16 %v8890
    %v10198 = vunpack.c.h.b16 %v8890
    %v10199 = vunpack.c.l.b16 %v8891
    %v10200 = vunpack.c.h.b16 %v8891
    %v10201 = vunpack.c.l.b16 %v8892
    %v10202 = vunpack.c.h.b16 %v8892
    %v10203 = vunpack.c.l.b16 %v8893
    %v10204 = vunpack.c.h.b16 %v8893
    %v10205 = vunpack.c.l.b16 %v8894
    %v10206 = vunpack.c.h.b16 %v8894
    %v10207 = vunpack.c.l.b16 %v8895
    %v10208 = vunpack.c.h.b16 %v8895
    %v10209 = vunpack.c.l.b16 %v8896
    %v10210 = vunpack.c.h.b16 %v8896
    %v10211 = vunpack.c.l.b16 %v8897
    %v10212 = vunpack.c.h.b16 %v8897
    %v10213 = vunpack.c.l.b16 %v8898
    %v10214 = vunpack.c.h.b16 %v8898
    %v10215 = vunpack.c.l.b16 %v8899
    %v10216 = vunpack.c.h.b16 %v8899
    %v10217 = vunpack.c.l.b16 %v8900
    %v10218 = vunpack.c.h.b16 %v8900
    %v10219 = vunpack.c.l.b16 %v8901
    %v10220 = vunpack.c.h.b16 %v8901
    %v10221 = vunpack.c.l.b16 %v8902
    %v10222 = vunpack.c.h.b16 %v8902
    %v10223 = vunpack.c.l.b16 %v8903
    %v10224 = vunpack.c.h.b16 %v8903
    %v10225 = vunpack.c.l.b16 %v8904
    %v10226 = vunpack.c.h.b16 %v8904
    %v10227 = vunpack.c.l.b16 %v8905
    %v10228 = vunpack.c.h.b16 %v8905
    %v10229 = vunpack.c.l.b16 %v8906
    %v10230 = vunpack.c.h.b16 %v8906
    %v10231 = vunpack.c.l.b16 %v8907
    %v10232 = vunpack.c.h.b16 %v8907
    %v10233 = vunpack.c.l.b16 %v8908
    %v10234 = vunpack.c.h.b16 %v8908
    %v10235 = vunpack.c.l.b16 %v8909
    %v10236 = vunpack.c.h.b16 %v8909
    %v10237 = vunpack.c.l.b16 %v8910
    %v10238 = vunpack.c.h.b16 %v8910
    %v10239 = vunpack.c.l.b16 %v8911
    %v10240 = vunpack.c.h.b16 %v8911
    %v10241 = vunpack.c.l.b16 %v8912
    %v10242 = vunpack.c.h.b16 %v8912
    %v10243 = vunpack.c.l.b16 %v8913
    %v10244 = vunpack.c.h.b16 %v8913
    %v10245 = vunpack.c.l.b16 %v8914
    %v10246 = vunpack.c.h.b16 %v8914
    %v10247 = vunpack.c.l.b16 %v8915
    %v10248 = vunpack.c.h.b16 %v8915
    %v10249 = vunpack.c.l.b16 %v8916
    %v10250 = vunpack.c.h.b16 %v8916
    %v10251 = vunpack.c.l.b16 %v8917
    %v10252 = vunpack.c.h.b16 %v8917
    %v10253 = vunpack.c.l.b16 %v8918
    %v10254 = vunpack.c.h.b16 %v8918
    %v10255 = vunpack.c.l.b16 %v8919
    %v10256 = vunpack.c.h.b16 %v8919
    %v10257 = vunpack.c.l.b16 %v8920
    %v10258 = vunpack.c.h.b16 %v8920
    %v10259 = vunpack.c.l.b16 %v8921
    %v10260 = vunpack.c.h.b16 %v8921
    %v10261 = vunpack.c.l.b16 %v8922
    %v10262 = vunpack.c.h.b16 %v8922
    %v10263 = vunpack.c.l.b16 %v8923
    %v10264 = vunpack.c.h.b16 %v8923
    %v10265 = vunpack.c.l.b16 %v8924
    %v10266 = vunpack.c.h.b16 %v8924
    %v10267 = vunpack.c.l.b16 %v8925
    %v10268 = vunpack.c.h.b16 %v8925
    %v10269 = vunpack.c.l.b16 %v8926
    %v10270 = vunpack.c.h.b16 %v8926
    %v10271 = vunpack.c.l.b16 %v8927
    %v10272 = vunpack.c.h.b16 %v8927
    %v10273 = vunpack.c.l.b16 %v8928
    %v10274 = vunpack.c.h.b16 %v8928
    %v10275 = vunpack.c.l.b16 %v8929
    %v10276 = vunpack.c.h.b16 %v8929
    %v10277 = vunpack.c.l.b16 %v8930
    %v10278 = vunpack.c.h.b16 %v8930
    %v10279 = vunpack.c.l.b16 %v8931
    %v10280 = vunpack.c.h.b16 %v8931
    %v10281 = vunpack.c.l.b16 %v8932
    %v10282 = vunpack.c.h.b16 %v8932
    %v10283 = vunpack.c.l.b16 %v8933
    %v10284 = vunpack.c.h.b16 %v8933
    %v10285 = vunpack.c.l.b16 %v8934
    %v10286 = vunpack.c.h.b16 %v8934
    %v10287 = vunpack.c.l.b16 %v8935
    %v10288 = vunpack.c.h.b16 %v8935
    %v10289 = vunpack.c.l.b16 %v8936
    %v10290 = vunpack.c.h.b16 %v8936
    %v10291 = vunpack.c.l.b16 %v8937
    %v10292 = vunpack.c.h.b16 %v8937
    %v10293 = vunpack.c.l.b16 %v8938
    %v10294 = vunpack.c.h.b16 %v8938
    %v10295 = vunpack.c.l.b16 %v8939
    %v10296 = vunpack.c.h.b16 %v8939
    %v10297 = vunpack.c.l.b16 %v8940
    %v10298 = vunpack.c.h.b16 %v8940
    %v10299 = vunpack.c.l.b16 %v8941
    %v10300 = vunpack.c.h.b16 %v8941
    %v10301 = vunpack.c.l.b16 %v8942
    %v10302 = vunpack.c.h.b16 %v8942
    %v10303 = vunpack.c.l.b16 %v8943
    %v10304 = vunpack.c.h.b16 %v8943
    %v10305 = vunpack.c.l.b16 %v8944
    %v10306 = vunpack.c.h.b16 %v8944
    %v10307 = vunpack.c.l.b16 %v8945
    %v10308 = vunpack.c.h.b16 %v8945
    %v10309 = vunpack.c.l.b16 %v8946
    %v10310 = vunpack.c.h.b16 %v8946
    %v10311 = vunpack.c.l.b16 %v8947
    %v10312 = vunpack.c.h.b16 %v8947
    %v10313 = vunpack.c.l.b16 %v8948
    %v10314 = vunpack.c.h.b16 %v8948
    %v10315 = vunpack.c.l.b16 %v8949
    %v10316 = vunpack.c.h.b16 %v8949
    %v10317 = vunpack.c.l.b16 %v8950
    %v10318 = vunpack.c.h.b16 %v8950
    %v10319 = vunpack.c.l.b16 %v8951
    %v10320 = vunpack.c.h.b16 %v8951
    %v10321 = vunpack.c.l.b16 %v8952
    %v10322 = vunpack.c.h.b16 %v8952
    %v10323 = vunpack.c.l.b16 %v8953
    %v10324 = vunpack.c.h.b16 %v8953
    %v10325 = vunpack.c.l.b16 %v8954
    %v10326 = vunpack.c.h.b16 %v8954
    %v10327 = vunpack.c.l.b16 %v8955
    %v10328 = vunpack.c.h.b16 %v8955
    %v10329 = vunpack.c.l.b16 %v8956
    %v10330 = vunpack.c.h.b16 %v8956
    %v10331 = vunpack.c.l.b16 %v8957
    %v10332 = vunpack.c.h.b16 %v8957
    %v10333 = vunpack.c.l.b16 %v8958
    %v10334 = vunpack.c.h.b16 %v8958
    %v10335 = vunpack.c.l.b16 %v8959
    %v10336 = vunpack.c.h.b16 %v8959
    %v10337 = vunpack.c.l.b16 %v8960
    %v10338 = vunpack.c.h.b16 %v8960
    %v10339 = vunpack.c.l.b16 %v8961
    %v10340 = vunpack.c.h.b16 %v8961
    %v10341 = vunpack.c.l.b16 %v8962
    %v10342 = vunpack.c.h.b16 %v8962
    %v10343 = vunpack.c.l.b16 %v8963
    %v10344 = vunpack.c.h.b16 %v8963
    %v10345 = vunpack.c.l.b16 %v8964
    %v10346 = vunpack.c.h.b16 %v8964
    %v10347 = vunpack.c.l.b16 %v8965
    %v10348 = vunpack.c.h.b16 %v8965
    %v10349 = vunpack.c.l.b16 %v8966
    %v10350 = vunpack.c.h.b16 %v8966
    %v10351 = vunpack.c.l.b16 %v8967
    %v10352 = vunpack.c.h.b16 %v8967
    %v10353 = vunpack.c.l.b16 %v8968
    %v10354 = vunpack.c.h.b16 %v8968
    %v10355 = vunpack.c.l.b16 %v8969
    %v10356 = vunpack.c.h.b16 %v8969
    %v10357 = vunpack.c.l.b16 %v8970
    %v10358 = vunpack.c.h.b16 %v8970
    %v10359 = vunpack.c.l.b16 %v8971
    %v10360 = vunpack.c.h.b16 %v8971
    %v10361 = vunpack.c.l.b16 %v8972
    %v10362 = vunpack.c.h.b16 %v8972
    %v10363 = vunpack.c.l.b16 %v8973
    %v10364 = vunpack.c.h.b16 %v8973
    %v10365 = vunpack.c.l.b16 %v8974
    %v10366 = vunpack.c.h.b16 %v8974
    %v10367 = vunpack.c.l.b16 %v8975
    %v10368 = vunpack.c.h.b16 %v8975
    %v10369 = vunpack.c.l.b16 %v8976
    %v10370 = vunpack.c.h.b16 %v8976
    %v10371 = vunpack.c.l.b16 %v8977
    %v10372 = vunpack.c.h.b16 %v8977
    %v10373 = vunpack.c.l.b16 %v8978
    %v10374 = vunpack.c.h.b16 %v8978
    %v10375 = vunpack.c.l.b16 %v8979
    %v10376 = vunpack.c.h.b16 %v8979
    %v10377 = vunpack.c.l.b16 %v8980
    %v10378 = vunpack.c.h.b16 %v8980
    %v10379 = vunpack.c.l.b16 %v8981
    %v10380 = vunpack.c.h.b16 %v8981
    %v10381 = vunpack.c.l.b16 %v8982
    %v10382 = vunpack.c.h.b16 %v8982
    %v10383 = vunpack.c.l.b16 %v8983
    %v10384 = vunpack.c.h.b16 %v8983
    %v10385 = vunpack.c.l.b16 %v8984
    %v10386 = vunpack.c.h.b16 %v8984
    %v10387 = vunpack.c.l.b16 %v8985
    %v10388 = vunpack.c.h.b16 %v8985
    %v10389 = vunpack.c.l.b16 %v8986
    %v10390 = vunpack.c.h.b16 %v8986
    %v10391 = vunpack.c.l.b16 %v8987
    %v10392 = vunpack.c.h.b16 %v8987
    %v10393 = vunpack.c.l.b16 %v8988
    %v10394 = vunpack.c.h.b16 %v8988
    %v10395 = vunpack.c.l.b16 %v8989
    %v10396 = vunpack.c.h.b16 %v8989
    %v10397 = vunpack.c.l.b16 %v8990
    %v10398 = vunpack.c.h.b16 %v8990
    %v10399 = vunpack.c.l.b16 %v8991
    %v10400 = vunpack.c.h.b16 %v8991
    %v10401 = vunpack.c.l.b16 %v8992
    %v10402 = vunpack.c.h.b16 %v8992
    %v10403 = vunpack.c.l.b16 %v8993
    %v10404 = vunpack.c.h.b16 %v8993
    %v10405 = vunpack.c.l.b16 %v8994
    %v10406 = vunpack.c.h.b16 %v8994
    %v10407 = vunpack.c.l.b16 %v8995
    %v10408 = vunpack.c.h.b16 %v8995
    %v10409 = vunpack.c.l.b16 %v8996
    %v10410 = vunpack.c.h.b16 %v8996
    %v10411 = vunpack.c.l.b16 %v8997
    %v10412 = vunpack.c.h.b16 %v8997
    %v10413 = vunpack.c.l.b16 %v8998
    %v10414 = vunpack.c.h.b16 %v8998
    %v10415 = vunpack.c.l.b16 %v8999
    %v10416 = vunpack.c.h.b16 %v8999
    %v10417 = vunpack.c.l.b16 %v9000
    %v10418 = vunpack.c.h.b16 %v9000
    %v10419 = vunpack.c.l.b16 %v9001
    %v10420 = vunpack.c.h.b16 %v9001
    %v10421 = vunpack.c.l.b16 %v9002
    %v10422 = vunpack.c.h.b16 %v9002
    %v10423 = vunpack.c.l.b16 %v9003
    %v10424 = vunpack.c.h.b16 %v9003
    %v10425 = vunpack.c.l.b16 %v9004
    %v10426 = vunpack.c.h.b16 %v9004
    %v10427 = vunpack.c.l.b16 %v9005
    %v10428 = vunpack.c.h.b16 %v9005
    %v10429 = vunpack.c.l.b16 %v9006
    %v10430 = vunpack.c.h.b16 %v9006
    %v10431 = vunpack.c.l.b16 %v9007
    %v10432 = vunpack.c.h.b16 %v9007
    %v10433 = vunpack.c.l.b16 %v9008
    %v10434 = vunpack.c.h.b16 %v9008
    %v10435 = vunpack.c.l.b16 %v9009
    %v10436 = vunpack.c.h.b16 %v9009
    %v10437 = vunpack.c.l.b16 %v9010
    %v10438 = vunpack.c.h.b16 %v9010
    %v10439 = vunpack.c.l.b16 %v9011
    %v10440 = vunpack.c.h.b16 %v9011
    %v10441 = vunpack.c.l.b16 %v9012
    %v10442 = vunpack.c.h.b16 %v9012
    %v10443 = vunpack.c.l.b16 %v9013
    %v10444 = vunpack.c.h.b16 %v9013
    %v10445 = vunpack.c.l.b16 %v9014
    %v10446 = vunpack.c.h.b16 %v9014
    %v10447 = vunpack.c.l.b16 %v9015
    %v10448 = vunpack.c.h.b16 %v9015
    %v10449 = vunpack.c.l.b16 %v9016
    %v10450 = vunpack.c.h.b16 %v9016
    %v10451 = vunpack.c.l.b16 %v9017
    %v10452 = vunpack.c.h.b16 %v9017
    %v10453 = vunpack.c.l.b16 %v9018
    %v10454 = vunpack.c.h.b16 %v9018
    %v10455 = vunpack.c.l.b16 %v9019
    %v10456 = vunpack.c.h.b16 %v9019
    %v10457 = vunpack.c.l.b16 %v9020
    %v10458 = vunpack.c.h.b16 %v9020
    %v10459 = vunpack.c.l.b16 %v9021
    %v10460 = vunpack.c.h.b16 %v9021
    %v10461 = vunpack.c.l.b16 %v9022
    %v10462 = vunpack.c.h.b16 %v9022
    %v10463 = vunpack.c.l.b16 %v9023
    %v10464 = vunpack.c.h.b16 %v9023
    %v10465 = vunpack.c.l.b16 %v9024
    %v10466 = vunpack.c.h.b16 %v9024
    %v10467 = vunpack.c.l.b16 %v9025
    %v10468 = vunpack.c.h.b16 %v9025
    %v10469 = vunpack.c.l.b16 %v9026
    %v10470 = vunpack.c.h.b16 %v9026
    %v10471 = vunpack.c.l.b16 %v9027
    %v10472 = vunpack.c.h.b16 %v9027
    %v10473 = vunpack.c.l.b16 %v9028
    %v10474 = vunpack.c.h.b16 %v9028
    %v10475 = vunpack.c.l.b16 %v9029
    %v10476 = vunpack.c.h.b16 %v9029
    %v10477 = vunpack.c.l.b16 %v9030
    %v10478 = vunpack.c.h.b16 %v9030
    %v10479 = vunpack.c.l.b16 %v9031
    %v10480 = vunpack.c.h.b16 %v9031
    %v10481 = vunpack.c.l.b16 %v9032
    %v10482 = vunpack.c.h.b16 %v9032
    %v10483 = vunpack.c.l.b16 %v9033
    %v10484 = vunpack.c.h.b16 %v9033
    %v10485 = vunpack.c.l.b16 %v9034
    %v10486 = vunpack.c.h.b16 %v9034
    %v10487 = vunpack.c.l.b16 %v9035
    %v10488 = vunpack.c.h.b16 %v9035
    %v10489 = vunpack.c.l.b16 %v9036
    %v10490 = vunpack.c.h.b16 %v9036
    %v10491 = vunpack.c.l.b16 %v9037
    %v10492 = vunpack.c.h.b16 %v9037
    %v10493 = vunpack.c.l.b16 %v9038
    %v10494 = vunpack.c.h.b16 %v9038
    %v10495 = vunpack.c.l.b16 %v9039
    %v10496 = vunpack.c.h.b16 %v9039
    %v10497 = vunpack.c.l.b16 %v9040
    %v10498 = vunpack.c.h.b16 %v9040
    %v10499 = vunpack.c.l.b16 %v9041
    %v10500 = vunpack.c.h.b16 %v9041
    %v10501 = vunpack.c.l.b16 %v9042
    %v10502 = vunpack.c.h.b16 %v9042
    %v10503 = vunpack.c.l.b16 %v9043
    %v10504 = vunpack.c.h.b16 %v9043
    %v10505 = vunpack.c.l.b16 %v9044
    %v10506 = vunpack.c.h.b16 %v9044
    %v10507 = vunpack.c.l.b16 %v9045
    %v10508 = vunpack.c.h.b16 %v9045
    %v10509 = vunpack.c.l.b16 %v9046
    %v10510 = vunpack.c.h.b16 %v9046
    %v10511 = vunpack.c.l.b16 %v9047
    %v10512 = vunpack.c.h.b16 %v9047
    %v10513 = vunpack.c.l.b16 %v9048
    %v10514 = vunpack.c.h.b16 %v9048
    %v10515 = vunpack.c.l.b16 %v9049
    %v10516 = vunpack.c.h.b16 %v9049
    %v10517 = vunpack.c.l.b16 %v9050
    %v10518 = vunpack.c.h.b16 %v9050
    %v10519 = vunpack.c.l.b16 %v9051
    %v10520 = vunpack.c.h.b16 %v9051
    %v10521 = vunpack.c.l.b16 %v9052
    %v10522 = vunpack.c.h.b16 %v9052
    %v10523 = vunpack.c.l.b16 %v9053
    %v10524 = vunpack.c.h.b16 %v9053
    %v10525 = vunpack.c.l.b16 %v9054
    %v10526 = vunpack.c.h.b16 %v9054
    %v10527 = vunpack.c.l.b16 %v9055
    %v10528 = vunpack.c.h.b16 %v9055
    %v10529 = vunpack.c.l.b16 %v9056
    %v10530 = vunpack.c.h.b16 %v9056
    %v10531 = vunpack.c.l.b16 %v9057
    %v10532 = vunpack.c.h.b16 %v9057
    %v10533 = vunpack.c.l.b16 %v9058
    %v10534 = vunpack.c.h.b16 %v9058
    %v10535 = vunpack.c.l.b16 %v9059
    %v10536 = vunpack.c.h.b16 %v9059
    %v10537 = vunpack.c.l.b16 %v9060
    %v10538 = vunpack.c.h.b16 %v9060
    %v10539 = vunpack.c.l.b16 %v9061
    %v10540 = vunpack.c.h.b16 %v9061
    %v10541 = vunpack.c.l.b16 %v9062
    %v10542 = vunpack.c.h.b16 %v9062
    %v10543 = vunpack.c.l.b16 %v9063
    %v10544 = vunpack.c.h.b16 %v9063
    %v10545 = vunpack.c.l.b16 %v9064
    %v10546 = vunpack.c.h.b16 %v9064
    %v10547 = vunpack.c.l.b16 %v9065
    %v10548 = vunpack.c.h.b16 %v9065
    %v10549 = vunpack.c.l.b16 %v9066
    %v10550 = vunpack.c.h.b16 %v9066
    %v10551 = vunpack.c.l.b16 %v9067
    %v10552 = vunpack.c.h.b16 %v9067
    %v10553 = vunpack.c.l.b16 %v9068
    %v10554 = vunpack.c.h.b16 %v9068
    %v10555 = vunpack.c.l.b16 %v9069
    %v10556 = vunpack.c.h.b16 %v9069
    %v10557 = vunpack.c.l.b16 %v9070
    %v10558 = vunpack.c.h.b16 %v9070
    %v10559 = vunpack.c.l.b16 %v9071
    %v10560 = vunpack.c.h.b16 %v9071
    %v10561 = vunpack.c.l.b16 %v9072
    %v10562 = vunpack.c.h.b16 %v9072
    %v10563 = vunpack.c.l.b16 %v9073
    %v10564 = vunpack.c.h.b16 %v9073
    %v10565 = vunpack.c.l.b16 %v9074
    %v10566 = vunpack.c.h.b16 %v9074
    %v10567 = vunpack.c.l.b16 %v9075
    %v10568 = vunpack.c.h.b16 %v9075
    %v10569 = vunpack.c.l.b16 %v9076
    %v10570 = vunpack.c.h.b16 %v9076
    %v10571 = vunpack.c.l.b16 %v9077
    %v10572 = vunpack.c.h.b16 %v9077
    %v10573 = vunpack.c.l.b16 %v9078
    %v10574 = vunpack.c.h.b16 %v9078
    %v10575 = vunpack.c.l.b16 %v9079
    %v10576 = vunpack.c.h.b16 %v9079
    %v10577 = vunpack.c.l.b16 %v9080
    %v10578 = vunpack.c.h.b16 %v9080
    %v10579 = vunpack.c.l.b16 %v9081
    %v10580 = vunpack.c.h.b16 %v9081
    %v10581 = vunpack.c.l.b16 %v9082
    %v10582 = vunpack.c.h.b16 %v9082
    %v10583 = vunpack.c.l.b16 %v9083
    %v10584 = vunpack.c.h.b16 %v9083
    %v10585 = vunpack.c.l.b16 %v9084
    %v10586 = vunpack.c.h.b16 %v9084
    %v10587 = vunpack.c.l.b16 %v9085
    %v10588 = vunpack.c.h.b16 %v9085
    %v10589 = vunpack.c.l.b16 %v9086
    %v10590 = vunpack.c.h.b16 %v9086
    %v10591 = vunpack.c.l.b16 %v9087
    %v10592 = vunpack.c.h.b16 %v9087
    %v10593 = vunpack.c.l.b16 %v9088
    %v10594 = vunpack.c.h.b16 %v9088
    %v10595 = vunpack.c.l.b16 %v9089
    %v10596 = vunpack.c.h.b16 %v9089
    %v10597 = vunpack.c.l.b16 %v9090
    %v10598 = vunpack.c.h.b16 %v9090
    %v10599 = vunpack.c.l.b16 %v9091
    %v10600 = vunpack.c.h.b16 %v9091
    %v10601 = vunpack.c.l.b16 %v9092
    %v10602 = vunpack.c.h.b16 %v9092
    %v10603 = vunpack.c.l.b16 %v9093
    %v10604 = vunpack.c.h.b16 %v9093
    %v10605 = vunpack.c.l.b16 %v9094
    %v10606 = vunpack.c.h.b16 %v9094
    %v10607 = vunpack.c.l.b16 %v9095
    %v10608 = vunpack.c.h.b16 %v9095
    %v10609 = vunpack.c.l.b16 %v9096
    %v10610 = vunpack.c.h.b16 %v9096
    %v10611 = vunpack.c.l.b16 %v9097
    %v10612 = vunpack.c.h.b16 %v9097
    %v10613 = vunpack.c.l.b16 %v9098
    %v10614 = vunpack.c.h.b16 %v9098
    %v10615 = vunpack.c.l.b16 %v9099
    %v10616 = vunpack.c.h.b16 %v9099
    %v10617 = vunpack.c.l.b16 %v9100
    %v10618 = vunpack.c.h.b16 %v9100
    %v10619 = vunpack.c.l.b16 %v9101
    %v10620 = vunpack.c.h.b16 %v9101
    %v10621 = vunpack.c.l.b16 %v9102
    %v10622 = vunpack.c.h.b16 %v9102
    %v10623 = vunpack.c.l.b16 %v9103
    %v10624 = vunpack.c.h.b16 %v9103
    %v10625 = vunpack.c.l.b16 %v9104
    %v10626 = vunpack.c.h.b16 %v9104
    %v10627 = vunpack.c.l.b16 %v9105
    %v10628 = vunpack.c.h.b16 %v9105
    %v10629 = vunpack.c.l.b16 %v9106
    %v10630 = vunpack.c.h.b16 %v9106
    %v10631 = vunpack.c.l.b16 %v9107
    %v10632 = vunpack.c.h.b16 %v9107
    %v10633 = vunpack.c.l.b16 %v9108
    %v10634 = vunpack.c.h.b16 %v9108
    %v10635 = vunpack.c.l.b16 %v9109
    %v10636 = vunpack.c.h.b16 %v9109
    %v10637 = vunpack.c.l.b16 %v9110
    %v10638 = vunpack.c.h.b16 %v9110
    %v10639 = vunpack.c.l.b16 %v9111
    %v10640 = vunpack.c.h.b16 %v9111
    %v10641 = vunpack.c.l.b16 %v9112
    %v10642 = vunpack.c.h.b16 %v9112
    %v10643 = vunpack.c.l.b16 %v9113
    %v10644 = vunpack.c.h.b16 %v9113
    %v10645 = vunpack.c.l.b16 %v9114
    %v10646 = vunpack.c.h.b16 %v9114
    %v10647 = vunpack.c.l.b16 %v9115
    %v10648 = vunpack.c.h.b16 %v9115
    %v10649 = vunpack.c.l.b16 %v9116
    %v10650 = vunpack.c.h.b16 %v9116
    %v10651 = vunpack.c.l.b16 %v9117
    %v10652 = vunpack.c.h.b16 %v9117
    %v10653 = vunpack.c.l.b16 %v9118
    %v10654 = vunpack.c.h.b16 %v9118
    %v10655 = vpack.c.b16 %v9639, %v9631
    %v10656 = vpack.c.b16 %v9640, %v9632
    %v10657 = vpack.c.b16 %v9641, %v9633
    %v10658 = vpack.c.b16 %v9642, %v9634
    %v10659 = vpack.c.b16 %v9643, %v9635
    %v10660 = vpack.c.b16 %v9644, %v9636
    %v10661 = vpack.c.b16 %v9645, %v9637
    %v10662 = vpack.c.b16 %v9646, %v9638
    %v10663 = vpack.c.b16 %v9655, %v9647
    %v10664 = vpack.c.b16 %v9656, %v9648
    %v10665 = vpack.c.b16 %v9657, %v9649
    %v10666 = vpack.c.b16 %v9658, %v9650
    %v10667 = vpack.c.b16 %v9659, %v9651
    %v10668 = vpack.c.b16 %v9660, %v9652
    %v10669 = vpack.c.b16 %v9661, %v9653
    %v10670 = vpack.c.b16 %v9662, %v9654
    %v10671 = vpack.c.b16 %v9671, %v9663
    %v10672 = vpack.c.b16 %v9672, %v9664
    %v10673 = vpack.c.b16 %v9673, %v9665
    %v10674 = vpack.c.b16 %v9674, %v9666
    %v10675 = vpack.c.b16 %v9675, %v9667
    %v10676 = vpack.c.b16 %v9676, %v9668
    %v10677 = vpack.c.b16 %v9677, %v9669
    %v10678 = vpack.c.b16 %v9678, %v9670
    %v10679 = vpack.c.b16 %v9687, %v9679
    %v10680 = vpack.c.b16 %v9688, %v9680
    %v10681 = vpack.c.b16 %v9689, %v9681
    %v10682 = vpack.c.b16 %v9690, %v9682
    %v10683 = vpack.c.b16 %v9691, %v9683
    %v10684 = vpack.c.b16 %v9692, %v9684
    %v10685 = vpack.c.b16 %v9693, %v9685
    %v10686 = vpack.c.b16 %v9694, %v9686
    %v10687 = vpack.c.b16 %v9703, %v9695
    %v10688 = vpack.c.b16 %v9704, %v9696
    %v10689 = vpack.c.b16 %v9705, %v9697
    %v10690 = vpack.c.b16 %v9706, %v9698
    %v10691 = vpack.c.b16 %v9707, %v9699
    %v10692 = vpack.c.b16 %v9708, %v9700
    %v10693 = vpack.c.b16 %v9709, %v9701
    %v10694 = vpack.c.b16 %v9710, %v9702
    %v10695 = vpack.c.b16 %v9719, %v9711
    %v10696 = vpack.c.b16 %v9720, %v9712
    %v10697 = vpack.c.b16 %v9721, %v9713
    %v10698 = vpack.c.b16 %v9722, %v9714
    %v10699 = vpack.c.b16 %v9723, %v9715
    %v10700 = vpack.c.b16 %v9724, %v9716
    %v10701 = vpack.c.b16 %v9725, %v9717
    %v10702 = vpack.c.b16 %v9726, %v9718
    %v10703 = vpack.c.b16 %v9735, %v9727
    %v10704 = vpack.c.b16 %v9736, %v9728
    %v10705 = vpack.c.b16 %v9737, %v9729
    %v10706 = vpack.c.b16 %v9738, %v9730
    %v10707 = vpack.c.b16 %v9739, %v9731
    %v10708 = vpack.c.b16 %v9740, %v9732
    %v10709 = vpack.c.b16 %v9741, %v9733
    %v10710 = vpack.c.b16 %v9742, %v9734
    %v10711 = vpack.c.b16 %v9751, %v9743
    %v10712 = vpack.c.b16 %v9752, %v9744
    %v10713 = vpack.c.b16 %v9753, %v9745
    %v10714 = vpack.c.b16 %v9754, %v9746
    %v10715 = vpack.c.b16 %v9755, %v9747
    %v10716 = vpack.c.b16 %v9756, %v9748
    %v10717 = vpack.c.b16 %v9757, %v9749
    %v10718 = vpack.c.b16 %v9758, %v9750
    %v10719 = vpack.c.b16 %v9767, %v9759
    %v10720 = vpack.c.b16 %v9768, %v9760
    %v10721 = vpack.c.b16 %v9769, %v9761
    %v10722 = vpack.c.b16 %v9770, %v9762
    %v10723 = vpack.c.b16 %v9771, %v9763
    %v10724 = vpack.c.b16 %v9772, %v9764
    %v10725 = vpack.c.b16 %v9773, %v9765
    %v10726 = vpack.c.b16 %v9774, %v9766
    %v10727 = vpack.c.b16 %v9783, %v9775
    %v10728 = vpack.c.b16 %v9784, %v9776
    %v10729 = vpack.c.b16 %v9785, %v9777
    %v10730 = vpack.c.b16 %v9786, %v9778
    %v10731 = vpack.c.b16 %v9787, %v9779
    %v10732 = vpack.c.b16 %v9788, %v9780
    %v10733 = vpack.c.b16 %v9789, %v9781
    %v10734 = vpack.c.b16 %v9790, %v9782
    %v10735 = vpack.c.b16 %v9799, %v9791
    %v10736 = vpack.c.b16 %v9800, %v9792
    %v10737 = vpack.c.b16 %v9801, %v9793
    %v10738 = vpack.c.b16 %v9802, %v9794
    %v10739 = vpack.c.b16 %v9803, %v9795
    %v10740 = vpack.c.b16 %v9804, %v9796
    %v10741 = vpack.c.b16 %v9805, %v9797
    %v10742 = vpack.c.b16 %v9806, %v9798
    %v10743 = vpack.c.b16 %v9815, %v9807
    %v10744 = vpack.c.b16 %v9816, %v9808
    %v10745 = vpack.c.b16 %v9817, %v9809
    %v10746 = vpack.c.b16 %v9818, %v9810
    %v10747 = vpack.c.b16 %v9819, %v9811
    %v10748 = vpack.c.b16 %v9820, %v9812
    %v10749 = vpack.c.b16 %v9821, %v9813
    %v10750 = vpack.c.b16 %v9822, %v9814
    %v10751 = vpack.c.b16 %v9831, %v9823
    %v10752 = vpack.c.b16 %v9832, %v9824
    %v10753 = vpack.c.b16 %v9833, %v9825
    %v10754 = vpack.c.b16 %v9834, %v9826
    %v10755 = vpack.c.b16 %v9835, %v9827
    %v10756 = vpack.c.b16 %v9836, %v9828
    %v10757 = vpack.c.b16 %v9837, %v9829
    %v10758 = vpack.c.b16 %v9838, %v9830
    %v10759 = vpack.c.b16 %v9847, %v9839
    %v10760 = vpack.c.b16 %v9848, %v9840
    %v10761 = vpack.c.b16 %v9849, %v9841
    %v10762 = vpack.c.b16 %v9850, %v9842
    %v10763 = vpack.c.b16 %v9851, %v9843
    %v10764 = vpack.c.b16 %v9852, %v9844
    %v10765 = vpack.c.b16 %v9853, %v9845
    %v10766 = vpack.c.b16 %v9854, %v9846
    %v10767 = vpack.c.b16 %v9863, %v9855
    %v10768 = vpack.c.b16 %v9864, %v9856
    %v10769 = vpack.c.b16 %v9865, %v9857
    %v10770 = vpack.c.b16 %v9866, %v9858
    %v10771 = vpack.c.b16 %v9867, %v9859
    %v10772 = vpack.c.b16 %v9868, %v9860
    %v10773 = vpack.c.b16 %v9869, %v9861
    %v10774 = vpack.c.b16 %v9870, %v9862
    %v10775 = vpack.c.b16 %v9879, %v9871
    %v10776 = vpack.c.b16 %v9880, %v9872
    %v10777 = vpack.c.b16 %v9881, %v9873
    %v10778 = vpack.c.b16 %v9882, %v9874
    %v10779 = vpack.c.b16 %v9883, %v9875
    %v10780 = vpack.c.b16 %v9884, %v9876
    %v10781 = vpack.c.b16 %v9885, %v9877
    %v10782 = vpack.c.b16 %v9886, %v9878
    %v10783 = vpack.c.b16 %v9895, %v9887
    %v10784 = vpack.c.b16 %v9896, %v9888
    %v10785 = vpack.c.b16 %v9897, %v9889
    %v10786 = vpack.c.b16 %v9898, %v9890
    %v10787 = vpack.c.b16 %v9899, %v9891
    %v10788 = vpack.c.b16 %v9900, %v9892
    %v10789 = vpack.c.b16 %v9901, %v9893
    %v10790 = vpack.c.b16 %v9902, %v9894
    %v10791 = vpack.c.b16 %v9911, %v9903
    %v10792 = vpack.c.b16 %v9912, %v9904
    %v10793 = vpack.c.b16 %v9913, %v9905
    %v10794 = vpack.c.b16 %v9914, %v9906
    %v10795 = vpack.c.b16 %v9915, %v9907
    %v10796 = vpack.c.b16 %v9916, %v9908
    %v10797 = vpack.c.b16 %v9917, %v9909
    %v10798 = vpack.c.b16 %v9918, %v9910
    %v10799 = vpack.c.b16 %v9927, %v9919
    %v10800 = vpack.c.b16 %v9928, %v9920
    %v10801 = vpack.c.b16 %v9929, %v9921
    %v10802 = vpack.c.b16 %v9930, %v9922
    %v10803 = vpack.c.b16 %v9931, %v9923
    %v10804 = vpack.c.b16 %v9932, %v9924
    %v10805 = vpack.c.b16 %v9933, %v9925
    %v10806 = vpack.c.b16 %v9934, %v9926
    %v10807 = vpack.c.b16 %v9943, %v9935
    %v10808 = vpack.c.b16 %v9944, %v9936
    %v10809 = vpack.c.b16 %v9945, %v9937
    %v10810 = vpack.c.b16 %v9946, %v9938
    %v10811 = vpack.c.b16 %v9947, %v9939
    %v10812 = vpack.c.b16 %v9948, %v9940
    %v10813 = vpack.c.b16 %v9949, %v9941
    %v10814 = vpack.c.b16 %v9950, %v9942
    %v10815 = vpack.c.b16 %v9959, %v9951
    %v10816 = vpack.c.b16 %v9960, %v9952
    %v10817 = vpack.c.b16 %v9961, %v9953
    %v10818 = vpack.c.b16 %v9962, %v9954
    %v10819 = vpack.c.b16 %v9963, %v9955
    %v10820 = vpack.c.b16 %v9964, %v9956
    %v10821 = vpack.c.b16 %v9965, %v9957
    %v10822 = vpack.c.b16 %v9966, %v9958
    %v10823 = vpack.c.b16 %v9975, %v9967
    %v10824 = vpack.c.b16 %v9976, %v9968
    %v10825 = vpack.c.b16 %v9977, %v9969
    %v10826 = vpack.c.b16 %v9978, %v9970
    %v10827 = vpack.c.b16 %v9979, %v9971
    %v10828 = vpack.c.b16 %v9980, %v9972
    %v10829 = vpack.c.b16 %v9981, %v9973
    %v10830 = vpack.c.b16 %v9982, %v9974
    %v10831 = vpack.c.b16 %v9991, %v9983
    %v10832 = vpack.c.b16 %v9992, %v9984
    %v10833 = vpack.c.b16 %v9993, %v9985
    %v10834 = vpack.c.b16 %v9994, %v9986
    %v10835 = vpack.c.b16 %v9995, %v9987
    %v10836 = vpack.c.b16 %v9996, %v9988
    %v10837 = vpack.c.b16 %v9997, %v9989
    %v10838 = vpack.c.b16 %v9998, %v9990
    %v10839 = vpack.c.b16 %v10007, %v9999
    %v10840 = vpack.c.b16 %v10008, %v10000
    %v10841 = vpack.c.b16 %v10009, %v10001
    %v10842 = vpack.c.b16 %v10010, %v10002
    %v10843 = vpack.c.b16 %v10011, %v10003
    %v10844 = vpack.c.b16 %v10012, %v10004
    %v10845 = vpack.c.b16 %v10013, %v10005
    %v10846 = vpack.c.b16 %v10014, %v10006
    %v10847 = vpack.c.b16 %v10023, %v10015
    %v10848 = vpack.c.b16 %v10024, %v10016
    %v10849 = vpack.c.b16 %v10025, %v10017
    %v10850 = vpack.c.b16 %v10026, %v10018
    %v10851 = vpack.c.b16 %v10027, %v10019
    %v10852 = vpack.c.b16 %v10028, %v10020
    %v10853 = vpack.c.b16 %v10029, %v10021
    %v10854 = vpack.c.b16 %v10030, %v10022
    %v10855 = vpack.c.b16 %v10039, %v10031
    %v10856 = vpack.c.b16 %v10040, %v10032
    %v10857 = vpack.c.b16 %v10041, %v10033
    %v10858 = vpack.c.b16 %v10042, %v10034
    %v10859 = vpack.c.b16 %v10043, %v10035
    %v10860 = vpack.c.b16 %v10044, %v10036
    %v10861 = vpack.c.b16 %v10045, %v10037
    %v10862 = vpack.c.b16 %v10046, %v10038
    %v10863 = vpack.c.b16 %v10055, %v10047
    %v10864 = vpack.c.b16 %v10056, %v10048
    %v10865 = vpack.c.b16 %v10057, %v10049
    %v10866 = vpack.c.b16 %v10058, %v10050
    %v10867 = vpack.c.b16 %v10059, %v10051
    %v10868 = vpack.c.b16 %v10060, %v10052
    %v10869 = vpack.c.b16 %v10061, %v10053
    %v10870 = vpack.c.b16 %v10062, %v10054
    %v10871 = vpack.c.b16 %v10071, %v10063
    %v10872 = vpack.c.b16 %v10072, %v10064
    %v10873 = vpack.c.b16 %v10073, %v10065
    %v10874 = vpack.c.b16 %v10074, %v10066
    %v10875 = vpack.c.b16 %v10075, %v10067
    %v10876 = vpack.c.b16 %v10076, %v10068
    %v10877 = vpack.c.b16 %v10077, %v10069
    %v10878 = vpack.c.b16 %v10078, %v10070
    %v10879 = vpack.c.b16 %v10087, %v10079
    %v10880 = vpack.c.b16 %v10088, %v10080
    %v10881 = vpack.c.b16 %v10089, %v10081
    %v10882 = vpack.c.b16 %v10090, %v10082
    %v10883 = vpack.c.b16 %v10091, %v10083
    %v10884 = vpack.c.b16 %v10092, %v10084
    %v10885 = vpack.c.b16 %v10093, %v10085
    %v10886 = vpack.c.b16 %v10094, %v10086
    %v10887 = vpack.c.b16 %v10103, %v10095
    %v10888 = vpack.c.b16 %v10104, %v10096
    %v10889 = vpack.c.b16 %v10105, %v10097
    %v10890 = vpack.c.b16 %v10106, %v10098
    %v10891 = vpack.c.b16 %v10107, %v10099
    %v10892 = vpack.c.b16 %v10108, %v10100
    %v10893 = vpack.c.b16 %v10109, %v10101
    %v10894 = vpack.c.b16 %v10110, %v10102
    %v10895 = vpack.c.b16 %v10119, %v10111
    %v10896 = vpack.c.b16 %v10120, %v10112
    %v10897 = vpack.c.b16 %v10121, %v10113
    %v10898 = vpack.c.b16 %v10122, %v10114
    %v10899 = vpack.c.b16 %v10123, %v10115
    %v10900 = vpack.c.b16 %v10124, %v10116
    %v10901 = vpack.c.b16 %v10125, %v10117
    %v10902 = vpack.c.b16 %v10126, %v10118
    %v10903 = vpack.c.b16 %v10135, %v10127
    %v10904 = vpack.c.b16 %v10136, %v10128
    %v10905 = vpack.c.b16 %v10137, %v10129
    %v10906 = vpack.c.b16 %v10138, %v10130
    %v10907 = vpack.c.b16 %v10139, %v10131
    %v10908 = vpack.c.b16 %v10140, %v10132
    %v10909 = vpack.c.b16 %v10141, %v10133
    %v10910 = vpack.c.b16 %v10142, %v10134
    %v10911 = vpack.c.b16 %v10151, %v10143
    %v10912 = vpack.c.b16 %v10152, %v10144
    %v10913 = vpack.c.b16 %v10153, %v10145
    %v10914 = vpack.c.b16 %v10154, %v10146
    %v10915 = vpack.c.b16 %v10155, %v10147
    %v10916 = vpack.c.b16 %v10156, %v10148
    %v10917 = vpack.c.b16 %v10157, %v10149
    %v10918 = vpack.c.b16 %v10158, %v10150
    %v10919 = vpack.c.b16 %v10167, %v10159
    %v10920 = vpack.c.b16 %v10168, %v10160
    %v10921 = vpack.c.b16 %v10169, %v10161
    %v10922 = vpack.c.b16 %v10170, %v10162
    %v10923 = vpack.c.b16 %v10171, %v10163
    %v10924 = vpack.c.b16 %v10172, %v10164
    %v10925 = vpack.c.b16 %v10173, %v10165
    %v10926 = vpack.c.b16 %v10174, %v10166
    %v10927 = vpack.c.b16 %v10183, %v10175
    %v10928 = vpack.c.b16 %v10184, %v10176
    %v10929 = vpack.c.b16 %v10185, %v10177
    %v10930 = vpack.c.b16 %v10186, %v10178
    %v10931 = vpack.c.b16 %v10187, %v10179
    %v10932 = vpack.c.b16 %v10188, %v10180
    %v10933 = vpack.c.b16 %v10189, %v10181
    %v10934 = vpack.c.b16 %v10190, %v10182
    %v10935 = vpack.c.b16 %v10199, %v10191
    %v10936 = vpack.c.b16 %v10200, %v10192
    %v10937 = vpack.c.b16 %v10201, %v10193
    %v10938 = vpack.c.b16 %v10202, %v10194
    %v10939 = vpack.c.b16 %v10203, %v10195
    %v10940 = vpack.c.b16 %v10204, %v10196
    %v10941 = vpack.c.b16 %v10205, %v10197
    %v10942 = vpack.c.b16 %v10206, %v10198
    %v10943 = vpack.c.b16 %v10215, %v10207
    %v10944 = vpack.c.b16 %v10216, %v10208
    %v10945 = vpack.c.b16 %v10217, %v10209
    %v10946 = vpack.c.b16 %v10218, %v10210
    %v10947 = vpack.c.b16 %v10219, %v10211
    %v10948 = vpack.c.b16 %v10220, %v10212
    %v10949 = vpack.c.b16 %v10221, %v10213
    %v10950 = vpack.c.b16 %v10222, %v10214
    %v10951 = vpack.c.b16 %v10231, %v10223
    %v10952 = vpack.c.b16 %v10232, %v10224
    %v10953 = vpack.c.b16 %v10233, %v10225
    %v10954 = vpack.c.b16 %v10234, %v10226
    %v10955 = vpack.c.b16 %v10235, %v10227
    %v10956 = vpack.c.b16 %v10236, %v10228
    %v10957 = vpack.c.b16 %v10237, %v10229
    %v10958 = vpack.c.b16 %v10238, %v10230
    %v10959 = vpack.c.b16 %v10247, %v10239
    %v10960 = vpack.c.b16 %v10248, %v10240
    %v10961 = vpack.c.b16 %v10249, %v10241
    %v10962 = vpack.c.b16 %v10250, %v10242
    %v10963 = vpack.c.b16 %v10251, %v10243
    %v10964 = vpack.c.b16 %v10252, %v10244
    %v10965 = vpack.c.b16 %v10253, %v10245
    %v10966 = vpack.c.b16 %v10254, %v10246
    %v10967 = vpack.c.b16 %v10263, %v10255
    %v10968 = vpack.c.b16 %v10264, %v10256
    %v10969 = vpack.c.b16 %v10265, %v10257
    %v10970 = vpack.c.b16 %v10266, %v10258
    %v10971 = vpack.c.b16 %v10267, %v10259
    %v10972 = vpack.c.b16 %v10268, %v10260
    %v10973 = vpack.c.b16 %v10269, %v10261
    %v10974 = vpack.c.b16 %v10270, %v10262
    %v10975 = vpack.c.b16 %v10279, %v10271
    %v10976 = vpack.c.b16 %v10280, %v10272
    %v10977 = vpack.c.b16 %v10281, %v10273
    %v10978 = vpack.c.b16 %v10282, %v10274
    %v10979 = vpack.c.b16 %v10283, %v10275
    %v10980 = vpack.c.b16 %v10284, %v10276
    %v10981 = vpack.c.b16 %v10285, %v10277
    %v10982 = vpack.c.b16 %v10286, %v10278
    %v10983 = vpack.c.b16 %v10295, %v10287
    %v10984 = vpack.c.b16 %v10296, %v10288
    %v10985 = vpack.c.b16 %v10297, %v10289
    %v10986 = vpack.c.b16 %v10298, %v10290
    %v10987 = vpack.c.b16 %v10299, %v10291
    %v10988 = vpack.c.b16 %v10300, %v10292
    %v10989 = vpack.c.b16 %v10301, %v10293
    %v10990 = vpack.c.b16 %v10302, %v10294
    %v10991 = vpack.c.b16 %v10311, %v10303
    %v10992 = vpack.c.b16 %v10312, %v10304
    %v10993 = vpack.c.b16 %v10313, %v10305
    %v10994 = vpack.c.b16 %v10314, %v10306
    %v10995 = vpack.c.b16 %v10315, %v10307
    %v10996 = vpack.c.b16 %v10316, %v10308
    %v10997 = vpack.c.b16 %v10317, %v10309
    %v10998 = vpack.c.b16 %v10318, %v10310
    %v10999 = vpack.c.b16 %v10327, %v10319
    %v11000 = vpack.c.b16 %v10328, %v10320
    %v11001 = vpack.c.b16 %v10329, %v10321
    %v11002 = vpack.c.b16 %v10330, %v10322
    %v11003 = vpack.c.b16 %v10331, %v10323
    %v11004 = vpack.c.b16 %v10332, %v10324
    %v11005 = vpack.c.b16 %v10333, %v10325
    %v11006 = vpack.c.b16 %v10334, %v10326
    %v11007 = vpack.c.b16 %v10343, %v10335
    %v11008 = vpack.c.b16 %v10344, %v10336
    %v11009 = vpack.c.b16 %v10345, %v10337
    %v11010 = vpack.c.b16 %v10346, %v10338
    %v11011 = vpack.c.b16 %v10347, %v10339
    %v11012 = vpack.c.b16 %v10348, %v10340
    %v11013 = vpack.c.b16 %v10349, %v10341
    %v11014 = vpack.c.b16 %v10350, %v10342
    %v11015 = vpack.c.b16 %v10359, %v10351
    %v11016 = vpack.c.b16 %v10360, %v10352
    %v11017 = vpack.c.b16 %v10361, %v10353
    %v11018 = vpack.c.b16 %v10362, %v10354
    %v11019 = vpack.c.b16 %v10363, %v10355
    %v11020 = vpack.c.b16 %v10364, %v10356
    %v11021 = vpack.c.b16 %v10365, %v10357
    %v11022 = vpack.c.b16 %v10366, %v10358
    %v11023 = vpack.c.b16 %v10375, %v10367
    %v11024 = vpack.c.b16 %v10376, %v10368
    %v11025 = vpack.c.b16 %v10377, %v10369
    %v11026 = vpack.c.b16 %v10378, %v10370
    %v11027 = vpack.c.b16 %v10379, %v10371
    %v11028 = vpack.c.b16 %v10380, %v10372
    %v11029 = vpack.c.b16 %v10381, %v10373
    %v11030 = vpack.c.b16 %v10382, %v10374
    %v11031 = vpack.c.b16 %v10391, %v10383
    %v11032 = vpack.c.b16 %v10392, %v10384
    %v11033 = vpack.c.b16 %v10393, %v10385
    %v11034 = vpack.c.b16 %v10394, %v10386
    %v11035 = vpack.c.b16 %v10395, %v10387
    %v11036 = vpack.c.b16 %v10396, %v10388
    %v11037 = vpack.c.b16 %v10397, %v10389
    %v11038 = vpack.c.b16 %v10398, %v10390
    %v11039 = vpack.c.b16 %v10407, %v10399
    %v11040 = vpack.c.b16 %v10408, %v10400
    %v11041 = vpack.c.b16 %v10409, %v10401
    %v11042 = vpack.c.b16 %v10410, %v10402
    %v11043 = vpack.c.b16 %v10411, %v10403
    %v11044 = vpack.c.b16 %v10412, %v10404
    %v11045 = vpack.c.b16 %v10413, %v10405
    %v11046 = vpack.c.b16 %v10414, %v10406
    %v11047 = vpack.c.b16 %v10423, %v10415
    %v11048 = vpack.c.b16 %v10424, %v10416
    %v11049 = vpack.c.b16 %v10425, %v10417
    %v11050 = vpack.c.b16 %v10426, %v10418
    %v11051 = vpack.c.b16 %v10427, %v10419
    %v11052 = vpack.c.b16 %v10428, %v10420
    %v11053 = vpack.c.b16 %v10429, %v10421
    %v11054 = vpack.c.b16 %v10430, %v10422
    %v11055 = vpack.c.b16 %v10439, %v10431
    %v11056 = vpack.c.b16 %v10440, %v10432
    %v11057 = vpack.c.b16 %v10441, %v10433
    %v11058 = vpack.c.b16 %v10442, %v10434
    %v11059 = vpack.c.b16 %v10443, %v10435
    %v11060 = vpack.c.b16 %v10444, %v10436
    %v11061 = vpack.c.b16 %v10445, %v10437
    %v11062 = vpack.c.b16 %v10446, %v10438
    %v11063 = vpack.c.b16 %v10455, %v10447
    %v11064 = vpack.c.b16 %v10456, %v10448
    %v11065 = vpack.c.b16 %v10457, %v10449
    %v11066 = vpack.c.b16 %v10458, %v10450
    %v11067 = vpack.c.b16 %v10459, %v10451
    %v11068 = vpack.c.b16 %v10460, %v10452
    %v11069 = vpack.c.b16 %v10461, %v10453
    %v11070 = vpack.c.b16 %v10462, %v10454
    %v11071 = vpack.c.b16 %v10471, %v10463
    %v11072 = vpack.c.b16 %v10472, %v10464
    %v11073 = vpack.c.b16 %v10473, %v10465
    %v11074 = vpack.c.b16 %v10474, %v10466
    %v11075 = vpack.c.b16 %v10475, %v10467
    %v11076 = vpack.c.b16 %v10476, %v10468
    %v11077 = vpack.c.b16 %v10477, %v10469
    %v11078 = vpack.c.b16 %v10478, %v10470
    %v11079 = vpack.c.b16 %v10487, %v10479
    %v11080 = vpack.c.b16 %v10488, %v10480
    %v11081 = vpack.c.b16 %v10489, %v10481
    %v11082 = vpack.c.b16 %v10490, %v10482
    %v11083 = vpack.c.b16 %v10491, %v10483
    %v11084 = vpack.c.b16 %v10492, %v10484
    %v11085 = vpack.c.b16 %v10493, %v10485
    %v11086 = vpack.c.b16 %v10494, %v10486
    %v11087 = vpack.c.b16 %v10503, %v10495
    %v11088 = vpack.c.b16 %v10504, %v10496
    %v11089 = vpack.c.b16 %v10505, %v10497
    %v11090 = vpack.c.b16 %v10506, %v10498
    %v11091 = vpack.c.b16 %v10507, %v10499
    %v11092 = vpack.c.b16 %v10508, %v10500
    %v11093 = vpack.c.b16 %v10509, %v10501
    %v11094 = vpack.c.b16 %v10510, %v10502
    %v11095 = vpack.c.b16 %v10519, %v10511
    %v11096 = vpack.c.b16 %v10520, %v10512
    %v11097 = vpack.c.b16 %v10521, %v10513
    %v11098 = vpack.c.b16 %v10522, %v10514
    %v11099 = vpack.c.b16 %v10523, %v10515
    %v11100 = vpack.c.b16 %v10524, %v10516
    %v11101 = vpack.c.b16 %v10525, %v10517
    %v11102 = vpack.c.b16 %v10526, %v10518
    %v11103 = vpack.c.b16 %v10535, %v10527
    %v11104 = vpack.c.b16 %v10536, %v10528
    %v11105 = vpack.c.b16 %v10537, %v10529
    %v11106 = vpack.c.b16 %v10538, %v10530
    %v11107 = vpack.c.b16 %v10539, %v10531
    %v11108 = vpack.c.b16 %v10540, %v10532
    %v11109 = vpack.c.b16 %v10541, %v10533
    %v11110 = vpack.c.b16 %v10542, %v10534
    %v11111 = vpack.c.b16 %v10551, %v10543
    %v11112 = vpack.c.b16 %v10552, %v10544
    %v11113 = vpack.c.b16 %v10553, %v10545
    %v11114 = vpack.c.b16 %v10554, %v10546
    %v11115 = vpack.c.b16 %v10555, %v10547
    %v11116 = vpack.c.b16 %v10556, %v10548
    %v11117 = vpack.c.b16 %v10557, %v10549
    %v11118 = vpack.c.b16 %v10558, %v10550
    %v11119 = vpack.c.b16 %v10567, %v10559
    %v11120 = vpack.c.b16 %v10568, %v10560
    %v11121 = vpack.c.b16 %v10569, %v10561
    %v11122 = vpack.c.b16 %v10570, %v10562
    %v11123 = vpack.c.b16 %v10571, %v10563
    %v11124 = vpack.c.b16 %v10572, %v10564
    %v11125 = vpack.c.b16 %v10573, %v10565
    %v11126 = vpack.c.b16 %v10574, %v10566
    %v11127 = vpack.c.b16 %v10583, %v10575
    %v11128 = vpack.c.b16 %v10584, %v10576
    %v11129 = vpack.c.b16 %v10585, %v10577
    %v11130 = vpack.c.b16 %v10586, %v10578
    %v11131 = vpack.c.b16 %v10587, %v10579
    %v11132 = vpack.c.b16 %v10588, %v10580
    %v11133 = vpack.c.b16 %v10589, %v10581
    %v11134 = vpack.c.b16 %v10590, %v10582
    %v11135 = vpack.c.b16 %v10599, %v10591
    %v11136 = vpack.c.b16 %v10600, %v10592
    %v11137 = vpack.c.b16 %v10601, %v10593
    %v11138 = vpack.c.b16 %v10602, %v10594
    %v11139 = vpack.c.b16 %v10603, %v10595
    %v11140 = vpack.c.b16 %v10604, %v10596
    %v11141 = vpack.c.b16 %v10605, %v10597
    %v11142 = vpack.c.b16 %v10606, %v10598
    %v11143 = vpack.c.b16 %v10615, %v10607
    %v11144 = vpack.c.b16 %v10616, %v10608
    %v11145 = vpack.c.b16 %v10617, %v10609
    %v11146 = vpack.c.b16 %v10618, %v10610
    %v11147 = vpack.c.b16 %v10619, %v10611
    %v11148 = vpack.c.b16 %v10620, %v10612
    %v11149 = vpack.c.b16 %v10621, %v10613
    %v11150 = vpack.c.b16 %v10622, %v10614
    %v11151 = vpack.c.b16 %v10631, %v10623
    %v11152 = vpack.c.b16 %v10632, %v10624
    %v11153 = vpack.c.b16 %v10633, %v10625
    %v11154 = vpack.c.b16 %v10634, %v10626
    %v11155 = vpack.c.b16 %v10635, %v10627
    %v11156 = vpack.c.b16 %v10636, %v10628
    %v11157 = vpack.c.b16 %v10637, %v10629
    %v11158 = vpack.c.b16 %v10638, %v10630
    %v11159 = vpack.c.b16 %v10647, %v10639
    %v11160 = vpack.c.b16 %v10648, %v10640
    %v11161 = vpack.c.b16 %v10649, %v10641
    %v11162 = vpack.c.b16 %v10650, %v10642
    %v11163 = vpack.c.b16 %v10651, %v10643
    %v11164 = vpack.c.b16 %v10652, %v10644
    %v11165 = vpack.c.b16 %v10653, %v10645
    %v11166 = vpack.c.b16 %v10654, %v10646
    %11679 = vmatprep.subr.bf16.mxu0 %v10712
    %11680 = vmatpush1.bf16.msra.mxu0 %v10711
    %11681 = vmatprep.subr.bf16.mxu0 %v10704
    %11682 = vmatpush1.bf16.msra.mxu0 %v10703
    %11683 = vmatprep.subr.bf16.mxu0 %v10696
    %11684 = vmatpush1.bf16.msra.mxu0 %v10695
    %11685 = vmatprep.subr.bf16.mxu0 %v10688
    %11686 = vmatpush1.bf16.msra.mxu0 %v10687
    %11687 = vmatprep.subr.bf16.mxu0 %v10680
    %11688 = vmatpush1.bf16.msra.mxu0 %v10679
    %11689 = vmatprep.subr.bf16.mxu0 %v10672
    %11690 = vmatpush1.bf16.msra.mxu0 %v10671
    %11691 = vmatprep.subr.bf16.mxu0 %v10664
    %11692 = vmatpush1.bf16.msra.mxu0 %v10663
    %11693 = vmatprep.subr.bf16.mxu0 %v10656
    %11694 = vmatpush1.bf16.msra.mxu0 %v10655
    %11695 = vmatprep.subr.bf16.mxu0 %v10776
    %11696 = vmatpush2.bf16.msra.mxu0 %v10775
    %11697 = vmatprep.subr.bf16.mxu0 %v10768
    %11698 = vmatpush2.bf16.msra.mxu0 %v10767
    %11699 = vmatprep.subr.bf16.mxu0 %v10760
    %11700 = vmatpush2.bf16.msra.mxu0 %v10759
    %11701 = vmatprep.subr.bf16.mxu0 %v10752
    %11702 = vmatpush2.bf16.msra.mxu0 %v10751
    %11703 = vmatprep.subr.bf16.mxu0 %v10744
    %11704 = vmatpush2.bf16.msra.mxu0 %v10743
    %11705 = vmatprep.subr.bf16.mxu0 %v10736
    %11706 = vmatpush2.bf16.msra.mxu0 %v10735
    %11707 = vmatprep.subr.bf16.mxu0 %v10728
    %11708 = vmatpush2.bf16.msra.mxu0 %v10727
    %11709 = vmatprep.subr.bf16.mxu0 %v10720
    %11710 = vmatpush2.bf16.msra.mxu0 %v10719
    %11711 = vmatprep.mubr.bf16.mxu0 %v8600
    %11712 = vmatmul.mubr.bf16.gmra.mxu0 %v8599
    %v11713 = vpop.f32.mrf.mxu0
    %v11714 = vadd.f32 0.0, %v11713
    %v11715 = vpop.f32.mrf.mxu0
    %v11716 = vadd.f32 0.0, %v11715
    %v11717 = vpop.f32.mrf.mxu0
    %v11718 = vadd.f32 0.0, %v11717
    %v11719 = vpop.f32.mrf.mxu0
    %v11720 = vadd.f32 0.0, %v11719
    %11721 = vdwg.mxu0
    %11722 = vmatprep.subr.bf16.mxu0 %v10840
    %11723 = vmatpush1.bf16.msra.mxu0 %v10839
    %11724 = vmatprep.subr.bf16.mxu0 %v10832
    %11725 = vmatpush1.bf16.msra.mxu0 %v10831
    %11726 = vmatprep.subr.bf16.mxu0 %v10824
    %11727 = vmatpush1.bf16.msra.mxu0 %v10823
    %11728 = vmatprep.subr.bf16.mxu0 %v10816
    %11729 = vmatpush1.bf16.msra.mxu0 %v10815
    %11730 = vmatprep.subr.bf16.mxu0 %v10808
    %11731 = vmatpush1.bf16.msra.mxu0 %v10807
    %11732 = vmatprep.subr.bf16.mxu0 %v10800
    %11733 = vmatpush1.bf16.msra.mxu0 %v10799
    %11734 = vmatprep.subr.bf16.mxu0 %v10792
    %11735 = vmatpush1.bf16.msra.mxu0 %v10791
    %11736 = vmatprep.subr.bf16.mxu0 %v10784
    %11737 = vmatpush1.bf16.msra.mxu0 %v10783
    %11738 = vmatprep.subr.bf16.mxu0 %v10904
    %11739 = vmatpush2.bf16.msra.mxu0 %v10903
    %11740 = vmatprep.subr.bf16.mxu0 %v10896
    %11741 = vmatpush2.bf16.msra.mxu0 %v10895
    %11742 = vmatprep.subr.bf16.mxu0 %v10888
    %11743 = vmatpush2.bf16.msra.mxu0 %v10887
    %11744 = vmatprep.subr.bf16.mxu0 %v10880
    %11745 = vmatpush2.bf16.msra.mxu0 %v10879
    %11746 = vmatprep.subr.bf16.mxu0 %v10872
    %11747 = vmatpush2.bf16.msra.mxu0 %v10871
    %11748 = vmatprep.subr.bf16.mxu0 %v10864
    %11749 = vmatpush2.bf16.msra.mxu0 %v10863
    %11750 = vmatprep.subr.bf16.mxu0 %v10856
    %11751 = vmatpush2.bf16.msra.mxu0 %v10855
    %11752 = vmatprep.subr.bf16.mxu0 %v10848
    %11753 = vmatpush2.bf16.msra.mxu0 %v10847
    %11754 = vmatprep.mubr.bf16.mxu0 %v8602
    %11755 = vmatmul.mubr.bf16.gmra.mxu0 %v8601
    %v11756 = vpop.f32.mrf.mxu0
    %v11757 = vadd.f32 %v11714, %v11756
    %v11758 = vpop.f32.mrf.mxu0
    %v11759 = vadd.f32 %v11716, %v11758
    %v11760 = vpop.f32.mrf.mxu0
    %v11761 = vadd.f32 %v11718, %v11760
    %v11762 = vpop.f32.mrf.mxu0
    %v11763 = vadd.f32 %v11720, %v11762
    %11764 = vdwg.mxu0
    %11765 = vmatprep.subr.bf16.mxu0 %v10968
    %11766 = vmatpush1.bf16.msra.mxu0 %v10967
    %11767 = vmatprep.subr.bf16.mxu0 %v10960
    %11768 = vmatpush1.bf16.msra.mxu0 %v10959
    %11769 = vmatprep.subr.bf16.mxu0 %v10952
    %11770 = vmatpush1.bf16.msra.mxu0 %v10951
    %11771 = vmatprep.subr.bf16.mxu0 %v10944
    %11772 = vmatpush1.bf16.msra.mxu0 %v10943
    %11773 = vmatprep.subr.bf16.mxu0 %v10936
    %11774 = vmatpush1.bf16.msra.mxu0 %v10935
    %11775 = vmatprep.subr.bf16.mxu0 %v10928
    %11776 = vmatpush1.bf16.msra.mxu0 %v10927
    %11777 = vmatprep.subr.bf16.mxu0 %v10920
    %11778 = vmatpush1.bf16.msra.mxu0 %v10919
    %11779 = vmatprep.subr.bf16.mxu0 %v10912
    %11780 = vmatpush1.bf16.msra.mxu0 %v10911
    %11781 = vmatprep.subr.bf16.mxu0 %v11032
    %11782 = vmatpush2.bf16.msra.mxu0 %v11031
    %11783 = vmatprep.subr.bf16.mxu0 %v11024
    %11784 = vmatpush2.bf16.msra.mxu0 %v11023
    %11785 = vmatprep.subr.bf16.mxu0 %v11016
    %11786 = vmatpush2.bf16.msra.mxu0 %v11015
    %11787 = vmatprep.subr.bf16.mxu0 %v11008
    %11788 = vmatpush2.bf16.msra.mxu0 %v11007
    %11789 = vmatprep.subr.bf16.mxu0 %v11000
    %11790 = vmatpush2.bf16.msra.mxu0 %v10999
    %11791 = vmatprep.subr.bf16.mxu0 %v10992
    %11792 = vmatpush2.bf16.msra.mxu0 %v10991
    %11793 = vmatprep.subr.bf16.mxu0 %v10984
    %11794 = vmatpush2.bf16.msra.mxu0 %v10983
    %11795 = vmatprep.subr.bf16.mxu0 %v10976
    %11796 = vmatpush2.bf16.msra.mxu0 %v10975
    %11797 = vmatprep.mubr.bf16.mxu0 %v8604
    %11798 = vmatmul.mubr.bf16.gmra.mxu0 %v8603
    %v11799 = vpop.f32.mrf.mxu0
    %v11800 = vadd.f32 %v11757, %v11799
    %v11801 = vpop.f32.mrf.mxu0
    %v11802 = vadd.f32 %v11759, %v11801
    %v11803 = vpop.f32.mrf.mxu0
    %v11804 = vadd.f32 %v11761, %v11803
    %v11805 = vpop.f32.mrf.mxu0
    %v11806 = vadd.f32 %v11763, %v11805
    %11807 = vdwg.mxu0
    %11808 = vmatprep.subr.bf16.mxu0 %v11096
    %11809 = vmatpush1.bf16.msra.mxu0 %v11095
    %11810 = vmatprep.subr.bf16.mxu0 %v11088
    %11811 = vmatpush1.bf16.msra.mxu0 %v11087
    %11812 = vmatprep.subr.bf16.mxu0 %v11080
    %11813 = vmatpush1.bf16.msra.mxu0 %v11079
    %11814 = vmatprep.subr.bf16.mxu0 %v11072
    %11815 = vmatpush1.bf16.msra.mxu0 %v11071
    %11816 = vmatprep.subr.bf16.mxu0 %v11064
    %11817 = vmatpush1.bf16.msra.mxu0 %v11063
    %11818 = vmatprep.subr.bf16.mxu0 %v11056
    %11819 = vmatpush1.bf16.msra.mxu0 %v11055
    %11820 = vmatprep.subr.bf16.mxu0 %v11048
    %11821 = vmatpush1.bf16.msra.mxu0 %v11047
    %11822 = vmatprep.subr.bf16.mxu0 %v11040
    %11823 = vmatpush1.bf16.msra.mxu0 %v11039
    %11824 = vmatprep.subr.bf16.mxu0 %v11160
    %11825 = vmatpush2.bf16.msra.mxu0 %v11159
    %11826 = vmatprep.subr.bf16.mxu0 %v11152
    %11827 = vmatpush2.bf16.msra.mxu0 %v11151
    %11828 = vmatprep.subr.bf16.mxu0 %v11144
    %11829 = vmatpush2.bf16.msra.mxu0 %v11143
    %11830 = vmatprep.subr.bf16.mxu0 %v11136
    %11831 = vmatpush2.bf16.msra.mxu0 %v11135
    %11832 = vmatprep.subr.bf16.mxu0 %v11128
    %11833 = vmatpush2.bf16.msra.mxu0 %v11127
    %11834 = vmatprep.subr.bf16.mxu0 %v11120
    %11835 = vmatpush2.bf16.msra.mxu0 %v11119
    %11836 = vmatprep.subr.bf16.mxu0 %v11112
    %11837 = vmatpush2.bf16.msra.mxu0 %v11111
    %11838 = vmatprep.subr.bf16.mxu0 %v11104
    %11839 = vmatpush2.bf16.msra.mxu0 %v11103
    %11840 = vmatprep.mubr.bf16.mxu0 %v8606
    %11841 = vmatmul.mubr.bf16.gmra.mxu0 %v8605
    %v11842 = vpop.f32.mrf.mxu0
    %v11843 = vadd.f32 %v11800, %v11842
    %v11844 = vpop.f32.mrf.mxu0
    %v11845 = vadd.f32 %v11802, %v11844
    %v11846 = vpop.f32.mrf.mxu0
    %v11847 = vadd.f32 %v11804, %v11846
    %v11848 = vpop.f32.mrf.mxu0
    %v11849 = vadd.f32 %v11806, %v11848
    %11850 = vdwg.mxu0
    %11851 = vmatprep.subr.bf16.mxu0 %v10714
    %11852 = vmatpush1.bf16.msra.mxu0 %v10713
    %11853 = vmatprep.subr.bf16.mxu0 %v10706
    %11854 = vmatpush1.bf16.msra.mxu0 %v10705
    %11855 = vmatprep.subr.bf16.mxu0 %v10698
    %11856 = vmatpush1.bf16.msra.mxu0 %v10697
    %11857 = vmatprep.subr.bf16.mxu0 %v10690
    %11858 = vmatpush1.bf16.msra.mxu0 %v10689
    %11859 = vmatprep.subr.bf16.mxu0 %v10682
    %11860 = vmatpush1.bf16.msra.mxu0 %v10681
    %11861 = vmatprep.subr.bf16.mxu0 %v10674
    %11862 = vmatpush1.bf16.msra.mxu0 %v10673
    %11863 = vmatprep.subr.bf16.mxu0 %v10666
    %11864 = vmatpush1.bf16.msra.mxu0 %v10665
    %11865 = vmatprep.subr.bf16.mxu0 %v10658
    %11866 = vmatpush1.bf16.msra.mxu0 %v10657
    %11867 = vmatprep.subr.bf16.mxu0 %v10778
    %11868 = vmatpush2.bf16.msra.mxu0 %v10777
    %11869 = vmatprep.subr.bf16.mxu0 %v10770
    %11870 = vmatpush2.bf16.msra.mxu0 %v10769
    %11871 = vmatprep.subr.bf16.mxu0 %v10762
    %11872 = vmatpush2.bf16.msra.mxu0 %v10761
    %11873 = vmatprep.subr.bf16.mxu0 %v10754
    %11874 = vmatpush2.bf16.msra.mxu0 %v10753
    %11875 = vmatprep.subr.bf16.mxu0 %v10746
    %11876 = vmatpush2.bf16.msra.mxu0 %v10745
    %11877 = vmatprep.subr.bf16.mxu0 %v10738
    %11878 = vmatpush2.bf16.msra.mxu0 %v10737
    %11879 = vmatprep.subr.bf16.mxu0 %v10730
    %11880 = vmatpush2.bf16.msra.mxu0 %v10729
    %11881 = vmatprep.subr.bf16.mxu0 %v10722
    %11882 = vmatpush2.bf16.msra.mxu0 %v10721
    %11883 = vmatprep.mubr.bf16.mxu0 %v8600
    %11884 = vmatmul.mubr.bf16.gmra.mxu0 %v8599
    %v11885 = vpop.f32.mrf.mxu0
    %v11886 = vadd.f32 0.0, %v11885
    %v11887 = vpop.f32.mrf.mxu0
    %v11888 = vadd.f32 0.0, %v11887
    %v11889 = vpop.f32.mrf.mxu0
    %v11890 = vadd.f32 0.0, %v11889
    %v11891 = vpop.f32.mrf.mxu0
    %v11892 = vadd.f32 0.0, %v11891
    %11893 = vdwg.mxu0
    %11894 = vmatprep.subr.bf16.mxu0 %v10842
    %11895 = vmatpush1.bf16.msra.mxu0 %v10841
    %11896 = vmatprep.subr.bf16.mxu0 %v10834
    %11897 = vmatpush1.bf16.msra.mxu0 %v10833
    %11898 = vmatprep.subr.bf16.mxu0 %v10826
    %11899 = vmatpush1.bf16.msra.mxu0 %v10825
    %11900 = vmatprep.subr.bf16.mxu0 %v10818
    %11901 = vmatpush1.bf16.msra.mxu0 %v10817
    %11902 = vmatprep.subr.bf16.mxu0 %v10810
    %11903 = vmatpush1.bf16.msra.mxu0 %v10809
    %11904 = vmatprep.subr.bf16.mxu0 %v10802
    %11905 = vmatpush1.bf16.msra.mxu0 %v10801
    %11906 = vmatprep.subr.bf16.mxu0 %v10794
    %11907 = vmatpush1.bf16.msra.mxu0 %v10793
    %11908 = vmatprep.subr.bf16.mxu0 %v10786
    %11909 = vmatpush1.bf16.msra.mxu0 %v10785
    %11910 = vmatprep.subr.bf16.mxu0 %v10906
    %11911 = vmatpush2.bf16.msra.mxu0 %v10905
    %11912 = vmatprep.subr.bf16.mxu0 %v10898
    %11913 = vmatpush2.bf16.msra.mxu0 %v10897
    %11914 = vmatprep.subr.bf16.mxu0 %v10890
    %11915 = vmatpush2.bf16.msra.mxu0 %v10889
    %11916 = vmatprep.subr.bf16.mxu0 %v10882
    %11917 = vmatpush2.bf16.msra.mxu0 %v10881
    %11918 = vmatprep.subr.bf16.mxu0 %v10874
    %11919 = vmatpush2.bf16.msra.mxu0 %v10873
    %11920 = vmatprep.subr.bf16.mxu0 %v10866
    %11921 = vmatpush2.bf16.msra.mxu0 %v10865
    %11922 = vmatprep.subr.bf16.mxu0 %v10858
    %11923 = vmatpush2.bf16.msra.mxu0 %v10857
    %11924 = vmatprep.subr.bf16.mxu0 %v10850
    %11925 = vmatpush2.bf16.msra.mxu0 %v10849
    %11926 = vmatprep.mubr.bf16.mxu0 %v8602
    %11927 = vmatmul.mubr.bf16.gmra.mxu0 %v8601
    %v11928 = vpop.f32.mrf.mxu0
    %v11929 = vadd.f32 %v11886, %v11928
    %v11930 = vpop.f32.mrf.mxu0
    %v11931 = vadd.f32 %v11888, %v11930
    %v11932 = vpop.f32.mrf.mxu0
    %v11933 = vadd.f32 %v11890, %v11932
    %v11934 = vpop.f32.mrf.mxu0
    %v11935 = vadd.f32 %v11892, %v11934
    %11936 = vdwg.mxu0
    %11937 = vmatprep.subr.bf16.mxu0 %v10970
    %11938 = vmatpush1.bf16.msra.mxu0 %v10969
    %11939 = vmatprep.subr.bf16.mxu0 %v10962
    %11940 = vmatpush1.bf16.msra.mxu0 %v10961
    %11941 = vmatprep.subr.bf16.mxu0 %v10954
    %11942 = vmatpush1.bf16.msra.mxu0 %v10953
    %11943 = vmatprep.subr.bf16.mxu0 %v10946
    %11944 = vmatpush1.bf16.msra.mxu0 %v10945
    %11945 = vmatprep.subr.bf16.mxu0 %v10938
    %11946 = vmatpush1.bf16.msra.mxu0 %v10937
    %11947 = vmatprep.subr.bf16.mxu0 %v10930
    %11948 = vmatpush1.bf16.msra.mxu0 %v10929
    %11949 = vmatprep.subr.bf16.mxu0 %v10922
    %11950 = vmatpush1.bf16.msra.mxu0 %v10921
    %11951 = vmatprep.subr.bf16.mxu0 %v10914
    %11952 = vmatpush1.bf16.msra.mxu0 %v10913
    %11953 = vmatprep.subr.bf16.mxu0 %v11034
    %11954 = vmatpush2.bf16.msra.mxu0 %v11033
    %11955 = vmatprep.subr.bf16.mxu0 %v11026
    %11956 = vmatpush2.bf16.msra.mxu0 %v11025
    %11957 = vmatprep.subr.bf16.mxu0 %v11018
    %11958 = vmatpush2.bf16.msra.mxu0 %v11017
    %11959 = vmatprep.subr.bf16.mxu0 %v11010
    %11960 = vmatpush2.bf16.msra.mxu0 %v11009
    %11961 = vmatprep.subr.bf16.mxu0 %v11002
    %11962 = vmatpush2.bf16.msra.mxu0 %v11001
    %11963 = vmatprep.subr.bf16.mxu0 %v10994
    %11964 = vmatpush2.bf16.msra.mxu0 %v10993
    %11965 = vmatprep.subr.bf16.mxu0 %v10986
    %11966 = vmatpush2.bf16.msra.mxu0 %v10985
    %11967 = vmatprep.subr.bf16.mxu0 %v10978
    %11968 = vmatpush2.bf16.msra.mxu0 %v10977
    %11969 = vmatprep.mubr.bf16.mxu0 %v8604
    %11970 = vmatmul.mubr.bf16.gmra.mxu0 %v8603
    %v11971 = vpop.f32.mrf.mxu0
    %v11972 = vadd.f32 %v11929, %v11971
    %v11973 = vpop.f32.mrf.mxu0
    %v11974 = vadd.f32 %v11931, %v11973
    %v11975 = vpop.f32.mrf.mxu0
    %v11976 = vadd.f32 %v11933, %v11975
    %v11977 = vpop.f32.mrf.mxu0
    %v11978 = vadd.f32 %v11935, %v11977
    %11979 = vdwg.mxu0
    %11980 = vmatprep.subr.bf16.mxu0 %v11098
    %11981 = vmatpush1.bf16.msra.mxu0 %v11097
    %11982 = vmatprep.subr.bf16.mxu0 %v11090
    %11983 = vmatpush1.bf16.msra.mxu0 %v11089
    %11984 = vmatprep.subr.bf16.mxu0 %v11082
    %11985 = vmatpush1.bf16.msra.mxu0 %v11081
    %11986 = vmatprep.subr.bf16.mxu0 %v11074
    %11987 = vmatpush1.bf16.msra.mxu0 %v11073
    %11988 = vmatprep.subr.bf16.mxu0 %v11066
    %11989 = vmatpush1.bf16.msra.mxu0 %v11065
    %11990 = vmatprep.subr.bf16.mxu0 %v11058
    %11991 = vmatpush1.bf16.msra.mxu0 %v11057
    %11992 = vmatprep.subr.bf16.mxu0 %v11050
    %11993 = vmatpush1.bf16.msra.mxu0 %v11049
    %11994 = vmatprep.subr.bf16.mxu0 %v11042
    %11995 = vmatpush1.bf16.msra.mxu0 %v11041
    %11996 = vmatprep.subr.bf16.mxu0 %v11162
    %11997 = vmatpush2.bf16.msra.mxu0 %v11161
    %11998 = vmatprep.subr.bf16.mxu0 %v11154
    %11999 = vmatpush2.bf16.msra.mxu0 %v11153
    %12000 = vmatprep.subr.bf16.mxu0 %v11146
    %12001 = vmatpush2.bf16.msra.mxu0 %v11145
    %12002 = vmatprep.subr.bf16.mxu0 %v11138
    %12003 = vmatpush2.bf16.msra.mxu0 %v11137
    %12004 = vmatprep.subr.bf16.mxu0 %v11130
    %12005 = vmatpush2.bf16.msra.mxu0 %v11129
    %12006 = vmatprep.subr.bf16.mxu0 %v11122
    %12007 = vmatpush2.bf16.msra.mxu0 %v11121
    %12008 = vmatprep.subr.bf16.mxu0 %v11114
    %12009 = vmatpush2.bf16.msra.mxu0 %v11113
    %12010 = vmatprep.subr.bf16.mxu0 %v11106
    %12011 = vmatpush2.bf16.msra.mxu0 %v11105
    %12012 = vmatprep.mubr.bf16.mxu0 %v8606
    %12013 = vmatmul.mubr.bf16.gmra.mxu0 %v8605
    %v12014 = vpop.f32.mrf.mxu0
    %v12015 = vadd.f32 %v11972, %v12014
    %v12016 = vpop.f32.mrf.mxu0
    %v12017 = vadd.f32 %v11974, %v12016
    %v12018 = vpop.f32.mrf.mxu0
    %v12019 = vadd.f32 %v11976, %v12018
    %v12020 = vpop.f32.mrf.mxu0
    %v12021 = vadd.f32 %v11978, %v12020
    %12022 = vdwg.mxu0
    %12023 = vmatprep.subr.bf16.mxu0 %v10716
    %12024 = vmatpush1.bf16.msra.mxu0 %v10715
    %12025 = vmatprep.subr.bf16.mxu0 %v10708
    %12026 = vmatpush1.bf16.msra.mxu0 %v10707
    %12027 = vmatprep.subr.bf16.mxu0 %v10700
    %12028 = vmatpush1.bf16.msra.mxu0 %v10699
    %12029 = vmatprep.subr.bf16.mxu0 %v10692
    %12030 = vmatpush1.bf16.msra.mxu0 %v10691
    %12031 = vmatprep.subr.bf16.mxu0 %v10684
    %12032 = vmatpush1.bf16.msra.mxu0 %v10683
    %12033 = vmatprep.subr.bf16.mxu0 %v10676
    %12034 = vmatpush1.bf16.msra.mxu0 %v10675
    %12035 = vmatprep.subr.bf16.mxu0 %v10668
    %12036 = vmatpush1.bf16.msra.mxu0 %v10667
    %12037 = vmatprep.subr.bf16.mxu0 %v10660
    %12038 = vmatpush1.bf16.msra.mxu0 %v10659
    %12039 = vmatprep.subr.bf16.mxu0 %v10780
    %12040 = vmatpush2.bf16.msra.mxu0 %v10779
    %12041 = vmatprep.subr.bf16.mxu0 %v10772
    %12042 = vmatpush2.bf16.msra.mxu0 %v10771
    %12043 = vmatprep.subr.bf16.mxu0 %v10764
    %12044 = vmatpush2.bf16.msra.mxu0 %v10763
    %12045 = vmatprep.subr.bf16.mxu0 %v10756
    %12046 = vmatpush2.bf16.msra.mxu0 %v10755
    %12047 = vmatprep.subr.bf16.mxu0 %v10748
    %12048 = vmatpush2.bf16.msra.mxu0 %v10747
    %12049 = vmatprep.subr.bf16.mxu0 %v10740
    %12050 = vmatpush2.bf16.msra.mxu0 %v10739
    %12051 = vmatprep.subr.bf16.mxu0 %v10732
    %12052 = vmatpush2.bf16.msra.mxu0 %v10731
    %12053 = vmatprep.subr.bf16.mxu0 %v10724
    %12054 = vmatpush2.bf16.msra.mxu0 %v10723
    %12055 = vmatprep.mubr.bf16.mxu0 %v8600
    %12056 = vmatmul.mubr.bf16.gmra.mxu0 %v8599
    %v12057 = vpop.f32.mrf.mxu0
    %v12058 = vadd.f32 0.0, %v12057
    %v12059 = vpop.f32.mrf.mxu0
    %v12060 = vadd.f32 0.0, %v12059
    %v12061 = vpop.f32.mrf.mxu0
    %v12062 = vadd.f32 0.0, %v12061
    %v12063 = vpop.f32.mrf.mxu0
    %v12064 = vadd.f32 0.0, %v12063
    %12065 = vdwg.mxu0
    %12066 = vmatprep.subr.bf16.mxu0 %v10844
    %12067 = vmatpush1.bf16.msra.mxu0 %v10843
    %12068 = vmatprep.subr.bf16.mxu0 %v10836
    %12069 = vmatpush1.bf16.msra.mxu0 %v10835
    %12070 = vmatprep.subr.bf16.mxu0 %v10828
    %12071 = vmatpush1.bf16.msra.mxu0 %v10827
    %12072 = vmatprep.subr.bf16.mxu0 %v10820
    %12073 = vmatpush1.bf16.msra.mxu0 %v10819
    %12074 = vmatprep.subr.bf16.mxu0 %v10812
    %12075 = vmatpush1.bf16.msra.mxu0 %v10811
    %12076 = vmatprep.subr.bf16.mxu0 %v10804
    %12077 = vmatpush1.bf16.msra.mxu0 %v10803
    %12078 = vmatprep.subr.bf16.mxu0 %v10796
    %12079 = vmatpush1.bf16.msra.mxu0 %v10795
    %12080 = vmatprep.subr.bf16.mxu0 %v10788
    %12081 = vmatpush1.bf16.msra.mxu0 %v10787
    %12082 = vmatprep.subr.bf16.mxu0 %v10908
    %12083 = vmatpush2.bf16.msra.mxu0 %v10907
    %12084 = vmatprep.subr.bf16.mxu0 %v10900
    %12085 = vmatpush2.bf16.msra.mxu0 %v10899
    %12086 = vmatprep.subr.bf16.mxu0 %v10892
    %12087 = vmatpush2.bf16.msra.mxu0 %v10891
    %12088 = vmatprep.subr.bf16.mxu0 %v10884
    %12089 = vmatpush2.bf16.msra.mxu0 %v10883
    %12090 = vmatprep.subr.bf16.mxu0 %v10876
    %12091 = vmatpush2.bf16.msra.mxu0 %v10875
    %12092 = vmatprep.subr.bf16.mxu0 %v10868
    %12093 = vmatpush2.bf16.msra.mxu0 %v10867
    %12094 = vmatprep.subr.bf16.mxu0 %v10860
    %12095 = vmatpush2.bf16.msra.mxu0 %v10859
    %12096 = vmatprep.subr.bf16.mxu0 %v10852
    %12097 = vmatpush2.bf16.msra.mxu0 %v10851
    %12098 = vmatprep.mubr.bf16.mxu0 %v8602
    %12099 = vmatmul.mubr.bf16.gmra.mxu0 %v8601
    %v12100 = vpop.f32.mrf.mxu0
    %v12101 = vadd.f32 %v12058, %v12100
    %v12102 = vpop.f32.mrf.mxu0
    %v12103 = vadd.f32 %v12060, %v12102
    %v12104 = vpop.f32.mrf.mxu0
    %v12105 = vadd.f32 %v12062, %v12104
    %v12106 = vpop.f32.mrf.mxu0
    %v12107 = vadd.f32 %v12064, %v12106
    %12108 = vdwg.mxu0
    %12109 = vmatprep.subr.bf16.mxu0 %v10972
    %12110 = vmatpush1.bf16.msra.mxu0 %v10971
    %12111 = vmatprep.subr.bf16.mxu0 %v10964
    %12112 = vmatpush1.bf16.msra.mxu0 %v10963
    %12113 = vmatprep.subr.bf16.mxu0 %v10956
    %12114 = vmatpush1.bf16.msra.mxu0 %v10955
    %12115 = vmatprep.subr.bf16.mxu0 %v10948
    %12116 = vmatpush1.bf16.msra.mxu0 %v10947
    %12117 = vmatprep.subr.bf16.mxu0 %v10940
    %12118 = vmatpush1.bf16.msra.mxu0 %v10939
    %12119 = vmatprep.subr.bf16.mxu0 %v10932
    %12120 = vmatpush1.bf16.msra.mxu0 %v10931
    %12121 = vmatprep.subr.bf16.mxu0 %v10924
    %12122 = vmatpush1.bf16.msra.mxu0 %v10923
    %12123 = vmatprep.subr.bf16.mxu0 %v10916
    %12124 = vmatpush1.bf16.msra.mxu0 %v10915
    %12125 = vmatprep.subr.bf16.mxu0 %v11036
    %12126 = vmatpush2.bf16.msra.mxu0 %v11035
    %12127 = vmatprep.subr.bf16.mxu0 %v11028
    %12128 = vmatpush2.bf16.msra.mxu0 %v11027
    %12129 = vmatprep.subr.bf16.mxu0 %v11020
    %12130 = vmatpush2.bf16.msra.mxu0 %v11019
    %12131 = vmatprep.subr.bf16.mxu0 %v11012
    %12132 = vmatpush2.bf16.msra.mxu0 %v11011
    %12133 = vmatprep.subr.bf16.mxu0 %v11004
    %12134 = vmatpush2.bf16.msra.mxu0 %v11003
    %12135 = vmatprep.subr.bf16.mxu0 %v10996
    %12136 = vmatpush2.bf16.msra.mxu0 %v10995
    %12137 = vmatprep.subr.bf16.mxu0 %v10988
    %12138 = vmatpush2.bf16.msra.mxu0 %v10987
    %12139 = vmatprep.subr.bf16.mxu0 %v10980
    %12140 = vmatpush2.bf16.msra.mxu0 %v10979
    %12141 = vmatprep.mubr.bf16.mxu0 %v8604
    %12142 = vmatmul.mubr.bf16.gmra.mxu0 %v8603
    %v12143 = vpop.f32.mrf.mxu0
    %v12144 = vadd.f32 %v12101, %v12143
    %v12145 = vpop.f32.mrf.mxu0
    %v12146 = vadd.f32 %v12103, %v12145
    %v12147 = vpop.f32.mrf.mxu0
    %v12148 = vadd.f32 %v12105, %v12147
    %v12149 = vpop.f32.mrf.mxu0
    %v12150 = vadd.f32 %v12107, %v12149
    %12151 = vdwg.mxu0
    %12152 = vmatprep.subr.bf16.mxu0 %v11100
    %12153 = vmatpush1.bf16.msra.mxu0 %v11099
    %12154 = vmatprep.subr.bf16.mxu0 %v11092
    %12155 = vmatpush1.bf16.msra.mxu0 %v11091
    %12156 = vmatprep.subr.bf16.mxu0 %v11084
    %12157 = vmatpush1.bf16.msra.mxu0 %v11083
    %12158 = vmatprep.subr.bf16.mxu0 %v11076
    %12159 = vmatpush1.bf16.msra.mxu0 %v11075
    %12160 = vmatprep.subr.bf16.mxu0 %v11068
    %12161 = vmatpush1.bf16.msra.mxu0 %v11067
    %12162 = vmatprep.subr.bf16.mxu0 %v11060
    %12163 = vmatpush1.bf16.msra.mxu0 %v11059
    %12164 = vmatprep.subr.bf16.mxu0 %v11052
    %12165 = vmatpush1.bf16.msra.mxu0 %v11051
    %12166 = vmatprep.subr.bf16.mxu0 %v11044
    %12167 = vmatpush1.bf16.msra.mxu0 %v11043
    %12168 = vmatprep.subr.bf16.mxu0 %v11164
    %12169 = vmatpush2.bf16.msra.mxu0 %v11163
    %12170 = vmatprep.subr.bf16.mxu0 %v11156
    %12171 = vmatpush2.bf16.msra.mxu0 %v11155
    %12172 = vmatprep.subr.bf16.mxu0 %v11148
    %12173 = vmatpush2.bf16.msra.mxu0 %v11147
    %12174 = vmatprep.subr.bf16.mxu0 %v11140
    %12175 = vmatpush2.bf16.msra.mxu0 %v11139
    %12176 = vmatprep.subr.bf16.mxu0 %v11132
    %12177 = vmatpush2.bf16.msra.mxu0 %v11131
    %12178 = vmatprep.subr.bf16.mxu0 %v11124
    %12179 = vmatpush2.bf16.msra.mxu0 %v11123
    %12180 = vmatprep.subr.bf16.mxu0 %v11116
    %12181 = vmatpush2.bf16.msra.mxu0 %v11115
    %12182 = vmatprep.subr.bf16.mxu0 %v11108
    %12183 = vmatpush2.bf16.msra.mxu0 %v11107
    %12184 = vmatprep.mubr.bf16.mxu0 %v8606
    %12185 = vmatmul.mubr.bf16.gmra.mxu0 %v8605
    %v12186 = vpop.f32.mrf.mxu0
    %v12187 = vadd.f32 %v12144, %v12186
    %v12188 = vpop.f32.mrf.mxu0
    %v12189 = vadd.f32 %v12146, %v12188
    %v12190 = vpop.f32.mrf.mxu0
    %v12191 = vadd.f32 %v12148, %v12190
    %v12192 = vpop.f32.mrf.mxu0
    %v12193 = vadd.f32 %v12150, %v12192
    %12194 = vdwg.mxu0
    %12195 = vmatprep.subr.bf16.mxu0 %v10718
    %12196 = vmatpush1.bf16.msra.mxu0 %v10717
    %12197 = vmatprep.subr.bf16.mxu0 %v10710
    %12198 = vmatpush1.bf16.msra.mxu0 %v10709
    %12199 = vmatprep.subr.bf16.mxu0 %v10702
    %12200 = vmatpush1.bf16.msra.mxu0 %v10701
    %12201 = vmatprep.subr.bf16.mxu0 %v10694
    %12202 = vmatpush1.bf16.msra.mxu0 %v10693
    %12203 = vmatprep.subr.bf16.mxu0 %v10686
    %12204 = vmatpush1.bf16.msra.mxu0 %v10685
    %12205 = vmatprep.subr.bf16.mxu0 %v10678
    %12206 = vmatpush1.bf16.msra.mxu0 %v10677
    %12207 = vmatprep.subr.bf16.mxu0 %v10670
    %12208 = vmatpush1.bf16.msra.mxu0 %v10669
    %12209 = vmatprep.subr.bf16.mxu0 %v10662
    %12210 = vmatpush1.bf16.msra.mxu0 %v10661
    %12211 = vmatprep.subr.bf16.mxu0 %v10782
    %12212 = vmatpush2.bf16.msra.mxu0 %v10781
    %12213 = vmatprep.subr.bf16.mxu0 %v10774
    %12214 = vmatpush2.bf16.msra.mxu0 %v10773
    %12215 = vmatprep.subr.bf16.mxu0 %v10766
    %12216 = vmatpush2.bf16.msra.mxu0 %v10765
    %12217 = vmatprep.subr.bf16.mxu0 %v10758
    %12218 = vmatpush2.bf16.msra.mxu0 %v10757
    %12219 = vmatprep.subr.bf16.mxu0 %v10750
    %12220 = vmatpush2.bf16.msra.mxu0 %v10749
    %12221 = vmatprep.subr.bf16.mxu0 %v10742
    %12222 = vmatpush2.bf16.msra.mxu0 %v10741
    %12223 = vmatprep.subr.bf16.mxu0 %v10734
    %12224 = vmatpush2.bf16.msra.mxu0 %v10733
    %12225 = vmatprep.subr.bf16.mxu0 %v10726
    %12226 = vmatpush2.bf16.msra.mxu0 %v10725
    %12227 = vmatprep.mubr.bf16.mxu0 %v8600
    %12228 = vmatmul.mubr.bf16.gmra.mxu0 %v8599
    %v12229 = vpop.f32.mrf.mxu0
    %v12230 = vadd.f32 0.0, %v12229
    %v12231 = vpop.f32.mrf.mxu0
    %v12232 = vadd.f32 0.0, %v12231
    %v12233 = vpop.f32.mrf.mxu0
    %v12234 = vadd.f32 0.0, %v12233
    %v12235 = vpop.f32.mrf.mxu0
    %v12236 = vadd.f32 0.0, %v12235
    %12237 = vdwg.mxu0
    %12238 = vmatprep.subr.bf16.mxu0 %v10846
    %12239 = vmatpush1.bf16.msra.mxu0 %v10845
    %12240 = vmatprep.subr.bf16.mxu0 %v10838
    %12241 = vmatpush1.bf16.msra.mxu0 %v10837
    %12242 = vmatprep.subr.bf16.mxu0 %v10830
    %12243 = vmatpush1.bf16.msra.mxu0 %v10829
    %12244 = vmatprep.subr.bf16.mxu0 %v10822
    %12245 = vmatpush1.bf16.msra.mxu0 %v10821
    %12246 = vmatprep.subr.bf16.mxu0 %v10814
    %12247 = vmatpush1.bf16.msra.mxu0 %v10813
    %12248 = vmatprep.subr.bf16.mxu0 %v10806
    %12249 = vmatpush1.bf16.msra.mxu0 %v10805
    %12250 = vmatprep.subr.bf16.mxu0 %v10798
    %12251 = vmatpush1.bf16.msra.mxu0 %v10797
    %12252 = vmatprep.subr.bf16.mxu0 %v10790
    %12253 = vmatpush1.bf16.msra.mxu0 %v10789
    %12254 = vmatprep.subr.bf16.mxu0 %v10910
    %12255 = vmatpush2.bf16.msra.mxu0 %v10909
    %12256 = vmatprep.subr.bf16.mxu0 %v10902
    %12257 = vmatpush2.bf16.msra.mxu0 %v10901
    %12258 = vmatprep.subr.bf16.mxu0 %v10894
    %12259 = vmatpush2.bf16.msra.mxu0 %v10893
    %12260 = vmatprep.subr.bf16.mxu0 %v10886
    %12261 = vmatpush2.bf16.msra.mxu0 %v10885
    %12262 = vmatprep.subr.bf16.mxu0 %v10878
    %12263 = vmatpush2.bf16.msra.mxu0 %v10877
    %12264 = vmatprep.subr.bf16.mxu0 %v10870
    %12265 = vmatpush2.bf16.msra.mxu0 %v10869
    %12266 = vmatprep.subr.bf16.mxu0 %v10862
    %12267 = vmatpush2.bf16.msra.mxu0 %v10861
    %12268 = vmatprep.subr.bf16.mxu0 %v10854
    %12269 = vmatpush2.bf16.msra.mxu0 %v10853
    %12270 = vmatprep.mubr.bf16.mxu0 %v8602
    %12271 = vmatmul.mubr.bf16.gmra.mxu0 %v8601
    %v12272 = vpop.f32.mrf.mxu0
    %v12273 = vadd.f32 %v12230, %v12272
    %v12274 = vpop.f32.mrf.mxu0
    %v12275 = vadd.f32 %v12232, %v12274
    %v12276 = vpop.f32.mrf.mxu0
    %v12277 = vadd.f32 %v12234, %v12276
    %v12278 = vpop.f32.mrf.mxu0
    %v12279 = vadd.f32 %v12236, %v12278
    %12280 = vdwg.mxu0
    %12281 = vmatprep.subr.bf16.mxu0 %v10974
    %12282 = vmatpush1.bf16.msra.mxu0 %v10973
    %12283 = vmatprep.subr.bf16.mxu0 %v10966
    %12284 = vmatpush1.bf16.msra.mxu0 %v10965
    %12285 = vmatprep.subr.bf16.mxu0 %v10958
    %12286 = vmatpush1.bf16.msra.mxu0 %v10957
    %12287 = vmatprep.subr.bf16.mxu0 %v10950
    %12288 = vmatpush1.bf16.msra.mxu0 %v10949
    %12289 = vmatprep.subr.bf16.mxu0 %v10942
    %12290 = vmatpush1.bf16.msra.mxu0 %v10941
    %12291 = vmatprep.subr.bf16.mxu0 %v10934
    %12292 = vmatpush1.bf16.msra.mxu0 %v10933
    %12293 = vmatprep.subr.bf16.mxu0 %v10926
    %12294 = vmatpush1.bf16.msra.mxu0 %v10925
    %12295 = vmatprep.subr.bf16.mxu0 %v10918
    %12296 = vmatpush1.bf16.msra.mxu0 %v10917
    %12297 = vmatprep.subr.bf16.mxu0 %v11038
    %12298 = vmatpush2.bf16.msra.mxu0 %v11037
    %12299 = vmatprep.subr.bf16.mxu0 %v11030
    %12300 = vmatpush2.bf16.msra.mxu0 %v11029
    %12301 = vmatprep.subr.bf16.mxu0 %v11022
    %12302 = vmatpush2.bf16.msra.mxu0 %v11021
    %12303 = vmatprep.subr.bf16.mxu0 %v11014
    %12304 = vmatpush2.bf16.msra.mxu0 %v11013
    %12305 = vmatprep.subr.bf16.mxu0 %v11006
    %12306 = vmatpush2.bf16.msra.mxu0 %v11005
    %12307 = vmatprep.subr.bf16.mxu0 %v10998
    %12308 = vmatpush2.bf16.msra.mxu0 %v10997
    %12309 = vmatprep.subr.bf16.mxu0 %v10990
    %12310 = vmatpush2.bf16.msra.mxu0 %v10989
    %12311 = vmatprep.subr.bf16.mxu0 %v10982
    %12312 = vmatpush2.bf16.msra.mxu0 %v10981
    %12313 = vmatprep.mubr.bf16.mxu0 %v8604
    %12314 = vmatmul.mubr.bf16.gmra.mxu0 %v8603
    %v12315 = vpop.f32.mrf.mxu0
    %v12316 = vadd.f32 %v12273, %v12315
    %v12317 = vpop.f32.mrf.mxu0
    %v12318 = vadd.f32 %v12275, %v12317
    %v12319 = vpop.f32.mrf.mxu0
    %v12320 = vadd.f32 %v12277, %v12319
    %v12321 = vpop.f32.mrf.mxu0
    %v12322 = vadd.f32 %v12279, %v12321
    %12323 = vdwg.mxu0
    %12324 = vmatprep.subr.bf16.mxu0 %v11102
    %12325 = vmatpush1.bf16.msra.mxu0 %v11101
    %12326 = vmatprep.subr.bf16.mxu0 %v11094
    %12327 = vmatpush1.bf16.msra.mxu0 %v11093
    %12328 = vmatprep.subr.bf16.mxu0 %v11086
    %12329 = vmatpush1.bf16.msra.mxu0 %v11085
    %12330 = vmatprep.subr.bf16.mxu0 %v11078
    %12331 = vmatpush1.bf16.msra.mxu0 %v11077
    %12332 = vmatprep.subr.bf16.mxu0 %v11070
    %12333 = vmatpush1.bf16.msra.mxu0 %v11069
    %12334 = vmatprep.subr.bf16.mxu0 %v11062
    %12335 = vmatpush1.bf16.msra.mxu0 %v11061
    %12336 = vmatprep.subr.bf16.mxu0 %v11054
    %12337 = vmatpush1.bf16.msra.mxu0 %v11053
    %12338 = vmatprep.subr.bf16.mxu0 %v11046
    %12339 = vmatpush1.bf16.msra.mxu0 %v11045
    %12340 = vmatprep.subr.bf16.mxu0 %v11166
    %12341 = vmatpush2.bf16.msra.mxu0 %v11165
    %12342 = vmatprep.subr.bf16.mxu0 %v11158
    %12343 = vmatpush2.bf16.msra.mxu0 %v11157
    %12344 = vmatprep.subr.bf16.mxu0 %v11150
    %12345 = vmatpush2.bf16.msra.mxu0 %v11149
    %12346 = vmatprep.subr.bf16.mxu0 %v11142
    %12347 = vmatpush2.bf16.msra.mxu0 %v11141
    %12348 = vmatprep.subr.bf16.mxu0 %v11134
    %12349 = vmatpush2.bf16.msra.mxu0 %v11133
    %12350 = vmatprep.subr.bf16.mxu0 %v11126
    %12351 = vmatpush2.bf16.msra.mxu0 %v11125
    %12352 = vmatprep.subr.bf16.mxu0 %v11118
    %12353 = vmatpush2.bf16.msra.mxu0 %v11117
    %12354 = vmatprep.subr.bf16.mxu0 %v11110
    %12355 = vmatpush2.bf16.msra.mxu0 %v11109
    %12356 = vmatprep.mubr.bf16.mxu0 %v8606
    %12357 = vmatmul.mubr.bf16.gmra.mxu0 %v8605
    %v12358 = vpop.f32.mrf.mxu0
    %v12359 = vadd.f32 %v12316, %v12358
    %v12360 = vpop.f32.mrf.mxu0
    %v12361 = vadd.f32 %v12318, %v12360
    %v12362 = vpop.f32.mrf.mxu0
    %v12363 = vadd.f32 %v12320, %v12362
    %v12364 = vpop.f32.mrf.mxu0
    %v12365 = vadd.f32 %v12322, %v12364
    %12366 = vdwg.mxu0
    %v12367 = vld [vmem:[%s9] sm:$0xff]
    %v12369 = vlaneseq
    %v12370 = vshrl.u32 %v12369, 7
    %v12371 = vsub.s32 0, %v12370
    %v12372 = vrot.slane %v12367, %v12371
    %v12373 = vlaneseq
    %v12374 = vshrl.u32 %v12373, 7
    %v12375 = vsub.s32 1, %v12374
    %v12376 = vrot.slane %v12367, %v12375
    %v12377 = vlaneseq
    %v12378 = vshrl.u32 %v12377, 7
    %v12379 = vsub.s32 2, %v12378
    %v12380 = vrot.slane %v12367, %v12379
    %v12381 = vlaneseq
    %v12382 = vshrl.u32 %v12381, 7
    %v12383 = vsub.s32 3, %v12382
    %v12384 = vrot.slane %v12367, %v12383
    %v12385 = vlaneseq
    %v12386 = vshrl.u32 %v12385, 7
    %v12387 = vsub.s32 4, %v12386
    %v12388 = vrot.slane %v12367, %v12387
    %v12389 = vlaneseq
    %v12390 = vshrl.u32 %v12389, 7
    %v12391 = vsub.s32 5, %v12390
    %v12392 = vrot.slane %v12367, %v12391
    %v12393 = vlaneseq
    %v12394 = vshrl.u32 %v12393, 7
    %v12395 = vsub.s32 6, %v12394
    %v12396 = vrot.slane %v12367, %v12395
    %v12397 = vlaneseq
    %v12398 = vshrl.u32 %v12397, 7
    %v12399 = vsub.s32 7, %v12398
    %v12400 = vrot.slane %v12367, %v12399
    %v12409 = vmul.f32 %v11843, %v12372
    %v12410 = vmul.f32 %v11845, %v12376
    %v12411 = vmul.f32 %v12015, %v12380
    %v12412 = vmul.f32 %v12017, %v12384
    %v12413 = vmul.f32 %v12187, %v12388
    %v12414 = vmul.f32 %v12189, %v12392
    %v12415 = vmul.f32 %v12359, %v12396
    %v12416 = vmul.f32 %v12361, %v12400
    %v12417 = vmul.f32 %v11847, %v12372
    %v12418 = vmul.f32 %v11849, %v12376
    %v12419 = vmul.f32 %v12019, %v12380
    %v12420 = vmul.f32 %v12021, %v12384
    %v12421 = vmul.f32 %v12191, %v12388
    %v12422 = vmul.f32 %v12193, %v12392
    %v12423 = vmul.f32 %v12363, %v12396
    %v12424 = vmul.f32 %v12365, %v12400
    %v12425 = vld [vmem:[#allocation18] sm:$0xff]
    %v12427 = vlaneseq
    %v12428 = vshrl.u32 %v12427, 7
    %v12429 = vsub.s32 0, %v12428
    %v12430 = vrot.slane %v12425, %v12429
    %v12431 = vlaneseq
    %v12432 = vshrl.u32 %v12431, 7
    %v12433 = vsub.s32 1, %v12432
    %v12434 = vrot.slane %v12425, %v12433
    %v12435 = vlaneseq
    %v12436 = vshrl.u32 %v12435, 7
    %v12437 = vsub.s32 2, %v12436
    %v12438 = vrot.slane %v12425, %v12437
    %v12439 = vlaneseq
    %v12440 = vshrl.u32 %v12439, 7
    %v12441 = vsub.s32 3, %v12440
    %v12442 = vrot.slane %v12425, %v12441
    %v12443 = vlaneseq
    %v12444 = vshrl.u32 %v12443, 7
    %v12445 = vsub.s32 4, %v12444
    %v12446 = vrot.slane %v12425, %v12445
    %v12447 = vlaneseq
    %v12448 = vshrl.u32 %v12447, 7
    %v12449 = vsub.s32 5, %v12448
    %v12450 = vrot.slane %v12425, %v12449
    %v12451 = vlaneseq
    %v12452 = vshrl.u32 %v12451, 7
    %v12453 = vsub.s32 6, %v12452
    %v12454 = vrot.slane %v12425, %v12453
    %v12455 = vlaneseq
    %v12456 = vshrl.u32 %v12455, 7
    %v12457 = vsub.s32 7, %v12456
    %v12458 = vrot.slane %v12425, %v12457
    %v12467 = vadd.f32 %v12409, %v12430
    %v12468 = vadd.f32 %v12410, %v12434
    %v12469 = vadd.f32 %v12411, %v12438
    %v12470 = vadd.f32 %v12412, %v12442
    %v12471 = vadd.f32 %v12413, %v12446
    %v12472 = vadd.f32 %v12414, %v12450
    %v12473 = vadd.f32 %v12415, %v12454
    %v12474 = vadd.f32 %v12416, %v12458
    %v12475 = vadd.f32 %v12417, %v12430
    %v12476 = vadd.f32 %v12418, %v12434
    %v12477 = vadd.f32 %v12419, %v12438
    %v12478 = vadd.f32 %v12420, %v12442
    %v12479 = vadd.f32 %v12421, %v12446
    %v12480 = vadd.f32 %v12422, %v12450
    %v12481 = vadd.f32 %v12423, %v12454
    %v12482 = vadd.f32 %v12424, %v12458
    %12483 = vst [vmem:[#allocation19] sm:$0xff] %v12467
    %12484 = vst [vmem:[#allocation19 + $0x8] sm:$0xff] %v12468
    %12485 = vst [vmem:[#allocation19 + $0x10] sm:$0xff] %v12469
    %12486 = vst [vmem:[#allocation19 + $0x18] sm:$0xff] %v12470
    %12487 = vst [vmem:[#allocation19 + $0x20] sm:$0xff] %v12471
    %12488 = vst [vmem:[#allocation19 + $0x28] sm:$0xff] %v12472
    %12489 = vst [vmem:[#allocation19 + $0x30] sm:$0xff] %v12473
    %12490 = vst [vmem:[#allocation19 + $0x38] sm:$0xff] %v12474
    %12491 = vst [vmem:[#allocation19 + $0x40] sm:$0xff] %v12475
    %12492 = vst [vmem:[#allocation19 + $0x48] sm:$0xff] %v12476
    %12493 = vst [vmem:[#allocation19 + $0x50] sm:$0xff] %v12477
    %12494 = vst [vmem:[#allocation19 + $0x58] sm:$0xff] %v12478
    %12495 = vst [vmem:[#allocation19 + $0x60] sm:$0xff] %v12479
    %12496 = vst [vmem:[#allocation19 + $0x68] sm:$0xff] %v12480
    %12497 = vst [vmem:[#allocation19 + $0x70] sm:$0xff] %v12481
    %12498 = vst [vmem:[#allocation19 + $0x78] sm:$0xff] %v12482
    // Predicated region
    $region86: #{_generator_forward_padded.1} parent=1 // pred_check
      _
    $region87: #{_generator_forward_padded.1} parent=1 // pred_check_branch
      %12500 = sbr.rel (0) target = $region89
    $region88: #{_generator_forward_padded.1} parent=1 // pred_region
      %s12502 = ssub.s32 2048, 2048
      %12503 = vsyncadd [#allocation6], %s12502
      %s12504 = sshll.u32 [#allocation19], 4
      %s12505 = int_to_ptr.vmem [resolvable:$true] %s12504
      %12510 = dma.vmem_to_hbm [thread:$0]  %s12505, 2048, %s11, [#allocation6], 1024, 1024, 64
    $region89: #{_generator_forward_padded.1} parent=1 // pred_fallthru
      _
    // Predicated region
    $region90: #{_generator_forward_padded.1} parent=1 // pred_check
      _
    $region91: #{_generator_forward_padded.1} parent=1 // pred_check_branch
      %12512 = sbr.rel (0) target = $region93
    $region92: #{_generator_forward_padded.1} parent=1 // pred_region
      %12513 = dma.done [#allocation6], 2048
    $region93: #{_generator_forward_padded.1} parent=1 // pred_fallthru
      _
    %12514 = vsyncpa [#allocation5], 1
    %12515 = vsyncpa [#allocation8], 1
    %12516 = vsyncpa [#allocation11], 1
    %12517 = vsyncpa [#allocation14], 1
    %12518 = vsyncpa [#allocation17], 1
    %12519 = vsyncpa [#allocation6], 1

</llo_original>
